<compile_context>
chip_gen: v7x
topology: tpu7x:2x2x1
jax: 0.10.0
libtpu: 0.0.40
codegen_flags: <defaults>
</compile_context>

<pallas_src>
import functools

import jax
import jax.numpy as jnp
from jax import lax
from jax.experimental import pallas as pl
from jax.experimental.pallas import tpu as pltpu


def _round_up(a, b):
    return (a + b - 1) // b * b


def _ngf_body(x_hbm, dm_ref, a_ref, pt_ref, ws_ref, b_ref, wn_ref, wfp_ref,
              fp_ref, sem, xc_sc, hs_sc, y_sc, a_sc, *, f_real):
    """Fused NGF forward body.

    Grid: (num_layers, num_node_tiles), both axes "arbitrary" (sequential) —
    the fingerprint accumulator and the node-feature scratch carry state across
    BOTH axes, so neither may be marked "parallel".

    x_hbm   : HBM ref [Np, Dmax] f32     padded node features (copied once)
    dm_ref  : [Np, D+1] bf16             one-hot source-degree mask (zero row if deg>max)
    a_ref   : resident: HBM ref [Np, Np] bf16   (copied once into a_sc)
              streamed: VMEM tile [TN, Np] bf16 adjacency rows (A[target, source])
    pt_ref  : [Gp, TN] f32               pooling columns for this tile (P[g,n]=batch[n]==g)
    ws_ref  : [1, Dmax, H]               W_self (pre-transposed), this layer
    b_ref   : [1, 1, H]                  W_self bias, this layer
    wn_ref  : [1, (D+1)*Dmax, H]         W_neigh stacked along K, this layer
    wfp_ref : [1, H, Fp]                 W_fp (pre-transposed, zero-padded to Fp)
    fp_ref  : [Gp, Fp]                   fingerprint accumulator (resident)
    sem     : DMA semaphores (2,)
    xc_sc   : VMEM [Np, Dmax] f32        current-layer node features
    hs_sc   : VMEM [Np, H]    f32        h_self for all nodes, this layer
    y_sc    : VMEM [Np, H]    bf16       degree-gated transform of all nodes
    a_sc    : VMEM [Np, Np]   bf16 or None   resident adjacency copy
    """
    a_resident = a_sc is not None
    l = pl.program_id(0)          # layer index
    t = pl.program_id(1)          # node-tile index
    tn = pt_ref.shape[1]
    n_pad, d_max = xc_sc.shape
    hidden = y_sc.shape[1]
    n_deg = dm_ref.shape[1]
    f_pad = fp_ref.shape[1]

    # ---- one-time staging (first grid step): DMA x (and A, if resident) from
    # HBM into VMEM scratch; zero the fingerprint accumulator.
    @pl.when(jnp.logical_and(l == 0, t == 0))
    def _():
        cp_x = pltpu.make_async_copy(x_hbm, xc_sc, sem.at[0])
        cp_x.start()
        if a_resident:
            cp_a = pltpu.make_async_copy(a_ref, a_sc, sem.at[1])
            cp_a.start()
            cp_a.wait()
        cp_x.wait()
        fp_ref[...] = jnp.zeros_like(fp_ref)

    # ---- per-layer preamble (t == 0): ONE wide-K degree-gated matmul producing
    # y[i] = x[i] @ Wn[deg(i)]  for ALL nodes (0 if deg(i) > max_degree),
    # plus h_self for all nodes (cached so per-tile work is just A@y + epilogue).
    @pl.when(t == 0)
    def _():
        xc = xc_sc[...]                                   # [Np, Dmax] f32
        dm = dm_ref[...].astype(jnp.float32)              # [Np, D+1]
        # gated K-slabs: Xg = [dm[:,0]*x | dm[:,1]*x | ...] -> [Np, (D+1)*Dmax]
        xg = jnp.concatenate(
            [dm[:, d:d + 1] * xc for d in range(n_deg)], axis=1)
        y = jnp.dot(xg, wn_ref[0], preferred_element_type=jnp.float32)   # [Np, H]
        y_sc[...] = y.astype(y_sc.dtype)
        hs_sc[...] = (jnp.dot(xc, ws_ref[0], preferred_element_type=jnp.float32)
                      + b_ref[0])

    row0 = pl.multiple_of(t * tn, tn)
    if a_resident:
        a_rows = a_sc[pl.ds(row0, tn), :]                 # [TN, Np] bf16
    else:
        a_rows = a_ref[...]                               # [TN, Np] bf16

    # neighbor contribution: ONE dense matmul, bf16 x bf16 -> f32 accumulate
    nc = jnp.dot(a_rows, y_sc[...], preferred_element_type=jnp.float32)   # [TN, H]

    # smooth_fn = tanh
    h = jnp.tanh(hs_sc[pl.ds(row0, tn), :] + nc)          # [TN, H]

    # sparsify_fn = softmax over the fingerprint dim (masked to the real F
    # columns — W_fp is zero-padded to a lane-dense F_pad).
    logits = jnp.dot(h, wfp_ref[0], preferred_element_type=jnp.float32)   # [TN, Fp]
    if f_real < f_pad:
        col = lax.broadcasted_iota(jnp.int32, logits.shape, 1)
        logits = jnp.where(col < f_real, logits, -1e30)
    m = jnp.max(logits, axis=1, keepdims=True)
    e = jnp.exp(logits - m)
    contrib = e * pl.reciprocal(jnp.sum(e, axis=1, keepdims=True), approx=True)

    # global_add_pool: fp[g, :] += P[g, tile-nodes] @ contrib
    fp_ref[...] += jnp.dot(pt_ref[...], contrib, preferred_element_type=jnp.float32)

    # h becomes next layer's node features (zero-pad columns if Dmax > H).
    if d_max > hidden:
        h = jnp.concatenate([h, jnp.zeros((tn, d_max - hidden), jnp.float32)], axis=1)
    xc_sc[pl.ds(row0, tn), :] = h


def _make_kernel(a_resident, f_real):
    if a_resident:
        def kern(x_hbm, dm, a_hbm, pt, ws, b, wn, wfp, fp, sem, xc, hs, y, a_sc):
            _ngf_body(x_hbm, dm, a_hbm, pt, ws, b, wn, wfp, fp, sem, xc, hs, y,
                      a_sc, f_real=f_real)
    else:
        def kern(x_hbm, dm, a_tile, pt, ws, b, wn, wfp, fp, sem, xc, hs, y):
            _ngf_body(x_hbm, dm, a_tile, pt, ws, b, wn, wfp, fp, sem, xc, hs, y,
                      None, f_real=f_real)
    return kern


def _vmem_estimate_bytes(n_pad, d_max, hidden, n_deg, tile_n, g_pad, f_pad,
                         a_resident):
    def lanes(c):
        return max(_round_up(c, 128), 128)
    est = 0
    est += n_pad * lanes(d_max) * 4                 # xc_sc
    est += n_pad * lanes(hidden) * 4                # hs_sc
    est += n_pad * lanes(hidden) * 2                # y_sc (bf16)
    if a_resident:
        est += n_pad * lanes(n_pad) * 2             # resident adjacency (bf16)
    else:
        est += 3 * tile_n * lanes(n_pad) * 2        # streamed adjacency tiles
    est += 2 * n_pad * lanes(n_deg) * 2             # degree-mask blocks (bf16)
    est += 2 * g_pad * lanes(tile_n) * 4            # pooling tiles
    est += 2 * 4 * (d_max * lanes(hidden) + lanes(hidden)
                    + n_deg * d_max * lanes(hidden) + hidden * lanes(f_pad))
    est += g_pad * lanes(f_pad) * 4                 # fingerprint accumulator
    est += n_pad * lanes(n_deg * d_max) * 4         # gated-X intermediate
    est += 2 * tile_n * lanes(f_pad) * 4            # logits / contrib
    return est


def make_params(key, in_channels, hidden_dim, fingerprint_dim, num_layers,
                max_degree, weight_scale):
    """Deterministic parameter init matching reset_parameters():
       W_self ~ N(0, scale), bias = 0, W_neigh[d] ~ N(0, scale), W_fp ~ N(0, scale).
       Shapes follow the PyTorch module (nn.Linear weight: [out, in])."""
    params = []
    for layer in range(num_layers):
        in_dim = in_channels if layer == 0 else hidden_dim
        key, k1, k2, k3 = jax.random.split(key, 4)
        w_self = weight_scale * jax.random.normal(k1, (hidden_dim, in_dim), jnp.float32)
        bias = jnp.zeros((1, hidden_dim), jnp.float32)
        w_neigh = weight_scale * jax.random.normal(
            k2, (max_degree + 1, hidden_dim, in_dim), jnp.float32)
        w_fp = weight_scale * jax.random.normal(
            k3, (fingerprint_dim, hidden_dim), jnp.float32)
        params.append((w_self, bias, w_neigh, w_fp))
    return params


def neural_graph_fingerprint(x, edge_index, batch, num_graphs, params, max_degree,
                             *, tile_n=256, a_resident=None, vmem_limit_bytes=None):
    """Full forward pass.  Edge-list densification / weight layout plumbing is
    plain-JAX glue; all matmul / activation / softmax / pooling hot-path work
    runs inside ONE fused Pallas call (grid = layers x node tiles)."""
    x = x.astype(jnp.float32)
    n_nodes, in_channels = x.shape
    num_layers = len(params)
    hidden = params[0][0].shape[0]
    f_dim = params[0][3].shape[0]
    n_deg = max_degree + 1
    d_max = max(in_channels, hidden)
    f_pad = _round_up(f_dim, 128)
    g_pad = _round_up(num_graphs, 8)

    # Node tiling: large lane/MXU-friendly tiles (128/256 rows), multiples of 16
    # for bf16 sublane packing; multiples of 128 when several tiles are needed.
    n_min = _round_up(n_nodes, 16)
    if n_min <= tile_n:
        tile_n = n_min
        n_pad = n_min
    else:
        tile_n = _round_up(tile_n, 128)
        n_pad = _round_up(n_nodes, tile_n)
    n_tiles = n_pad // tile_n

    # Adjacency residency: keep the whole bf16 A in a VMEM scratch (copied once,
    # never re-streamed per layer) when it fits comfortably under the smallest
    # per-core budget (v7x: 64 MiB); otherwise stream row tiles per grid step.
    a_bytes = 2 * n_pad * n_pad
    if a_resident is None:
        a_resident = a_bytes <= 24 * 1024 * 1024

    if vmem_limit_bytes is None:
        est = _vmem_estimate_bytes(n_pad, d_max, hidden, n_deg, tile_n, g_pad,
                                   f_pad, a_resident)
        # NOTE: on v7x (64 MiB/TC) pass vmem_limit_bytes / a_resident explicitly
        # for very large graphs; v5e/v6e (128 MiB) can raise this further.
        vmem_limit_bytes = min(max(est + est // 2 + (4 << 20), 32 << 20), 96 << 20)

    row, col = edge_index[0], edge_index[1]

    # out-degree of every source node
    deg = jnp.zeros((n_nodes,), jnp.int32).at[row].add(1)
    # one-hot degree mask; nodes with deg > max_degree get an all-zero row,
    # i.e. their outgoing edges are dropped (matches the reference module).
    dm = (deg[:, None] == jnp.arange(n_deg)[None, :]).astype(jnp.bfloat16)
    dm = jnp.pad(dm, ((0, n_pad - n_nodes), (0, 0)))

    # dense adjacency: A[target, source] = #edges source->target (duplicates
    # accumulate, like index_add_).  Cast to bf16 AFTER accumulation — exact for
    # integer edge counts <= 256.
    adj = jnp.zeros((n_pad, n_pad), jnp.float32).at[col, row].add(1.0)
    adj = adj.astype(jnp.bfloat16)

    # pooling matrix P[g, n] = (batch[n] == g); padded graphs/nodes -> 0
    pmat = (jnp.arange(g_pad)[:, None] == batch[None, :]).astype(jnp.float32)
    pmat = jnp.pad(pmat, ((0, 0), (0, n_pad - n_nodes)))

    xp = jnp.pad(x, ((0, n_pad - n_nodes), (0, d_max - in_channels)))

    # Pre-transpose, zero-pad (layer-0 Din -> Dmax, F -> Fp) and stack weights.
    # W_neigh is stacked along K to match the in-kernel gated-slab concat order.
    ws_l, b_l, wn_l, wfp_l = [], [], [], []
    for (w_self, bias, w_neigh, w_fp) in params:
        din = w_self.shape[1]
        ws_l.append(jnp.pad(w_self.T, ((0, d_max - din), (0, 0))))           # [Dmax, H]
        b_l.append(bias.reshape(1, hidden))                                  # [1, H]
        wn_t = jnp.pad(jnp.transpose(w_neigh, (0, 2, 1)),
                       ((0, 0), (0, d_max - din), (0, 0)))                   # [D+1, Dmax, H]
        wn_l.append(wn_t.reshape(n_deg * d_max, hidden))                     # [(D+1)*Dmax, H]
        wfp_l.append(jnp.pad(w_fp.T, ((0, 0), (0, f_pad - f_dim))))          # [H, Fp]
    ws_all = jnp.stack(ws_l)          # [L, Dmax, H]
    b_all = jnp.stack(b_l)            # [L, 1, H]
    wn_all = jnp.stack(wn_l)          # [L, (D+1)*Dmax, H]
    wfp_all = jnp.stack(wfp_l)        # [L, H, Fp]

    if a_resident:
        a_spec = pl.BlockSpec(memory_space=pl.ANY)        # raw HBM ref, copied once
    elif n_tiles >= 3:
        a_spec = pl.BlockSpec((tile_n, n_pad), lambda l, t: (t, 0),
                              pipeline_mode=pl.Buffered(3))
    else:
        a_spec = pl.BlockSpec((tile_n, n_pad), lambda l, t: (t, 0))

    scratch = [
        pltpu.SemaphoreType.DMA((2,)),
        pltpu.VMEM((n_pad, d_max), jnp.float32),      # current-layer node features
        pltpu.VMEM((n_pad, hidden), jnp.float32),     # h_self cache
        pltpu.VMEM((n_pad, hidden), jnp.bfloat16),    # degree-gated messages
    ]
    if a_resident:
        scratch.append(pltpu.VMEM((n_pad, n_pad), jnp.bfloat16))   # resident A

    kern = _make_kernel(a_resident, f_dim)

    fp = pl.pallas_call(
        kern,
        out_shape=jax.ShapeDtypeStruct((g_pad, f_pad), jnp.float32),
        grid_spec=pltpu.PrefetchScalarGridSpec(
            num_scalar_prefetch=0,
            grid=(num_layers, n_tiles),
            in_specs=[
                pl.BlockSpec(memory_space=pl.ANY),                           # x (HBM)
                pl.BlockSpec((n_pad, n_deg), lambda l, t: (0, 0)),           # degree mask
                a_spec,                                                      # adjacency
                pl.BlockSpec((g_pad, tile_n), lambda l, t: (0, t)),          # pooling cols
                pl.BlockSpec((1, d_max, hidden), lambda l, t: (l, 0, 0)),    # W_self
                pl.BlockSpec((1, 1, hidden), lambda l, t: (l, 0, 0)),        # bias
                pl.BlockSpec((1, n_deg * d_max, hidden),
                             lambda l, t: (l, 0, 0)),                        # W_neigh stacked
                pl.BlockSpec((1, hidden, f_pad), lambda l, t: (l, 0, 0)),    # W_fp
            ],
            # fp accumulator is resident across BOTH grid axes (constant index
            # map) — do not mark either axis "parallel".
            out_specs=pl.BlockSpec((g_pad, f_pad), lambda l, t: (0, 0)),
            scratch_shapes=scratch,
        ),
        compiler_params=pltpu.CompilerParams(
            dimension_semantics=("arbitrary", "arbitrary"),
            vmem_limit_bytes=vmem_limit_bytes),
    )(xp, dm, adj, pmat, ws_all, b_all, wn_all, wfp_all)

    # TODO(synk): v7x dual-TensorCore split of the node-tile axis (per-core
    # partial fingerprints summed in the wrapper) is not implemented.
    # TODO(synk): very large sparse graphs should use an edge-list / block-sparse
    # aggregation instead of the dense Np^2 adjacency.
    return fp[:num_graphs, :f_dim]


if __name__ == "__main__":
    # Small deterministic example consistent with the module's expected inputs:
    #   data.x: [N, in_channels], data.edge_index: [2, E], data.batch: [N]
    in_channels = 8
    hidden_dim = 32
    fingerprint_dim = 16
    num_layers = 3
    weight_scale = 5.0
    max_degree = 5

    n_nodes = 300
    n_edges = 900
    num_graphs = 3

    key = jax.random.PRNGKey(0)
    kx, ke1, ke2, kp = jax.random.split(key, 4)

    x = jax.random.normal(kx, (n_nodes, in_channels), jnp.float32)
    row = jax.random.randint(ke1, (n_edges,), 0, n_nodes, dtype=jnp.int32)
    col = jax.random.randint(ke2, (n_edges,), 0, n_nodes, dtype=jnp.int32)
    edge_index = jnp.stack([row, col], axis=0)
    batch = jnp.repeat(jnp.arange(num_graphs, dtype=jnp.int32),
                       n_nodes // num_graphs)

    params = make_params(kp, in_channels, hidden_dim, fingerprint_dim,
                         num_layers, max_degree, weight_scale)

    fp = neural_graph_fingerprint(x, edge_index, batch, num_graphs, params,
                                  max_degree)
    fp = jax.block_until_ready(fp)
    assert fp.shape == (num_graphs, fingerprint_dim)
    assert bool(jnp.all(jnp.isfinite(fp)))
    # TODO(synk): only the default smooth_fn='tanh' / sparsify_fn='softmax' paths
    # are implemented; 'gumbel'/'sparsemax' variants and sum_fn='bond_weighted'
    # (unused by forward()) are not ported.
    print("KERNEL_OK")
</pallas_src>

<mosaic_0001>
module attributes {stable_mosaic.version = 11 : i64} {
  func.func @kern(%arg0: i32, %arg1: i32, %arg2: memref<512x32xf32, #tpu.memory_space<any>>, %arg3: memref<512x6xbf16, #tpu.memory_space<vmem>>, %arg4: memref<512x512xbf16, #tpu.memory_space<any>>, %arg5: memref<8x256xf32, #tpu.memory_space<vmem>>, %arg6: memref<1x32x32xf32, #tpu.memory_space<vmem>>, %arg7: memref<1x1x32xf32, #tpu.memory_space<vmem>>, %arg8: memref<1x192x32xf32, #tpu.memory_space<vmem>>, %arg9: memref<1x32x128xf32, #tpu.memory_space<vmem>>, %arg10: memref<8x128xf32, #tpu.memory_space<vmem>>, %arg11: memref<2x!tpu.dma_semaphore, #tpu.memory_space<semaphore_mem>>, %arg12: memref<512x32xf32, #tpu.memory_space<vmem>>, %arg13: memref<512x32xf32, #tpu.memory_space<vmem>>, %arg14: memref<512x32xbf16, #tpu.memory_space<vmem>>, %arg15: memref<512x512xbf16, #tpu.memory_space<vmem>>) attributes {dimension_semantics = [#tpu.dimension_semantics<arbitrary>, #tpu.dimension_semantics<arbitrary>], iteration_bounds = array<i64: 3, 2>, scalar_prefetch = 0 : i64, scratch_operands = 5 : i64, tpu.core_type = #tpu.core_type<tc>, window_params = [{}, {pipeline_mode = #tpu.pipeline_mode<synchronous>, transform_indices = @transform_1, window_bounds = array<i64: 512, 6>}, {}, {transform_indices = @transform_3, window_bounds = array<i64: 8, 256>}, {transform_indices = @transform_4, window_bounds = array<i64: 1, 32, 32>}, {transform_indices = @transform_5, window_bounds = array<i64: 1, 1, 32>}, {transform_indices = @transform_6, window_bounds = array<i64: 1, 192, 32>}, {transform_indices = @transform_7, window_bounds = array<i64: 1, 32, 128>}, {pipeline_mode = #tpu.pipeline_mode<synchronous>, transform_indices = @transform_8, window_bounds = array<i64: 8, 128>}]} {
    %c0_i32 = arith.constant 0 : i32
    %0 = arith.cmpi eq, %arg0, %c0_i32 : i32
    %c0_i32_0 = arith.constant 0 : i32
    %1 = arith.cmpi eq, %arg1, %c0_i32_0 : i32
    %2 = arith.andi %0, %1 : i1
    %3 = arith.extui %2 : i1 to i32
    %c0_i32_1 = arith.constant 0 : i32
    %4 = arith.cmpi ne, %3, %c0_i32_1 : i32
    scf.if %4 {
      %c0_i32_22 = arith.constant 0 : i32
      %43 = tpu.memref_slice %arg11[%c0_i32_22] : memref<2x!tpu.dma_semaphore, #tpu.memory_space<semaphore_mem>> -> memref<1x!tpu.dma_semaphore, #tpu.memory_space<semaphore_mem>>
      %44 = tpu.memref_squeeze %43 : memref<1x!tpu.dma_semaphore, #tpu.memory_space<semaphore_mem>> -> memref<!tpu.dma_semaphore, #tpu.memory_space<semaphore_mem>>
      tpu.enqueue_dma source(%arg2 : memref<512x32xf32, #tpu.memory_space<any>>) target(%arg12 : memref<512x32xf32, #tpu.memory_space<vmem>>) target_semaphore(%44 : memref<!tpu.dma_semaphore, #tpu.memory_space<semaphore_mem>>)
      %c1_i32 = arith.constant 1 : i32
      %45 = tpu.memref_slice %arg11[%c1_i32] : memref<2x!tpu.dma_semaphore, #tpu.memory_space<semaphore_mem>> -> memref<1x!tpu.dma_semaphore, #tpu.memory_space<semaphore_mem>>
      %46 = tpu.memref_squeeze %45 : memref<1x!tpu.dma_semaphore, #tpu.memory_space<semaphore_mem>> -> memref<!tpu.dma_semaphore, #tpu.memory_space<semaphore_mem>>
      tpu.enqueue_dma source(%arg4 : memref<512x512xbf16, #tpu.memory_space<any>>) target(%arg15 : memref<512x512xbf16, #tpu.memory_space<vmem>>) target_semaphore(%46 : memref<!tpu.dma_semaphore, #tpu.memory_space<semaphore_mem>>)
      %c1_i32_23 = arith.constant 1 : i32
      %47 = tpu.memref_slice %arg11[%c1_i32_23] : memref<2x!tpu.dma_semaphore, #tpu.memory_space<semaphore_mem>> -> memref<1x!tpu.dma_semaphore, #tpu.memory_space<semaphore_mem>>
      %48 = tpu.memref_squeeze %47 : memref<1x!tpu.dma_semaphore, #tpu.memory_space<semaphore_mem>> -> memref<!tpu.dma_semaphore, #tpu.memory_space<semaphore_mem>>
      tpu.wait_dma2 semaphore(%48 : memref<!tpu.dma_semaphore, #tpu.memory_space<semaphore_mem>>) src(%arg4 : memref<512x512xbf16, #tpu.memory_space<any>>) dst(%arg15 : memref<512x512xbf16, #tpu.memory_space<vmem>>)
      %c0_i32_24 = arith.constant 0 : i32
      %49 = tpu.memref_slice %arg11[%c0_i32_24] : memref<2x!tpu.dma_semaphore, #tpu.memory_space<semaphore_mem>> -> memref<1x!tpu.dma_semaphore, #tpu.memory_space<semaphore_mem>>
      %50 = tpu.memref_squeeze %49 : memref<1x!tpu.dma_semaphore, #tpu.memory_space<semaphore_mem>> -> memref<!tpu.dma_semaphore, #tpu.memory_space<semaphore_mem>>
      tpu.wait_dma2 semaphore(%50 : memref<!tpu.dma_semaphore, #tpu.memory_space<semaphore_mem>>) src(%arg2 : memref<512x32xf32, #tpu.memory_space<any>>) dst(%arg12 : memref<512x32xf32, #tpu.memory_space<vmem>>)
      %cst_25 = arith.constant 0.000000e+00 : f32
      %51 = vector.broadcast %cst_25 : f32 to vector<8x128xf32>
      %c0_26 = arith.constant 0 : index
      %c0_27 = arith.constant 0 : index
      %52 = vector.load %arg10[%c0_26, %c0_27] : memref<8x128xf32, #tpu.memory_space<vmem>>, vector<8x128xf32>
      tpu.vector_store %arg10[%c0_26, %c0_27], %51 {strides = array<i32>} : memref<8x128xf32, #tpu.memory_space<vmem>>, vector<8x128xf32>,
    } else {
    }
    %c0_i32_2 = arith.constant 0 : i32
    %5 = arith.cmpi eq, %arg1, %c0_i32_2 : i32
    %6 = arith.extui %5 : i1 to i32
    %c0_i32_3 = arith.constant 0 : i32
    %7 = arith.cmpi ne, %6, %c0_i32_3 : i32
    scf.if %7 {
      %c0_22 = arith.constant 0 : index
      %c0_23 = arith.constant 0 : index
      %43 = vector.load %arg12[%c0_22, %c0_23] : memref<512x32xf32, #tpu.memory_space<vmem>>, vector<512x32xf32>
      %c0_24 = arith.constant 0 : index
      %c0_25 = arith.constant 0 : index
      %44 = vector.load %arg3[%c0_24, %c0_25] : memref<512x6xbf16, #tpu.memory_space<vmem>>, vector<512x6xbf16>
      %45 = arith.extf %44 : vector<512x6xbf16> to vector<512x6xf32>
      %46 = vector.extract_strided_slice %45 {offsets = [0, 0], sizes = [512, 1], strides = [1, 1]} : vector<512x6xf32> to vector<512x1xf32>
      %47 = vector.broadcast %46 : vector<512x1xf32> to vector<512x32xf32>
      %48 = arith.mulf %47, %43 : vector<512x32xf32>
      %49 = vector.extract_strided_slice %45 {offsets = [0, 1], sizes = [512, 1], strides = [1, 1]} : vector<512x6xf32> to vector<512x1xf32>
      %50 = vector.broadcast %49 : vector<512x1xf32> to vector<512x32xf32>
      %51 = arith.mulf %50, %43 : vector<512x32xf32>
      %52 = vector.extract_strided_slice %45 {offsets = [0, 2], sizes = [512, 1], strides = [1, 1]} : vector<512x6xf32> to vector<512x1xf32>
      %53 = vector.broadcast %52 : vector<512x1xf32> to vector<512x32xf32>
      %54 = arith.mulf %53, %43 : vector<512x32xf32>
      %55 = vector.extract_strided_slice %45 {offsets = [0, 3], sizes = [512, 1], strides = [1, 1]} : vector<512x6xf32> to vector<512x1xf32>
      %56 = vector.broadcast %55 : vector<512x1xf32> to vector<512x32xf32>
      %57 = arith.mulf %56, %43 : vector<512x32xf32>
      %58 = vector.extract_strided_slice %45 {offsets = [0, 4], sizes = [512, 1], strides = [1, 1]} : vector<512x6xf32> to vector<512x1xf32>
      %59 = vector.broadcast %58 : vector<512x1xf32> to vector<512x32xf32>
      %60 = arith.mulf %59, %43 : vector<512x32xf32>
      %61 = vector.extract_strided_slice %45 {offsets = [0, 5], sizes = [512, 1], strides = [1, 1]} : vector<512x6xf32> to vector<512x1xf32>
      %62 = vector.broadcast %61 : vector<512x1xf32> to vector<512x32xf32>
      %63 = arith.mulf %62, %43 : vector<512x32xf32>
      %64 = tpu.concatenate %48, %51, %54, %57, %60, %63 in 1 : vector<512x32xf32>, vector<512x32xf32>, vector<512x32xf32>, vector<512x32xf32>, vector<512x32xf32>, vector<512x32xf32> -> vector<512x192xf32>
      %c0_26 = arith.constant 0 : index
      %c0_27 = arith.constant 0 : index
      %c0_28 = arith.constant 0 : index
      %65 = vector.load %arg8[%c0_26, %c0_27, %c0_28] : memref<1x192x32xf32, #tpu.memory_space<vmem>>, vector<1x192x32xf32>
      %66 = vector.shape_cast %65 : vector<1x192x32xf32> to vector<192x32xf32>
      %cst_29 = arith.constant dense<0.000000e+00> : vector<512x32xf32>
      %67 = tpu.matmul %64, %66, %cst_29 {dimension_numbers = #tpu.dot_dimension_numbers<[1], [0], [0], [1], [0, 0, 1, 1], [], []>} : vector<512x192xf32>, vector<192x32xf32>, vector<512x32xf32> -> vector<512x32xf32>
      %68 = arith.truncf %67 : vector<512x32xf32> to vector<512x32xbf16>
      %c0_30 = arith.constant 0 : index
      %c0_31 = arith.constant 0 : index
      %69 = vector.load %arg14[%c0_30, %c0_31] : memref<512x32xbf16, #tpu.memory_space<vmem>>, vector<512x32xbf16>
      tpu.vector_store %arg14[%c0_30, %c0_31], %68 {strides = array<i32>} : memref<512x32xbf16, #tpu.memory_space<vmem>>, vector<512x32xbf16>,
      %c0_32 = arith.constant 0 : index
      %c0_33 = arith.constant 0 : index
      %c0_34 = arith.constant 0 : index
      %70 = vector.load %arg6[%c0_32, %c0_33, %c0_34] : memref<1x32x32xf32, #tpu.memory_space<vmem>>, vector<1x32x32xf32>
      %71 = vector.shape_cast %70 : vector<1x32x32xf32> to vector<32x32xf32>
      %cst_35 = arith.constant dense<0.000000e+00> : vector<512x32xf32>
      %72 = tpu.matmul %43, %71, %cst_35 {dimension_numbers = #tpu.dot_dimension_numbers<[1], [0], [0], [1], [0, 0, 1, 1], [], []>} : vector<512x32xf32>, vector<32x32xf32>, vector<512x32xf32> -> vector<512x32xf32>
      %c0_36 = arith.constant 0 : index
      %c0_37 = arith.constant 0 : index
      %c0_38 = arith.constant 0 : index
      %73 = vector.load %arg7[%c0_36, %c0_37, %c0_38] : memref<1x1x32xf32, #tpu.memory_space<vmem>>, vector<1x1x32xf32>
      %74 = vector.shape_cast %73 : vector<1x1x32xf32> to vector<1x32xf32>
      %75 = vector.broadcast %74 : vector<1x32xf32> to vector<512x32xf32>
      %76 = arith.addf %72, %75 : vector<512x32xf32>
      %c0_39 = arith.constant 0 : index
      %c0_40 = arith.constant 0 : index
      %77 = vector.load %arg13[%c0_39, %c0_40] : memref<512x32xf32, #tpu.memory_space<vmem>>, vector<512x32xf32>
      tpu.vector_store %arg13[%c0_39, %c0_40], %76 {strides = array<i32>} : memref<512x32xf32, #tpu.memory_space<vmem>>, vector<512x32xf32>,
    } else {
    }
    %c256_i32 = arith.constant 256 : i32
    %8 = arith.muli %arg1, %c256_i32 : i32
    %9 = tpu.assume_multiple %8, 256 : i32
    %10 = arith.index_cast %9 : i32 to index
    %c0 = arith.constant 0 : index
    %11 = vector.load %arg15[%10, %c0] : memref<512x512xbf16, #tpu.memory_space<vmem>>, vector<256x512xbf16>
    %c0_4 = arith.constant 0 : index
    %c0_5 = arith.constant 0 : index
    %12 = vector.load %arg14[%c0_4, %c0_5] : memref<512x32xbf16, #tpu.memory_space<vmem>>, vector<512x32xbf16>
    %cst = arith.constant dense<0.000000e+00> : vector<256x32xf32>
    %13 = tpu.matmul %11, %12, %cst {dimension_numbers = #tpu.dot_dimension_numbers<[1], [0], [0], [1], [0, 0, 1, 1], [], []>} : vector<256x512xbf16>, vector<512x32xbf16>, vector<256x32xf32> -> vector<256x32xf32>
    %14 = arith.index_cast %9 : i32 to index
    %c0_6 = arith.constant 0 : index
    %15 = vector.load %arg13[%14, %c0_6] : memref<512x32xf32, #tpu.memory_space<vmem>>, vector<256x32xf32>
    %16 = arith.addf %15, %13 : vector<256x32xf32>
    %17 = math.tanh %16 : vector<256x32xf32>
    %c0_7 = arith.constant 0 : index
    %c0_8 = arith.constant 0 : index
    %c0_9 = arith.constant 0 : index
    %18 = vector.load %arg9[%c0_7, %c0_8, %c0_9] : memref<1x32x128xf32, #tpu.memory_space<vmem>>, vector<1x32x128xf32>
    %19 = vector.shape_cast %18 : vector<1x32x128xf32> to vector<32x128xf32>
    %cst_10 = arith.constant dense<0.000000e+00> : vector<256x128xf32>
    %20 = tpu.matmul %17, %19, %cst_10 {dimension_numbers = #tpu.dot_dimension_numbers<[1], [0], [0], [1], [0, 0, 1, 1], [], []>} : vector<256x32xf32>, vector<32x128xf32>, vector<256x128xf32> -> vector<256x128xf32>
    %21 = tpu.iota {dimensions = array<i32: 1>} : vector<256x128xi32>
    %c16_i32 = arith.constant 16 : i32
    %22 = vector.broadcast %c16_i32 : i32 to vector<256x128xi32>
    %23 = arith.cmpi slt, %21, %22 : vector<256x128xi32>
    %cst_11 = arith.constant -1.000000e+30 : f32
    %24 = vector.broadcast %cst_11 : f32 to vector<256x128xf32>
    %25 = arith.select %23, %20, %24 : vector<256x128xi1>, vector<256x128xf32>
    %cst_12 = arith.constant dense<0xFF800000> : vector<256xf32>
    %26 = vector.multi_reduction <maximumf>, %25, %cst_12 [1] : vector<256x128xf32> to vector<256xf32>
    %27 = vector.shape_cast %26 : vector<256xf32> to vector<256x1xf32>
    %28 = vector.broadcast %27 : vector<256x1xf32> to vector<256x128xf32>
    %29 = arith.subf %25, %28 : vector<256x128xf32>
    %30 = math.exp %29 : vector<256x128xf32>
    %cst_13 = arith.constant dense<0.000000e+00> : vector<256xf32>
    %31 = vector.multi_reduction <add>, %30, %cst_13 [1] : vector<256x128xf32> to vector<256xf32>
    %32 = vector.shape_cast %31 : vector<256xf32> to vector<256x1xf32>
    %33 = tpu.reciprocal %32 {approx = true} : vector<256x1xf32> -> vector<256x1xf32>
    %34 = vector.broadcast %33 : vector<256x1xf32> to vector<256x128xf32>
    %35 = arith.mulf %30, %34 : vector<256x128xf32>
    %c0_14 = arith.constant 0 : index
    %c0_15 = arith.constant 0 : index
    %36 = vector.load %arg10[%c0_14, %c0_15] : memref<8x128xf32, #tpu.memory_space<vmem>>, vector<8x128xf32>
    %c0_16 = arith.constant 0 : index
    %c0_17 = arith.constant 0 : index
    %37 = vector.load %arg5[%c0_16, %c0_17] : memref<8x256xf32, #tpu.memory_space<vmem>>, vector<8x256xf32>
    %cst_18 = arith.constant dense<0.000000e+00> : vector<8x128xf32>
    %38 = tpu.matmul %37, %35, %cst_18 {dimension_numbers = #tpu.dot_dimension_numbers<[1], [0], [0], [1], [0, 0, 1, 1], [], []>} : vector<8x256xf32>, vector<256x128xf32>, vector<8x128xf32> -> vector<8x128xf32>
    %39 = arith.addf %36, %38 : vector<8x128xf32>
    %c0_19 = arith.constant 0 : index
    %c0_20 = arith.constant 0 : index
    %40 = vector.load %arg10[%c0_19, %c0_20] : memref<8x128xf32, #tpu.memory_space<vmem>>, vector<8x128xf32>
    tpu.vector_store %arg10[%c0_19, %c0_20], %39 {strides = array<i32>} : memref<8x128xf32, #tpu.memory_space<vmem>>, vector<8x128xf32>,
    %41 = arith.index_cast %9 : i32 to index
    %c0_21 = arith.constant 0 : index
    %42 = vector.load %arg12[%41, %c0_21] : memref<512x32xf32, #tpu.memory_space<vmem>>, vector<256x32xf32>
    tpu.vector_store %arg12[%41, %c0_21], %17 {strides = array<i32>} : memref<512x32xf32, #tpu.memory_space<vmem>>, vector<256x32xf32>,
    return
  }
  func.func @transform_1(%arg0: i32, %arg1: i32) -> (i32, i32) {
    %c0_i32 = arith.constant 0 : i32
    %c0_i32_0 = arith.constant 0 : i32
    %c0_i32_1 = arith.constant 0 : i32
    return %c0_i32, %c0_i32_0 : i32, i32
  }
  func.func @transform_3(%arg0: i32, %arg1: i32) -> (i32, i32) {
    %c0_i32 = arith.constant 0 : i32
    %c0_i32_0 = arith.constant 0 : i32
    return %c0_i32, %arg1 : i32, i32
  }
  func.func @transform_4(%arg0: i32, %arg1: i32) -> (i32, i32, i32) {
    %c0_i32 = arith.constant 0 : i32
    %c0_i32_0 = arith.constant 0 : i32
    %c0_i32_1 = arith.constant 0 : i32
    return %arg0, %c0_i32, %c0_i32_0 : i32, i32, i32
  }
  func.func @transform_5(%arg0: i32, %arg1: i32) -> (i32, i32, i32) {
    %c0_i32 = arith.constant 0 : i32
    %c0_i32_0 = arith.constant 0 : i32
    %c0_i32_1 = arith.constant 0 : i32
    return %arg0, %c0_i32, %c0_i32_0 : i32, i32, i32
  }
  func.func @transform_6(%arg0: i32, %arg1: i32) -> (i32, i32, i32) {
    %c0_i32 = arith.constant 0 : i32
    %c0_i32_0 = arith.constant 0 : i32
    %c0_i32_1 = arith.constant 0 : i32
    return %arg0, %c0_i32, %c0_i32_0 : i32, i32, i32
  }
  func.func @transform_7(%arg0: i32, %arg1: i32) -> (i32, i32, i32) {
    %c0_i32 = arith.constant 0 : i32
    %c0_i32_0 = arith.constant 0 : i32
    %c0_i32_1 = arith.constant 0 : i32
    return %arg0, %c0_i32, %c0_i32_0 : i32, i32, i32
  }
  func.func @transform_8(%arg0: i32, %arg1: i32) -> (i32, i32) {
    %c0_i32 = arith.constant 0 : i32
    %c0_i32_0 = arith.constant 0 : i32
    %c0_i32_1 = arith.constant 0 : i32
    return %c0_i32, %c0_i32_0 : i32, i32
  }
}

</mosaic_0001>

<llo_original>
// kernel: tpu_custom_call.1
$region0: #{tpu_custom_call.1}
  #allocation0 [shape = 'u32[]', space=smem, size = 0x4, offset = 0x4, fixed_abs, tag = 'smem constant byte address 0x4 - core index']
  #allocation1 [shape = 'u32[144,128]{1,0:T(1,128)}', space=vmem, size = 0x12000, scoped, tag = 'internal scratch']
  #allocation2 [shape = 's32[2]{0}', space=sflag, size = 0x8, scoped, tag = 'scratch operand']
  #allocation3 [shape = 'f32[512,32]{1,0:T(8,128)}', space=vmem, size = 0x40000, scoped, tag = 'scratch operand']
  #allocation4 [shape = 'f32[512,32]{1,0:T(8,128)}', space=vmem, size = 0x40000, scoped, tag = 'scratch operand']
  #allocation5 [shape = 'bf16[512,32]{1,0:T(16,128)(2,1)}', space=vmem, size = 0x20000, scoped, tag = 'scratch operand']
  #allocation6 [shape = 'bf16[512,512]{1,0:T(16,128)(2,1)}', space=vmem, size = 0x80000, scoped, tag = 'scratch operand']
  #allocation9 [shape = 's32[]', space=sflag, size = 0x4, offset = 0, fixed_abs, tag = 'sflag constant byte address 0x0 - dummy sync flag']
  #allocation10 [shape = 's32[]', space=sflag, size = 0x4, offset = 0, fixed_abs, tag = 'sflag constant byte address 0x0 - dummy sync flag']
  %s0 = inlined_call_operand.vmem [shape: f32[512,32], index: 0, kind: input, shape index: {}]
  %s1 = inlined_call_operand.vmem [shape: bf16[512,6], index: 1, kind: input, shape index: {}]
  %s2 = inlined_call_operand.vmem [shape: bf16[512,512], index: 2, kind: input, shape index: {}]
  %s3 = inlined_call_operand.vmem [shape: f32[8,512], index: 3, kind: input, shape index: {}]
  %s4 = inlined_call_operand.vmem [shape: f32[3,32,32], index: 4, kind: input, shape index: {}]
  %s5 = inlined_call_operand.vmem [shape: f32[3,1,32], index: 5, kind: input, shape index: {}]
  %s6 = inlined_call_operand.vmem [shape: f32[3,192,32], index: 6, kind: input, shape index: {}]
  %s7 = inlined_call_operand.vmem [shape: f32[3,32,128], index: 7, kind: input, shape index: {}]
  %s8 = inlined_call_operand.hbm [shape: f32[8,128], index: 8, kind: output, shape index: {}]
  %s9 = sld [smem:[#allocation0]]
  $region136: #{tpu_custom_call.1} parent=0
    _
  %s11 = ssub.s32 1, %s9
  %s12 = scalar_select 0, %s11, %s9
  $region1: #{tpu_custom_call.1} parent=0
    #allocation7 [shape = 'u8[4096]{0}', space=vmem, size = 0x1000, scoped, tag = 'output window, operand 0, single buffered']
    #allocation8 [shape = 's32[2]{0}', space=sflag, size = 0x8, scoped, tag = 'scoped memory for tpu_custom_call.1']
    %13 = vsyncpa [#allocation8], 0
    loop: start=0, step=1, limit=8
    $region2: #{tpu_custom_call.1} parent=1 // loop_pre_header
      _
    $region3: #{tpu_custom_call.1} parent=1 // loop_header
      %s15 = sphi 0, %s19
      %p16 = scmp.ge.s32.totalorder %s15, 8
      %s22 = sphi 0, %s34
      %s23 = sphi 0, %s30
      %s24 = sphi 0, %s22
      %s25 = sphi 0, %s23
      %s26 = sphi 0, %s24
      %s27 = sphi 0, %s25
      %s35 = sphi 0, %s35
      %s37 = sphi 0, %s35
      %s38 = sphi 0, %s37
      %s52 = sphi 0, %s38
      %s58 = sphi 0, %s60
      %s61 = sphi 0, %s58
      %s62 = sphi 0, %s61
      %s78 = sphi 0, %s62
      %s84 = sphi 0, %s86
      %s87 = sphi 0, %s84
      %s88 = sphi 0, %s87
      %s104 = sphi 0, %s88
      %s110 = sphi 0, %s112
      %s113 = sphi 0, %s110
      %s114 = sphi 0, %s113
      %s130 = sphi 0, %s114
      %s136 = sphi 0, %s138
      %s139 = sphi 0, %s136
      %s140 = sphi 0, %s139
      %s156 = sphi 0, %s140
      %s162 = sphi 0, %s164
      %s165 = sphi 0, %s162
      %s166 = sphi 0, %s165
      %s182 = sphi 0, %s166
      %s186 = sphi 0, %s186
      %s188 = sphi 0, %s186
      %s189 = sphi 0, %s188
      %s203 = sphi 0, %s189
    $region4: #{tpu_custom_call.1} parent=1 // loop_header_branch
      %18 = sbr.rel (%p16) target = $region8
    $region5: #{tpu_custom_call.1} parent=1 // loop_body
      %s20 = ssub.s32 %s15, 1
      %s21 = ssub.s32 %s15, 2
      %s28 = sadd.s32 1, %s23
      %p29 = scmp.ge.s32.totalorder %s28, 2
      %s30 = scalar_select %p29, 0, %s28
      %s31 = sadd.s32 1, %s22
      %s32 = scalar_select %p29, %s31, %s22
      %p33 = scmp.ge.s32.totalorder %s32, 3
      %s34 = scalar_select %p33, 0, %s32
      %s36 = sadd.s32 %s35, 1
      %p39 = scmp.eq.s32.totalorder %s15, 5
      %p40 = scmp.ne.s32.totalorder %s35, %s37
      %p41 = scmp.eq.s32.totalorder %s15, 0
      %p42 = por %p40, %p41
      %p43 = scmp.ne.s32.totalorder %s35, %s37
      %p44 = scmp.eq.s32.totalorder %s20, 5
      %p45 = por %p43, %p44
      %p46 = scmp.ne.s32.totalorder %s37, %s38
      %p47 = scmp.eq.s32.totalorder %s20, 0
      %p48 = por %p46, %p47
      %p49 = scmp.ne.s32.totalorder %s37, %s38
      %p50 = scmp.eq.s32.totalorder %s21, 5
      %p51 = por %p49, %p50
      %p53 = scmp.ne.s32.totalorder %s38, %s52
      %p54 = scmp.eq.s32.totalorder %s21, 0
      %p55 = por %p53, %p54
      %s56 = ssub.s32 %s23, %s30
      %p57 = scmp.eq.s32.totalorder %s56, 0
      %s59 = sadd.s32 %s58, 1
      %s60 = scalar_select %p57, %s58, %s59
      %p63 = pneg %p57
      %p64 = scmp.eq.s32.totalorder %s15, 5
      %p65 = por %p63, %p64
      %p66 = scmp.ne.s32.totalorder %s58, %s61
      %p67 = scmp.eq.s32.totalorder %s15, 0
      %p68 = por %p66, %p67
      %p69 = scmp.ne.s32.totalorder %s58, %s61
      %p70 = scmp.eq.s32.totalorder %s20, 5
      %p71 = por %p69, %p70
      %p72 = scmp.ne.s32.totalorder %s61, %s62
      %p73 = scmp.eq.s32.totalorder %s20, 0
      %p74 = por %p72, %p73
      %p75 = scmp.ne.s32.totalorder %s61, %s62
      %p76 = scmp.eq.s32.totalorder %s21, 5
      %p77 = por %p75, %p76
      %p79 = scmp.ne.s32.totalorder %s62, %s78
      %p80 = scmp.eq.s32.totalorder %s21, 0
      %p81 = por %p79, %p80
      %s82 = ssub.s32 %s22, %s34
      %p83 = scmp.eq.s32.totalorder %s82, 0
      %s85 = sadd.s32 %s84, 1
      %s86 = scalar_select %p83, %s84, %s85
      %p89 = pneg %p83
      %p90 = scmp.eq.s32.totalorder %s15, 5
      %p91 = por %p89, %p90
      %p92 = scmp.ne.s32.totalorder %s84, %s87
      %p93 = scmp.eq.s32.totalorder %s15, 0
      %p94 = por %p92, %p93
      %p95 = scmp.ne.s32.totalorder %s84, %s87
      %p96 = scmp.eq.s32.totalorder %s20, 5
      %p97 = por %p95, %p96
      %p98 = scmp.ne.s32.totalorder %s87, %s88
      %p99 = scmp.eq.s32.totalorder %s20, 0
      %p100 = por %p98, %p99
      %p101 = scmp.ne.s32.totalorder %s87, %s88
      %p102 = scmp.eq.s32.totalorder %s21, 5
      %p103 = por %p101, %p102
      %p105 = scmp.ne.s32.totalorder %s88, %s104
      %p106 = scmp.eq.s32.totalorder %s21, 0
      %p107 = por %p105, %p106
      %s108 = ssub.s32 %s22, %s34
      %p109 = scmp.eq.s32.totalorder %s108, 0
      %s111 = sadd.s32 %s110, 1
      %s112 = scalar_select %p109, %s110, %s111
      %p115 = pneg %p109
      %p116 = scmp.eq.s32.totalorder %s15, 5
      %p117 = por %p115, %p116
      %p118 = scmp.ne.s32.totalorder %s110, %s113
      %p119 = scmp.eq.s32.totalorder %s15, 0
      %p120 = por %p118, %p119
      %p121 = scmp.ne.s32.totalorder %s110, %s113
      %p122 = scmp.eq.s32.totalorder %s20, 5
      %p123 = por %p121, %p122
      %p124 = scmp.ne.s32.totalorder %s113, %s114
      %p125 = scmp.eq.s32.totalorder %s20, 0
      %p126 = por %p124, %p125
      %p127 = scmp.ne.s32.totalorder %s113, %s114
      %p128 = scmp.eq.s32.totalorder %s21, 5
      %p129 = por %p127, %p128
      %p131 = scmp.ne.s32.totalorder %s114, %s130
      %p132 = scmp.eq.s32.totalorder %s21, 0
      %p133 = por %p131, %p132
      %s134 = ssub.s32 %s22, %s34
      %p135 = scmp.eq.s32.totalorder %s134, 0
      %s137 = sadd.s32 %s136, 1
      %s138 = scalar_select %p135, %s136, %s137
      %p141 = pneg %p135
      %p142 = scmp.eq.s32.totalorder %s15, 5
      %p143 = por %p141, %p142
      %p144 = scmp.ne.s32.totalorder %s136, %s139
      %p145 = scmp.eq.s32.totalorder %s15, 0
      %p146 = por %p144, %p145
      %p147 = scmp.ne.s32.totalorder %s136, %s139
      %p148 = scmp.eq.s32.totalorder %s20, 5
      %p149 = por %p147, %p148
      %p150 = scmp.ne.s32.totalorder %s139, %s140
      %p151 = scmp.eq.s32.totalorder %s20, 0
      %p152 = por %p150, %p151
      %p153 = scmp.ne.s32.totalorder %s139, %s140
      %p154 = scmp.eq.s32.totalorder %s21, 5
      %p155 = por %p153, %p154
      %p157 = scmp.ne.s32.totalorder %s140, %s156
      %p158 = scmp.eq.s32.totalorder %s21, 0
      %p159 = por %p157, %p158
      %s160 = ssub.s32 %s22, %s34
      %p161 = scmp.eq.s32.totalorder %s160, 0
      %s163 = sadd.s32 %s162, 1
      %s164 = scalar_select %p161, %s162, %s163
      %p167 = pneg %p161
      %p168 = scmp.eq.s32.totalorder %s15, 5
      %p169 = por %p167, %p168
      %p170 = scmp.ne.s32.totalorder %s162, %s165
      %p171 = scmp.eq.s32.totalorder %s15, 0
      %p172 = por %p170, %p171
      %p173 = scmp.ne.s32.totalorder %s162, %s165
      %p174 = scmp.eq.s32.totalorder %s20, 5
      %p175 = por %p173, %p174
      %p176 = scmp.ne.s32.totalorder %s165, %s166
      %p177 = scmp.eq.s32.totalorder %s20, 0
      %p178 = por %p176, %p177
      %p179 = scmp.ne.s32.totalorder %s165, %s166
      %p180 = scmp.eq.s32.totalorder %s21, 5
      %p181 = por %p179, %p180
      %p183 = scmp.ne.s32.totalorder %s166, %s182
      %p184 = scmp.eq.s32.totalorder %s21, 0
      %p185 = por %p183, %p184
      %s187 = sadd.s32 %s186, 1
      %p190 = scmp.eq.s32.totalorder %s15, 5
      %p191 = scmp.ne.s32.totalorder %s186, %s188
      %p192 = scmp.eq.s32.totalorder %s15, 0
      %p193 = por %p191, %p192
      %p194 = scmp.ne.s32.totalorder %s186, %s188
      %p195 = scmp.eq.s32.totalorder %s20, 5
      %p196 = por %p194, %p195
      %p197 = scmp.ne.s32.totalorder %s188, %s189
      %p198 = scmp.eq.s32.totalorder %s20, 0
      %p199 = por %p197, %p198
      %p200 = scmp.ne.s32.totalorder %s188, %s189
      %p201 = scmp.eq.s32.totalorder %s21, 5
      %p202 = por %p200, %p201
      %p204 = scmp.ne.s32.totalorder %s189, %s203
      %p205 = scmp.eq.s32.totalorder %s21, 0
      %p206 = por %p204, %p205
      %p207 = scmp.le.s32.totalorder 1, %s15
      %p208 = scmp.lt.s32.totalorder %s15, 7
      %p209 = pnand %p207, %p208
      %p210 = pneg %p209
      // Predicated region
      $region9: #{tpu_custom_call.1} parent=5 // pred_check
        _
      $region10: #{tpu_custom_call.1} parent=5 // pred_check_branch
        %212 = sbr.rel (%p209) target = $region12
      $region11: #{tpu_custom_call.1} parent=5 // pred_region
        %s213 = ssub.s32 %s15, 1
        // Predicated region
        $region13: #{tpu_custom_call.1} parent=11 // pred_check
          %p214 = pneg %p48
        $region14: #{tpu_custom_call.1} parent=11 // pred_check_branch
          %216 = sbr.rel (%p214) target = $region16
        $region15: #{tpu_custom_call.1} parent=11 // pred_region
          _
        $region16: #{tpu_custom_call.1} parent=11 // pred_fallthru
          _
      $region12: #{tpu_custom_call.1} parent=5 // pred_fallthru
        _
      %p217 = scmp.lt.s32.totalorder %s15, 6
      // Predicated region
      $region17: #{tpu_custom_call.1} parent=5 // pred_check
        %p218 = pneg %p217
      $region18: #{tpu_custom_call.1} parent=5 // pred_check_branch
        %220 = sbr.rel (%p218) target = $region20
      $region19: #{tpu_custom_call.1} parent=5 // pred_region
        // Predicated region
        $region21: #{tpu_custom_call.1} parent=19 // pred_check
          %p221 = pneg %p68
        $region22: #{tpu_custom_call.1} parent=19 // pred_check_branch
          %223 = sbr.rel (%p221) target = $region24
        $region23: #{tpu_custom_call.1} parent=19 // pred_region
          %s224 = smul.u32 2, %s23
          %p225 = scmp.lt.s32.totalorder %s224, 3
          %s226 = scalar_select %p225, %s224, 3
          %s227 = smul.addr %s226, 8
          %s228 = scalar_lea.vmem %s3, %s227
          %s229 = smul.u32 2, %s23
        $region24: #{tpu_custom_call.1} parent=19 // pred_fallthru
          _
        // Predicated region
        $region25: #{tpu_custom_call.1} parent=19 // pred_check
          %p230 = pneg %p94
        $region26: #{tpu_custom_call.1} parent=19 // pred_check_branch
          %232 = sbr.rel (%p230) target = $region28
        $region27: #{tpu_custom_call.1} parent=19 // pred_region
          %p233 = scmp.lt.s32.totalorder %s22, 2
          %s234 = scalar_select %p233, %s22, 2
          %s235 = smul.addr %s234, 4
          %s236 = smul.addr %s235, 8
          %s237 = scalar_lea.vmem %s4, %s236
        $region28: #{tpu_custom_call.1} parent=19 // pred_fallthru
          _
        // Predicated region
        $region29: #{tpu_custom_call.1} parent=19 // pred_check
          %p238 = pneg %p120
        $region30: #{tpu_custom_call.1} parent=19 // pred_check_branch
          %240 = sbr.rel (%p238) target = $region32
        $region31: #{tpu_custom_call.1} parent=19 // pred_region
          %p241 = scmp.lt.s32.totalorder %s22, 2
          %s242 = scalar_select %p241, %s22, 2
          %s243 = scalar_lea.vmem %s5, %s242
        $region32: #{tpu_custom_call.1} parent=19 // pred_fallthru
          _
        // Predicated region
        $region33: #{tpu_custom_call.1} parent=19 // pred_check
          %p244 = pneg %p146
        $region34: #{tpu_custom_call.1} parent=19 // pred_check_branch
          %246 = sbr.rel (%p244) target = $region36
        $region35: #{tpu_custom_call.1} parent=19 // pred_region
          %p247 = scmp.lt.s32.totalorder %s22, 2
          %s248 = scalar_select %p247, %s22, 2
          %s249 = smul.addr %s248, 24
          %s250 = smul.addr %s249, 8
          %s251 = scalar_lea.vmem %s6, %s250
        $region36: #{tpu_custom_call.1} parent=19 // pred_fallthru
          _
        // Predicated region
        $region37: #{tpu_custom_call.1} parent=19 // pred_check
          %p252 = pneg %p172
        $region38: #{tpu_custom_call.1} parent=19 // pred_check_branch
          %254 = sbr.rel (%p252) target = $region40
        $region39: #{tpu_custom_call.1} parent=19 // pred_region
          %p255 = scmp.lt.s32.totalorder %s22, 2
          %s256 = scalar_select %p255, %s22, 2
          %s257 = smul.addr %s256, 4
          %s258 = smul.addr %s257, 8
          %s259 = scalar_lea.vmem %s7, %s258
        $region40: #{tpu_custom_call.1} parent=19 // pred_fallthru
          _
      $region20: #{tpu_custom_call.1} parent=5 // pred_fallthru
        _
      %p260 = scmp.le.s32.totalorder 1, %s15
      %p261 = scmp.lt.s32.totalorder %s15, 7
      %p262 = pnand %p260, %p261
      %p263 = pneg %p262
      // Predicated region
      $region41: #{tpu_custom_call.1} parent=5 // pred_check
        _
      $region42: #{tpu_custom_call.1} parent=5 // pred_check_branch
        %265 = sbr.rel (%p262) target = $region44
      $region43: #{tpu_custom_call.1} parent=5 // pred_region
        %s266 = ssub.s32 %s15, 1
        %p267 = pneg %p48
        %p268 = pneg %p45
        %s269 = smul.u32 2, %s25
        %p270 = scmp.lt.s32.totalorder %s269, 3
        %s271 = scalar_select %p270, %s269, 3
        %s272 = smul.addr %s271, 8
        %s273 = scalar_lea.vmem %s3, %s272
        %p274 = pneg %p74
        %p275 = pneg %p71
        %p276 = scmp.lt.s32.totalorder %s24, 2
        %s277 = scalar_select %p276, %s24, 2
        %s278 = smul.addr %s277, 4
        %s279 = smul.addr %s278, 8
        %s280 = scalar_lea.vmem %s4, %s279
        %p281 = pneg %p100
        %p282 = pneg %p97
        %p283 = scmp.lt.s32.totalorder %s24, 2
        %s284 = scalar_select %p283, %s24, 2
        %s285 = scalar_lea.vmem %s5, %s284
        %p286 = pneg %p126
        %p287 = pneg %p123
        %p288 = scmp.lt.s32.totalorder %s24, 2
        %s289 = scalar_select %p288, %s24, 2
        %s290 = smul.addr %s289, 24
        %s291 = smul.addr %s290, 8
        %s292 = scalar_lea.vmem %s6, %s291
        %p293 = pneg %p152
        %p294 = pneg %p149
        %p295 = scmp.lt.s32.totalorder %s24, 2
        %s296 = scalar_select %p295, %s24, 2
        %s297 = smul.addr %s296, 4
        %s298 = smul.addr %s297, 8
        %s299 = scalar_lea.vmem %s7, %s298
        %p300 = pneg %p178
        %p301 = pneg %p175
        %p302 = pneg %p199
        %p303 = pneg %p196
        %s304 = smul.u32 2, %s25
        %p305 = scmp.lt.s32.totalorder %s304, 3
        %s306 = scalar_select %p305, %s304, 3
        %s307 = smul.addr %s306, 8
        %s308 = scalar_lea.vmem %s3, %s307
        %s309 = smul.u32 2, %s25
        %p310 = scmp.lt.s32.totalorder %s24, 2
        %s311 = scalar_select %p310, %s24, 2
        %s312 = smul.addr %s311, 4
        %s313 = smul.addr %s312, 8
        %s314 = scalar_lea.vmem %s4, %s313
        %p315 = scmp.lt.s32.totalorder %s24, 2
        %s316 = scalar_select %p315, %s24, 2
        %s317 = scalar_lea.vmem %s5, %s316
        %p318 = scmp.lt.s32.totalorder %s24, 2
        %s319 = scalar_select %p318, %s24, 2
        %s320 = smul.addr %s319, 24
        %s321 = smul.addr %s320, 8
        %s322 = scalar_lea.vmem %s6, %s321
        %p323 = scmp.lt.s32.totalorder %s24, 2
        %s324 = scalar_select %p323, %s24, 2
        %s325 = smul.addr %s324, 4
        %s326 = smul.addr %s325, 8
        %s327 = scalar_lea.vmem %s7, %s326
        %p329 = scmp.eq.s32.totalorder %s24, 0
        %p330 = scmp.eq.s32.totalorder %s25, 0
        %p331 = pnand %p329, %p330
        %p332 = pneg %p331
        // Predicated region
        $region45: #{tpu_custom_call.1} parent=43 // pred_check
          _
        $region46: #{tpu_custom_call.1} parent=43 // pred_check_branch
          %334 = sbr.rel (%p331) target = $region48
        $region47: #{tpu_custom_call.1} parent=43 // pred_region
          %p336 = scmp.lt.u32.totalorder 512, 8
          %p337 = pneg %p336
          // Predicated region
          $region49: #{tpu_custom_call.1} parent=47 // pred_check
            _
          $region50: #{tpu_custom_call.1} parent=47 // pred_check_branch
            %339 = sbr.rel (%p336) target = $region52
          $region51: #{tpu_custom_call.1} parent=47 // pred_region
            %s354 = sand.u32 512, 7
            %p355 = scmp.eq.s32.totalorder %s354, 0
            // Predicated region
            $region64: #{tpu_custom_call.1} parent=51 // pred_check
              %p356 = pneg %p355
            $region65: #{tpu_custom_call.1} parent=51 // pred_check_branch
              %358 = sbr.rel (%p356) target = $region67
            $region66: #{tpu_custom_call.1} parent=51 // pred_region
              loop: start=0, step=1, limit=1
              $region68: #{tpu_custom_call.1} parent=66 // loop_pre_header
                _
              $region69: #{tpu_custom_call.1} parent=66 // loop_header
                %s360 = sphi 0, %s364
                %p361 = scmp.ge.s32.totalorder %s360, 1
                %s365 = sphi %s0, %s0
                %s366 = sphi [#allocation3], [#allocation3]
              $region70: #{tpu_custom_call.1} parent=66 // loop_header_branch
                %363 = sbr.rel (%p361) target = $region74
              $region71: #{tpu_custom_call.1} parent=66 // loop_body
                %v367 = vld [vmem:[%s365] sm:$0xff]
                %368 = vst [vmem:[%s366] sm:$0xff] %v367
                %v369 = vld [vmem:[%s365 + $0x8] sm:$0xff]
                %370 = vst [vmem:[%s366 + $0x8] sm:$0xff] %v369
                %v371 = vld [vmem:[%s365 + $0x10] sm:$0xff]
                %372 = vst [vmem:[%s366 + $0x10] sm:$0xff] %v371
                %v373 = vld [vmem:[%s365 + $0x18] sm:$0xff]
                %374 = vst [vmem:[%s366 + $0x18] sm:$0xff] %v373
                %v375 = vld [vmem:[%s365 + $0x20] sm:$0xff]
                %376 = vst [vmem:[%s366 + $0x20] sm:$0xff] %v375
                %v377 = vld [vmem:[%s365 + $0x28] sm:$0xff]
                %378 = vst [vmem:[%s366 + $0x28] sm:$0xff] %v377
                %v379 = vld [vmem:[%s365 + $0x30] sm:$0xff]
                %380 = vst [vmem:[%s366 + $0x30] sm:$0xff] %v379
                %v381 = vld [vmem:[%s365 + $0x38] sm:$0xff]
                %382 = vst [vmem:[%s366 + $0x38] sm:$0xff] %v381
                %v383 = vld [vmem:[%s365 + $0x40] sm:$0xff]
                %384 = vst [vmem:[%s366 + $0x40] sm:$0xff] %v383
                %v385 = vld [vmem:[%s365 + $0x48] sm:$0xff]
                %386 = vst [vmem:[%s366 + $0x48] sm:$0xff] %v385
                %v387 = vld [vmem:[%s365 + $0x50] sm:$0xff]
                %388 = vst [vmem:[%s366 + $0x50] sm:$0xff] %v387
                %v389 = vld [vmem:[%s365 + $0x58] sm:$0xff]
                %390 = vst [vmem:[%s366 + $0x58] sm:$0xff] %v389
                %v391 = vld [vmem:[%s365 + $0x60] sm:$0xff]
                %392 = vst [vmem:[%s366 + $0x60] sm:$0xff] %v391
                %v393 = vld [vmem:[%s365 + $0x68] sm:$0xff]
                %394 = vst [vmem:[%s366 + $0x68] sm:$0xff] %v393
                %v395 = vld [vmem:[%s365 + $0x70] sm:$0xff]
                %396 = vst [vmem:[%s366 + $0x70] sm:$0xff] %v395
                %v397 = vld [vmem:[%s365 + $0x78] sm:$0xff]
                %398 = vst [vmem:[%s366 + $0x78] sm:$0xff] %v397
                %v399 = vld [vmem:[%s365 + $0x80] sm:$0xff]
                %400 = vst [vmem:[%s366 + $0x80] sm:$0xff] %v399
                %v401 = vld [vmem:[%s365 + $0x88] sm:$0xff]
                %402 = vst [vmem:[%s366 + $0x88] sm:$0xff] %v401
                %v403 = vld [vmem:[%s365 + $0x90] sm:$0xff]
                %404 = vst [vmem:[%s366 + $0x90] sm:$0xff] %v403
                %v405 = vld [vmem:[%s365 + $0x98] sm:$0xff]
                %406 = vst [vmem:[%s366 + $0x98] sm:$0xff] %v405
                %v407 = vld [vmem:[%s365 + $0xa0] sm:$0xff]
                %408 = vst [vmem:[%s366 + $0xa0] sm:$0xff] %v407
                %v409 = vld [vmem:[%s365 + $0xa8] sm:$0xff]
                %410 = vst [vmem:[%s366 + $0xa8] sm:$0xff] %v409
                %v411 = vld [vmem:[%s365 + $0xb0] sm:$0xff]
                %412 = vst [vmem:[%s366 + $0xb0] sm:$0xff] %v411
                %v413 = vld [vmem:[%s365 + $0xb8] sm:$0xff]
                %414 = vst [vmem:[%s366 + $0xb8] sm:$0xff] %v413
                %v415 = vld [vmem:[%s365 + $0xc0] sm:$0xff]
                %416 = vst [vmem:[%s366 + $0xc0] sm:$0xff] %v415
                %v417 = vld [vmem:[%s365 + $0xc8] sm:$0xff]
                %418 = vst [vmem:[%s366 + $0xc8] sm:$0xff] %v417
                %v419 = vld [vmem:[%s365 + $0xd0] sm:$0xff]
                %420 = vst [vmem:[%s366 + $0xd0] sm:$0xff] %v419
                %v421 = vld [vmem:[%s365 + $0xd8] sm:$0xff]
                %422 = vst [vmem:[%s366 + $0xd8] sm:$0xff] %v421
                %v423 = vld [vmem:[%s365 + $0xe0] sm:$0xff]
                %424 = vst [vmem:[%s366 + $0xe0] sm:$0xff] %v423
                %v425 = vld [vmem:[%s365 + $0xe8] sm:$0xff]
                %426 = vst [vmem:[%s366 + $0xe8] sm:$0xff] %v425
                %v427 = vld [vmem:[%s365 + $0xf0] sm:$0xff]
                %428 = vst [vmem:[%s366 + $0xf0] sm:$0xff] %v427
                %v429 = vld [vmem:[%s365 + $0xf8] sm:$0xff]
                %430 = vst [vmem:[%s366 + $0xf8] sm:$0xff] %v429
                %v431 = vld [vmem:[%s365 + $0x100] sm:$0xff]
                %432 = vst [vmem:[%s366 + $0x100] sm:$0xff] %v431
                %v433 = vld [vmem:[%s365 + $0x108] sm:$0xff]
                %434 = vst [vmem:[%s366 + $0x108] sm:$0xff] %v433
                %v435 = vld [vmem:[%s365 + $0x110] sm:$0xff]
                %436 = vst [vmem:[%s366 + $0x110] sm:$0xff] %v435
                %v437 = vld [vmem:[%s365 + $0x118] sm:$0xff]
                %438 = vst [vmem:[%s366 + $0x118] sm:$0xff] %v437
                %v439 = vld [vmem:[%s365 + $0x120] sm:$0xff]
                %440 = vst [vmem:[%s366 + $0x120] sm:$0xff] %v439
                %v441 = vld [vmem:[%s365 + $0x128] sm:$0xff]
                %442 = vst [vmem:[%s366 + $0x128] sm:$0xff] %v441
                %v443 = vld [vmem:[%s365 + $0x130] sm:$0xff]
                %444 = vst [vmem:[%s366 + $0x130] sm:$0xff] %v443
                %v445 = vld [vmem:[%s365 + $0x138] sm:$0xff]
                %446 = vst [vmem:[%s366 + $0x138] sm:$0xff] %v445
                %v447 = vld [vmem:[%s365 + $0x140] sm:$0xff]
                %448 = vst [vmem:[%s366 + $0x140] sm:$0xff] %v447
                %v449 = vld [vmem:[%s365 + $0x148] sm:$0xff]
                %450 = vst [vmem:[%s366 + $0x148] sm:$0xff] %v449
                %v451 = vld [vmem:[%s365 + $0x150] sm:$0xff]
                %452 = vst [vmem:[%s366 + $0x150] sm:$0xff] %v451
                %v453 = vld [vmem:[%s365 + $0x158] sm:$0xff]
                %454 = vst [vmem:[%s366 + $0x158] sm:$0xff] %v453
                %v455 = vld [vmem:[%s365 + $0x160] sm:$0xff]
                %456 = vst [vmem:[%s366 + $0x160] sm:$0xff] %v455
                %v457 = vld [vmem:[%s365 + $0x168] sm:$0xff]
                %458 = vst [vmem:[%s366 + $0x168] sm:$0xff] %v457
                %v459 = vld [vmem:[%s365 + $0x170] sm:$0xff]
                %460 = vst [vmem:[%s366 + $0x170] sm:$0xff] %v459
                %v461 = vld [vmem:[%s365 + $0x178] sm:$0xff]
                %462 = vst [vmem:[%s366 + $0x178] sm:$0xff] %v461
                %v463 = vld [vmem:[%s365 + $0x180] sm:$0xff]
                %464 = vst [vmem:[%s366 + $0x180] sm:$0xff] %v463
                %v465 = vld [vmem:[%s365 + $0x188] sm:$0xff]
                %466 = vst [vmem:[%s366 + $0x188] sm:$0xff] %v465
                %v467 = vld [vmem:[%s365 + $0x190] sm:$0xff]
                %468 = vst [vmem:[%s366 + $0x190] sm:$0xff] %v467
                %v469 = vld [vmem:[%s365 + $0x198] sm:$0xff]
                %470 = vst [vmem:[%s366 + $0x198] sm:$0xff] %v469
                %v471 = vld [vmem:[%s365 + $0x1a0] sm:$0xff]
                %472 = vst [vmem:[%s366 + $0x1a0] sm:$0xff] %v471
                %v473 = vld [vmem:[%s365 + $0x1a8] sm:$0xff]
                %474 = vst [vmem:[%s366 + $0x1a8] sm:$0xff] %v473
                %v475 = vld [vmem:[%s365 + $0x1b0] sm:$0xff]
                %476 = vst [vmem:[%s366 + $0x1b0] sm:$0xff] %v475
                %v477 = vld [vmem:[%s365 + $0x1b8] sm:$0xff]
                %478 = vst [vmem:[%s366 + $0x1b8] sm:$0xff] %v477
                %v479 = vld [vmem:[%s365 + $0x1c0] sm:$0xff]
                %480 = vst [vmem:[%s366 + $0x1c0] sm:$0xff] %v479
                %v481 = vld [vmem:[%s365 + $0x1c8] sm:$0xff]
                %482 = vst [vmem:[%s366 + $0x1c8] sm:$0xff] %v481
                %v483 = vld [vmem:[%s365 + $0x1d0] sm:$0xff]
                %484 = vst [vmem:[%s366 + $0x1d0] sm:$0xff] %v483
                %v485 = vld [vmem:[%s365 + $0x1d8] sm:$0xff]
                %486 = vst [vmem:[%s366 + $0x1d8] sm:$0xff] %v485
                %v487 = vld [vmem:[%s365 + $0x1e0] sm:$0xff]
                %488 = vst [vmem:[%s366 + $0x1e0] sm:$0xff] %v487
                %v489 = vld [vmem:[%s365 + $0x1e8] sm:$0xff]
                %490 = vst [vmem:[%s366 + $0x1e8] sm:$0xff] %v489
                %v491 = vld [vmem:[%s365 + $0x1f0] sm:$0xff]
                %492 = vst [vmem:[%s366 + $0x1f0] sm:$0xff] %v491
                %v493 = vld [vmem:[%s365 + $0x1f8] sm:$0xff]
                %494 = vst [vmem:[%s366 + $0x1f8] sm:$0xff] %v493
              $region72: #{tpu_custom_call.1} parent=66 // loop_footer
                %s364 = sadd.s32 1, %s360
              $region73: #{tpu_custom_call.1} parent=66 // loop_footer_branch
                %359 = sbr.rel target = $region69
              $region74: #{tpu_custom_call.1} parent=66 // loop_exit
                _
            $region67: #{tpu_custom_call.1} parent=51 // pred_fallthru
              _
            %p495 = pneg %p355
            // Predicated region
            $region75: #{tpu_custom_call.1} parent=51 // pred_check
              _
            $region76: #{tpu_custom_call.1} parent=51 // pred_check_branch
              %497 = sbr.rel (%p355) target = $region78
            $region77: #{tpu_custom_call.1} parent=51 // pred_region
              %s498 = sand.u32 512, 7
            $region78: #{tpu_custom_call.1} parent=51 // pred_fallthru
              _
          $region52: #{tpu_custom_call.1} parent=47 // pred_fallthru
            _
          // Predicated region
          $region53: #{tpu_custom_call.1} parent=47 // pred_check
            %p340 = pneg %p336
          $region54: #{tpu_custom_call.1} parent=47 // pred_check_branch
            %342 = sbr.rel (%p340) target = $region56
          $region55: #{tpu_custom_call.1} parent=47 // pred_region
            %s343 = sshllo.u32 0, 512
            loop: start=0, step=1, limit=1
            $region57: #{tpu_custom_call.1} parent=55 // loop_pre_header
              _
            $region58: #{tpu_custom_call.1} parent=55 // loop_header
              %s345 = sphi 0, %s349
              %p346 = scmp.ge.s32.totalorder %s345, 1
              %s350 = sphi %s0, %s0
              %s351 = sphi [#allocation3], [#allocation3]
            $region59: #{tpu_custom_call.1} parent=55 // loop_header_branch
              %348 = sbr.rel (%p346) target = $region63
            $region60: #{tpu_custom_call.1} parent=55 // loop_body
              %v352 = vld [vmem:[%s350] sm:%s343]
              %353 = vst [vmem:[%s351] sm:%s343] %v352
            $region61: #{tpu_custom_call.1} parent=55 // loop_footer
              %s349 = sadd.s32 1, %s345
            $region62: #{tpu_custom_call.1} parent=55 // loop_footer_branch
              %344 = sbr.rel target = $region58
            $region63: #{tpu_custom_call.1} parent=55 // loop_exit
              _
          $region56: #{tpu_custom_call.1} parent=47 // pred_fallthru
            _
          // Predicated region
          $region79: #{tpu_custom_call.1} parent=47 // pred_check
            _
          $region80: #{tpu_custom_call.1} parent=47 // pred_check_branch
            %501 = sbr.rel (0) target = $region82
          $region81: #{tpu_custom_call.1} parent=47 // pred_region
            %502 = vsyncadd [#allocation2], 8192
          $region82: #{tpu_custom_call.1} parent=47 // pred_fallthru
            _
          %s503 = scalar_lea.sflag [#allocation2], 1
          %p505 = scmp.lt.u32.totalorder 4, 8
          %p506 = pneg %p505
          // Predicated region
          $region83: #{tpu_custom_call.1} parent=47 // pred_check
            _
          $region84: #{tpu_custom_call.1} parent=47 // pred_check_branch
            %508 = sbr.rel (%p505) target = $region86
          $region85: #{tpu_custom_call.1} parent=47 // pred_region
            %s1033 = sand.u32 4, 7
            %p1034 = scmp.eq.s32.totalorder %s1033, 0
            %p1035 = pneg %p1034
            // Predicated region
            $region98: #{tpu_custom_call.1} parent=85 // pred_check
              _
            $region99: #{tpu_custom_call.1} parent=85 // pred_check_branch
              %1037 = sbr.rel (%p1034) target = $region101
            $region100: #{tpu_custom_call.1} parent=85 // pred_region
              %s1038 = sand.u32 4, 7
              %s1039 = ssub.s32 4, %s1038
              %s1040 = scalar_lea.vmem %s2, %s1039
              %s1041 = ssub.s32 4, %s1038
              %s1042 = scalar_lea.vmem [#allocation6], %s1041
              loop: start=0, step=1, limit=1
              $region102: #{tpu_custom_call.1} parent=100 // loop_pre_header
                _
              $region103: #{tpu_custom_call.1} parent=100 // loop_header
                %s1044 = sphi 0, %s1048
                %p1045 = scmp.ge.s32.totalorder %s1044, 1
                %s1049 = sphi %s2, %s2
                %s1050 = sphi [#allocation6], [#allocation6]
              $region104: #{tpu_custom_call.1} parent=100 // loop_header_branch
                %1047 = sbr.rel (%p1045) target = $region108
              $region105: #{tpu_custom_call.1} parent=100 // loop_body
                _
              $region106: #{tpu_custom_call.1} parent=100 // loop_footer
                %s1048 = sadd.s32 1, %s1044
              $region107: #{tpu_custom_call.1} parent=100 // loop_footer_branch
                %1043 = sbr.rel target = $region103
              $region108: #{tpu_custom_call.1} parent=100 // loop_exit
                _
              %s1051 = sshllo.u32 0, %s1038
              loop: start=0, step=1, limit=1
              $region109: #{tpu_custom_call.1} parent=100 // loop_pre_header
                _
              $region110: #{tpu_custom_call.1} parent=100 // loop_header
                %s1053 = sphi 0, %s1057
                %p1054 = scmp.ge.s32.totalorder %s1053, 1
                %s1058 = sphi %s1040, %s1040
                %s1059 = sphi %s1042, %s1042
              $region111: #{tpu_custom_call.1} parent=100 // loop_header_branch
                %1056 = sbr.rel (%p1054) target = $region115
              $region112: #{tpu_custom_call.1} parent=100 // loop_body
                %v1060 = vld [vmem:[%s1058] sm:%s1051]
                %1061 = vst [vmem:[%s1059] sm:%s1051] %v1060
                %v1062 = vld [vmem:[%s1058 + $0x10] sm:%s1051]
                %1063 = vst [vmem:[%s1059 + $0x4] sm:%s1051] %v1062
                %v1064 = vld [vmem:[%s1058 + $0x4] sm:%s1051]
                %1065 = vst [vmem:[%s1059 + $0x8] sm:%s1051] %v1064
                %v1066 = vld [vmem:[%s1058 + $0x14] sm:%s1051]
                %1067 = vst [vmem:[%s1059 + $0xc] sm:%s1051] %v1066
                %v1068 = vld [vmem:[%s1058 + $0x8] sm:%s1051]
                %1069 = vst [vmem:[%s1059 + $0x10] sm:%s1051] %v1068
                %v1070 = vld [vmem:[%s1058 + $0x18] sm:%s1051]
                %1071 = vst [vmem:[%s1059 + $0x14] sm:%s1051] %v1070
                %v1072 = vld [vmem:[%s1058 + $0xc] sm:%s1051]
                %1073 = vst [vmem:[%s1059 + $0x18] sm:%s1051] %v1072
                %v1074 = vld [vmem:[%s1058 + $0x1c] sm:%s1051]
                %1075 = vst [vmem:[%s1059 + $0x1c] sm:%s1051] %v1074
                %v1076 = vld [vmem:[%s1058 + $0x20] sm:%s1051]
                %1077 = vst [vmem:[%s1059 + $0x20] sm:%s1051] %v1076
                %v1078 = vld [vmem:[%s1058 + $0x30] sm:%s1051]
                %1079 = vst [vmem:[%s1059 + $0x24] sm:%s1051] %v1078
                %v1080 = vld [vmem:[%s1058 + $0x24] sm:%s1051]
                %1081 = vst [vmem:[%s1059 + $0x28] sm:%s1051] %v1080
                %v1082 = vld [vmem:[%s1058 + $0x34] sm:%s1051]
                %1083 = vst [vmem:[%s1059 + $0x2c] sm:%s1051] %v1082
                %v1084 = vld [vmem:[%s1058 + $0x28] sm:%s1051]
                %1085 = vst [vmem:[%s1059 + $0x30] sm:%s1051] %v1084
                %v1086 = vld [vmem:[%s1058 + $0x38] sm:%s1051]
                %1087 = vst [vmem:[%s1059 + $0x34] sm:%s1051] %v1086
                %v1088 = vld [vmem:[%s1058 + $0x2c] sm:%s1051]
                %1089 = vst [vmem:[%s1059 + $0x38] sm:%s1051] %v1088
                %v1090 = vld [vmem:[%s1058 + $0x3c] sm:%s1051]
                %1091 = vst [vmem:[%s1059 + $0x3c] sm:%s1051] %v1090
                %v1092 = vld [vmem:[%s1058 + $0x40] sm:%s1051]
                %1093 = vst [vmem:[%s1059 + $0x40] sm:%s1051] %v1092
                %v1094 = vld [vmem:[%s1058 + $0x50] sm:%s1051]
                %1095 = vst [vmem:[%s1059 + $0x44] sm:%s1051] %v1094
                %v1096 = vld [vmem:[%s1058 + $0x44] sm:%s1051]
                %1097 = vst [vmem:[%s1059 + $0x48] sm:%s1051] %v1096
                %v1098 = vld [vmem:[%s1058 + $0x54] sm:%s1051]
                %1099 = vst [vmem:[%s1059 + $0x4c] sm:%s1051] %v1098
                %v1100 = vld [vmem:[%s1058 + $0x48] sm:%s1051]
                %1101 = vst [vmem:[%s1059 + $0x50] sm:%s1051] %v1100
                %v1102 = vld [vmem:[%s1058 + $0x58] sm:%s1051]
                %1103 = vst [vmem:[%s1059 + $0x54] sm:%s1051] %v1102
                %v1104 = vld [vmem:[%s1058 + $0x4c] sm:%s1051]
                %1105 = vst [vmem:[%s1059 + $0x58] sm:%s1051] %v1104
                %v1106 = vld [vmem:[%s1058 + $0x5c] sm:%s1051]
                %1107 = vst [vmem:[%s1059 + $0x5c] sm:%s1051] %v1106
                %v1108 = vld [vmem:[%s1058 + $0x60] sm:%s1051]
                %1109 = vst [vmem:[%s1059 + $0x60] sm:%s1051] %v1108
                %v1110 = vld [vmem:[%s1058 + $0x70] sm:%s1051]
                %1111 = vst [vmem:[%s1059 + $0x64] sm:%s1051] %v1110
                %v1112 = vld [vmem:[%s1058 + $0x64] sm:%s1051]
                %1113 = vst [vmem:[%s1059 + $0x68] sm:%s1051] %v1112
                %v1114 = vld [vmem:[%s1058 + $0x74] sm:%s1051]
                %1115 = vst [vmem:[%s1059 + $0x6c] sm:%s1051] %v1114
                %v1116 = vld [vmem:[%s1058 + $0x68] sm:%s1051]
                %1117 = vst [vmem:[%s1059 + $0x70] sm:%s1051] %v1116
                %v1118 = vld [vmem:[%s1058 + $0x78] sm:%s1051]
                %1119 = vst [vmem:[%s1059 + $0x74] sm:%s1051] %v1118
                %v1120 = vld [vmem:[%s1058 + $0x6c] sm:%s1051]
                %1121 = vst [vmem:[%s1059 + $0x78] sm:%s1051] %v1120
                %v1122 = vld [vmem:[%s1058 + $0x7c] sm:%s1051]
                %1123 = vst [vmem:[%s1059 + $0x7c] sm:%s1051] %v1122
                %v1124 = vld [vmem:[%s1058 + $0x80] sm:%s1051]
                %1125 = vst [vmem:[%s1059 + $0x80] sm:%s1051] %v1124
                %v1126 = vld [vmem:[%s1058 + $0x90] sm:%s1051]
                %1127 = vst [vmem:[%s1059 + $0x84] sm:%s1051] %v1126
                %v1128 = vld [vmem:[%s1058 + $0x84] sm:%s1051]
                %1129 = vst [vmem:[%s1059 + $0x88] sm:%s1051] %v1128
                %v1130 = vld [vmem:[%s1058 + $0x94] sm:%s1051]
                %1131 = vst [vmem:[%s1059 + $0x8c] sm:%s1051] %v1130
                %v1132 = vld [vmem:[%s1058 + $0x88] sm:%s1051]
                %1133 = vst [vmem:[%s1059 + $0x90] sm:%s1051] %v1132
                %v1134 = vld [vmem:[%s1058 + $0x98] sm:%s1051]
                %1135 = vst [vmem:[%s1059 + $0x94] sm:%s1051] %v1134
                %v1136 = vld [vmem:[%s1058 + $0x8c] sm:%s1051]
                %1137 = vst [vmem:[%s1059 + $0x98] sm:%s1051] %v1136
                %v1138 = vld [vmem:[%s1058 + $0x9c] sm:%s1051]
                %1139 = vst [vmem:[%s1059 + $0x9c] sm:%s1051] %v1138
                %v1140 = vld [vmem:[%s1058 + $0xa0] sm:%s1051]
                %1141 = vst [vmem:[%s1059 + $0xa0] sm:%s1051] %v1140
                %v1142 = vld [vmem:[%s1058 + $0xb0] sm:%s1051]
                %1143 = vst [vmem:[%s1059 + $0xa4] sm:%s1051] %v1142
                %v1144 = vld [vmem:[%s1058 + $0xa4] sm:%s1051]
                %1145 = vst [vmem:[%s1059 + $0xa8] sm:%s1051] %v1144
                %v1146 = vld [vmem:[%s1058 + $0xb4] sm:%s1051]
                %1147 = vst [vmem:[%s1059 + $0xac] sm:%s1051] %v1146
                %v1148 = vld [vmem:[%s1058 + $0xa8] sm:%s1051]
                %1149 = vst [vmem:[%s1059 + $0xb0] sm:%s1051] %v1148
                %v1150 = vld [vmem:[%s1058 + $0xb8] sm:%s1051]
                %1151 = vst [vmem:[%s1059 + $0xb4] sm:%s1051] %v1150
                %v1152 = vld [vmem:[%s1058 + $0xac] sm:%s1051]
                %1153 = vst [vmem:[%s1059 + $0xb8] sm:%s1051] %v1152
                %v1154 = vld [vmem:[%s1058 + $0xbc] sm:%s1051]
                %1155 = vst [vmem:[%s1059 + $0xbc] sm:%s1051] %v1154
                %v1156 = vld [vmem:[%s1058 + $0xc0] sm:%s1051]
                %1157 = vst [vmem:[%s1059 + $0xc0] sm:%s1051] %v1156
                %v1158 = vld [vmem:[%s1058 + $0xd0] sm:%s1051]
                %1159 = vst [vmem:[%s1059 + $0xc4] sm:%s1051] %v1158
                %v1160 = vld [vmem:[%s1058 + $0xc4] sm:%s1051]
                %1161 = vst [vmem:[%s1059 + $0xc8] sm:%s1051] %v1160
                %v1162 = vld [vmem:[%s1058 + $0xd4] sm:%s1051]
                %1163 = vst [vmem:[%s1059 + $0xcc] sm:%s1051] %v1162
                %v1164 = vld [vmem:[%s1058 + $0xc8] sm:%s1051]
                %1165 = vst [vmem:[%s1059 + $0xd0] sm:%s1051] %v1164
                %v1166 = vld [vmem:[%s1058 + $0xd8] sm:%s1051]
                %1167 = vst [vmem:[%s1059 + $0xd4] sm:%s1051] %v1166
                %v1168 = vld [vmem:[%s1058 + $0xcc] sm:%s1051]
                %1169 = vst [vmem:[%s1059 + $0xd8] sm:%s1051] %v1168
                %v1170 = vld [vmem:[%s1058 + $0xdc] sm:%s1051]
                %1171 = vst [vmem:[%s1059 + $0xdc] sm:%s1051] %v1170
                %v1172 = vld [vmem:[%s1058 + $0xe0] sm:%s1051]
                %1173 = vst [vmem:[%s1059 + $0xe0] sm:%s1051] %v1172
                %v1174 = vld [vmem:[%s1058 + $0xf0] sm:%s1051]
                %1175 = vst [vmem:[%s1059 + $0xe4] sm:%s1051] %v1174
                %v1176 = vld [vmem:[%s1058 + $0xe4] sm:%s1051]
                %1177 = vst [vmem:[%s1059 + $0xe8] sm:%s1051] %v1176
                %v1178 = vld [vmem:[%s1058 + $0xf4] sm:%s1051]
                %1179 = vst [vmem:[%s1059 + $0xec] sm:%s1051] %v1178
                %v1180 = vld [vmem:[%s1058 + $0xe8] sm:%s1051]
                %1181 = vst [vmem:[%s1059 + $0xf0] sm:%s1051] %v1180
                %v1182 = vld [vmem:[%s1058 + $0xf8] sm:%s1051]
                %1183 = vst [vmem:[%s1059 + $0xf4] sm:%s1051] %v1182
                %v1184 = vld [vmem:[%s1058 + $0xec] sm:%s1051]
                %1185 = vst [vmem:[%s1059 + $0xf8] sm:%s1051] %v1184
                %v1186 = vld [vmem:[%s1058 + $0xfc] sm:%s1051]
                %1187 = vst [vmem:[%s1059 + $0xfc] sm:%s1051] %v1186
                %v1188 = vld [vmem:[%s1058 + $0x100] sm:%s1051]
                %1189 = vst [vmem:[%s1059 + $0x100] sm:%s1051] %v1188
                %v1190 = vld [vmem:[%s1058 + $0x110] sm:%s1051]
                %1191 = vst [vmem:[%s1059 + $0x104] sm:%s1051] %v1190
                %v1192 = vld [vmem:[%s1058 + $0x104] sm:%s1051]
                %1193 = vst [vmem:[%s1059 + $0x108] sm:%s1051] %v1192
                %v1194 = vld [vmem:[%s1058 + $0x114] sm:%s1051]
                %1195 = vst [vmem:[%s1059 + $0x10c] sm:%s1051] %v1194
                %v1196 = vld [vmem:[%s1058 + $0x108] sm:%s1051]
                %1197 = vst [vmem:[%s1059 + $0x110] sm:%s1051] %v1196
                %v1198 = vld [vmem:[%s1058 + $0x118] sm:%s1051]
                %1199 = vst [vmem:[%s1059 + $0x114] sm:%s1051] %v1198
                %v1200 = vld [vmem:[%s1058 + $0x10c] sm:%s1051]
                %1201 = vst [vmem:[%s1059 + $0x118] sm:%s1051] %v1200
                %v1202 = vld [vmem:[%s1058 + $0x11c] sm:%s1051]
                %1203 = vst [vmem:[%s1059 + $0x11c] sm:%s1051] %v1202
                %v1204 = vld [vmem:[%s1058 + $0x120] sm:%s1051]
                %1205 = vst [vmem:[%s1059 + $0x120] sm:%s1051] %v1204
                %v1206 = vld [vmem:[%s1058 + $0x130] sm:%s1051]
                %1207 = vst [vmem:[%s1059 + $0x124] sm:%s1051] %v1206
                %v1208 = vld [vmem:[%s1058 + $0x124] sm:%s1051]
                %1209 = vst [vmem:[%s1059 + $0x128] sm:%s1051] %v1208
                %v1210 = vld [vmem:[%s1058 + $0x134] sm:%s1051]
                %1211 = vst [vmem:[%s1059 + $0x12c] sm:%s1051] %v1210
                %v1212 = vld [vmem:[%s1058 + $0x128] sm:%s1051]
                %1213 = vst [vmem:[%s1059 + $0x130] sm:%s1051] %v1212
                %v1214 = vld [vmem:[%s1058 + $0x138] sm:%s1051]
                %1215 = vst [vmem:[%s1059 + $0x134] sm:%s1051] %v1214
                %v1216 = vld [vmem:[%s1058 + $0x12c] sm:%s1051]
                %1217 = vst [vmem:[%s1059 + $0x138] sm:%s1051] %v1216
                %v1218 = vld [vmem:[%s1058 + $0x13c] sm:%s1051]
                %1219 = vst [vmem:[%s1059 + $0x13c] sm:%s1051] %v1218
                %v1220 = vld [vmem:[%s1058 + $0x140] sm:%s1051]
                %1221 = vst [vmem:[%s1059 + $0x140] sm:%s1051] %v1220
                %v1222 = vld [vmem:[%s1058 + $0x150] sm:%s1051]
                %1223 = vst [vmem:[%s1059 + $0x144] sm:%s1051] %v1222
                %v1224 = vld [vmem:[%s1058 + $0x144] sm:%s1051]
                %1225 = vst [vmem:[%s1059 + $0x148] sm:%s1051] %v1224
                %v1226 = vld [vmem:[%s1058 + $0x154] sm:%s1051]
                %1227 = vst [vmem:[%s1059 + $0x14c] sm:%s1051] %v1226
                %v1228 = vld [vmem:[%s1058 + $0x148] sm:%s1051]
                %1229 = vst [vmem:[%s1059 + $0x150] sm:%s1051] %v1228
                %v1230 = vld [vmem:[%s1058 + $0x158] sm:%s1051]
                %1231 = vst [vmem:[%s1059 + $0x154] sm:%s1051] %v1230
                %v1232 = vld [vmem:[%s1058 + $0x14c] sm:%s1051]
                %1233 = vst [vmem:[%s1059 + $0x158] sm:%s1051] %v1232
                %v1234 = vld [vmem:[%s1058 + $0x15c] sm:%s1051]
                %1235 = vst [vmem:[%s1059 + $0x15c] sm:%s1051] %v1234
                %v1236 = vld [vmem:[%s1058 + $0x160] sm:%s1051]
                %1237 = vst [vmem:[%s1059 + $0x160] sm:%s1051] %v1236
                %v1238 = vld [vmem:[%s1058 + $0x170] sm:%s1051]
                %1239 = vst [vmem:[%s1059 + $0x164] sm:%s1051] %v1238
                %v1240 = vld [vmem:[%s1058 + $0x164] sm:%s1051]
                %1241 = vst [vmem:[%s1059 + $0x168] sm:%s1051] %v1240
                %v1242 = vld [vmem:[%s1058 + $0x174] sm:%s1051]
                %1243 = vst [vmem:[%s1059 + $0x16c] sm:%s1051] %v1242
                %v1244 = vld [vmem:[%s1058 + $0x168] sm:%s1051]
                %1245 = vst [vmem:[%s1059 + $0x170] sm:%s1051] %v1244
                %v1246 = vld [vmem:[%s1058 + $0x178] sm:%s1051]
                %1247 = vst [vmem:[%s1059 + $0x174] sm:%s1051] %v1246
                %v1248 = vld [vmem:[%s1058 + $0x16c] sm:%s1051]
                %1249 = vst [vmem:[%s1059 + $0x178] sm:%s1051] %v1248
                %v1250 = vld [vmem:[%s1058 + $0x17c] sm:%s1051]
                %1251 = vst [vmem:[%s1059 + $0x17c] sm:%s1051] %v1250
                %v1252 = vld [vmem:[%s1058 + $0x180] sm:%s1051]
                %1253 = vst [vmem:[%s1059 + $0x180] sm:%s1051] %v1252
                %v1254 = vld [vmem:[%s1058 + $0x190] sm:%s1051]
                %1255 = vst [vmem:[%s1059 + $0x184] sm:%s1051] %v1254
                %v1256 = vld [vmem:[%s1058 + $0x184] sm:%s1051]
                %1257 = vst [vmem:[%s1059 + $0x188] sm:%s1051] %v1256
                %v1258 = vld [vmem:[%s1058 + $0x194] sm:%s1051]
                %1259 = vst [vmem:[%s1059 + $0x18c] sm:%s1051] %v1258
                %v1260 = vld [vmem:[%s1058 + $0x188] sm:%s1051]
                %1261 = vst [vmem:[%s1059 + $0x190] sm:%s1051] %v1260
                %v1262 = vld [vmem:[%s1058 + $0x198] sm:%s1051]
                %1263 = vst [vmem:[%s1059 + $0x194] sm:%s1051] %v1262
                %v1264 = vld [vmem:[%s1058 + $0x18c] sm:%s1051]
                %1265 = vst [vmem:[%s1059 + $0x198] sm:%s1051] %v1264
                %v1266 = vld [vmem:[%s1058 + $0x19c] sm:%s1051]
                %1267 = vst [vmem:[%s1059 + $0x19c] sm:%s1051] %v1266
                %v1268 = vld [vmem:[%s1058 + $0x1a0] sm:%s1051]
                %1269 = vst [vmem:[%s1059 + $0x1a0] sm:%s1051] %v1268
                %v1270 = vld [vmem:[%s1058 + $0x1b0] sm:%s1051]
                %1271 = vst [vmem:[%s1059 + $0x1a4] sm:%s1051] %v1270
                %v1272 = vld [vmem:[%s1058 + $0x1a4] sm:%s1051]
                %1273 = vst [vmem:[%s1059 + $0x1a8] sm:%s1051] %v1272
                %v1274 = vld [vmem:[%s1058 + $0x1b4] sm:%s1051]
                %1275 = vst [vmem:[%s1059 + $0x1ac] sm:%s1051] %v1274
                %v1276 = vld [vmem:[%s1058 + $0x1a8] sm:%s1051]
                %1277 = vst [vmem:[%s1059 + $0x1b0] sm:%s1051] %v1276
                %v1278 = vld [vmem:[%s1058 + $0x1b8] sm:%s1051]
                %1279 = vst [vmem:[%s1059 + $0x1b4] sm:%s1051] %v1278
                %v1280 = vld [vmem:[%s1058 + $0x1ac] sm:%s1051]
                %1281 = vst [vmem:[%s1059 + $0x1b8] sm:%s1051] %v1280
                %v1282 = vld [vmem:[%s1058 + $0x1bc] sm:%s1051]
                %1283 = vst [vmem:[%s1059 + $0x1bc] sm:%s1051] %v1282
                %v1284 = vld [vmem:[%s1058 + $0x1c0] sm:%s1051]
                %1285 = vst [vmem:[%s1059 + $0x1c0] sm:%s1051] %v1284
                %v1286 = vld [vmem:[%s1058 + $0x1d0] sm:%s1051]
                %1287 = vst [vmem:[%s1059 + $0x1c4] sm:%s1051] %v1286
                %v1288 = vld [vmem:[%s1058 + $0x1c4] sm:%s1051]
                %1289 = vst [vmem:[%s1059 + $0x1c8] sm:%s1051] %v1288
                %v1290 = vld [vmem:[%s1058 + $0x1d4] sm:%s1051]
                %1291 = vst [vmem:[%s1059 + $0x1cc] sm:%s1051] %v1290
                %v1292 = vld [vmem:[%s1058 + $0x1c8] sm:%s1051]
                %1293 = vst [vmem:[%s1059 + $0x1d0] sm:%s1051] %v1292
                %v1294 = vld [vmem:[%s1058 + $0x1d8] sm:%s1051]
                %1295 = vst [vmem:[%s1059 + $0x1d4] sm:%s1051] %v1294
                %v1296 = vld [vmem:[%s1058 + $0x1cc] sm:%s1051]
                %1297 = vst [vmem:[%s1059 + $0x1d8] sm:%s1051] %v1296
                %v1298 = vld [vmem:[%s1058 + $0x1dc] sm:%s1051]
                %1299 = vst [vmem:[%s1059 + $0x1dc] sm:%s1051] %v1298
                %v1300 = vld [vmem:[%s1058 + $0x1e0] sm:%s1051]
                %1301 = vst [vmem:[%s1059 + $0x1e0] sm:%s1051] %v1300
                %v1302 = vld [vmem:[%s1058 + $0x1f0] sm:%s1051]
                %1303 = vst [vmem:[%s1059 + $0x1e4] sm:%s1051] %v1302
                %v1304 = vld [vmem:[%s1058 + $0x1e4] sm:%s1051]
                %1305 = vst [vmem:[%s1059 + $0x1e8] sm:%s1051] %v1304
                %v1306 = vld [vmem:[%s1058 + $0x1f4] sm:%s1051]
                %1307 = vst [vmem:[%s1059 + $0x1ec] sm:%s1051] %v1306
                %v1308 = vld [vmem:[%s1058 + $0x1e8] sm:%s1051]
                %1309 = vst [vmem:[%s1059 + $0x1f0] sm:%s1051] %v1308
                %v1310 = vld [vmem:[%s1058 + $0x1f8] sm:%s1051]
                %1311 = vst [vmem:[%s1059 + $0x1f4] sm:%s1051] %v1310
                %v1312 = vld [vmem:[%s1058 + $0x1ec] sm:%s1051]
                %1313 = vst [vmem:[%s1059 + $0x1f8] sm:%s1051] %v1312
                %v1314 = vld [vmem:[%s1058 + $0x1fc] sm:%s1051]
                %1315 = vst [vmem:[%s1059 + $0x1fc] sm:%s1051] %v1314
                %v1316 = vld [vmem:[%s1058 + $0x200] sm:%s1051]
                %1317 = vst [vmem:[%s1059 + $0x200] sm:%s1051] %v1316
                %v1318 = vld [vmem:[%s1058 + $0x210] sm:%s1051]
                %1319 = vst [vmem:[%s1059 + $0x204] sm:%s1051] %v1318
                %v1320 = vld [vmem:[%s1058 + $0x204] sm:%s1051]
                %1321 = vst [vmem:[%s1059 + $0x208] sm:%s1051] %v1320
                %v1322 = vld [vmem:[%s1058 + $0x214] sm:%s1051]
                %1323 = vst [vmem:[%s1059 + $0x20c] sm:%s1051] %v1322
                %v1324 = vld [vmem:[%s1058 + $0x208] sm:%s1051]
                %1325 = vst [vmem:[%s1059 + $0x210] sm:%s1051] %v1324
                %v1326 = vld [vmem:[%s1058 + $0x218] sm:%s1051]
                %1327 = vst [vmem:[%s1059 + $0x214] sm:%s1051] %v1326
                %v1328 = vld [vmem:[%s1058 + $0x20c] sm:%s1051]
                %1329 = vst [vmem:[%s1059 + $0x218] sm:%s1051] %v1328
                %v1330 = vld [vmem:[%s1058 + $0x21c] sm:%s1051]
                %1331 = vst [vmem:[%s1059 + $0x21c] sm:%s1051] %v1330
                %v1332 = vld [vmem:[%s1058 + $0x220] sm:%s1051]
                %1333 = vst [vmem:[%s1059 + $0x220] sm:%s1051] %v1332
                %v1334 = vld [vmem:[%s1058 + $0x230] sm:%s1051]
                %1335 = vst [vmem:[%s1059 + $0x224] sm:%s1051] %v1334
                %v1336 = vld [vmem:[%s1058 + $0x224] sm:%s1051]
                %1337 = vst [vmem:[%s1059 + $0x228] sm:%s1051] %v1336
                %v1338 = vld [vmem:[%s1058 + $0x234] sm:%s1051]
                %1339 = vst [vmem:[%s1059 + $0x22c] sm:%s1051] %v1338
                %v1340 = vld [vmem:[%s1058 + $0x228] sm:%s1051]
                %1341 = vst [vmem:[%s1059 + $0x230] sm:%s1051] %v1340
                %v1342 = vld [vmem:[%s1058 + $0x238] sm:%s1051]
                %1343 = vst [vmem:[%s1059 + $0x234] sm:%s1051] %v1342
                %v1344 = vld [vmem:[%s1058 + $0x22c] sm:%s1051]
                %1345 = vst [vmem:[%s1059 + $0x238] sm:%s1051] %v1344
                %v1346 = vld [vmem:[%s1058 + $0x23c] sm:%s1051]
                %1347 = vst [vmem:[%s1059 + $0x23c] sm:%s1051] %v1346
                %v1348 = vld [vmem:[%s1058 + $0x240] sm:%s1051]
                %1349 = vst [vmem:[%s1059 + $0x240] sm:%s1051] %v1348
                %v1350 = vld [vmem:[%s1058 + $0x250] sm:%s1051]
                %1351 = vst [vmem:[%s1059 + $0x244] sm:%s1051] %v1350
                %v1352 = vld [vmem:[%s1058 + $0x244] sm:%s1051]
                %1353 = vst [vmem:[%s1059 + $0x248] sm:%s1051] %v1352
                %v1354 = vld [vmem:[%s1058 + $0x254] sm:%s1051]
                %1355 = vst [vmem:[%s1059 + $0x24c] sm:%s1051] %v1354
                %v1356 = vld [vmem:[%s1058 + $0x248] sm:%s1051]
                %1357 = vst [vmem:[%s1059 + $0x250] sm:%s1051] %v1356
                %v1358 = vld [vmem:[%s1058 + $0x258] sm:%s1051]
                %1359 = vst [vmem:[%s1059 + $0x254] sm:%s1051] %v1358
                %v1360 = vld [vmem:[%s1058 + $0x24c] sm:%s1051]
                %1361 = vst [vmem:[%s1059 + $0x258] sm:%s1051] %v1360
                %v1362 = vld [vmem:[%s1058 + $0x25c] sm:%s1051]
                %1363 = vst [vmem:[%s1059 + $0x25c] sm:%s1051] %v1362
                %v1364 = vld [vmem:[%s1058 + $0x260] sm:%s1051]
                %1365 = vst [vmem:[%s1059 + $0x260] sm:%s1051] %v1364
                %v1366 = vld [vmem:[%s1058 + $0x270] sm:%s1051]
                %1367 = vst [vmem:[%s1059 + $0x264] sm:%s1051] %v1366
                %v1368 = vld [vmem:[%s1058 + $0x264] sm:%s1051]
                %1369 = vst [vmem:[%s1059 + $0x268] sm:%s1051] %v1368
                %v1370 = vld [vmem:[%s1058 + $0x274] sm:%s1051]
                %1371 = vst [vmem:[%s1059 + $0x26c] sm:%s1051] %v1370
                %v1372 = vld [vmem:[%s1058 + $0x268] sm:%s1051]
                %1373 = vst [vmem:[%s1059 + $0x270] sm:%s1051] %v1372
                %v1374 = vld [vmem:[%s1058 + $0x278] sm:%s1051]
                %1375 = vst [vmem:[%s1059 + $0x274] sm:%s1051] %v1374
                %v1376 = vld [vmem:[%s1058 + $0x26c] sm:%s1051]
                %1377 = vst [vmem:[%s1059 + $0x278] sm:%s1051] %v1376
                %v1378 = vld [vmem:[%s1058 + $0x27c] sm:%s1051]
                %1379 = vst [vmem:[%s1059 + $0x27c] sm:%s1051] %v1378
                %v1380 = vld [vmem:[%s1058 + $0x280] sm:%s1051]
                %1381 = vst [vmem:[%s1059 + $0x280] sm:%s1051] %v1380
                %v1382 = vld [vmem:[%s1058 + $0x290] sm:%s1051]
                %1383 = vst [vmem:[%s1059 + $0x284] sm:%s1051] %v1382
                %v1384 = vld [vmem:[%s1058 + $0x284] sm:%s1051]
                %1385 = vst [vmem:[%s1059 + $0x288] sm:%s1051] %v1384
                %v1386 = vld [vmem:[%s1058 + $0x294] sm:%s1051]
                %1387 = vst [vmem:[%s1059 + $0x28c] sm:%s1051] %v1386
                %v1388 = vld [vmem:[%s1058 + $0x288] sm:%s1051]
                %1389 = vst [vmem:[%s1059 + $0x290] sm:%s1051] %v1388
                %v1390 = vld [vmem:[%s1058 + $0x298] sm:%s1051]
                %1391 = vst [vmem:[%s1059 + $0x294] sm:%s1051] %v1390
                %v1392 = vld [vmem:[%s1058 + $0x28c] sm:%s1051]
                %1393 = vst [vmem:[%s1059 + $0x298] sm:%s1051] %v1392
                %v1394 = vld [vmem:[%s1058 + $0x29c] sm:%s1051]
                %1395 = vst [vmem:[%s1059 + $0x29c] sm:%s1051] %v1394
                %v1396 = vld [vmem:[%s1058 + $0x2a0] sm:%s1051]
                %1397 = vst [vmem:[%s1059 + $0x2a0] sm:%s1051] %v1396
                %v1398 = vld [vmem:[%s1058 + $0x2b0] sm:%s1051]
                %1399 = vst [vmem:[%s1059 + $0x2a4] sm:%s1051] %v1398
                %v1400 = vld [vmem:[%s1058 + $0x2a4] sm:%s1051]
                %1401 = vst [vmem:[%s1059 + $0x2a8] sm:%s1051] %v1400
                %v1402 = vld [vmem:[%s1058 + $0x2b4] sm:%s1051]
                %1403 = vst [vmem:[%s1059 + $0x2ac] sm:%s1051] %v1402
                %v1404 = vld [vmem:[%s1058 + $0x2a8] sm:%s1051]
                %1405 = vst [vmem:[%s1059 + $0x2b0] sm:%s1051] %v1404
                %v1406 = vld [vmem:[%s1058 + $0x2b8] sm:%s1051]
                %1407 = vst [vmem:[%s1059 + $0x2b4] sm:%s1051] %v1406
                %v1408 = vld [vmem:[%s1058 + $0x2ac] sm:%s1051]
                %1409 = vst [vmem:[%s1059 + $0x2b8] sm:%s1051] %v1408
                %v1410 = vld [vmem:[%s1058 + $0x2bc] sm:%s1051]
                %1411 = vst [vmem:[%s1059 + $0x2bc] sm:%s1051] %v1410
                %v1412 = vld [vmem:[%s1058 + $0x2c0] sm:%s1051]
                %1413 = vst [vmem:[%s1059 + $0x2c0] sm:%s1051] %v1412
                %v1414 = vld [vmem:[%s1058 + $0x2d0] sm:%s1051]
                %1415 = vst [vmem:[%s1059 + $0x2c4] sm:%s1051] %v1414
                %v1416 = vld [vmem:[%s1058 + $0x2c4] sm:%s1051]
                %1417 = vst [vmem:[%s1059 + $0x2c8] sm:%s1051] %v1416
                %v1418 = vld [vmem:[%s1058 + $0x2d4] sm:%s1051]
                %1419 = vst [vmem:[%s1059 + $0x2cc] sm:%s1051] %v1418
                %v1420 = vld [vmem:[%s1058 + $0x2c8] sm:%s1051]
                %1421 = vst [vmem:[%s1059 + $0x2d0] sm:%s1051] %v1420
                %v1422 = vld [vmem:[%s1058 + $0x2d8] sm:%s1051]
                %1423 = vst [vmem:[%s1059 + $0x2d4] sm:%s1051] %v1422
                %v1424 = vld [vmem:[%s1058 + $0x2cc] sm:%s1051]
                %1425 = vst [vmem:[%s1059 + $0x2d8] sm:%s1051] %v1424
                %v1426 = vld [vmem:[%s1058 + $0x2dc] sm:%s1051]
                %1427 = vst [vmem:[%s1059 + $0x2dc] sm:%s1051] %v1426
                %v1428 = vld [vmem:[%s1058 + $0x2e0] sm:%s1051]
                %1429 = vst [vmem:[%s1059 + $0x2e0] sm:%s1051] %v1428
                %v1430 = vld [vmem:[%s1058 + $0x2f0] sm:%s1051]
                %1431 = vst [vmem:[%s1059 + $0x2e4] sm:%s1051] %v1430
                %v1432 = vld [vmem:[%s1058 + $0x2e4] sm:%s1051]
                %1433 = vst [vmem:[%s1059 + $0x2e8] sm:%s1051] %v1432
                %v1434 = vld [vmem:[%s1058 + $0x2f4] sm:%s1051]
                %1435 = vst [vmem:[%s1059 + $0x2ec] sm:%s1051] %v1434
                %v1436 = vld [vmem:[%s1058 + $0x2e8] sm:%s1051]
                %1437 = vst [vmem:[%s1059 + $0x2f0] sm:%s1051] %v1436
                %v1438 = vld [vmem:[%s1058 + $0x2f8] sm:%s1051]
                %1439 = vst [vmem:[%s1059 + $0x2f4] sm:%s1051] %v1438
                %v1440 = vld [vmem:[%s1058 + $0x2ec] sm:%s1051]
                %1441 = vst [vmem:[%s1059 + $0x2f8] sm:%s1051] %v1440
                %v1442 = vld [vmem:[%s1058 + $0x2fc] sm:%s1051]
                %1443 = vst [vmem:[%s1059 + $0x2fc] sm:%s1051] %v1442
                %v1444 = vld [vmem:[%s1058 + $0x300] sm:%s1051]
                %1445 = vst [vmem:[%s1059 + $0x300] sm:%s1051] %v1444
                %v1446 = vld [vmem:[%s1058 + $0x310] sm:%s1051]
                %1447 = vst [vmem:[%s1059 + $0x304] sm:%s1051] %v1446
                %v1448 = vld [vmem:[%s1058 + $0x304] sm:%s1051]
                %1449 = vst [vmem:[%s1059 + $0x308] sm:%s1051] %v1448
                %v1450 = vld [vmem:[%s1058 + $0x314] sm:%s1051]
                %1451 = vst [vmem:[%s1059 + $0x30c] sm:%s1051] %v1450
                %v1452 = vld [vmem:[%s1058 + $0x308] sm:%s1051]
                %1453 = vst [vmem:[%s1059 + $0x310] sm:%s1051] %v1452
                %v1454 = vld [vmem:[%s1058 + $0x318] sm:%s1051]
                %1455 = vst [vmem:[%s1059 + $0x314] sm:%s1051] %v1454
                %v1456 = vld [vmem:[%s1058 + $0x30c] sm:%s1051]
                %1457 = vst [vmem:[%s1059 + $0x318] sm:%s1051] %v1456
                %v1458 = vld [vmem:[%s1058 + $0x31c] sm:%s1051]
                %1459 = vst [vmem:[%s1059 + $0x31c] sm:%s1051] %v1458
                %v1460 = vld [vmem:[%s1058 + $0x320] sm:%s1051]
                %1461 = vst [vmem:[%s1059 + $0x320] sm:%s1051] %v1460
                %v1462 = vld [vmem:[%s1058 + $0x330] sm:%s1051]
                %1463 = vst [vmem:[%s1059 + $0x324] sm:%s1051] %v1462
                %v1464 = vld [vmem:[%s1058 + $0x324] sm:%s1051]
                %1465 = vst [vmem:[%s1059 + $0x328] sm:%s1051] %v1464
                %v1466 = vld [vmem:[%s1058 + $0x334] sm:%s1051]
                %1467 = vst [vmem:[%s1059 + $0x32c] sm:%s1051] %v1466
                %v1468 = vld [vmem:[%s1058 + $0x328] sm:%s1051]
                %1469 = vst [vmem:[%s1059 + $0x330] sm:%s1051] %v1468
                %v1470 = vld [vmem:[%s1058 + $0x338] sm:%s1051]
                %1471 = vst [vmem:[%s1059 + $0x334] sm:%s1051] %v1470
                %v1472 = vld [vmem:[%s1058 + $0x32c] sm:%s1051]
                %1473 = vst [vmem:[%s1059 + $0x338] sm:%s1051] %v1472
                %v1474 = vld [vmem:[%s1058 + $0x33c] sm:%s1051]
                %1475 = vst [vmem:[%s1059 + $0x33c] sm:%s1051] %v1474
                %v1476 = vld [vmem:[%s1058 + $0x340] sm:%s1051]
                %1477 = vst [vmem:[%s1059 + $0x340] sm:%s1051] %v1476
                %v1478 = vld [vmem:[%s1058 + $0x350] sm:%s1051]
                %1479 = vst [vmem:[%s1059 + $0x344] sm:%s1051] %v1478
                %v1480 = vld [vmem:[%s1058 + $0x344] sm:%s1051]
                %1481 = vst [vmem:[%s1059 + $0x348] sm:%s1051] %v1480
                %v1482 = vld [vmem:[%s1058 + $0x354] sm:%s1051]
                %1483 = vst [vmem:[%s1059 + $0x34c] sm:%s1051] %v1482
                %v1484 = vld [vmem:[%s1058 + $0x348] sm:%s1051]
                %1485 = vst [vmem:[%s1059 + $0x350] sm:%s1051] %v1484
                %v1486 = vld [vmem:[%s1058 + $0x358] sm:%s1051]
                %1487 = vst [vmem:[%s1059 + $0x354] sm:%s1051] %v1486
                %v1488 = vld [vmem:[%s1058 + $0x34c] sm:%s1051]
                %1489 = vst [vmem:[%s1059 + $0x358] sm:%s1051] %v1488
                %v1490 = vld [vmem:[%s1058 + $0x35c] sm:%s1051]
                %1491 = vst [vmem:[%s1059 + $0x35c] sm:%s1051] %v1490
                %v1492 = vld [vmem:[%s1058 + $0x360] sm:%s1051]
                %1493 = vst [vmem:[%s1059 + $0x360] sm:%s1051] %v1492
                %v1494 = vld [vmem:[%s1058 + $0x370] sm:%s1051]
                %1495 = vst [vmem:[%s1059 + $0x364] sm:%s1051] %v1494
                %v1496 = vld [vmem:[%s1058 + $0x364] sm:%s1051]
                %1497 = vst [vmem:[%s1059 + $0x368] sm:%s1051] %v1496
                %v1498 = vld [vmem:[%s1058 + $0x374] sm:%s1051]
                %1499 = vst [vmem:[%s1059 + $0x36c] sm:%s1051] %v1498
                %v1500 = vld [vmem:[%s1058 + $0x368] sm:%s1051]
                %1501 = vst [vmem:[%s1059 + $0x370] sm:%s1051] %v1500
                %v1502 = vld [vmem:[%s1058 + $0x378] sm:%s1051]
                %1503 = vst [vmem:[%s1059 + $0x374] sm:%s1051] %v1502
                %v1504 = vld [vmem:[%s1058 + $0x36c] sm:%s1051]
                %1505 = vst [vmem:[%s1059 + $0x378] sm:%s1051] %v1504
                %v1506 = vld [vmem:[%s1058 + $0x37c] sm:%s1051]
                %1507 = vst [vmem:[%s1059 + $0x37c] sm:%s1051] %v1506
                %v1508 = vld [vmem:[%s1058 + $0x380] sm:%s1051]
                %1509 = vst [vmem:[%s1059 + $0x380] sm:%s1051] %v1508
                %v1510 = vld [vmem:[%s1058 + $0x390] sm:%s1051]
                %1511 = vst [vmem:[%s1059 + $0x384] sm:%s1051] %v1510
                %v1512 = vld [vmem:[%s1058 + $0x384] sm:%s1051]
                %1513 = vst [vmem:[%s1059 + $0x388] sm:%s1051] %v1512
                %v1514 = vld [vmem:[%s1058 + $0x394] sm:%s1051]
                %1515 = vst [vmem:[%s1059 + $0x38c] sm:%s1051] %v1514
                %v1516 = vld [vmem:[%s1058 + $0x388] sm:%s1051]
                %1517 = vst [vmem:[%s1059 + $0x390] sm:%s1051] %v1516
                %v1518 = vld [vmem:[%s1058 + $0x398] sm:%s1051]
                %1519 = vst [vmem:[%s1059 + $0x394] sm:%s1051] %v1518
                %v1520 = vld [vmem:[%s1058 + $0x38c] sm:%s1051]
                %1521 = vst [vmem:[%s1059 + $0x398] sm:%s1051] %v1520
                %v1522 = vld [vmem:[%s1058 + $0x39c] sm:%s1051]
                %1523 = vst [vmem:[%s1059 + $0x39c] sm:%s1051] %v1522
                %v1524 = vld [vmem:[%s1058 + $0x3a0] sm:%s1051]
                %1525 = vst [vmem:[%s1059 + $0x3a0] sm:%s1051] %v1524
                %v1526 = vld [vmem:[%s1058 + $0x3b0] sm:%s1051]
                %1527 = vst [vmem:[%s1059 + $0x3a4] sm:%s1051] %v1526
                %v1528 = vld [vmem:[%s1058 + $0x3a4] sm:%s1051]
                %1529 = vst [vmem:[%s1059 + $0x3a8] sm:%s1051] %v1528
                %v1530 = vld [vmem:[%s1058 + $0x3b4] sm:%s1051]
                %1531 = vst [vmem:[%s1059 + $0x3ac] sm:%s1051] %v1530
                %v1532 = vld [vmem:[%s1058 + $0x3a8] sm:%s1051]
                %1533 = vst [vmem:[%s1059 + $0x3b0] sm:%s1051] %v1532
                %v1534 = vld [vmem:[%s1058 + $0x3b8] sm:%s1051]
                %1535 = vst [vmem:[%s1059 + $0x3b4] sm:%s1051] %v1534
                %v1536 = vld [vmem:[%s1058 + $0x3ac] sm:%s1051]
                %1537 = vst [vmem:[%s1059 + $0x3b8] sm:%s1051] %v1536
                %v1538 = vld [vmem:[%s1058 + $0x3bc] sm:%s1051]
                %1539 = vst [vmem:[%s1059 + $0x3bc] sm:%s1051] %v1538
                %v1540 = vld [vmem:[%s1058 + $0x3c0] sm:%s1051]
                %1541 = vst [vmem:[%s1059 + $0x3c0] sm:%s1051] %v1540
                %v1542 = vld [vmem:[%s1058 + $0x3d0] sm:%s1051]
                %1543 = vst [vmem:[%s1059 + $0x3c4] sm:%s1051] %v1542
                %v1544 = vld [vmem:[%s1058 + $0x3c4] sm:%s1051]
                %1545 = vst [vmem:[%s1059 + $0x3c8] sm:%s1051] %v1544
                %v1546 = vld [vmem:[%s1058 + $0x3d4] sm:%s1051]
                %1547 = vst [vmem:[%s1059 + $0x3cc] sm:%s1051] %v1546
                %v1548 = vld [vmem:[%s1058 + $0x3c8] sm:%s1051]
                %1549 = vst [vmem:[%s1059 + $0x3d0] sm:%s1051] %v1548
                %v1550 = vld [vmem:[%s1058 + $0x3d8] sm:%s1051]
                %1551 = vst [vmem:[%s1059 + $0x3d4] sm:%s1051] %v1550
                %v1552 = vld [vmem:[%s1058 + $0x3cc] sm:%s1051]
                %1553 = vst [vmem:[%s1059 + $0x3d8] sm:%s1051] %v1552
                %v1554 = vld [vmem:[%s1058 + $0x3dc] sm:%s1051]
                %1555 = vst [vmem:[%s1059 + $0x3dc] sm:%s1051] %v1554
                %v1556 = vld [vmem:[%s1058 + $0x3e0] sm:%s1051]
                %1557 = vst [vmem:[%s1059 + $0x3e0] sm:%s1051] %v1556
                %v1558 = vld [vmem:[%s1058 + $0x3f0] sm:%s1051]
                %1559 = vst [vmem:[%s1059 + $0x3e4] sm:%s1051] %v1558
                %v1560 = vld [vmem:[%s1058 + $0x3e4] sm:%s1051]
                %1561 = vst [vmem:[%s1059 + $0x3e8] sm:%s1051] %v1560
                %v1562 = vld [vmem:[%s1058 + $0x3f4] sm:%s1051]
                %1563 = vst [vmem:[%s1059 + $0x3ec] sm:%s1051] %v1562
                %v1564 = vld [vmem:[%s1058 + $0x3e8] sm:%s1051]
                %1565 = vst [vmem:[%s1059 + $0x3f0] sm:%s1051] %v1564
                %v1566 = vld [vmem:[%s1058 + $0x3f8] sm:%s1051]
                %1567 = vst [vmem:[%s1059 + $0x3f4] sm:%s1051] %v1566
                %v1568 = vld [vmem:[%s1058 + $0x3ec] sm:%s1051]
                %1569 = vst [vmem:[%s1059 + $0x3f8] sm:%s1051] %v1568
                %v1570 = vld [vmem:[%s1058 + $0x3fc] sm:%s1051]
                %1571 = vst [vmem:[%s1059 + $0x3fc] sm:%s1051] %v1570
              $region113: #{tpu_custom_call.1} parent=100 // loop_footer
                %s1057 = sadd.s32 1, %s1053
              $region114: #{tpu_custom_call.1} parent=100 // loop_footer_branch
                %1052 = sbr.rel target = $region110
              $region115: #{tpu_custom_call.1} parent=100 // loop_exit
                _
            $region101: #{tpu_custom_call.1} parent=85 // pred_fallthru
              _
          $region86: #{tpu_custom_call.1} parent=47 // pred_fallthru
            _
          // Predicated region
          $region87: #{tpu_custom_call.1} parent=47 // pred_check
            %p509 = pneg %p505
          $region88: #{tpu_custom_call.1} parent=47 // pred_check_branch
            %511 = sbr.rel (%p509) target = $region90
          $region89: #{tpu_custom_call.1} parent=47 // pred_region
            %s512 = sshllo.u32 0, 4
            loop: start=0, step=1, limit=1
            $region91: #{tpu_custom_call.1} parent=89 // loop_pre_header
              _
            $region92: #{tpu_custom_call.1} parent=89 // loop_header
              %s514 = sphi 0, %s518
              %p515 = scmp.ge.s32.totalorder %s514, 1
              %s519 = sphi %s2, %s2
              %s520 = sphi [#allocation6], [#allocation6]
            $region93: #{tpu_custom_call.1} parent=89 // loop_header_branch
              %517 = sbr.rel (%p515) target = $region97
            $region94: #{tpu_custom_call.1} parent=89 // loop_body
              %v521 = vld [vmem:[%s519] sm:%s512]
              %522 = vst [vmem:[%s520] sm:%s512] %v521
              %v523 = vld [vmem:[%s519 + $0x10] sm:%s512]
              %524 = vst [vmem:[%s520 + $0x4] sm:%s512] %v523
              %v525 = vld [vmem:[%s519 + $0x4] sm:%s512]
              %526 = vst [vmem:[%s520 + $0x8] sm:%s512] %v525
              %v527 = vld [vmem:[%s519 + $0x14] sm:%s512]
              %528 = vst [vmem:[%s520 + $0xc] sm:%s512] %v527
              %v529 = vld [vmem:[%s519 + $0x8] sm:%s512]
              %530 = vst [vmem:[%s520 + $0x10] sm:%s512] %v529
              %v531 = vld [vmem:[%s519 + $0x18] sm:%s512]
              %532 = vst [vmem:[%s520 + $0x14] sm:%s512] %v531
              %v533 = vld [vmem:[%s519 + $0xc] sm:%s512]
              %534 = vst [vmem:[%s520 + $0x18] sm:%s512] %v533
              %v535 = vld [vmem:[%s519 + $0x1c] sm:%s512]
              %536 = vst [vmem:[%s520 + $0x1c] sm:%s512] %v535
              %v537 = vld [vmem:[%s519 + $0x20] sm:%s512]
              %538 = vst [vmem:[%s520 + $0x20] sm:%s512] %v537
              %v539 = vld [vmem:[%s519 + $0x30] sm:%s512]
              %540 = vst [vmem:[%s520 + $0x24] sm:%s512] %v539
              %v541 = vld [vmem:[%s519 + $0x24] sm:%s512]
              %542 = vst [vmem:[%s520 + $0x28] sm:%s512] %v541
              %v543 = vld [vmem:[%s519 + $0x34] sm:%s512]
              %544 = vst [vmem:[%s520 + $0x2c] sm:%s512] %v543
              %v545 = vld [vmem:[%s519 + $0x28] sm:%s512]
              %546 = vst [vmem:[%s520 + $0x30] sm:%s512] %v545
              %v547 = vld [vmem:[%s519 + $0x38] sm:%s512]
              %548 = vst [vmem:[%s520 + $0x34] sm:%s512] %v547
              %v549 = vld [vmem:[%s519 + $0x2c] sm:%s512]
              %550 = vst [vmem:[%s520 + $0x38] sm:%s512] %v549
              %v551 = vld [vmem:[%s519 + $0x3c] sm:%s512]
              %552 = vst [vmem:[%s520 + $0x3c] sm:%s512] %v551
              %v553 = vld [vmem:[%s519 + $0x40] sm:%s512]
              %554 = vst [vmem:[%s520 + $0x40] sm:%s512] %v553
              %v555 = vld [vmem:[%s519 + $0x50] sm:%s512]
              %556 = vst [vmem:[%s520 + $0x44] sm:%s512] %v555
              %v557 = vld [vmem:[%s519 + $0x44] sm:%s512]
              %558 = vst [vmem:[%s520 + $0x48] sm:%s512] %v557
              %v559 = vld [vmem:[%s519 + $0x54] sm:%s512]
              %560 = vst [vmem:[%s520 + $0x4c] sm:%s512] %v559
              %v561 = vld [vmem:[%s519 + $0x48] sm:%s512]
              %562 = vst [vmem:[%s520 + $0x50] sm:%s512] %v561
              %v563 = vld [vmem:[%s519 + $0x58] sm:%s512]
              %564 = vst [vmem:[%s520 + $0x54] sm:%s512] %v563
              %v565 = vld [vmem:[%s519 + $0x4c] sm:%s512]
              %566 = vst [vmem:[%s520 + $0x58] sm:%s512] %v565
              %v567 = vld [vmem:[%s519 + $0x5c] sm:%s512]
              %568 = vst [vmem:[%s520 + $0x5c] sm:%s512] %v567
              %v569 = vld [vmem:[%s519 + $0x60] sm:%s512]
              %570 = vst [vmem:[%s520 + $0x60] sm:%s512] %v569
              %v571 = vld [vmem:[%s519 + $0x70] sm:%s512]
              %572 = vst [vmem:[%s520 + $0x64] sm:%s512] %v571
              %v573 = vld [vmem:[%s519 + $0x64] sm:%s512]
              %574 = vst [vmem:[%s520 + $0x68] sm:%s512] %v573
              %v575 = vld [vmem:[%s519 + $0x74] sm:%s512]
              %576 = vst [vmem:[%s520 + $0x6c] sm:%s512] %v575
              %v577 = vld [vmem:[%s519 + $0x68] sm:%s512]
              %578 = vst [vmem:[%s520 + $0x70] sm:%s512] %v577
              %v579 = vld [vmem:[%s519 + $0x78] sm:%s512]
              %580 = vst [vmem:[%s520 + $0x74] sm:%s512] %v579
              %v581 = vld [vmem:[%s519 + $0x6c] sm:%s512]
              %582 = vst [vmem:[%s520 + $0x78] sm:%s512] %v581
              %v583 = vld [vmem:[%s519 + $0x7c] sm:%s512]
              %584 = vst [vmem:[%s520 + $0x7c] sm:%s512] %v583
              %v585 = vld [vmem:[%s519 + $0x80] sm:%s512]
              %586 = vst [vmem:[%s520 + $0x80] sm:%s512] %v585
              %v587 = vld [vmem:[%s519 + $0x90] sm:%s512]
              %588 = vst [vmem:[%s520 + $0x84] sm:%s512] %v587
              %v589 = vld [vmem:[%s519 + $0x84] sm:%s512]
              %590 = vst [vmem:[%s520 + $0x88] sm:%s512] %v589
              %v591 = vld [vmem:[%s519 + $0x94] sm:%s512]
              %592 = vst [vmem:[%s520 + $0x8c] sm:%s512] %v591
              %v593 = vld [vmem:[%s519 + $0x88] sm:%s512]
              %594 = vst [vmem:[%s520 + $0x90] sm:%s512] %v593
              %v595 = vld [vmem:[%s519 + $0x98] sm:%s512]
              %596 = vst [vmem:[%s520 + $0x94] sm:%s512] %v595
              %v597 = vld [vmem:[%s519 + $0x8c] sm:%s512]
              %598 = vst [vmem:[%s520 + $0x98] sm:%s512] %v597
              %v599 = vld [vmem:[%s519 + $0x9c] sm:%s512]
              %600 = vst [vmem:[%s520 + $0x9c] sm:%s512] %v599
              %v601 = vld [vmem:[%s519 + $0xa0] sm:%s512]
              %602 = vst [vmem:[%s520 + $0xa0] sm:%s512] %v601
              %v603 = vld [vmem:[%s519 + $0xb0] sm:%s512]
              %604 = vst [vmem:[%s520 + $0xa4] sm:%s512] %v603
              %v605 = vld [vmem:[%s519 + $0xa4] sm:%s512]
              %606 = vst [vmem:[%s520 + $0xa8] sm:%s512] %v605
              %v607 = vld [vmem:[%s519 + $0xb4] sm:%s512]
              %608 = vst [vmem:[%s520 + $0xac] sm:%s512] %v607
              %v609 = vld [vmem:[%s519 + $0xa8] sm:%s512]
              %610 = vst [vmem:[%s520 + $0xb0] sm:%s512] %v609
              %v611 = vld [vmem:[%s519 + $0xb8] sm:%s512]
              %612 = vst [vmem:[%s520 + $0xb4] sm:%s512] %v611
              %v613 = vld [vmem:[%s519 + $0xac] sm:%s512]
              %614 = vst [vmem:[%s520 + $0xb8] sm:%s512] %v613
              %v615 = vld [vmem:[%s519 + $0xbc] sm:%s512]
              %616 = vst [vmem:[%s520 + $0xbc] sm:%s512] %v615
              %v617 = vld [vmem:[%s519 + $0xc0] sm:%s512]
              %618 = vst [vmem:[%s520 + $0xc0] sm:%s512] %v617
              %v619 = vld [vmem:[%s519 + $0xd0] sm:%s512]
              %620 = vst [vmem:[%s520 + $0xc4] sm:%s512] %v619
              %v621 = vld [vmem:[%s519 + $0xc4] sm:%s512]
              %622 = vst [vmem:[%s520 + $0xc8] sm:%s512] %v621
              %v623 = vld [vmem:[%s519 + $0xd4] sm:%s512]
              %624 = vst [vmem:[%s520 + $0xcc] sm:%s512] %v623
              %v625 = vld [vmem:[%s519 + $0xc8] sm:%s512]
              %626 = vst [vmem:[%s520 + $0xd0] sm:%s512] %v625
              %v627 = vld [vmem:[%s519 + $0xd8] sm:%s512]
              %628 = vst [vmem:[%s520 + $0xd4] sm:%s512] %v627
              %v629 = vld [vmem:[%s519 + $0xcc] sm:%s512]
              %630 = vst [vmem:[%s520 + $0xd8] sm:%s512] %v629
              %v631 = vld [vmem:[%s519 + $0xdc] sm:%s512]
              %632 = vst [vmem:[%s520 + $0xdc] sm:%s512] %v631
              %v633 = vld [vmem:[%s519 + $0xe0] sm:%s512]
              %634 = vst [vmem:[%s520 + $0xe0] sm:%s512] %v633
              %v635 = vld [vmem:[%s519 + $0xf0] sm:%s512]
              %636 = vst [vmem:[%s520 + $0xe4] sm:%s512] %v635
              %v637 = vld [vmem:[%s519 + $0xe4] sm:%s512]
              %638 = vst [vmem:[%s520 + $0xe8] sm:%s512] %v637
              %v639 = vld [vmem:[%s519 + $0xf4] sm:%s512]
              %640 = vst [vmem:[%s520 + $0xec] sm:%s512] %v639
              %v641 = vld [vmem:[%s519 + $0xe8] sm:%s512]
              %642 = vst [vmem:[%s520 + $0xf0] sm:%s512] %v641
              %v643 = vld [vmem:[%s519 + $0xf8] sm:%s512]
              %644 = vst [vmem:[%s520 + $0xf4] sm:%s512] %v643
              %v645 = vld [vmem:[%s519 + $0xec] sm:%s512]
              %646 = vst [vmem:[%s520 + $0xf8] sm:%s512] %v645
              %v647 = vld [vmem:[%s519 + $0xfc] sm:%s512]
              %648 = vst [vmem:[%s520 + $0xfc] sm:%s512] %v647
              %v649 = vld [vmem:[%s519 + $0x100] sm:%s512]
              %650 = vst [vmem:[%s520 + $0x100] sm:%s512] %v649
              %v651 = vld [vmem:[%s519 + $0x110] sm:%s512]
              %652 = vst [vmem:[%s520 + $0x104] sm:%s512] %v651
              %v653 = vld [vmem:[%s519 + $0x104] sm:%s512]
              %654 = vst [vmem:[%s520 + $0x108] sm:%s512] %v653
              %v655 = vld [vmem:[%s519 + $0x114] sm:%s512]
              %656 = vst [vmem:[%s520 + $0x10c] sm:%s512] %v655
              %v657 = vld [vmem:[%s519 + $0x108] sm:%s512]
              %658 = vst [vmem:[%s520 + $0x110] sm:%s512] %v657
              %v659 = vld [vmem:[%s519 + $0x118] sm:%s512]
              %660 = vst [vmem:[%s520 + $0x114] sm:%s512] %v659
              %v661 = vld [vmem:[%s519 + $0x10c] sm:%s512]
              %662 = vst [vmem:[%s520 + $0x118] sm:%s512] %v661
              %v663 = vld [vmem:[%s519 + $0x11c] sm:%s512]
              %664 = vst [vmem:[%s520 + $0x11c] sm:%s512] %v663
              %v665 = vld [vmem:[%s519 + $0x120] sm:%s512]
              %666 = vst [vmem:[%s520 + $0x120] sm:%s512] %v665
              %v667 = vld [vmem:[%s519 + $0x130] sm:%s512]
              %668 = vst [vmem:[%s520 + $0x124] sm:%s512] %v667
              %v669 = vld [vmem:[%s519 + $0x124] sm:%s512]
              %670 = vst [vmem:[%s520 + $0x128] sm:%s512] %v669
              %v671 = vld [vmem:[%s519 + $0x134] sm:%s512]
              %672 = vst [vmem:[%s520 + $0x12c] sm:%s512] %v671
              %v673 = vld [vmem:[%s519 + $0x128] sm:%s512]
              %674 = vst [vmem:[%s520 + $0x130] sm:%s512] %v673
              %v675 = vld [vmem:[%s519 + $0x138] sm:%s512]
              %676 = vst [vmem:[%s520 + $0x134] sm:%s512] %v675
              %v677 = vld [vmem:[%s519 + $0x12c] sm:%s512]
              %678 = vst [vmem:[%s520 + $0x138] sm:%s512] %v677
              %v679 = vld [vmem:[%s519 + $0x13c] sm:%s512]
              %680 = vst [vmem:[%s520 + $0x13c] sm:%s512] %v679
              %v681 = vld [vmem:[%s519 + $0x140] sm:%s512]
              %682 = vst [vmem:[%s520 + $0x140] sm:%s512] %v681
              %v683 = vld [vmem:[%s519 + $0x150] sm:%s512]
              %684 = vst [vmem:[%s520 + $0x144] sm:%s512] %v683
              %v685 = vld [vmem:[%s519 + $0x144] sm:%s512]
              %686 = vst [vmem:[%s520 + $0x148] sm:%s512] %v685
              %v687 = vld [vmem:[%s519 + $0x154] sm:%s512]
              %688 = vst [vmem:[%s520 + $0x14c] sm:%s512] %v687
              %v689 = vld [vmem:[%s519 + $0x148] sm:%s512]
              %690 = vst [vmem:[%s520 + $0x150] sm:%s512] %v689
              %v691 = vld [vmem:[%s519 + $0x158] sm:%s512]
              %692 = vst [vmem:[%s520 + $0x154] sm:%s512] %v691
              %v693 = vld [vmem:[%s519 + $0x14c] sm:%s512]
              %694 = vst [vmem:[%s520 + $0x158] sm:%s512] %v693
              %v695 = vld [vmem:[%s519 + $0x15c] sm:%s512]
              %696 = vst [vmem:[%s520 + $0x15c] sm:%s512] %v695
              %v697 = vld [vmem:[%s519 + $0x160] sm:%s512]
              %698 = vst [vmem:[%s520 + $0x160] sm:%s512] %v697
              %v699 = vld [vmem:[%s519 + $0x170] sm:%s512]
              %700 = vst [vmem:[%s520 + $0x164] sm:%s512] %v699
              %v701 = vld [vmem:[%s519 + $0x164] sm:%s512]
              %702 = vst [vmem:[%s520 + $0x168] sm:%s512] %v701
              %v703 = vld [vmem:[%s519 + $0x174] sm:%s512]
              %704 = vst [vmem:[%s520 + $0x16c] sm:%s512] %v703
              %v705 = vld [vmem:[%s519 + $0x168] sm:%s512]
              %706 = vst [vmem:[%s520 + $0x170] sm:%s512] %v705
              %v707 = vld [vmem:[%s519 + $0x178] sm:%s512]
              %708 = vst [vmem:[%s520 + $0x174] sm:%s512] %v707
              %v709 = vld [vmem:[%s519 + $0x16c] sm:%s512]
              %710 = vst [vmem:[%s520 + $0x178] sm:%s512] %v709
              %v711 = vld [vmem:[%s519 + $0x17c] sm:%s512]
              %712 = vst [vmem:[%s520 + $0x17c] sm:%s512] %v711
              %v713 = vld [vmem:[%s519 + $0x180] sm:%s512]
              %714 = vst [vmem:[%s520 + $0x180] sm:%s512] %v713
              %v715 = vld [vmem:[%s519 + $0x190] sm:%s512]
              %716 = vst [vmem:[%s520 + $0x184] sm:%s512] %v715
              %v717 = vld [vmem:[%s519 + $0x184] sm:%s512]
              %718 = vst [vmem:[%s520 + $0x188] sm:%s512] %v717
              %v719 = vld [vmem:[%s519 + $0x194] sm:%s512]
              %720 = vst [vmem:[%s520 + $0x18c] sm:%s512] %v719
              %v721 = vld [vmem:[%s519 + $0x188] sm:%s512]
              %722 = vst [vmem:[%s520 + $0x190] sm:%s512] %v721
              %v723 = vld [vmem:[%s519 + $0x198] sm:%s512]
              %724 = vst [vmem:[%s520 + $0x194] sm:%s512] %v723
              %v725 = vld [vmem:[%s519 + $0x18c] sm:%s512]
              %726 = vst [vmem:[%s520 + $0x198] sm:%s512] %v725
              %v727 = vld [vmem:[%s519 + $0x19c] sm:%s512]
              %728 = vst [vmem:[%s520 + $0x19c] sm:%s512] %v727
              %v729 = vld [vmem:[%s519 + $0x1a0] sm:%s512]
              %730 = vst [vmem:[%s520 + $0x1a0] sm:%s512] %v729
              %v731 = vld [vmem:[%s519 + $0x1b0] sm:%s512]
              %732 = vst [vmem:[%s520 + $0x1a4] sm:%s512] %v731
              %v733 = vld [vmem:[%s519 + $0x1a4] sm:%s512]
              %734 = vst [vmem:[%s520 + $0x1a8] sm:%s512] %v733
              %v735 = vld [vmem:[%s519 + $0x1b4] sm:%s512]
              %736 = vst [vmem:[%s520 + $0x1ac] sm:%s512] %v735
              %v737 = vld [vmem:[%s519 + $0x1a8] sm:%s512]
              %738 = vst [vmem:[%s520 + $0x1b0] sm:%s512] %v737
              %v739 = vld [vmem:[%s519 + $0x1b8] sm:%s512]
              %740 = vst [vmem:[%s520 + $0x1b4] sm:%s512] %v739
              %v741 = vld [vmem:[%s519 + $0x1ac] sm:%s512]
              %742 = vst [vmem:[%s520 + $0x1b8] sm:%s512] %v741
              %v743 = vld [vmem:[%s519 + $0x1bc] sm:%s512]
              %744 = vst [vmem:[%s520 + $0x1bc] sm:%s512] %v743
              %v745 = vld [vmem:[%s519 + $0x1c0] sm:%s512]
              %746 = vst [vmem:[%s520 + $0x1c0] sm:%s512] %v745
              %v747 = vld [vmem:[%s519 + $0x1d0] sm:%s512]
              %748 = vst [vmem:[%s520 + $0x1c4] sm:%s512] %v747
              %v749 = vld [vmem:[%s519 + $0x1c4] sm:%s512]
              %750 = vst [vmem:[%s520 + $0x1c8] sm:%s512] %v749
              %v751 = vld [vmem:[%s519 + $0x1d4] sm:%s512]
              %752 = vst [vmem:[%s520 + $0x1cc] sm:%s512] %v751
              %v753 = vld [vmem:[%s519 + $0x1c8] sm:%s512]
              %754 = vst [vmem:[%s520 + $0x1d0] sm:%s512] %v753
              %v755 = vld [vmem:[%s519 + $0x1d8] sm:%s512]
              %756 = vst [vmem:[%s520 + $0x1d4] sm:%s512] %v755
              %v757 = vld [vmem:[%s519 + $0x1cc] sm:%s512]
              %758 = vst [vmem:[%s520 + $0x1d8] sm:%s512] %v757
              %v759 = vld [vmem:[%s519 + $0x1dc] sm:%s512]
              %760 = vst [vmem:[%s520 + $0x1dc] sm:%s512] %v759
              %v761 = vld [vmem:[%s519 + $0x1e0] sm:%s512]
              %762 = vst [vmem:[%s520 + $0x1e0] sm:%s512] %v761
              %v763 = vld [vmem:[%s519 + $0x1f0] sm:%s512]
              %764 = vst [vmem:[%s520 + $0x1e4] sm:%s512] %v763
              %v765 = vld [vmem:[%s519 + $0x1e4] sm:%s512]
              %766 = vst [vmem:[%s520 + $0x1e8] sm:%s512] %v765
              %v767 = vld [vmem:[%s519 + $0x1f4] sm:%s512]
              %768 = vst [vmem:[%s520 + $0x1ec] sm:%s512] %v767
              %v769 = vld [vmem:[%s519 + $0x1e8] sm:%s512]
              %770 = vst [vmem:[%s520 + $0x1f0] sm:%s512] %v769
              %v771 = vld [vmem:[%s519 + $0x1f8] sm:%s512]
              %772 = vst [vmem:[%s520 + $0x1f4] sm:%s512] %v771
              %v773 = vld [vmem:[%s519 + $0x1ec] sm:%s512]
              %774 = vst [vmem:[%s520 + $0x1f8] sm:%s512] %v773
              %v775 = vld [vmem:[%s519 + $0x1fc] sm:%s512]
              %776 = vst [vmem:[%s520 + $0x1fc] sm:%s512] %v775
              %v777 = vld [vmem:[%s519 + $0x200] sm:%s512]
              %778 = vst [vmem:[%s520 + $0x200] sm:%s512] %v777
              %v779 = vld [vmem:[%s519 + $0x210] sm:%s512]
              %780 = vst [vmem:[%s520 + $0x204] sm:%s512] %v779
              %v781 = vld [vmem:[%s519 + $0x204] sm:%s512]
              %782 = vst [vmem:[%s520 + $0x208] sm:%s512] %v781
              %v783 = vld [vmem:[%s519 + $0x214] sm:%s512]
              %784 = vst [vmem:[%s520 + $0x20c] sm:%s512] %v783
              %v785 = vld [vmem:[%s519 + $0x208] sm:%s512]
              %786 = vst [vmem:[%s520 + $0x210] sm:%s512] %v785
              %v787 = vld [vmem:[%s519 + $0x218] sm:%s512]
              %788 = vst [vmem:[%s520 + $0x214] sm:%s512] %v787
              %v789 = vld [vmem:[%s519 + $0x20c] sm:%s512]
              %790 = vst [vmem:[%s520 + $0x218] sm:%s512] %v789
              %v791 = vld [vmem:[%s519 + $0x21c] sm:%s512]
              %792 = vst [vmem:[%s520 + $0x21c] sm:%s512] %v791
              %v793 = vld [vmem:[%s519 + $0x220] sm:%s512]
              %794 = vst [vmem:[%s520 + $0x220] sm:%s512] %v793
              %v795 = vld [vmem:[%s519 + $0x230] sm:%s512]
              %796 = vst [vmem:[%s520 + $0x224] sm:%s512] %v795
              %v797 = vld [vmem:[%s519 + $0x224] sm:%s512]
              %798 = vst [vmem:[%s520 + $0x228] sm:%s512] %v797
              %v799 = vld [vmem:[%s519 + $0x234] sm:%s512]
              %800 = vst [vmem:[%s520 + $0x22c] sm:%s512] %v799
              %v801 = vld [vmem:[%s519 + $0x228] sm:%s512]
              %802 = vst [vmem:[%s520 + $0x230] sm:%s512] %v801
              %v803 = vld [vmem:[%s519 + $0x238] sm:%s512]
              %804 = vst [vmem:[%s520 + $0x234] sm:%s512] %v803
              %v805 = vld [vmem:[%s519 + $0x22c] sm:%s512]
              %806 = vst [vmem:[%s520 + $0x238] sm:%s512] %v805
              %v807 = vld [vmem:[%s519 + $0x23c] sm:%s512]
              %808 = vst [vmem:[%s520 + $0x23c] sm:%s512] %v807
              %v809 = vld [vmem:[%s519 + $0x240] sm:%s512]
              %810 = vst [vmem:[%s520 + $0x240] sm:%s512] %v809
              %v811 = vld [vmem:[%s519 + $0x250] sm:%s512]
              %812 = vst [vmem:[%s520 + $0x244] sm:%s512] %v811
              %v813 = vld [vmem:[%s519 + $0x244] sm:%s512]
              %814 = vst [vmem:[%s520 + $0x248] sm:%s512] %v813
              %v815 = vld [vmem:[%s519 + $0x254] sm:%s512]
              %816 = vst [vmem:[%s520 + $0x24c] sm:%s512] %v815
              %v817 = vld [vmem:[%s519 + $0x248] sm:%s512]
              %818 = vst [vmem:[%s520 + $0x250] sm:%s512] %v817
              %v819 = vld [vmem:[%s519 + $0x258] sm:%s512]
              %820 = vst [vmem:[%s520 + $0x254] sm:%s512] %v819
              %v821 = vld [vmem:[%s519 + $0x24c] sm:%s512]
              %822 = vst [vmem:[%s520 + $0x258] sm:%s512] %v821
              %v823 = vld [vmem:[%s519 + $0x25c] sm:%s512]
              %824 = vst [vmem:[%s520 + $0x25c] sm:%s512] %v823
              %v825 = vld [vmem:[%s519 + $0x260] sm:%s512]
              %826 = vst [vmem:[%s520 + $0x260] sm:%s512] %v825
              %v827 = vld [vmem:[%s519 + $0x270] sm:%s512]
              %828 = vst [vmem:[%s520 + $0x264] sm:%s512] %v827
              %v829 = vld [vmem:[%s519 + $0x264] sm:%s512]
              %830 = vst [vmem:[%s520 + $0x268] sm:%s512] %v829
              %v831 = vld [vmem:[%s519 + $0x274] sm:%s512]
              %832 = vst [vmem:[%s520 + $0x26c] sm:%s512] %v831
              %v833 = vld [vmem:[%s519 + $0x268] sm:%s512]
              %834 = vst [vmem:[%s520 + $0x270] sm:%s512] %v833
              %v835 = vld [vmem:[%s519 + $0x278] sm:%s512]
              %836 = vst [vmem:[%s520 + $0x274] sm:%s512] %v835
              %v837 = vld [vmem:[%s519 + $0x26c] sm:%s512]
              %838 = vst [vmem:[%s520 + $0x278] sm:%s512] %v837
              %v839 = vld [vmem:[%s519 + $0x27c] sm:%s512]
              %840 = vst [vmem:[%s520 + $0x27c] sm:%s512] %v839
              %v841 = vld [vmem:[%s519 + $0x280] sm:%s512]
              %842 = vst [vmem:[%s520 + $0x280] sm:%s512] %v841
              %v843 = vld [vmem:[%s519 + $0x290] sm:%s512]
              %844 = vst [vmem:[%s520 + $0x284] sm:%s512] %v843
              %v845 = vld [vmem:[%s519 + $0x284] sm:%s512]
              %846 = vst [vmem:[%s520 + $0x288] sm:%s512] %v845
              %v847 = vld [vmem:[%s519 + $0x294] sm:%s512]
              %848 = vst [vmem:[%s520 + $0x28c] sm:%s512] %v847
              %v849 = vld [vmem:[%s519 + $0x288] sm:%s512]
              %850 = vst [vmem:[%s520 + $0x290] sm:%s512] %v849
              %v851 = vld [vmem:[%s519 + $0x298] sm:%s512]
              %852 = vst [vmem:[%s520 + $0x294] sm:%s512] %v851
              %v853 = vld [vmem:[%s519 + $0x28c] sm:%s512]
              %854 = vst [vmem:[%s520 + $0x298] sm:%s512] %v853
              %v855 = vld [vmem:[%s519 + $0x29c] sm:%s512]
              %856 = vst [vmem:[%s520 + $0x29c] sm:%s512] %v855
              %v857 = vld [vmem:[%s519 + $0x2a0] sm:%s512]
              %858 = vst [vmem:[%s520 + $0x2a0] sm:%s512] %v857
              %v859 = vld [vmem:[%s519 + $0x2b0] sm:%s512]
              %860 = vst [vmem:[%s520 + $0x2a4] sm:%s512] %v859
              %v861 = vld [vmem:[%s519 + $0x2a4] sm:%s512]
              %862 = vst [vmem:[%s520 + $0x2a8] sm:%s512] %v861
              %v863 = vld [vmem:[%s519 + $0x2b4] sm:%s512]
              %864 = vst [vmem:[%s520 + $0x2ac] sm:%s512] %v863
              %v865 = vld [vmem:[%s519 + $0x2a8] sm:%s512]
              %866 = vst [vmem:[%s520 + $0x2b0] sm:%s512] %v865
              %v867 = vld [vmem:[%s519 + $0x2b8] sm:%s512]
              %868 = vst [vmem:[%s520 + $0x2b4] sm:%s512] %v867
              %v869 = vld [vmem:[%s519 + $0x2ac] sm:%s512]
              %870 = vst [vmem:[%s520 + $0x2b8] sm:%s512] %v869
              %v871 = vld [vmem:[%s519 + $0x2bc] sm:%s512]
              %872 = vst [vmem:[%s520 + $0x2bc] sm:%s512] %v871
              %v873 = vld [vmem:[%s519 + $0x2c0] sm:%s512]
              %874 = vst [vmem:[%s520 + $0x2c0] sm:%s512] %v873
              %v875 = vld [vmem:[%s519 + $0x2d0] sm:%s512]
              %876 = vst [vmem:[%s520 + $0x2c4] sm:%s512] %v875
              %v877 = vld [vmem:[%s519 + $0x2c4] sm:%s512]
              %878 = vst [vmem:[%s520 + $0x2c8] sm:%s512] %v877
              %v879 = vld [vmem:[%s519 + $0x2d4] sm:%s512]
              %880 = vst [vmem:[%s520 + $0x2cc] sm:%s512] %v879
              %v881 = vld [vmem:[%s519 + $0x2c8] sm:%s512]
              %882 = vst [vmem:[%s520 + $0x2d0] sm:%s512] %v881
              %v883 = vld [vmem:[%s519 + $0x2d8] sm:%s512]
              %884 = vst [vmem:[%s520 + $0x2d4] sm:%s512] %v883
              %v885 = vld [vmem:[%s519 + $0x2cc] sm:%s512]
              %886 = vst [vmem:[%s520 + $0x2d8] sm:%s512] %v885
              %v887 = vld [vmem:[%s519 + $0x2dc] sm:%s512]
              %888 = vst [vmem:[%s520 + $0x2dc] sm:%s512] %v887
              %v889 = vld [vmem:[%s519 + $0x2e0] sm:%s512]
              %890 = vst [vmem:[%s520 + $0x2e0] sm:%s512] %v889
              %v891 = vld [vmem:[%s519 + $0x2f0] sm:%s512]
              %892 = vst [vmem:[%s520 + $0x2e4] sm:%s512] %v891
              %v893 = vld [vmem:[%s519 + $0x2e4] sm:%s512]
              %894 = vst [vmem:[%s520 + $0x2e8] sm:%s512] %v893
              %v895 = vld [vmem:[%s519 + $0x2f4] sm:%s512]
              %896 = vst [vmem:[%s520 + $0x2ec] sm:%s512] %v895
              %v897 = vld [vmem:[%s519 + $0x2e8] sm:%s512]
              %898 = vst [vmem:[%s520 + $0x2f0] sm:%s512] %v897
              %v899 = vld [vmem:[%s519 + $0x2f8] sm:%s512]
              %900 = vst [vmem:[%s520 + $0x2f4] sm:%s512] %v899
              %v901 = vld [vmem:[%s519 + $0x2ec] sm:%s512]
              %902 = vst [vmem:[%s520 + $0x2f8] sm:%s512] %v901
              %v903 = vld [vmem:[%s519 + $0x2fc] sm:%s512]
              %904 = vst [vmem:[%s520 + $0x2fc] sm:%s512] %v903
              %v905 = vld [vmem:[%s519 + $0x300] sm:%s512]
              %906 = vst [vmem:[%s520 + $0x300] sm:%s512] %v905
              %v907 = vld [vmem:[%s519 + $0x310] sm:%s512]
              %908 = vst [vmem:[%s520 + $0x304] sm:%s512] %v907
              %v909 = vld [vmem:[%s519 + $0x304] sm:%s512]
              %910 = vst [vmem:[%s520 + $0x308] sm:%s512] %v909
              %v911 = vld [vmem:[%s519 + $0x314] sm:%s512]
              %912 = vst [vmem:[%s520 + $0x30c] sm:%s512] %v911
              %v913 = vld [vmem:[%s519 + $0x308] sm:%s512]
              %914 = vst [vmem:[%s520 + $0x310] sm:%s512] %v913
              %v915 = vld [vmem:[%s519 + $0x318] sm:%s512]
              %916 = vst [vmem:[%s520 + $0x314] sm:%s512] %v915
              %v917 = vld [vmem:[%s519 + $0x30c] sm:%s512]
              %918 = vst [vmem:[%s520 + $0x318] sm:%s512] %v917
              %v919 = vld [vmem:[%s519 + $0x31c] sm:%s512]
              %920 = vst [vmem:[%s520 + $0x31c] sm:%s512] %v919
              %v921 = vld [vmem:[%s519 + $0x320] sm:%s512]
              %922 = vst [vmem:[%s520 + $0x320] sm:%s512] %v921
              %v923 = vld [vmem:[%s519 + $0x330] sm:%s512]
              %924 = vst [vmem:[%s520 + $0x324] sm:%s512] %v923
              %v925 = vld [vmem:[%s519 + $0x324] sm:%s512]
              %926 = vst [vmem:[%s520 + $0x328] sm:%s512] %v925
              %v927 = vld [vmem:[%s519 + $0x334] sm:%s512]
              %928 = vst [vmem:[%s520 + $0x32c] sm:%s512] %v927
              %v929 = vld [vmem:[%s519 + $0x328] sm:%s512]
              %930 = vst [vmem:[%s520 + $0x330] sm:%s512] %v929
              %v931 = vld [vmem:[%s519 + $0x338] sm:%s512]
              %932 = vst [vmem:[%s520 + $0x334] sm:%s512] %v931
              %v933 = vld [vmem:[%s519 + $0x32c] sm:%s512]
              %934 = vst [vmem:[%s520 + $0x338] sm:%s512] %v933
              %v935 = vld [vmem:[%s519 + $0x33c] sm:%s512]
              %936 = vst [vmem:[%s520 + $0x33c] sm:%s512] %v935
              %v937 = vld [vmem:[%s519 + $0x340] sm:%s512]
              %938 = vst [vmem:[%s520 + $0x340] sm:%s512] %v937
              %v939 = vld [vmem:[%s519 + $0x350] sm:%s512]
              %940 = vst [vmem:[%s520 + $0x344] sm:%s512] %v939
              %v941 = vld [vmem:[%s519 + $0x344] sm:%s512]
              %942 = vst [vmem:[%s520 + $0x348] sm:%s512] %v941
              %v943 = vld [vmem:[%s519 + $0x354] sm:%s512]
              %944 = vst [vmem:[%s520 + $0x34c] sm:%s512] %v943
              %v945 = vld [vmem:[%s519 + $0x348] sm:%s512]
              %946 = vst [vmem:[%s520 + $0x350] sm:%s512] %v945
              %v947 = vld [vmem:[%s519 + $0x358] sm:%s512]
              %948 = vst [vmem:[%s520 + $0x354] sm:%s512] %v947
              %v949 = vld [vmem:[%s519 + $0x34c] sm:%s512]
              %950 = vst [vmem:[%s520 + $0x358] sm:%s512] %v949
              %v951 = vld [vmem:[%s519 + $0x35c] sm:%s512]
              %952 = vst [vmem:[%s520 + $0x35c] sm:%s512] %v951
              %v953 = vld [vmem:[%s519 + $0x360] sm:%s512]
              %954 = vst [vmem:[%s520 + $0x360] sm:%s512] %v953
              %v955 = vld [vmem:[%s519 + $0x370] sm:%s512]
              %956 = vst [vmem:[%s520 + $0x364] sm:%s512] %v955
              %v957 = vld [vmem:[%s519 + $0x364] sm:%s512]
              %958 = vst [vmem:[%s520 + $0x368] sm:%s512] %v957
              %v959 = vld [vmem:[%s519 + $0x374] sm:%s512]
              %960 = vst [vmem:[%s520 + $0x36c] sm:%s512] %v959
              %v961 = vld [vmem:[%s519 + $0x368] sm:%s512]
              %962 = vst [vmem:[%s520 + $0x370] sm:%s512] %v961
              %v963 = vld [vmem:[%s519 + $0x378] sm:%s512]
              %964 = vst [vmem:[%s520 + $0x374] sm:%s512] %v963
              %v965 = vld [vmem:[%s519 + $0x36c] sm:%s512]
              %966 = vst [vmem:[%s520 + $0x378] sm:%s512] %v965
              %v967 = vld [vmem:[%s519 + $0x37c] sm:%s512]
              %968 = vst [vmem:[%s520 + $0x37c] sm:%s512] %v967
              %v969 = vld [vmem:[%s519 + $0x380] sm:%s512]
              %970 = vst [vmem:[%s520 + $0x380] sm:%s512] %v969
              %v971 = vld [vmem:[%s519 + $0x390] sm:%s512]
              %972 = vst [vmem:[%s520 + $0x384] sm:%s512] %v971
              %v973 = vld [vmem:[%s519 + $0x384] sm:%s512]
              %974 = vst [vmem:[%s520 + $0x388] sm:%s512] %v973
              %v975 = vld [vmem:[%s519 + $0x394] sm:%s512]
              %976 = vst [vmem:[%s520 + $0x38c] sm:%s512] %v975
              %v977 = vld [vmem:[%s519 + $0x388] sm:%s512]
              %978 = vst [vmem:[%s520 + $0x390] sm:%s512] %v977
              %v979 = vld [vmem:[%s519 + $0x398] sm:%s512]
              %980 = vst [vmem:[%s520 + $0x394] sm:%s512] %v979
              %v981 = vld [vmem:[%s519 + $0x38c] sm:%s512]
              %982 = vst [vmem:[%s520 + $0x398] sm:%s512] %v981
              %v983 = vld [vmem:[%s519 + $0x39c] sm:%s512]
              %984 = vst [vmem:[%s520 + $0x39c] sm:%s512] %v983
              %v985 = vld [vmem:[%s519 + $0x3a0] sm:%s512]
              %986 = vst [vmem:[%s520 + $0x3a0] sm:%s512] %v985
              %v987 = vld [vmem:[%s519 + $0x3b0] sm:%s512]
              %988 = vst [vmem:[%s520 + $0x3a4] sm:%s512] %v987
              %v989 = vld [vmem:[%s519 + $0x3a4] sm:%s512]
              %990 = vst [vmem:[%s520 + $0x3a8] sm:%s512] %v989
              %v991 = vld [vmem:[%s519 + $0x3b4] sm:%s512]
              %992 = vst [vmem:[%s520 + $0x3ac] sm:%s512] %v991
              %v993 = vld [vmem:[%s519 + $0x3a8] sm:%s512]
              %994 = vst [vmem:[%s520 + $0x3b0] sm:%s512] %v993
              %v995 = vld [vmem:[%s519 + $0x3b8] sm:%s512]
              %996 = vst [vmem:[%s520 + $0x3b4] sm:%s512] %v995
              %v997 = vld [vmem:[%s519 + $0x3ac] sm:%s512]
              %998 = vst [vmem:[%s520 + $0x3b8] sm:%s512] %v997
              %v999 = vld [vmem:[%s519 + $0x3bc] sm:%s512]
              %1000 = vst [vmem:[%s520 + $0x3bc] sm:%s512] %v999
              %v1001 = vld [vmem:[%s519 + $0x3c0] sm:%s512]
              %1002 = vst [vmem:[%s520 + $0x3c0] sm:%s512] %v1001
              %v1003 = vld [vmem:[%s519 + $0x3d0] sm:%s512]
              %1004 = vst [vmem:[%s520 + $0x3c4] sm:%s512] %v1003
              %v1005 = vld [vmem:[%s519 + $0x3c4] sm:%s512]
              %1006 = vst [vmem:[%s520 + $0x3c8] sm:%s512] %v1005
              %v1007 = vld [vmem:[%s519 + $0x3d4] sm:%s512]
              %1008 = vst [vmem:[%s520 + $0x3cc] sm:%s512] %v1007
              %v1009 = vld [vmem:[%s519 + $0x3c8] sm:%s512]
              %1010 = vst [vmem:[%s520 + $0x3d0] sm:%s512] %v1009
              %v1011 = vld [vmem:[%s519 + $0x3d8] sm:%s512]
              %1012 = vst [vmem:[%s520 + $0x3d4] sm:%s512] %v1011
              %v1013 = vld [vmem:[%s519 + $0x3cc] sm:%s512]
              %1014 = vst [vmem:[%s520 + $0x3d8] sm:%s512] %v1013
              %v1015 = vld [vmem:[%s519 + $0x3dc] sm:%s512]
              %1016 = vst [vmem:[%s520 + $0x3dc] sm:%s512] %v1015
              %v1017 = vld [vmem:[%s519 + $0x3e0] sm:%s512]
              %1018 = vst [vmem:[%s520 + $0x3e0] sm:%s512] %v1017
              %v1019 = vld [vmem:[%s519 + $0x3f0] sm:%s512]
              %1020 = vst [vmem:[%s520 + $0x3e4] sm:%s512] %v1019
              %v1021 = vld [vmem:[%s519 + $0x3e4] sm:%s512]
              %1022 = vst [vmem:[%s520 + $0x3e8] sm:%s512] %v1021
              %v1023 = vld [vmem:[%s519 + $0x3f4] sm:%s512]
              %1024 = vst [vmem:[%s520 + $0x3ec] sm:%s512] %v1023
              %v1025 = vld [vmem:[%s519 + $0x3e8] sm:%s512]
              %1026 = vst [vmem:[%s520 + $0x3f0] sm:%s512] %v1025
              %v1027 = vld [vmem:[%s519 + $0x3f8] sm:%s512]
              %1028 = vst [vmem:[%s520 + $0x3f4] sm:%s512] %v1027
              %v1029 = vld [vmem:[%s519 + $0x3ec] sm:%s512]
              %1030 = vst [vmem:[%s520 + $0x3f8] sm:%s512] %v1029
              %v1031 = vld [vmem:[%s519 + $0x3fc] sm:%s512]
              %1032 = vst [vmem:[%s520 + $0x3fc] sm:%s512] %v1031
            $region95: #{tpu_custom_call.1} parent=89 // loop_footer
              %s518 = sadd.s32 1, %s514
            $region96: #{tpu_custom_call.1} parent=89 // loop_footer_branch
              %513 = sbr.rel target = $region92
            $region97: #{tpu_custom_call.1} parent=89 // loop_exit
              _
          $region90: #{tpu_custom_call.1} parent=47 // pred_fallthru
            _
          // Predicated region
          $region116: #{tpu_custom_call.1} parent=47 // pred_check
            _
          $region117: #{tpu_custom_call.1} parent=47 // pred_check_branch
            %1574 = sbr.rel (0) target = $region119
          $region118: #{tpu_custom_call.1} parent=47 // pred_region
            %1575 = vsyncadd %s503, 16384
          $region119: #{tpu_custom_call.1} parent=47 // pred_fallthru
            _
          %s1576 = smul.u32 4, 64
          %s1577 = smul.u32 %s1576, 4
          %s1578 = sshll.u32 %s1577, 4
          %1579 = dma.done %s503, %s1578
          %s1580 = smul.u32 512, 1
          %s1581 = sshll.u32 %s1580, 4
          %1582 = dma.done [#allocation2], %s1581
          %1583 = vst [vmem:[#allocation7] sm:$0xff] 0.0
        $region48: #{tpu_custom_call.1} parent=43 // pred_fallthru
          _
        // Predicated region
        $region120: #{tpu_custom_call.1} parent=43 // pred_check
          %p1584 = pneg %p330
        $region121: #{tpu_custom_call.1} parent=43 // pred_check_branch
          %1586 = sbr.rel (%p1584) target = $region123
        $region122: #{tpu_custom_call.1} parent=43 // pred_region
          %v1587 = vld [vmem:[#allocation3] sm:$0xff]
          %v1588 = vld [vmem:[#allocation3 + $0x8] sm:$0xff]
          %v1589 = vld [vmem:[#allocation3 + $0x10] sm:$0xff]
          %v1590 = vld [vmem:[#allocation3 + $0x18] sm:$0xff]
          %v1591 = vld [vmem:[#allocation3 + $0x20] sm:$0xff]
          %v1592 = vld [vmem:[#allocation3 + $0x28] sm:$0xff]
          %v1593 = vld [vmem:[#allocation3 + $0x30] sm:$0xff]
          %v1594 = vld [vmem:[#allocation3 + $0x38] sm:$0xff]
          %v1595 = vld [vmem:[#allocation3 + $0x40] sm:$0xff]
          %v1596 = vld [vmem:[#allocation3 + $0x48] sm:$0xff]
          %v1597 = vld [vmem:[#allocation3 + $0x50] sm:$0xff]
          %v1598 = vld [vmem:[#allocation3 + $0x58] sm:$0xff]
          %v1599 = vld [vmem:[#allocation3 + $0x60] sm:$0xff]
          %v1600 = vld [vmem:[#allocation3 + $0x68] sm:$0xff]
          %v1601 = vld [vmem:[#allocation3 + $0x70] sm:$0xff]
          %v1602 = vld [vmem:[#allocation3 + $0x78] sm:$0xff]
          %v1603 = vld [vmem:[#allocation3 + $0x80] sm:$0xff]
          %v1604 = vld [vmem:[#allocation3 + $0x88] sm:$0xff]
          %v1605 = vld [vmem:[#allocation3 + $0x90] sm:$0xff]
          %v1606 = vld [vmem:[#allocation3 + $0x98] sm:$0xff]
          %v1607 = vld [vmem:[#allocation3 + $0xa0] sm:$0xff]
          %v1608 = vld [vmem:[#allocation3 + $0xa8] sm:$0xff]
          %v1609 = vld [vmem:[#allocation3 + $0xb0] sm:$0xff]
          %v1610 = vld [vmem:[#allocation3 + $0xb8] sm:$0xff]
          %v1611 = vld [vmem:[#allocation3 + $0xc0] sm:$0xff]
          %v1612 = vld [vmem:[#allocation3 + $0xc8] sm:$0xff]
          %v1613 = vld [vmem:[#allocation3 + $0xd0] sm:$0xff]
          %v1614 = vld [vmem:[#allocation3 + $0xd8] sm:$0xff]
          %v1615 = vld [vmem:[#allocation3 + $0xe0] sm:$0xff]
          %v1616 = vld [vmem:[#allocation3 + $0xe8] sm:$0xff]
          %v1617 = vld [vmem:[#allocation3 + $0xf0] sm:$0xff]
          %v1618 = vld [vmem:[#allocation3 + $0xf8] sm:$0xff]
          %v1619 = vld [vmem:[#allocation3 + $0x100] sm:$0xff]
          %v1620 = vld [vmem:[#allocation3 + $0x108] sm:$0xff]
          %v1621 = vld [vmem:[#allocation3 + $0x110] sm:$0xff]
          %v1622 = vld [vmem:[#allocation3 + $0x118] sm:$0xff]
          %v1623 = vld [vmem:[#allocation3 + $0x120] sm:$0xff]
          %v1624 = vld [vmem:[#allocation3 + $0x128] sm:$0xff]
          %v1625 = vld [vmem:[#allocation3 + $0x130] sm:$0xff]
          %v1626 = vld [vmem:[#allocation3 + $0x138] sm:$0xff]
          %v1627 = vld [vmem:[#allocation3 + $0x140] sm:$0xff]
          %v1628 = vld [vmem:[#allocation3 + $0x148] sm:$0xff]
          %v1629 = vld [vmem:[#allocation3 + $0x150] sm:$0xff]
          %v1630 = vld [vmem:[#allocation3 + $0x158] sm:$0xff]
          %v1631 = vld [vmem:[#allocation3 + $0x160] sm:$0xff]
          %v1632 = vld [vmem:[#allocation3 + $0x168] sm:$0xff]
          %v1633 = vld [vmem:[#allocation3 + $0x170] sm:$0xff]
          %v1634 = vld [vmem:[#allocation3 + $0x178] sm:$0xff]
          %v1635 = vld [vmem:[#allocation3 + $0x180] sm:$0xff]
          %v1636 = vld [vmem:[#allocation3 + $0x188] sm:$0xff]
          %v1637 = vld [vmem:[#allocation3 + $0x190] sm:$0xff]
          %v1638 = vld [vmem:[#allocation3 + $0x198] sm:$0xff]
          %v1639 = vld [vmem:[#allocation3 + $0x1a0] sm:$0xff]
          %v1640 = vld [vmem:[#allocation3 + $0x1a8] sm:$0xff]
          %v1641 = vld [vmem:[#allocation3 + $0x1b0] sm:$0xff]
          %v1642 = vld [vmem:[#allocation3 + $0x1b8] sm:$0xff]
          %v1643 = vld [vmem:[#allocation3 + $0x1c0] sm:$0xff]
          %v1644 = vld [vmem:[#allocation3 + $0x1c8] sm:$0xff]
          %v1645 = vld [vmem:[#allocation3 + $0x1d0] sm:$0xff]
          %v1646 = vld [vmem:[#allocation3 + $0x1d8] sm:$0xff]
          %v1647 = vld [vmem:[#allocation3 + $0x1e0] sm:$0xff]
          %v1648 = vld [vmem:[#allocation3 + $0x1e8] sm:$0xff]
          %v1649 = vld [vmem:[#allocation3 + $0x1f0] sm:$0xff]
          %v1650 = vld [vmem:[#allocation3 + $0x1f8] sm:$0xff]
          %v1651 = vld [vmem:[%s1] sm:$0xf]
          %v1652 = vld [vmem:[%s1 + $0x4] sm:$0xf]
          %v1653 = vld [vmem:[%s1 + $0x8] sm:$0xf]
          %v1654 = vld [vmem:[%s1 + $0xc] sm:$0xf]
          %v1655 = vld [vmem:[%s1 + $0x10] sm:$0xf]
          %v1656 = vld [vmem:[%s1 + $0x14] sm:$0xf]
          %v1657 = vld [vmem:[%s1 + $0x18] sm:$0xf]
          %v1658 = vld [vmem:[%s1 + $0x1c] sm:$0xf]
          %v1659 = vld [vmem:[%s1 + $0x20] sm:$0xf]
          %v1660 = vld [vmem:[%s1 + $0x24] sm:$0xf]
          %v1661 = vld [vmem:[%s1 + $0x28] sm:$0xf]
          %v1662 = vld [vmem:[%s1 + $0x2c] sm:$0xf]
          %v1663 = vld [vmem:[%s1 + $0x30] sm:$0xf]
          %v1664 = vld [vmem:[%s1 + $0x34] sm:$0xf]
          %v1665 = vld [vmem:[%s1 + $0x38] sm:$0xf]
          %v1666 = vld [vmem:[%s1 + $0x3c] sm:$0xf]
          %v1667 = vld [vmem:[%s1 + $0x40] sm:$0xf]
          %v1668 = vld [vmem:[%s1 + $0x44] sm:$0xf]
          %v1669 = vld [vmem:[%s1 + $0x48] sm:$0xf]
          %v1670 = vld [vmem:[%s1 + $0x4c] sm:$0xf]
          %v1671 = vld [vmem:[%s1 + $0x50] sm:$0xf]
          %v1672 = vld [vmem:[%s1 + $0x54] sm:$0xf]
          %v1673 = vld [vmem:[%s1 + $0x58] sm:$0xf]
          %v1674 = vld [vmem:[%s1 + $0x5c] sm:$0xf]
          %v1675 = vld [vmem:[%s1 + $0x60] sm:$0xf]
          %v1676 = vld [vmem:[%s1 + $0x64] sm:$0xf]
          %v1677 = vld [vmem:[%s1 + $0x68] sm:$0xf]
          %v1678 = vld [vmem:[%s1 + $0x6c] sm:$0xf]
          %v1679 = vld [vmem:[%s1 + $0x70] sm:$0xf]
          %v1680 = vld [vmem:[%s1 + $0x74] sm:$0xf]
          %v1681 = vld [vmem:[%s1 + $0x78] sm:$0xf]
          %v1682 = vld [vmem:[%s1 + $0x7c] sm:$0xf]
          %v1683 = vld [vmem:[%s1 + $0x80] sm:$0xf]
          %v1684 = vld [vmem:[%s1 + $0x84] sm:$0xf]
          %v1685 = vld [vmem:[%s1 + $0x88] sm:$0xf]
          %v1686 = vld [vmem:[%s1 + $0x8c] sm:$0xf]
          %v1687 = vld [vmem:[%s1 + $0x90] sm:$0xf]
          %v1688 = vld [vmem:[%s1 + $0x94] sm:$0xf]
          %v1689 = vld [vmem:[%s1 + $0x98] sm:$0xf]
          %v1690 = vld [vmem:[%s1 + $0x9c] sm:$0xf]
          %v1691 = vld [vmem:[%s1 + $0xa0] sm:$0xf]
          %v1692 = vld [vmem:[%s1 + $0xa4] sm:$0xf]
          %v1693 = vld [vmem:[%s1 + $0xa8] sm:$0xf]
          %v1694 = vld [vmem:[%s1 + $0xac] sm:$0xf]
          %v1695 = vld [vmem:[%s1 + $0xb0] sm:$0xf]
          %v1696 = vld [vmem:[%s1 + $0xb4] sm:$0xf]
          %v1697 = vld [vmem:[%s1 + $0xb8] sm:$0xf]
          %v1698 = vld [vmem:[%s1 + $0xbc] sm:$0xf]
          %v1699 = vld [vmem:[%s1 + $0xc0] sm:$0xf]
          %v1700 = vld [vmem:[%s1 + $0xc4] sm:$0xf]
          %v1701 = vld [vmem:[%s1 + $0xc8] sm:$0xf]
          %v1702 = vld [vmem:[%s1 + $0xcc] sm:$0xf]
          %v1703 = vld [vmem:[%s1 + $0xd0] sm:$0xf]
          %v1704 = vld [vmem:[%s1 + $0xd4] sm:$0xf]
          %v1705 = vld [vmem:[%s1 + $0xd8] sm:$0xf]
          %v1706 = vld [vmem:[%s1 + $0xdc] sm:$0xf]
          %v1707 = vld [vmem:[%s1 + $0xe0] sm:$0xf]
          %v1708 = vld [vmem:[%s1 + $0xe4] sm:$0xf]
          %v1709 = vld [vmem:[%s1 + $0xe8] sm:$0xf]
          %v1710 = vld [vmem:[%s1 + $0xec] sm:$0xf]
          %v1711 = vld [vmem:[%s1 + $0xf0] sm:$0xf]
          %v1712 = vld [vmem:[%s1 + $0xf4] sm:$0xf]
          %v1713 = vld [vmem:[%s1 + $0xf8] sm:$0xf]
          %v1714 = vld [vmem:[%s1 + $0xfc] sm:$0xf]
          %v1715 = vunpack.c.l.bf16 %v1651
          %v1716 = vunpack.c.l.bf16 %v1652
          %v1717 = vunpack.c.l.bf16 %v1653
          %v1718 = vunpack.c.l.bf16 %v1654
          %v1719 = vunpack.c.l.bf16 %v1655
          %v1720 = vunpack.c.l.bf16 %v1656
          %v1721 = vunpack.c.l.bf16 %v1657
          %v1722 = vunpack.c.l.bf16 %v1658
          %v1723 = vunpack.c.l.bf16 %v1659
          %v1724 = vunpack.c.l.bf16 %v1660
          %v1725 = vunpack.c.l.bf16 %v1661
          %v1726 = vunpack.c.l.bf16 %v1662
          %v1727 = vunpack.c.l.bf16 %v1663
          %v1728 = vunpack.c.l.bf16 %v1664
          %v1729 = vunpack.c.l.bf16 %v1665
          %v1730 = vunpack.c.l.bf16 %v1666
          %v1731 = vunpack.c.l.bf16 %v1667
          %v1732 = vunpack.c.l.bf16 %v1668
          %v1733 = vunpack.c.l.bf16 %v1669
          %v1734 = vunpack.c.l.bf16 %v1670
          %v1735 = vunpack.c.l.bf16 %v1671
          %v1736 = vunpack.c.l.bf16 %v1672
          %v1737 = vunpack.c.l.bf16 %v1673
          %v1738 = vunpack.c.l.bf16 %v1674
          %v1739 = vunpack.c.l.bf16 %v1675
          %v1740 = vunpack.c.l.bf16 %v1676
          %v1741 = vunpack.c.l.bf16 %v1677
          %v1742 = vunpack.c.l.bf16 %v1678
          %v1743 = vunpack.c.l.bf16 %v1679
          %v1744 = vunpack.c.l.bf16 %v1680
          %v1745 = vunpack.c.l.bf16 %v1681
          %v1746 = vunpack.c.l.bf16 %v1682
          %v1747 = vunpack.c.l.bf16 %v1683
          %v1748 = vunpack.c.l.bf16 %v1684
          %v1749 = vunpack.c.l.bf16 %v1685
          %v1750 = vunpack.c.l.bf16 %v1686
          %v1751 = vunpack.c.l.bf16 %v1687
          %v1752 = vunpack.c.l.bf16 %v1688
          %v1753 = vunpack.c.l.bf16 %v1689
          %v1754 = vunpack.c.l.bf16 %v1690
          %v1755 = vunpack.c.l.bf16 %v1691
          %v1756 = vunpack.c.l.bf16 %v1692
          %v1757 = vunpack.c.l.bf16 %v1693
          %v1758 = vunpack.c.l.bf16 %v1694
          %v1759 = vunpack.c.l.bf16 %v1695
          %v1760 = vunpack.c.l.bf16 %v1696
          %v1761 = vunpack.c.l.bf16 %v1697
          %v1762 = vunpack.c.l.bf16 %v1698
          %v1763 = vunpack.c.l.bf16 %v1699
          %v1764 = vunpack.c.l.bf16 %v1700
          %v1765 = vunpack.c.l.bf16 %v1701
          %v1766 = vunpack.c.l.bf16 %v1702
          %v1767 = vunpack.c.l.bf16 %v1703
          %v1768 = vunpack.c.l.bf16 %v1704
          %v1769 = vunpack.c.l.bf16 %v1705
          %v1770 = vunpack.c.l.bf16 %v1706
          %v1771 = vunpack.c.l.bf16 %v1707
          %v1772 = vunpack.c.l.bf16 %v1708
          %v1773 = vunpack.c.l.bf16 %v1709
          %v1774 = vunpack.c.l.bf16 %v1710
          %v1775 = vunpack.c.l.bf16 %v1711
          %v1776 = vunpack.c.l.bf16 %v1712
          %v1777 = vunpack.c.l.bf16 %v1713
          %v1778 = vunpack.c.l.bf16 %v1714
          %1780 = vset.pattern.permute.xlu0 0
          %1781 = vperm.xlu0 %1780, %v1715
          %v1782 = vpop.permute.xlu0 %1781
          %1785 = vset.pattern.permute.xlu0 0
          %1786 = vperm.xlu0 %1785, %v1716
          %v1787 = vpop.permute.xlu0 %1786
          %1790 = vset.pattern.permute.xlu0 0
          %1791 = vperm.xlu0 %1790, %v1717
          %v1792 = vpop.permute.xlu0 %1791
          %1795 = vset.pattern.permute.xlu0 0
          %1796 = vperm.xlu0 %1795, %v1718
          %v1797 = vpop.permute.xlu0 %1796
          %1800 = vset.pattern.permute.xlu0 0
          %1801 = vperm.xlu0 %1800, %v1719
          %v1802 = vpop.permute.xlu0 %1801
          %1805 = vset.pattern.permute.xlu0 0
          %1806 = vperm.xlu0 %1805, %v1720
          %v1807 = vpop.permute.xlu0 %1806
          %1810 = vset.pattern.permute.xlu0 0
          %1811 = vperm.xlu0 %1810, %v1721
          %v1812 = vpop.permute.xlu0 %1811
          %1815 = vset.pattern.permute.xlu0 0
          %1816 = vperm.xlu0 %1815, %v1722
          %v1817 = vpop.permute.xlu0 %1816
          %1820 = vset.pattern.permute.xlu0 0
          %1821 = vperm.xlu0 %1820, %v1723
          %v1822 = vpop.permute.xlu0 %1821
          %1825 = vset.pattern.permute.xlu0 0
          %1826 = vperm.xlu0 %1825, %v1724
          %v1827 = vpop.permute.xlu0 %1826
          %1830 = vset.pattern.permute.xlu0 0
          %1831 = vperm.xlu0 %1830, %v1725
          %v1832 = vpop.permute.xlu0 %1831
          %1835 = vset.pattern.permute.xlu0 0
          %1836 = vperm.xlu0 %1835, %v1726
          %v1837 = vpop.permute.xlu0 %1836
          %1840 = vset.pattern.permute.xlu0 0
          %1841 = vperm.xlu0 %1840, %v1727
          %v1842 = vpop.permute.xlu0 %1841
          %1845 = vset.pattern.permute.xlu0 0
          %1846 = vperm.xlu0 %1845, %v1728
          %v1847 = vpop.permute.xlu0 %1846
          %1850 = vset.pattern.permute.xlu0 0
          %1851 = vperm.xlu0 %1850, %v1729
          %v1852 = vpop.permute.xlu0 %1851
          %1855 = vset.pattern.permute.xlu0 0
          %1856 = vperm.xlu0 %1855, %v1730
          %v1857 = vpop.permute.xlu0 %1856
          %1860 = vset.pattern.permute.xlu0 0
          %1861 = vperm.xlu0 %1860, %v1731
          %v1862 = vpop.permute.xlu0 %1861
          %1865 = vset.pattern.permute.xlu0 0
          %1866 = vperm.xlu0 %1865, %v1732
          %v1867 = vpop.permute.xlu0 %1866
          %1870 = vset.pattern.permute.xlu0 0
          %1871 = vperm.xlu0 %1870, %v1733
          %v1872 = vpop.permute.xlu0 %1871
          %1875 = vset.pattern.permute.xlu0 0
          %1876 = vperm.xlu0 %1875, %v1734
          %v1877 = vpop.permute.xlu0 %1876
          %1880 = vset.pattern.permute.xlu0 0
          %1881 = vperm.xlu0 %1880, %v1735
          %v1882 = vpop.permute.xlu0 %1881
          %1885 = vset.pattern.permute.xlu0 0
          %1886 = vperm.xlu0 %1885, %v1736
          %v1887 = vpop.permute.xlu0 %1886
          %1890 = vset.pattern.permute.xlu0 0
          %1891 = vperm.xlu0 %1890, %v1737
          %v1892 = vpop.permute.xlu0 %1891
          %1895 = vset.pattern.permute.xlu0 0
          %1896 = vperm.xlu0 %1895, %v1738
          %v1897 = vpop.permute.xlu0 %1896
          %1900 = vset.pattern.permute.xlu0 0
          %1901 = vperm.xlu0 %1900, %v1739
          %v1902 = vpop.permute.xlu0 %1901
          %1905 = vset.pattern.permute.xlu0 0
          %1906 = vperm.xlu0 %1905, %v1740
          %v1907 = vpop.permute.xlu0 %1906
          %1910 = vset.pattern.permute.xlu0 0
          %1911 = vperm.xlu0 %1910, %v1741
          %v1912 = vpop.permute.xlu0 %1911
          %1915 = vset.pattern.permute.xlu0 0
          %1916 = vperm.xlu0 %1915, %v1742
          %v1917 = vpop.permute.xlu0 %1916
          %1920 = vset.pattern.permute.xlu0 0
          %1921 = vperm.xlu0 %1920, %v1743
          %v1922 = vpop.permute.xlu0 %1921
          %1925 = vset.pattern.permute.xlu0 0
          %1926 = vperm.xlu0 %1925, %v1744
          %v1927 = vpop.permute.xlu0 %1926
          %1930 = vset.pattern.permute.xlu0 0
          %1931 = vperm.xlu0 %1930, %v1745
          %v1932 = vpop.permute.xlu0 %1931
          %1935 = vset.pattern.permute.xlu0 0
          %1936 = vperm.xlu0 %1935, %v1746
          %v1937 = vpop.permute.xlu0 %1936
          %1940 = vset.pattern.permute.xlu0 0
          %1941 = vperm.xlu0 %1940, %v1747
          %v1942 = vpop.permute.xlu0 %1941
          %1945 = vset.pattern.permute.xlu0 0
          %1946 = vperm.xlu0 %1945, %v1748
          %v1947 = vpop.permute.xlu0 %1946
          %1950 = vset.pattern.permute.xlu0 0
          %1951 = vperm.xlu0 %1950, %v1749
          %v1952 = vpop.permute.xlu0 %1951
          %1955 = vset.pattern.permute.xlu0 0
          %1956 = vperm.xlu0 %1955, %v1750
          %v1957 = vpop.permute.xlu0 %1956
          %1960 = vset.pattern.permute.xlu0 0
          %1961 = vperm.xlu0 %1960, %v1751
          %v1962 = vpop.permute.xlu0 %1961
          %1965 = vset.pattern.permute.xlu0 0
          %1966 = vperm.xlu0 %1965, %v1752
          %v1967 = vpop.permute.xlu0 %1966
          %1970 = vset.pattern.permute.xlu0 0
          %1971 = vperm.xlu0 %1970, %v1753
          %v1972 = vpop.permute.xlu0 %1971
          %1975 = vset.pattern.permute.xlu0 0
          %1976 = vperm.xlu0 %1975, %v1754
          %v1977 = vpop.permute.xlu0 %1976
          %1980 = vset.pattern.permute.xlu0 0
          %1981 = vperm.xlu0 %1980, %v1755
          %v1982 = vpop.permute.xlu0 %1981
          %1985 = vset.pattern.permute.xlu0 0
          %1986 = vperm.xlu0 %1985, %v1756
          %v1987 = vpop.permute.xlu0 %1986
          %1990 = vset.pattern.permute.xlu0 0
          %1991 = vperm.xlu0 %1990, %v1757
          %v1992 = vpop.permute.xlu0 %1991
          %1995 = vset.pattern.permute.xlu0 0
          %1996 = vperm.xlu0 %1995, %v1758
          %v1997 = vpop.permute.xlu0 %1996
          %2000 = vset.pattern.permute.xlu0 0
          %2001 = vperm.xlu0 %2000, %v1759
          %v2002 = vpop.permute.xlu0 %2001
          %2005 = vset.pattern.permute.xlu0 0
          %2006 = vperm.xlu0 %2005, %v1760
          %v2007 = vpop.permute.xlu0 %2006
          %2010 = vset.pattern.permute.xlu0 0
          %2011 = vperm.xlu0 %2010, %v1761
          %v2012 = vpop.permute.xlu0 %2011
          %2015 = vset.pattern.permute.xlu0 0
          %2016 = vperm.xlu0 %2015, %v1762
          %v2017 = vpop.permute.xlu0 %2016
          %2020 = vset.pattern.permute.xlu0 0
          %2021 = vperm.xlu0 %2020, %v1763
          %v2022 = vpop.permute.xlu0 %2021
          %2025 = vset.pattern.permute.xlu0 0
          %2026 = vperm.xlu0 %2025, %v1764
          %v2027 = vpop.permute.xlu0 %2026
          %2030 = vset.pattern.permute.xlu0 0
          %2031 = vperm.xlu0 %2030, %v1765
          %v2032 = vpop.permute.xlu0 %2031
          %2035 = vset.pattern.permute.xlu0 0
          %2036 = vperm.xlu0 %2035, %v1766
          %v2037 = vpop.permute.xlu0 %2036
          %2040 = vset.pattern.permute.xlu0 0
          %2041 = vperm.xlu0 %2040, %v1767
          %v2042 = vpop.permute.xlu0 %2041
          %2045 = vset.pattern.permute.xlu0 0
          %2046 = vperm.xlu0 %2045, %v1768
          %v2047 = vpop.permute.xlu0 %2046
          %2050 = vset.pattern.permute.xlu0 0
          %2051 = vperm.xlu0 %2050, %v1769
          %v2052 = vpop.permute.xlu0 %2051
          %2055 = vset.pattern.permute.xlu0 0
          %2056 = vperm.xlu0 %2055, %v1770
          %v2057 = vpop.permute.xlu0 %2056
          %2060 = vset.pattern.permute.xlu0 0
          %2061 = vperm.xlu0 %2060, %v1771
          %v2062 = vpop.permute.xlu0 %2061
          %2065 = vset.pattern.permute.xlu0 0
          %2066 = vperm.xlu0 %2065, %v1772
          %v2067 = vpop.permute.xlu0 %2066
          %2070 = vset.pattern.permute.xlu0 0
          %2071 = vperm.xlu0 %2070, %v1773
          %v2072 = vpop.permute.xlu0 %2071
          %2075 = vset.pattern.permute.xlu0 0
          %2076 = vperm.xlu0 %2075, %v1774
          %v2077 = vpop.permute.xlu0 %2076
          %2080 = vset.pattern.permute.xlu0 0
          %2081 = vperm.xlu0 %2080, %v1775
          %v2082 = vpop.permute.xlu0 %2081
          %2085 = vset.pattern.permute.xlu0 0
          %2086 = vperm.xlu0 %2085, %v1776
          %v2087 = vpop.permute.xlu0 %2086
          %2090 = vset.pattern.permute.xlu0 0
          %2091 = vperm.xlu0 %2090, %v1777
          %v2092 = vpop.permute.xlu0 %2091
          %2095 = vset.pattern.permute.xlu0 0
          %2096 = vperm.xlu0 %2095, %v1778
          %v2097 = vpop.permute.xlu0 %2096
          %v2099 = vmul.f32 %v1782, %v1587
          %v2100 = vmul.f32 %v1787, %v1588
          %v2101 = vmul.f32 %v1792, %v1589
          %v2102 = vmul.f32 %v1797, %v1590
          %v2103 = vmul.f32 %v1802, %v1591
          %v2104 = vmul.f32 %v1807, %v1592
          %v2105 = vmul.f32 %v1812, %v1593
          %v2106 = vmul.f32 %v1817, %v1594
          %v2107 = vmul.f32 %v1822, %v1595
          %v2108 = vmul.f32 %v1827, %v1596
          %v2109 = vmul.f32 %v1832, %v1597
          %v2110 = vmul.f32 %v1837, %v1598
          %v2111 = vmul.f32 %v1842, %v1599
          %v2112 = vmul.f32 %v1847, %v1600
          %v2113 = vmul.f32 %v1852, %v1601
          %v2114 = vmul.f32 %v1857, %v1602
          %v2115 = vmul.f32 %v1862, %v1603
          %v2116 = vmul.f32 %v1867, %v1604
          %v2117 = vmul.f32 %v1872, %v1605
          %v2118 = vmul.f32 %v1877, %v1606
          %v2119 = vmul.f32 %v1882, %v1607
          %v2120 = vmul.f32 %v1887, %v1608
          %v2121 = vmul.f32 %v1892, %v1609
          %v2122 = vmul.f32 %v1897, %v1610
          %v2123 = vmul.f32 %v1902, %v1611
          %v2124 = vmul.f32 %v1907, %v1612
          %v2125 = vmul.f32 %v1912, %v1613
          %v2126 = vmul.f32 %v1917, %v1614
          %v2127 = vmul.f32 %v1922, %v1615
          %v2128 = vmul.f32 %v1927, %v1616
          %v2129 = vmul.f32 %v1932, %v1617
          %v2130 = vmul.f32 %v1937, %v1618
          %v2131 = vmul.f32 %v1942, %v1619
          %v2132 = vmul.f32 %v1947, %v1620
          %v2133 = vmul.f32 %v1952, %v1621
          %v2134 = vmul.f32 %v1957, %v1622
          %v2135 = vmul.f32 %v1962, %v1623
          %v2136 = vmul.f32 %v1967, %v1624
          %v2137 = vmul.f32 %v1972, %v1625
          %v2138 = vmul.f32 %v1977, %v1626
          %v2139 = vmul.f32 %v1982, %v1627
          %v2140 = vmul.f32 %v1987, %v1628
          %v2141 = vmul.f32 %v1992, %v1629
          %v2142 = vmul.f32 %v1997, %v1630
          %v2143 = vmul.f32 %v2002, %v1631
          %v2144 = vmul.f32 %v2007, %v1632
          %v2145 = vmul.f32 %v2012, %v1633
          %v2146 = vmul.f32 %v2017, %v1634
          %v2147 = vmul.f32 %v2022, %v1635
          %v2148 = vmul.f32 %v2027, %v1636
          %v2149 = vmul.f32 %v2032, %v1637
          %v2150 = vmul.f32 %v2037, %v1638
          %v2151 = vmul.f32 %v2042, %v1639
          %v2152 = vmul.f32 %v2047, %v1640
          %v2153 = vmul.f32 %v2052, %v1641
          %v2154 = vmul.f32 %v2057, %v1642
          %v2155 = vmul.f32 %v2062, %v1643
          %v2156 = vmul.f32 %v2067, %v1644
          %v2157 = vmul.f32 %v2072, %v1645
          %v2158 = vmul.f32 %v2077, %v1646
          %v2159 = vmul.f32 %v2082, %v1647
          %v2160 = vmul.f32 %v2087, %v1648
          %v2161 = vmul.f32 %v2092, %v1649
          %v2162 = vmul.f32 %v2097, %v1650
          %2163 = vset.pattern.permute.xlu0 1
          %2164 = vperm.xlu0 %2163, %v1715
          %v2165 = vpop.permute.xlu0 %2164
          %2167 = vset.pattern.permute.xlu0 1
          %2168 = vperm.xlu0 %2167, %v1716
          %v2169 = vpop.permute.xlu0 %2168
          %2171 = vset.pattern.permute.xlu0 1
          %2172 = vperm.xlu0 %2171, %v1717
          %v2173 = vpop.permute.xlu0 %2172
          %2175 = vset.pattern.permute.xlu0 1
          %2176 = vperm.xlu0 %2175, %v1718
          %v2177 = vpop.permute.xlu0 %2176
          %2179 = vset.pattern.permute.xlu0 1
          %2180 = vperm.xlu0 %2179, %v1719
          %v2181 = vpop.permute.xlu0 %2180
          %2183 = vset.pattern.permute.xlu0 1
          %2184 = vperm.xlu0 %2183, %v1720
          %v2185 = vpop.permute.xlu0 %2184
          %2187 = vset.pattern.permute.xlu0 1
          %2188 = vperm.xlu0 %2187, %v1721
          %v2189 = vpop.permute.xlu0 %2188
          %2191 = vset.pattern.permute.xlu0 1
          %2192 = vperm.xlu0 %2191, %v1722
          %v2193 = vpop.permute.xlu0 %2192
          %2195 = vset.pattern.permute.xlu0 1
          %2196 = vperm.xlu0 %2195, %v1723
          %v2197 = vpop.permute.xlu0 %2196
          %2199 = vset.pattern.permute.xlu0 1
          %2200 = vperm.xlu0 %2199, %v1724
          %v2201 = vpop.permute.xlu0 %2200
          %2203 = vset.pattern.permute.xlu0 1
          %2204 = vperm.xlu0 %2203, %v1725
          %v2205 = vpop.permute.xlu0 %2204
          %2207 = vset.pattern.permute.xlu0 1
          %2208 = vperm.xlu0 %2207, %v1726
          %v2209 = vpop.permute.xlu0 %2208
          %2211 = vset.pattern.permute.xlu0 1
          %2212 = vperm.xlu0 %2211, %v1727
          %v2213 = vpop.permute.xlu0 %2212
          %2215 = vset.pattern.permute.xlu0 1
          %2216 = vperm.xlu0 %2215, %v1728
          %v2217 = vpop.permute.xlu0 %2216
          %2219 = vset.pattern.permute.xlu0 1
          %2220 = vperm.xlu0 %2219, %v1729
          %v2221 = vpop.permute.xlu0 %2220
          %2223 = vset.pattern.permute.xlu0 1
          %2224 = vperm.xlu0 %2223, %v1730
          %v2225 = vpop.permute.xlu0 %2224
          %2227 = vset.pattern.permute.xlu0 1
          %2228 = vperm.xlu0 %2227, %v1731
          %v2229 = vpop.permute.xlu0 %2228
          %2231 = vset.pattern.permute.xlu0 1
          %2232 = vperm.xlu0 %2231, %v1732
          %v2233 = vpop.permute.xlu0 %2232
          %2235 = vset.pattern.permute.xlu0 1
          %2236 = vperm.xlu0 %2235, %v1733
          %v2237 = vpop.permute.xlu0 %2236
          %2239 = vset.pattern.permute.xlu0 1
          %2240 = vperm.xlu0 %2239, %v1734
          %v2241 = vpop.permute.xlu0 %2240
          %2243 = vset.pattern.permute.xlu0 1
          %2244 = vperm.xlu0 %2243, %v1735
          %v2245 = vpop.permute.xlu0 %2244
          %2247 = vset.pattern.permute.xlu0 1
          %2248 = vperm.xlu0 %2247, %v1736
          %v2249 = vpop.permute.xlu0 %2248
          %2251 = vset.pattern.permute.xlu0 1
          %2252 = vperm.xlu0 %2251, %v1737
          %v2253 = vpop.permute.xlu0 %2252
          %2255 = vset.pattern.permute.xlu0 1
          %2256 = vperm.xlu0 %2255, %v1738
          %v2257 = vpop.permute.xlu0 %2256
          %2259 = vset.pattern.permute.xlu0 1
          %2260 = vperm.xlu0 %2259, %v1739
          %v2261 = vpop.permute.xlu0 %2260
          %2263 = vset.pattern.permute.xlu0 1
          %2264 = vperm.xlu0 %2263, %v1740
          %v2265 = vpop.permute.xlu0 %2264
          %2267 = vset.pattern.permute.xlu0 1
          %2268 = vperm.xlu0 %2267, %v1741
          %v2269 = vpop.permute.xlu0 %2268
          %2271 = vset.pattern.permute.xlu0 1
          %2272 = vperm.xlu0 %2271, %v1742
          %v2273 = vpop.permute.xlu0 %2272
          %2275 = vset.pattern.permute.xlu0 1
          %2276 = vperm.xlu0 %2275, %v1743
          %v2277 = vpop.permute.xlu0 %2276
          %2279 = vset.pattern.permute.xlu0 1
          %2280 = vperm.xlu0 %2279, %v1744
          %v2281 = vpop.permute.xlu0 %2280
          %2283 = vset.pattern.permute.xlu0 1
          %2284 = vperm.xlu0 %2283, %v1745
          %v2285 = vpop.permute.xlu0 %2284
          %2287 = vset.pattern.permute.xlu0 1
          %2288 = vperm.xlu0 %2287, %v1746
          %v2289 = vpop.permute.xlu0 %2288
          %2291 = vset.pattern.permute.xlu0 1
          %2292 = vperm.xlu0 %2291, %v1747
          %v2293 = vpop.permute.xlu0 %2292
          %2295 = vset.pattern.permute.xlu0 1
          %2296 = vperm.xlu0 %2295, %v1748
          %v2297 = vpop.permute.xlu0 %2296
          %2299 = vset.pattern.permute.xlu0 1
          %2300 = vperm.xlu0 %2299, %v1749
          %v2301 = vpop.permute.xlu0 %2300
          %2303 = vset.pattern.permute.xlu0 1
          %2304 = vperm.xlu0 %2303, %v1750
          %v2305 = vpop.permute.xlu0 %2304
          %2307 = vset.pattern.permute.xlu0 1
          %2308 = vperm.xlu0 %2307, %v1751
          %v2309 = vpop.permute.xlu0 %2308
          %2311 = vset.pattern.permute.xlu0 1
          %2312 = vperm.xlu0 %2311, %v1752
          %v2313 = vpop.permute.xlu0 %2312
          %2315 = vset.pattern.permute.xlu0 1
          %2316 = vperm.xlu0 %2315, %v1753
          %v2317 = vpop.permute.xlu0 %2316
          %2319 = vset.pattern.permute.xlu0 1
          %2320 = vperm.xlu0 %2319, %v1754
          %v2321 = vpop.permute.xlu0 %2320
          %2323 = vset.pattern.permute.xlu0 1
          %2324 = vperm.xlu0 %2323, %v1755
          %v2325 = vpop.permute.xlu0 %2324
          %2327 = vset.pattern.permute.xlu0 1
          %2328 = vperm.xlu0 %2327, %v1756
          %v2329 = vpop.permute.xlu0 %2328
          %2331 = vset.pattern.permute.xlu0 1
          %2332 = vperm.xlu0 %2331, %v1757
          %v2333 = vpop.permute.xlu0 %2332
          %2335 = vset.pattern.permute.xlu0 1
          %2336 = vperm.xlu0 %2335, %v1758
          %v2337 = vpop.permute.xlu0 %2336
          %2339 = vset.pattern.permute.xlu0 1
          %2340 = vperm.xlu0 %2339, %v1759
          %v2341 = vpop.permute.xlu0 %2340
          %2343 = vset.pattern.permute.xlu0 1
          %2344 = vperm.xlu0 %2343, %v1760
          %v2345 = vpop.permute.xlu0 %2344
          %2347 = vset.pattern.permute.xlu0 1
          %2348 = vperm.xlu0 %2347, %v1761
          %v2349 = vpop.permute.xlu0 %2348
          %2351 = vset.pattern.permute.xlu0 1
          %2352 = vperm.xlu0 %2351, %v1762
          %v2353 = vpop.permute.xlu0 %2352
          %2355 = vset.pattern.permute.xlu0 1
          %2356 = vperm.xlu0 %2355, %v1763
          %v2357 = vpop.permute.xlu0 %2356
          %2359 = vset.pattern.permute.xlu0 1
          %2360 = vperm.xlu0 %2359, %v1764
          %v2361 = vpop.permute.xlu0 %2360
          %2363 = vset.pattern.permute.xlu0 1
          %2364 = vperm.xlu0 %2363, %v1765
          %v2365 = vpop.permute.xlu0 %2364
          %2367 = vset.pattern.permute.xlu0 1
          %2368 = vperm.xlu0 %2367, %v1766
          %v2369 = vpop.permute.xlu0 %2368
          %2371 = vset.pattern.permute.xlu0 1
          %2372 = vperm.xlu0 %2371, %v1767
          %v2373 = vpop.permute.xlu0 %2372
          %2375 = vset.pattern.permute.xlu0 1
          %2376 = vperm.xlu0 %2375, %v1768
          %v2377 = vpop.permute.xlu0 %2376
          %2379 = vset.pattern.permute.xlu0 1
          %2380 = vperm.xlu0 %2379, %v1769
          %v2381 = vpop.permute.xlu0 %2380
          %2383 = vset.pattern.permute.xlu0 1
          %2384 = vperm.xlu0 %2383, %v1770
          %v2385 = vpop.permute.xlu0 %2384
          %2387 = vset.pattern.permute.xlu0 1
          %2388 = vperm.xlu0 %2387, %v1771
          %v2389 = vpop.permute.xlu0 %2388
          %2391 = vset.pattern.permute.xlu0 1
          %2392 = vperm.xlu0 %2391, %v1772
          %v2393 = vpop.permute.xlu0 %2392
          %2395 = vset.pattern.permute.xlu0 1
          %2396 = vperm.xlu0 %2395, %v1773
          %v2397 = vpop.permute.xlu0 %2396
          %2399 = vset.pattern.permute.xlu0 1
          %2400 = vperm.xlu0 %2399, %v1774
          %v2401 = vpop.permute.xlu0 %2400
          %2403 = vset.pattern.permute.xlu0 1
          %2404 = vperm.xlu0 %2403, %v1775
          %v2405 = vpop.permute.xlu0 %2404
          %2407 = vset.pattern.permute.xlu0 1
          %2408 = vperm.xlu0 %2407, %v1776
          %v2409 = vpop.permute.xlu0 %2408
          %2411 = vset.pattern.permute.xlu0 1
          %2412 = vperm.xlu0 %2411, %v1777
          %v2413 = vpop.permute.xlu0 %2412
          %2415 = vset.pattern.permute.xlu0 1
          %2416 = vperm.xlu0 %2415, %v1778
          %v2417 = vpop.permute.xlu0 %2416
          %v2419 = vmul.f32 %v2165, %v1587
          %v2420 = vmul.f32 %v2169, %v1588
          %v2421 = vmul.f32 %v2173, %v1589
          %v2422 = vmul.f32 %v2177, %v1590
          %v2423 = vmul.f32 %v2181, %v1591
          %v2424 = vmul.f32 %v2185, %v1592
          %v2425 = vmul.f32 %v2189, %v1593
          %v2426 = vmul.f32 %v2193, %v1594
          %v2427 = vmul.f32 %v2197, %v1595
          %v2428 = vmul.f32 %v2201, %v1596
          %v2429 = vmul.f32 %v2205, %v1597
          %v2430 = vmul.f32 %v2209, %v1598
          %v2431 = vmul.f32 %v2213, %v1599
          %v2432 = vmul.f32 %v2217, %v1600
          %v2433 = vmul.f32 %v2221, %v1601
          %v2434 = vmul.f32 %v2225, %v1602
          %v2435 = vmul.f32 %v2229, %v1603
          %v2436 = vmul.f32 %v2233, %v1604
          %v2437 = vmul.f32 %v2237, %v1605
          %v2438 = vmul.f32 %v2241, %v1606
          %v2439 = vmul.f32 %v2245, %v1607
          %v2440 = vmul.f32 %v2249, %v1608
          %v2441 = vmul.f32 %v2253, %v1609
          %v2442 = vmul.f32 %v2257, %v1610
          %v2443 = vmul.f32 %v2261, %v1611
          %v2444 = vmul.f32 %v2265, %v1612
          %v2445 = vmul.f32 %v2269, %v1613
          %v2446 = vmul.f32 %v2273, %v1614
          %v2447 = vmul.f32 %v2277, %v1615
          %v2448 = vmul.f32 %v2281, %v1616
          %v2449 = vmul.f32 %v2285, %v1617
          %v2450 = vmul.f32 %v2289, %v1618
          %v2451 = vmul.f32 %v2293, %v1619
          %v2452 = vmul.f32 %v2297, %v1620
          %v2453 = vmul.f32 %v2301, %v1621
          %v2454 = vmul.f32 %v2305, %v1622
          %v2455 = vmul.f32 %v2309, %v1623
          %v2456 = vmul.f32 %v2313, %v1624
          %v2457 = vmul.f32 %v2317, %v1625
          %v2458 = vmul.f32 %v2321, %v1626
          %v2459 = vmul.f32 %v2325, %v1627
          %v2460 = vmul.f32 %v2329, %v1628
          %v2461 = vmul.f32 %v2333, %v1629
          %v2462 = vmul.f32 %v2337, %v1630
          %v2463 = vmul.f32 %v2341, %v1631
          %v2464 = vmul.f32 %v2345, %v1632
          %v2465 = vmul.f32 %v2349, %v1633
          %v2466 = vmul.f32 %v2353, %v1634
          %v2467 = vmul.f32 %v2357, %v1635
          %v2468 = vmul.f32 %v2361, %v1636
          %v2469 = vmul.f32 %v2365, %v1637
          %v2470 = vmul.f32 %v2369, %v1638
          %v2471 = vmul.f32 %v2373, %v1639
          %v2472 = vmul.f32 %v2377, %v1640
          %v2473 = vmul.f32 %v2381, %v1641
          %v2474 = vmul.f32 %v2385, %v1642
          %v2475 = vmul.f32 %v2389, %v1643
          %v2476 = vmul.f32 %v2393, %v1644
          %v2477 = vmul.f32 %v2397, %v1645
          %v2478 = vmul.f32 %v2401, %v1646
          %v2479 = vmul.f32 %v2405, %v1647
          %v2480 = vmul.f32 %v2409, %v1648
          %v2481 = vmul.f32 %v2413, %v1649
          %v2482 = vmul.f32 %v2417, %v1650
          %2483 = vset.pattern.permute.xlu0 2
          %2484 = vperm.xlu0 %2483, %v1715
          %v2485 = vpop.permute.xlu0 %2484
          %2487 = vset.pattern.permute.xlu0 2
          %2488 = vperm.xlu0 %2487, %v1716
          %v2489 = vpop.permute.xlu0 %2488
          %2491 = vset.pattern.permute.xlu0 2
          %2492 = vperm.xlu0 %2491, %v1717
          %v2493 = vpop.permute.xlu0 %2492
          %2495 = vset.pattern.permute.xlu0 2
          %2496 = vperm.xlu0 %2495, %v1718
          %v2497 = vpop.permute.xlu0 %2496
          %2499 = vset.pattern.permute.xlu0 2
          %2500 = vperm.xlu0 %2499, %v1719
          %v2501 = vpop.permute.xlu0 %2500
          %2503 = vset.pattern.permute.xlu0 2
          %2504 = vperm.xlu0 %2503, %v1720
          %v2505 = vpop.permute.xlu0 %2504
          %2507 = vset.pattern.permute.xlu0 2
          %2508 = vperm.xlu0 %2507, %v1721
          %v2509 = vpop.permute.xlu0 %2508
          %2511 = vset.pattern.permute.xlu0 2
          %2512 = vperm.xlu0 %2511, %v1722
          %v2513 = vpop.permute.xlu0 %2512
          %2515 = vset.pattern.permute.xlu0 2
          %2516 = vperm.xlu0 %2515, %v1723
          %v2517 = vpop.permute.xlu0 %2516
          %2519 = vset.pattern.permute.xlu0 2
          %2520 = vperm.xlu0 %2519, %v1724
          %v2521 = vpop.permute.xlu0 %2520
          %2523 = vset.pattern.permute.xlu0 2
          %2524 = vperm.xlu0 %2523, %v1725
          %v2525 = vpop.permute.xlu0 %2524
          %2527 = vset.pattern.permute.xlu0 2
          %2528 = vperm.xlu0 %2527, %v1726
          %v2529 = vpop.permute.xlu0 %2528
          %2531 = vset.pattern.permute.xlu0 2
          %2532 = vperm.xlu0 %2531, %v1727
          %v2533 = vpop.permute.xlu0 %2532
          %2535 = vset.pattern.permute.xlu0 2
          %2536 = vperm.xlu0 %2535, %v1728
          %v2537 = vpop.permute.xlu0 %2536
          %2539 = vset.pattern.permute.xlu0 2
          %2540 = vperm.xlu0 %2539, %v1729
          %v2541 = vpop.permute.xlu0 %2540
          %2543 = vset.pattern.permute.xlu0 2
          %2544 = vperm.xlu0 %2543, %v1730
          %v2545 = vpop.permute.xlu0 %2544
          %2547 = vset.pattern.permute.xlu0 2
          %2548 = vperm.xlu0 %2547, %v1731
          %v2549 = vpop.permute.xlu0 %2548
          %2551 = vset.pattern.permute.xlu0 2
          %2552 = vperm.xlu0 %2551, %v1732
          %v2553 = vpop.permute.xlu0 %2552
          %2555 = vset.pattern.permute.xlu0 2
          %2556 = vperm.xlu0 %2555, %v1733
          %v2557 = vpop.permute.xlu0 %2556
          %2559 = vset.pattern.permute.xlu0 2
          %2560 = vperm.xlu0 %2559, %v1734
          %v2561 = vpop.permute.xlu0 %2560
          %2563 = vset.pattern.permute.xlu0 2
          %2564 = vperm.xlu0 %2563, %v1735
          %v2565 = vpop.permute.xlu0 %2564
          %2567 = vset.pattern.permute.xlu0 2
          %2568 = vperm.xlu0 %2567, %v1736
          %v2569 = vpop.permute.xlu0 %2568
          %2571 = vset.pattern.permute.xlu0 2
          %2572 = vperm.xlu0 %2571, %v1737
          %v2573 = vpop.permute.xlu0 %2572
          %2575 = vset.pattern.permute.xlu0 2
          %2576 = vperm.xlu0 %2575, %v1738
          %v2577 = vpop.permute.xlu0 %2576
          %2579 = vset.pattern.permute.xlu0 2
          %2580 = vperm.xlu0 %2579, %v1739
          %v2581 = vpop.permute.xlu0 %2580
          %2583 = vset.pattern.permute.xlu0 2
          %2584 = vperm.xlu0 %2583, %v1740
          %v2585 = vpop.permute.xlu0 %2584
          %2587 = vset.pattern.permute.xlu0 2
          %2588 = vperm.xlu0 %2587, %v1741
          %v2589 = vpop.permute.xlu0 %2588
          %2591 = vset.pattern.permute.xlu0 2
          %2592 = vperm.xlu0 %2591, %v1742
          %v2593 = vpop.permute.xlu0 %2592
          %2595 = vset.pattern.permute.xlu0 2
          %2596 = vperm.xlu0 %2595, %v1743
          %v2597 = vpop.permute.xlu0 %2596
          %2599 = vset.pattern.permute.xlu0 2
          %2600 = vperm.xlu0 %2599, %v1744
          %v2601 = vpop.permute.xlu0 %2600
          %2603 = vset.pattern.permute.xlu0 2
          %2604 = vperm.xlu0 %2603, %v1745
          %v2605 = vpop.permute.xlu0 %2604
          %2607 = vset.pattern.permute.xlu0 2
          %2608 = vperm.xlu0 %2607, %v1746
          %v2609 = vpop.permute.xlu0 %2608
          %2611 = vset.pattern.permute.xlu0 2
          %2612 = vperm.xlu0 %2611, %v1747
          %v2613 = vpop.permute.xlu0 %2612
          %2615 = vset.pattern.permute.xlu0 2
          %2616 = vperm.xlu0 %2615, %v1748
          %v2617 = vpop.permute.xlu0 %2616
          %2619 = vset.pattern.permute.xlu0 2
          %2620 = vperm.xlu0 %2619, %v1749
          %v2621 = vpop.permute.xlu0 %2620
          %2623 = vset.pattern.permute.xlu0 2
          %2624 = vperm.xlu0 %2623, %v1750
          %v2625 = vpop.permute.xlu0 %2624
          %2627 = vset.pattern.permute.xlu0 2
          %2628 = vperm.xlu0 %2627, %v1751
          %v2629 = vpop.permute.xlu0 %2628
          %2631 = vset.pattern.permute.xlu0 2
          %2632 = vperm.xlu0 %2631, %v1752
          %v2633 = vpop.permute.xlu0 %2632
          %2635 = vset.pattern.permute.xlu0 2
          %2636 = vperm.xlu0 %2635, %v1753
          %v2637 = vpop.permute.xlu0 %2636
          %2639 = vset.pattern.permute.xlu0 2
          %2640 = vperm.xlu0 %2639, %v1754
          %v2641 = vpop.permute.xlu0 %2640
          %2643 = vset.pattern.permute.xlu0 2
          %2644 = vperm.xlu0 %2643, %v1755
          %v2645 = vpop.permute.xlu0 %2644
          %2647 = vset.pattern.permute.xlu0 2
          %2648 = vperm.xlu0 %2647, %v1756
          %v2649 = vpop.permute.xlu0 %2648
          %2651 = vset.pattern.permute.xlu0 2
          %2652 = vperm.xlu0 %2651, %v1757
          %v2653 = vpop.permute.xlu0 %2652
          %2655 = vset.pattern.permute.xlu0 2
          %2656 = vperm.xlu0 %2655, %v1758
          %v2657 = vpop.permute.xlu0 %2656
          %2659 = vset.pattern.permute.xlu0 2
          %2660 = vperm.xlu0 %2659, %v1759
          %v2661 = vpop.permute.xlu0 %2660
          %2663 = vset.pattern.permute.xlu0 2
          %2664 = vperm.xlu0 %2663, %v1760
          %v2665 = vpop.permute.xlu0 %2664
          %2667 = vset.pattern.permute.xlu0 2
          %2668 = vperm.xlu0 %2667, %v1761
          %v2669 = vpop.permute.xlu0 %2668
          %2671 = vset.pattern.permute.xlu0 2
          %2672 = vperm.xlu0 %2671, %v1762
          %v2673 = vpop.permute.xlu0 %2672
          %2675 = vset.pattern.permute.xlu0 2
          %2676 = vperm.xlu0 %2675, %v1763
          %v2677 = vpop.permute.xlu0 %2676
          %2679 = vset.pattern.permute.xlu0 2
          %2680 = vperm.xlu0 %2679, %v1764
          %v2681 = vpop.permute.xlu0 %2680
          %2683 = vset.pattern.permute.xlu0 2
          %2684 = vperm.xlu0 %2683, %v1765
          %v2685 = vpop.permute.xlu0 %2684
          %2687 = vset.pattern.permute.xlu0 2
          %2688 = vperm.xlu0 %2687, %v1766
          %v2689 = vpop.permute.xlu0 %2688
          %2691 = vset.pattern.permute.xlu0 2
          %2692 = vperm.xlu0 %2691, %v1767
          %v2693 = vpop.permute.xlu0 %2692
          %2695 = vset.pattern.permute.xlu0 2
          %2696 = vperm.xlu0 %2695, %v1768
          %v2697 = vpop.permute.xlu0 %2696
          %2699 = vset.pattern.permute.xlu0 2
          %2700 = vperm.xlu0 %2699, %v1769
          %v2701 = vpop.permute.xlu0 %2700
          %2703 = vset.pattern.permute.xlu0 2
          %2704 = vperm.xlu0 %2703, %v1770
          %v2705 = vpop.permute.xlu0 %2704
          %2707 = vset.pattern.permute.xlu0 2
          %2708 = vperm.xlu0 %2707, %v1771
          %v2709 = vpop.permute.xlu0 %2708
          %2711 = vset.pattern.permute.xlu0 2
          %2712 = vperm.xlu0 %2711, %v1772
          %v2713 = vpop.permute.xlu0 %2712
          %2715 = vset.pattern.permute.xlu0 2
          %2716 = vperm.xlu0 %2715, %v1773
          %v2717 = vpop.permute.xlu0 %2716
          %2719 = vset.pattern.permute.xlu0 2
          %2720 = vperm.xlu0 %2719, %v1774
          %v2721 = vpop.permute.xlu0 %2720
          %2723 = vset.pattern.permute.xlu0 2
          %2724 = vperm.xlu0 %2723, %v1775
          %v2725 = vpop.permute.xlu0 %2724
          %2727 = vset.pattern.permute.xlu0 2
          %2728 = vperm.xlu0 %2727, %v1776
          %v2729 = vpop.permute.xlu0 %2728
          %2731 = vset.pattern.permute.xlu0 2
          %2732 = vperm.xlu0 %2731, %v1777
          %v2733 = vpop.permute.xlu0 %2732
          %2735 = vset.pattern.permute.xlu0 2
          %2736 = vperm.xlu0 %2735, %v1778
          %v2737 = vpop.permute.xlu0 %2736
          %v2739 = vmul.f32 %v2485, %v1587
          %v2740 = vmul.f32 %v2489, %v1588
          %v2741 = vmul.f32 %v2493, %v1589
          %v2742 = vmul.f32 %v2497, %v1590
          %v2743 = vmul.f32 %v2501, %v1591
          %v2744 = vmul.f32 %v2505, %v1592
          %v2745 = vmul.f32 %v2509, %v1593
          %v2746 = vmul.f32 %v2513, %v1594
          %v2747 = vmul.f32 %v2517, %v1595
          %v2748 = vmul.f32 %v2521, %v1596
          %v2749 = vmul.f32 %v2525, %v1597
          %v2750 = vmul.f32 %v2529, %v1598
          %v2751 = vmul.f32 %v2533, %v1599
          %v2752 = vmul.f32 %v2537, %v1600
          %v2753 = vmul.f32 %v2541, %v1601
          %v2754 = vmul.f32 %v2545, %v1602
          %v2755 = vmul.f32 %v2549, %v1603
          %v2756 = vmul.f32 %v2553, %v1604
          %v2757 = vmul.f32 %v2557, %v1605
          %v2758 = vmul.f32 %v2561, %v1606
          %v2759 = vmul.f32 %v2565, %v1607
          %v2760 = vmul.f32 %v2569, %v1608
          %v2761 = vmul.f32 %v2573, %v1609
          %v2762 = vmul.f32 %v2577, %v1610
          %v2763 = vmul.f32 %v2581, %v1611
          %v2764 = vmul.f32 %v2585, %v1612
          %v2765 = vmul.f32 %v2589, %v1613
          %v2766 = vmul.f32 %v2593, %v1614
          %v2767 = vmul.f32 %v2597, %v1615
          %v2768 = vmul.f32 %v2601, %v1616
          %v2769 = vmul.f32 %v2605, %v1617
          %v2770 = vmul.f32 %v2609, %v1618
          %v2771 = vmul.f32 %v2613, %v1619
          %v2772 = vmul.f32 %v2617, %v1620
          %v2773 = vmul.f32 %v2621, %v1621
          %v2774 = vmul.f32 %v2625, %v1622
          %v2775 = vmul.f32 %v2629, %v1623
          %v2776 = vmul.f32 %v2633, %v1624
          %v2777 = vmul.f32 %v2637, %v1625
          %v2778 = vmul.f32 %v2641, %v1626
          %v2779 = vmul.f32 %v2645, %v1627
          %v2780 = vmul.f32 %v2649, %v1628
          %v2781 = vmul.f32 %v2653, %v1629
          %v2782 = vmul.f32 %v2657, %v1630
          %v2783 = vmul.f32 %v2661, %v1631
          %v2784 = vmul.f32 %v2665, %v1632
          %v2785 = vmul.f32 %v2669, %v1633
          %v2786 = vmul.f32 %v2673, %v1634
          %v2787 = vmul.f32 %v2677, %v1635
          %v2788 = vmul.f32 %v2681, %v1636
          %v2789 = vmul.f32 %v2685, %v1637
          %v2790 = vmul.f32 %v2689, %v1638
          %v2791 = vmul.f32 %v2693, %v1639
          %v2792 = vmul.f32 %v2697, %v1640
          %v2793 = vmul.f32 %v2701, %v1641
          %v2794 = vmul.f32 %v2705, %v1642
          %v2795 = vmul.f32 %v2709, %v1643
          %v2796 = vmul.f32 %v2713, %v1644
          %v2797 = vmul.f32 %v2717, %v1645
          %v2798 = vmul.f32 %v2721, %v1646
          %v2799 = vmul.f32 %v2725, %v1647
          %v2800 = vmul.f32 %v2729, %v1648
          %v2801 = vmul.f32 %v2733, %v1649
          %v2802 = vmul.f32 %v2737, %v1650
          %2803 = vset.pattern.permute.xlu0 3
          %2804 = vperm.xlu0 %2803, %v1715
          %v2805 = vpop.permute.xlu0 %2804
          %2807 = vset.pattern.permute.xlu0 3
          %2808 = vperm.xlu0 %2807, %v1716
          %v2809 = vpop.permute.xlu0 %2808
          %2811 = vset.pattern.permute.xlu0 3
          %2812 = vperm.xlu0 %2811, %v1717
          %v2813 = vpop.permute.xlu0 %2812
          %2815 = vset.pattern.permute.xlu0 3
          %2816 = vperm.xlu0 %2815, %v1718
          %v2817 = vpop.permute.xlu0 %2816
          %2819 = vset.pattern.permute.xlu0 3
          %2820 = vperm.xlu0 %2819, %v1719
          %v2821 = vpop.permute.xlu0 %2820
          %2823 = vset.pattern.permute.xlu0 3
          %2824 = vperm.xlu0 %2823, %v1720
          %v2825 = vpop.permute.xlu0 %2824
          %2827 = vset.pattern.permute.xlu0 3
          %2828 = vperm.xlu0 %2827, %v1721
          %v2829 = vpop.permute.xlu0 %2828
          %2831 = vset.pattern.permute.xlu0 3
          %2832 = vperm.xlu0 %2831, %v1722
          %v2833 = vpop.permute.xlu0 %2832
          %2835 = vset.pattern.permute.xlu0 3
          %2836 = vperm.xlu0 %2835, %v1723
          %v2837 = vpop.permute.xlu0 %2836
          %2839 = vset.pattern.permute.xlu0 3
          %2840 = vperm.xlu0 %2839, %v1724
          %v2841 = vpop.permute.xlu0 %2840
          %2843 = vset.pattern.permute.xlu0 3
          %2844 = vperm.xlu0 %2843, %v1725
          %v2845 = vpop.permute.xlu0 %2844
          %2847 = vset.pattern.permute.xlu0 3
          %2848 = vperm.xlu0 %2847, %v1726
          %v2849 = vpop.permute.xlu0 %2848
          %2851 = vset.pattern.permute.xlu0 3
          %2852 = vperm.xlu0 %2851, %v1727
          %v2853 = vpop.permute.xlu0 %2852
          %2855 = vset.pattern.permute.xlu0 3
          %2856 = vperm.xlu0 %2855, %v1728
          %v2857 = vpop.permute.xlu0 %2856
          %2859 = vset.pattern.permute.xlu0 3
          %2860 = vperm.xlu0 %2859, %v1729
          %v2861 = vpop.permute.xlu0 %2860
          %2863 = vset.pattern.permute.xlu0 3
          %2864 = vperm.xlu0 %2863, %v1730
          %v2865 = vpop.permute.xlu0 %2864
          %2867 = vset.pattern.permute.xlu0 3
          %2868 = vperm.xlu0 %2867, %v1731
          %v2869 = vpop.permute.xlu0 %2868
          %2871 = vset.pattern.permute.xlu0 3
          %2872 = vperm.xlu0 %2871, %v1732
          %v2873 = vpop.permute.xlu0 %2872
          %2875 = vset.pattern.permute.xlu0 3
          %2876 = vperm.xlu0 %2875, %v1733
          %v2877 = vpop.permute.xlu0 %2876
          %2879 = vset.pattern.permute.xlu0 3
          %2880 = vperm.xlu0 %2879, %v1734
          %v2881 = vpop.permute.xlu0 %2880
          %2883 = vset.pattern.permute.xlu0 3
          %2884 = vperm.xlu0 %2883, %v1735
          %v2885 = vpop.permute.xlu0 %2884
          %2887 = vset.pattern.permute.xlu0 3
          %2888 = vperm.xlu0 %2887, %v1736
          %v2889 = vpop.permute.xlu0 %2888
          %2891 = vset.pattern.permute.xlu0 3
          %2892 = vperm.xlu0 %2891, %v1737
          %v2893 = vpop.permute.xlu0 %2892
          %2895 = vset.pattern.permute.xlu0 3
          %2896 = vperm.xlu0 %2895, %v1738
          %v2897 = vpop.permute.xlu0 %2896
          %2899 = vset.pattern.permute.xlu0 3
          %2900 = vperm.xlu0 %2899, %v1739
          %v2901 = vpop.permute.xlu0 %2900
          %2903 = vset.pattern.permute.xlu0 3
          %2904 = vperm.xlu0 %2903, %v1740
          %v2905 = vpop.permute.xlu0 %2904
          %2907 = vset.pattern.permute.xlu0 3
          %2908 = vperm.xlu0 %2907, %v1741
          %v2909 = vpop.permute.xlu0 %2908
          %2911 = vset.pattern.permute.xlu0 3
          %2912 = vperm.xlu0 %2911, %v1742
          %v2913 = vpop.permute.xlu0 %2912
          %2915 = vset.pattern.permute.xlu0 3
          %2916 = vperm.xlu0 %2915, %v1743
          %v2917 = vpop.permute.xlu0 %2916
          %2919 = vset.pattern.permute.xlu0 3
          %2920 = vperm.xlu0 %2919, %v1744
          %v2921 = vpop.permute.xlu0 %2920
          %2923 = vset.pattern.permute.xlu0 3
          %2924 = vperm.xlu0 %2923, %v1745
          %v2925 = vpop.permute.xlu0 %2924
          %2927 = vset.pattern.permute.xlu0 3
          %2928 = vperm.xlu0 %2927, %v1746
          %v2929 = vpop.permute.xlu0 %2928
          %2931 = vset.pattern.permute.xlu0 3
          %2932 = vperm.xlu0 %2931, %v1747
          %v2933 = vpop.permute.xlu0 %2932
          %2935 = vset.pattern.permute.xlu0 3
          %2936 = vperm.xlu0 %2935, %v1748
          %v2937 = vpop.permute.xlu0 %2936
          %2939 = vset.pattern.permute.xlu0 3
          %2940 = vperm.xlu0 %2939, %v1749
          %v2941 = vpop.permute.xlu0 %2940
          %2943 = vset.pattern.permute.xlu0 3
          %2944 = vperm.xlu0 %2943, %v1750
          %v2945 = vpop.permute.xlu0 %2944
          %2947 = vset.pattern.permute.xlu0 3
          %2948 = vperm.xlu0 %2947, %v1751
          %v2949 = vpop.permute.xlu0 %2948
          %2951 = vset.pattern.permute.xlu0 3
          %2952 = vperm.xlu0 %2951, %v1752
          %v2953 = vpop.permute.xlu0 %2952
          %2955 = vset.pattern.permute.xlu0 3
          %2956 = vperm.xlu0 %2955, %v1753
          %v2957 = vpop.permute.xlu0 %2956
          %2959 = vset.pattern.permute.xlu0 3
          %2960 = vperm.xlu0 %2959, %v1754
          %v2961 = vpop.permute.xlu0 %2960
          %2963 = vset.pattern.permute.xlu0 3
          %2964 = vperm.xlu0 %2963, %v1755
          %v2965 = vpop.permute.xlu0 %2964
          %2967 = vset.pattern.permute.xlu0 3
          %2968 = vperm.xlu0 %2967, %v1756
          %v2969 = vpop.permute.xlu0 %2968
          %2971 = vset.pattern.permute.xlu0 3
          %2972 = vperm.xlu0 %2971, %v1757
          %v2973 = vpop.permute.xlu0 %2972
          %2975 = vset.pattern.permute.xlu0 3
          %2976 = vperm.xlu0 %2975, %v1758
          %v2977 = vpop.permute.xlu0 %2976
          %2979 = vset.pattern.permute.xlu0 3
          %2980 = vperm.xlu0 %2979, %v1759
          %v2981 = vpop.permute.xlu0 %2980
          %2983 = vset.pattern.permute.xlu0 3
          %2984 = vperm.xlu0 %2983, %v1760
          %v2985 = vpop.permute.xlu0 %2984
          %2987 = vset.pattern.permute.xlu0 3
          %2988 = vperm.xlu0 %2987, %v1761
          %v2989 = vpop.permute.xlu0 %2988
          %2991 = vset.pattern.permute.xlu0 3
          %2992 = vperm.xlu0 %2991, %v1762
          %v2993 = vpop.permute.xlu0 %2992
          %2995 = vset.pattern.permute.xlu0 3
          %2996 = vperm.xlu0 %2995, %v1763
          %v2997 = vpop.permute.xlu0 %2996
          %2999 = vset.pattern.permute.xlu0 3
          %3000 = vperm.xlu0 %2999, %v1764
          %v3001 = vpop.permute.xlu0 %3000
          %3003 = vset.pattern.permute.xlu0 3
          %3004 = vperm.xlu0 %3003, %v1765
          %v3005 = vpop.permute.xlu0 %3004
          %3007 = vset.pattern.permute.xlu0 3
          %3008 = vperm.xlu0 %3007, %v1766
          %v3009 = vpop.permute.xlu0 %3008
          %3011 = vset.pattern.permute.xlu0 3
          %3012 = vperm.xlu0 %3011, %v1767
          %v3013 = vpop.permute.xlu0 %3012
          %3015 = vset.pattern.permute.xlu0 3
          %3016 = vperm.xlu0 %3015, %v1768
          %v3017 = vpop.permute.xlu0 %3016
          %3019 = vset.pattern.permute.xlu0 3
          %3020 = vperm.xlu0 %3019, %v1769
          %v3021 = vpop.permute.xlu0 %3020
          %3023 = vset.pattern.permute.xlu0 3
          %3024 = vperm.xlu0 %3023, %v1770
          %v3025 = vpop.permute.xlu0 %3024
          %3027 = vset.pattern.permute.xlu0 3
          %3028 = vperm.xlu0 %3027, %v1771
          %v3029 = vpop.permute.xlu0 %3028
          %3031 = vset.pattern.permute.xlu0 3
          %3032 = vperm.xlu0 %3031, %v1772
          %v3033 = vpop.permute.xlu0 %3032
          %3035 = vset.pattern.permute.xlu0 3
          %3036 = vperm.xlu0 %3035, %v1773
          %v3037 = vpop.permute.xlu0 %3036
          %3039 = vset.pattern.permute.xlu0 3
          %3040 = vperm.xlu0 %3039, %v1774
          %v3041 = vpop.permute.xlu0 %3040
          %3043 = vset.pattern.permute.xlu0 3
          %3044 = vperm.xlu0 %3043, %v1775
          %v3045 = vpop.permute.xlu0 %3044
          %3047 = vset.pattern.permute.xlu0 3
          %3048 = vperm.xlu0 %3047, %v1776
          %v3049 = vpop.permute.xlu0 %3048
          %3051 = vset.pattern.permute.xlu0 3
          %3052 = vperm.xlu0 %3051, %v1777
          %v3053 = vpop.permute.xlu0 %3052
          %3055 = vset.pattern.permute.xlu0 3
          %3056 = vperm.xlu0 %3055, %v1778
          %v3057 = vpop.permute.xlu0 %3056
          %v3059 = vmul.f32 %v2805, %v1587
          %v3060 = vmul.f32 %v2809, %v1588
          %v3061 = vmul.f32 %v2813, %v1589
          %v3062 = vmul.f32 %v2817, %v1590
          %v3063 = vmul.f32 %v2821, %v1591
          %v3064 = vmul.f32 %v2825, %v1592
          %v3065 = vmul.f32 %v2829, %v1593
          %v3066 = vmul.f32 %v2833, %v1594
          %v3067 = vmul.f32 %v2837, %v1595
          %v3068 = vmul.f32 %v2841, %v1596
          %v3069 = vmul.f32 %v2845, %v1597
          %v3070 = vmul.f32 %v2849, %v1598
          %v3071 = vmul.f32 %v2853, %v1599
          %v3072 = vmul.f32 %v2857, %v1600
          %v3073 = vmul.f32 %v2861, %v1601
          %v3074 = vmul.f32 %v2865, %v1602
          %v3075 = vmul.f32 %v2869, %v1603
          %v3076 = vmul.f32 %v2873, %v1604
          %v3077 = vmul.f32 %v2877, %v1605
          %v3078 = vmul.f32 %v2881, %v1606
          %v3079 = vmul.f32 %v2885, %v1607
          %v3080 = vmul.f32 %v2889, %v1608
          %v3081 = vmul.f32 %v2893, %v1609
          %v3082 = vmul.f32 %v2897, %v1610
          %v3083 = vmul.f32 %v2901, %v1611
          %v3084 = vmul.f32 %v2905, %v1612
          %v3085 = vmul.f32 %v2909, %v1613
          %v3086 = vmul.f32 %v2913, %v1614
          %v3087 = vmul.f32 %v2917, %v1615
          %v3088 = vmul.f32 %v2921, %v1616
          %v3089 = vmul.f32 %v2925, %v1617
          %v3090 = vmul.f32 %v2929, %v1618
          %v3091 = vmul.f32 %v2933, %v1619
          %v3092 = vmul.f32 %v2937, %v1620
          %v3093 = vmul.f32 %v2941, %v1621
          %v3094 = vmul.f32 %v2945, %v1622
          %v3095 = vmul.f32 %v2949, %v1623
          %v3096 = vmul.f32 %v2953, %v1624
          %v3097 = vmul.f32 %v2957, %v1625
          %v3098 = vmul.f32 %v2961, %v1626
          %v3099 = vmul.f32 %v2965, %v1627
          %v3100 = vmul.f32 %v2969, %v1628
          %v3101 = vmul.f32 %v2973, %v1629
          %v3102 = vmul.f32 %v2977, %v1630
          %v3103 = vmul.f32 %v2981, %v1631
          %v3104 = vmul.f32 %v2985, %v1632
          %v3105 = vmul.f32 %v2989, %v1633
          %v3106 = vmul.f32 %v2993, %v1634
          %v3107 = vmul.f32 %v2997, %v1635
          %v3108 = vmul.f32 %v3001, %v1636
          %v3109 = vmul.f32 %v3005, %v1637
          %v3110 = vmul.f32 %v3009, %v1638
          %v3111 = vmul.f32 %v3013, %v1639
          %v3112 = vmul.f32 %v3017, %v1640
          %v3113 = vmul.f32 %v3021, %v1641
          %v3114 = vmul.f32 %v3025, %v1642
          %v3115 = vmul.f32 %v3029, %v1643
          %v3116 = vmul.f32 %v3033, %v1644
          %v3117 = vmul.f32 %v3037, %v1645
          %v3118 = vmul.f32 %v3041, %v1646
          %v3119 = vmul.f32 %v3045, %v1647
          %v3120 = vmul.f32 %v3049, %v1648
          %v3121 = vmul.f32 %v3053, %v1649
          %v3122 = vmul.f32 %v3057, %v1650
          %3123 = vset.pattern.permute.xlu0 4
          %3124 = vperm.xlu0 %3123, %v1715
          %v3125 = vpop.permute.xlu0 %3124
          %3127 = vset.pattern.permute.xlu0 4
          %3128 = vperm.xlu0 %3127, %v1716
          %v3129 = vpop.permute.xlu0 %3128
          %3131 = vset.pattern.permute.xlu0 4
          %3132 = vperm.xlu0 %3131, %v1717
          %v3133 = vpop.permute.xlu0 %3132
          %3135 = vset.pattern.permute.xlu0 4
          %3136 = vperm.xlu0 %3135, %v1718
          %v3137 = vpop.permute.xlu0 %3136
          %3139 = vset.pattern.permute.xlu0 4
          %3140 = vperm.xlu0 %3139, %v1719
          %v3141 = vpop.permute.xlu0 %3140
          %3143 = vset.pattern.permute.xlu0 4
          %3144 = vperm.xlu0 %3143, %v1720
          %v3145 = vpop.permute.xlu0 %3144
          %3147 = vset.pattern.permute.xlu0 4
          %3148 = vperm.xlu0 %3147, %v1721
          %v3149 = vpop.permute.xlu0 %3148
          %3151 = vset.pattern.permute.xlu0 4
          %3152 = vperm.xlu0 %3151, %v1722
          %v3153 = vpop.permute.xlu0 %3152
          %3155 = vset.pattern.permute.xlu0 4
          %3156 = vperm.xlu0 %3155, %v1723
          %v3157 = vpop.permute.xlu0 %3156
          %3159 = vset.pattern.permute.xlu0 4
          %3160 = vperm.xlu0 %3159, %v1724
          %v3161 = vpop.permute.xlu0 %3160
          %3163 = vset.pattern.permute.xlu0 4
          %3164 = vperm.xlu0 %3163, %v1725
          %v3165 = vpop.permute.xlu0 %3164
          %3167 = vset.pattern.permute.xlu0 4
          %3168 = vperm.xlu0 %3167, %v1726
          %v3169 = vpop.permute.xlu0 %3168
          %3171 = vset.pattern.permute.xlu0 4
          %3172 = vperm.xlu0 %3171, %v1727
          %v3173 = vpop.permute.xlu0 %3172
          %3175 = vset.pattern.permute.xlu0 4
          %3176 = vperm.xlu0 %3175, %v1728
          %v3177 = vpop.permute.xlu0 %3176
          %3179 = vset.pattern.permute.xlu0 4
          %3180 = vperm.xlu0 %3179, %v1729
          %v3181 = vpop.permute.xlu0 %3180
          %3183 = vset.pattern.permute.xlu0 4
          %3184 = vperm.xlu0 %3183, %v1730
          %v3185 = vpop.permute.xlu0 %3184
          %3187 = vset.pattern.permute.xlu0 4
          %3188 = vperm.xlu0 %3187, %v1731
          %v3189 = vpop.permute.xlu0 %3188
          %3191 = vset.pattern.permute.xlu0 4
          %3192 = vperm.xlu0 %3191, %v1732
          %v3193 = vpop.permute.xlu0 %3192
          %3195 = vset.pattern.permute.xlu0 4
          %3196 = vperm.xlu0 %3195, %v1733
          %v3197 = vpop.permute.xlu0 %3196
          %3199 = vset.pattern.permute.xlu0 4
          %3200 = vperm.xlu0 %3199, %v1734
          %v3201 = vpop.permute.xlu0 %3200
          %3203 = vset.pattern.permute.xlu0 4
          %3204 = vperm.xlu0 %3203, %v1735
          %v3205 = vpop.permute.xlu0 %3204
          %3207 = vset.pattern.permute.xlu0 4
          %3208 = vperm.xlu0 %3207, %v1736
          %v3209 = vpop.permute.xlu0 %3208
          %3211 = vset.pattern.permute.xlu0 4
          %3212 = vperm.xlu0 %3211, %v1737
          %v3213 = vpop.permute.xlu0 %3212
          %3215 = vset.pattern.permute.xlu0 4
          %3216 = vperm.xlu0 %3215, %v1738
          %v3217 = vpop.permute.xlu0 %3216
          %3219 = vset.pattern.permute.xlu0 4
          %3220 = vperm.xlu0 %3219, %v1739
          %v3221 = vpop.permute.xlu0 %3220
          %3223 = vset.pattern.permute.xlu0 4
          %3224 = vperm.xlu0 %3223, %v1740
          %v3225 = vpop.permute.xlu0 %3224
          %3227 = vset.pattern.permute.xlu0 4
          %3228 = vperm.xlu0 %3227, %v1741
          %v3229 = vpop.permute.xlu0 %3228
          %3231 = vset.pattern.permute.xlu0 4
          %3232 = vperm.xlu0 %3231, %v1742
          %v3233 = vpop.permute.xlu0 %3232
          %3235 = vset.pattern.permute.xlu0 4
          %3236 = vperm.xlu0 %3235, %v1743
          %v3237 = vpop.permute.xlu0 %3236
          %3239 = vset.pattern.permute.xlu0 4
          %3240 = vperm.xlu0 %3239, %v1744
          %v3241 = vpop.permute.xlu0 %3240
          %3243 = vset.pattern.permute.xlu0 4
          %3244 = vperm.xlu0 %3243, %v1745
          %v3245 = vpop.permute.xlu0 %3244
          %3247 = vset.pattern.permute.xlu0 4
          %3248 = vperm.xlu0 %3247, %v1746
          %v3249 = vpop.permute.xlu0 %3248
          %3251 = vset.pattern.permute.xlu0 4
          %3252 = vperm.xlu0 %3251, %v1747
          %v3253 = vpop.permute.xlu0 %3252
          %3255 = vset.pattern.permute.xlu0 4
          %3256 = vperm.xlu0 %3255, %v1748
          %v3257 = vpop.permute.xlu0 %3256
          %3259 = vset.pattern.permute.xlu0 4
          %3260 = vperm.xlu0 %3259, %v1749
          %v3261 = vpop.permute.xlu0 %3260
          %3263 = vset.pattern.permute.xlu0 4
          %3264 = vperm.xlu0 %3263, %v1750
          %v3265 = vpop.permute.xlu0 %3264
          %3267 = vset.pattern.permute.xlu0 4
          %3268 = vperm.xlu0 %3267, %v1751
          %v3269 = vpop.permute.xlu0 %3268
          %3271 = vset.pattern.permute.xlu0 4
          %3272 = vperm.xlu0 %3271, %v1752
          %v3273 = vpop.permute.xlu0 %3272
          %3275 = vset.pattern.permute.xlu0 4
          %3276 = vperm.xlu0 %3275, %v1753
          %v3277 = vpop.permute.xlu0 %3276
          %3279 = vset.pattern.permute.xlu0 4
          %3280 = vperm.xlu0 %3279, %v1754
          %v3281 = vpop.permute.xlu0 %3280
          %3283 = vset.pattern.permute.xlu0 4
          %3284 = vperm.xlu0 %3283, %v1755
          %v3285 = vpop.permute.xlu0 %3284
          %3287 = vset.pattern.permute.xlu0 4
          %3288 = vperm.xlu0 %3287, %v1756
          %v3289 = vpop.permute.xlu0 %3288
          %3291 = vset.pattern.permute.xlu0 4
          %3292 = vperm.xlu0 %3291, %v1757
          %v3293 = vpop.permute.xlu0 %3292
          %3295 = vset.pattern.permute.xlu0 4
          %3296 = vperm.xlu0 %3295, %v1758
          %v3297 = vpop.permute.xlu0 %3296
          %3299 = vset.pattern.permute.xlu0 4
          %3300 = vperm.xlu0 %3299, %v1759
          %v3301 = vpop.permute.xlu0 %3300
          %3303 = vset.pattern.permute.xlu0 4
          %3304 = vperm.xlu0 %3303, %v1760
          %v3305 = vpop.permute.xlu0 %3304
          %3307 = vset.pattern.permute.xlu0 4
          %3308 = vperm.xlu0 %3307, %v1761
          %v3309 = vpop.permute.xlu0 %3308
          %3311 = vset.pattern.permute.xlu0 4
          %3312 = vperm.xlu0 %3311, %v1762
          %v3313 = vpop.permute.xlu0 %3312
          %3315 = vset.pattern.permute.xlu0 4
          %3316 = vperm.xlu0 %3315, %v1763
          %v3317 = vpop.permute.xlu0 %3316
          %3319 = vset.pattern.permute.xlu0 4
          %3320 = vperm.xlu0 %3319, %v1764
          %v3321 = vpop.permute.xlu0 %3320
          %3323 = vset.pattern.permute.xlu0 4
          %3324 = vperm.xlu0 %3323, %v1765
          %v3325 = vpop.permute.xlu0 %3324
          %3327 = vset.pattern.permute.xlu0 4
          %3328 = vperm.xlu0 %3327, %v1766
          %v3329 = vpop.permute.xlu0 %3328
          %3331 = vset.pattern.permute.xlu0 4
          %3332 = vperm.xlu0 %3331, %v1767
          %v3333 = vpop.permute.xlu0 %3332
          %3335 = vset.pattern.permute.xlu0 4
          %3336 = vperm.xlu0 %3335, %v1768
          %v3337 = vpop.permute.xlu0 %3336
          %3339 = vset.pattern.permute.xlu0 4
          %3340 = vperm.xlu0 %3339, %v1769
          %v3341 = vpop.permute.xlu0 %3340
          %3343 = vset.pattern.permute.xlu0 4
          %3344 = vperm.xlu0 %3343, %v1770
          %v3345 = vpop.permute.xlu0 %3344
          %3347 = vset.pattern.permute.xlu0 4
          %3348 = vperm.xlu0 %3347, %v1771
          %v3349 = vpop.permute.xlu0 %3348
          %3351 = vset.pattern.permute.xlu0 4
          %3352 = vperm.xlu0 %3351, %v1772
          %v3353 = vpop.permute.xlu0 %3352
          %3355 = vset.pattern.permute.xlu0 4
          %3356 = vperm.xlu0 %3355, %v1773
          %v3357 = vpop.permute.xlu0 %3356
          %3359 = vset.pattern.permute.xlu0 4
          %3360 = vperm.xlu0 %3359, %v1774
          %v3361 = vpop.permute.xlu0 %3360
          %3363 = vset.pattern.permute.xlu0 4
          %3364 = vperm.xlu0 %3363, %v1775
          %v3365 = vpop.permute.xlu0 %3364
          %3367 = vset.pattern.permute.xlu0 4
          %3368 = vperm.xlu0 %3367, %v1776
          %v3369 = vpop.permute.xlu0 %3368
          %3371 = vset.pattern.permute.xlu0 4
          %3372 = vperm.xlu0 %3371, %v1777
          %v3373 = vpop.permute.xlu0 %3372
          %3375 = vset.pattern.permute.xlu0 4
          %3376 = vperm.xlu0 %3375, %v1778
          %v3377 = vpop.permute.xlu0 %3376
          %v3379 = vmul.f32 %v3125, %v1587
          %v3380 = vmul.f32 %v3129, %v1588
          %v3381 = vmul.f32 %v3133, %v1589
          %v3382 = vmul.f32 %v3137, %v1590
          %v3383 = vmul.f32 %v3141, %v1591
          %v3384 = vmul.f32 %v3145, %v1592
          %v3385 = vmul.f32 %v3149, %v1593
          %v3386 = vmul.f32 %v3153, %v1594
          %v3387 = vmul.f32 %v3157, %v1595
          %v3388 = vmul.f32 %v3161, %v1596
          %v3389 = vmul.f32 %v3165, %v1597
          %v3390 = vmul.f32 %v3169, %v1598
          %v3391 = vmul.f32 %v3173, %v1599
          %v3392 = vmul.f32 %v3177, %v1600
          %v3393 = vmul.f32 %v3181, %v1601
          %v3394 = vmul.f32 %v3185, %v1602
          %v3395 = vmul.f32 %v3189, %v1603
          %v3396 = vmul.f32 %v3193, %v1604
          %v3397 = vmul.f32 %v3197, %v1605
          %v3398 = vmul.f32 %v3201, %v1606
          %v3399 = vmul.f32 %v3205, %v1607
          %v3400 = vmul.f32 %v3209, %v1608
          %v3401 = vmul.f32 %v3213, %v1609
          %v3402 = vmul.f32 %v3217, %v1610
          %v3403 = vmul.f32 %v3221, %v1611
          %v3404 = vmul.f32 %v3225, %v1612
          %v3405 = vmul.f32 %v3229, %v1613
          %v3406 = vmul.f32 %v3233, %v1614
          %v3407 = vmul.f32 %v3237, %v1615
          %v3408 = vmul.f32 %v3241, %v1616
          %v3409 = vmul.f32 %v3245, %v1617
          %v3410 = vmul.f32 %v3249, %v1618
          %v3411 = vmul.f32 %v3253, %v1619
          %v3412 = vmul.f32 %v3257, %v1620
          %v3413 = vmul.f32 %v3261, %v1621
          %v3414 = vmul.f32 %v3265, %v1622
          %v3415 = vmul.f32 %v3269, %v1623
          %v3416 = vmul.f32 %v3273, %v1624
          %v3417 = vmul.f32 %v3277, %v1625
          %v3418 = vmul.f32 %v3281, %v1626
          %v3419 = vmul.f32 %v3285, %v1627
          %v3420 = vmul.f32 %v3289, %v1628
          %v3421 = vmul.f32 %v3293, %v1629
          %v3422 = vmul.f32 %v3297, %v1630
          %v3423 = vmul.f32 %v3301, %v1631
          %v3424 = vmul.f32 %v3305, %v1632
          %v3425 = vmul.f32 %v3309, %v1633
          %v3426 = vmul.f32 %v3313, %v1634
          %v3427 = vmul.f32 %v3317, %v1635
          %v3428 = vmul.f32 %v3321, %v1636
          %v3429 = vmul.f32 %v3325, %v1637
          %v3430 = vmul.f32 %v3329, %v1638
          %v3431 = vmul.f32 %v3333, %v1639
          %v3432 = vmul.f32 %v3337, %v1640
          %v3433 = vmul.f32 %v3341, %v1641
          %v3434 = vmul.f32 %v3345, %v1642
          %v3435 = vmul.f32 %v3349, %v1643
          %v3436 = vmul.f32 %v3353, %v1644
          %v3437 = vmul.f32 %v3357, %v1645
          %v3438 = vmul.f32 %v3361, %v1646
          %v3439 = vmul.f32 %v3365, %v1647
          %v3440 = vmul.f32 %v3369, %v1648
          %v3441 = vmul.f32 %v3373, %v1649
          %v3442 = vmul.f32 %v3377, %v1650
          %3443 = vset.pattern.permute.xlu0 5
          %3444 = vperm.xlu0 %3443, %v1715
          %v3445 = vpop.permute.xlu0 %3444
          %3447 = vset.pattern.permute.xlu0 5
          %3448 = vperm.xlu0 %3447, %v1716
          %v3449 = vpop.permute.xlu0 %3448
          %3451 = vset.pattern.permute.xlu0 5
          %3452 = vperm.xlu0 %3451, %v1717
          %v3453 = vpop.permute.xlu0 %3452
          %3455 = vset.pattern.permute.xlu0 5
          %3456 = vperm.xlu0 %3455, %v1718
          %v3457 = vpop.permute.xlu0 %3456
          %3459 = vset.pattern.permute.xlu0 5
          %3460 = vperm.xlu0 %3459, %v1719
          %v3461 = vpop.permute.xlu0 %3460
          %3463 = vset.pattern.permute.xlu0 5
          %3464 = vperm.xlu0 %3463, %v1720
          %v3465 = vpop.permute.xlu0 %3464
          %3467 = vset.pattern.permute.xlu0 5
          %3468 = vperm.xlu0 %3467, %v1721
          %v3469 = vpop.permute.xlu0 %3468
          %3471 = vset.pattern.permute.xlu0 5
          %3472 = vperm.xlu0 %3471, %v1722
          %v3473 = vpop.permute.xlu0 %3472
          %3475 = vset.pattern.permute.xlu0 5
          %3476 = vperm.xlu0 %3475, %v1723
          %v3477 = vpop.permute.xlu0 %3476
          %3479 = vset.pattern.permute.xlu0 5
          %3480 = vperm.xlu0 %3479, %v1724
          %v3481 = vpop.permute.xlu0 %3480
          %3483 = vset.pattern.permute.xlu0 5
          %3484 = vperm.xlu0 %3483, %v1725
          %v3485 = vpop.permute.xlu0 %3484
          %3487 = vset.pattern.permute.xlu0 5
          %3488 = vperm.xlu0 %3487, %v1726
          %v3489 = vpop.permute.xlu0 %3488
          %3491 = vset.pattern.permute.xlu0 5
          %3492 = vperm.xlu0 %3491, %v1727
          %v3493 = vpop.permute.xlu0 %3492
          %3495 = vset.pattern.permute.xlu0 5
          %3496 = vperm.xlu0 %3495, %v1728
          %v3497 = vpop.permute.xlu0 %3496
          %3499 = vset.pattern.permute.xlu0 5
          %3500 = vperm.xlu0 %3499, %v1729
          %v3501 = vpop.permute.xlu0 %3500
          %3503 = vset.pattern.permute.xlu0 5
          %3504 = vperm.xlu0 %3503, %v1730
          %v3505 = vpop.permute.xlu0 %3504
          %3507 = vset.pattern.permute.xlu0 5
          %3508 = vperm.xlu0 %3507, %v1731
          %v3509 = vpop.permute.xlu0 %3508
          %3511 = vset.pattern.permute.xlu0 5
          %3512 = vperm.xlu0 %3511, %v1732
          %v3513 = vpop.permute.xlu0 %3512
          %3515 = vset.pattern.permute.xlu0 5
          %3516 = vperm.xlu0 %3515, %v1733
          %v3517 = vpop.permute.xlu0 %3516
          %3519 = vset.pattern.permute.xlu0 5
          %3520 = vperm.xlu0 %3519, %v1734
          %v3521 = vpop.permute.xlu0 %3520
          %3523 = vset.pattern.permute.xlu0 5
          %3524 = vperm.xlu0 %3523, %v1735
          %v3525 = vpop.permute.xlu0 %3524
          %3527 = vset.pattern.permute.xlu0 5
          %3528 = vperm.xlu0 %3527, %v1736
          %v3529 = vpop.permute.xlu0 %3528
          %3531 = vset.pattern.permute.xlu0 5
          %3532 = vperm.xlu0 %3531, %v1737
          %v3533 = vpop.permute.xlu0 %3532
          %3535 = vset.pattern.permute.xlu0 5
          %3536 = vperm.xlu0 %3535, %v1738
          %v3537 = vpop.permute.xlu0 %3536
          %3539 = vset.pattern.permute.xlu0 5
          %3540 = vperm.xlu0 %3539, %v1739
          %v3541 = vpop.permute.xlu0 %3540
          %3543 = vset.pattern.permute.xlu0 5
          %3544 = vperm.xlu0 %3543, %v1740
          %v3545 = vpop.permute.xlu0 %3544
          %3547 = vset.pattern.permute.xlu0 5
          %3548 = vperm.xlu0 %3547, %v1741
          %v3549 = vpop.permute.xlu0 %3548
          %3551 = vset.pattern.permute.xlu0 5
          %3552 = vperm.xlu0 %3551, %v1742
          %v3553 = vpop.permute.xlu0 %3552
          %3555 = vset.pattern.permute.xlu0 5
          %3556 = vperm.xlu0 %3555, %v1743
          %v3557 = vpop.permute.xlu0 %3556
          %3559 = vset.pattern.permute.xlu0 5
          %3560 = vperm.xlu0 %3559, %v1744
          %v3561 = vpop.permute.xlu0 %3560
          %3563 = vset.pattern.permute.xlu0 5
          %3564 = vperm.xlu0 %3563, %v1745
          %v3565 = vpop.permute.xlu0 %3564
          %3567 = vset.pattern.permute.xlu0 5
          %3568 = vperm.xlu0 %3567, %v1746
          %v3569 = vpop.permute.xlu0 %3568
          %3571 = vset.pattern.permute.xlu0 5
          %3572 = vperm.xlu0 %3571, %v1747
          %v3573 = vpop.permute.xlu0 %3572
          %3575 = vset.pattern.permute.xlu0 5
          %3576 = vperm.xlu0 %3575, %v1748
          %v3577 = vpop.permute.xlu0 %3576
          %3579 = vset.pattern.permute.xlu0 5
          %3580 = vperm.xlu0 %3579, %v1749
          %v3581 = vpop.permute.xlu0 %3580
          %3583 = vset.pattern.permute.xlu0 5
          %3584 = vperm.xlu0 %3583, %v1750
          %v3585 = vpop.permute.xlu0 %3584
          %3587 = vset.pattern.permute.xlu0 5
          %3588 = vperm.xlu0 %3587, %v1751
          %v3589 = vpop.permute.xlu0 %3588
          %3591 = vset.pattern.permute.xlu0 5
          %3592 = vperm.xlu0 %3591, %v1752
          %v3593 = vpop.permute.xlu0 %3592
          %3595 = vset.pattern.permute.xlu0 5
          %3596 = vperm.xlu0 %3595, %v1753
          %v3597 = vpop.permute.xlu0 %3596
          %3599 = vset.pattern.permute.xlu0 5
          %3600 = vperm.xlu0 %3599, %v1754
          %v3601 = vpop.permute.xlu0 %3600
          %3603 = vset.pattern.permute.xlu0 5
          %3604 = vperm.xlu0 %3603, %v1755
          %v3605 = vpop.permute.xlu0 %3604
          %3607 = vset.pattern.permute.xlu0 5
          %3608 = vperm.xlu0 %3607, %v1756
          %v3609 = vpop.permute.xlu0 %3608
          %3611 = vset.pattern.permute.xlu0 5
          %3612 = vperm.xlu0 %3611, %v1757
          %v3613 = vpop.permute.xlu0 %3612
          %3615 = vset.pattern.permute.xlu0 5
          %3616 = vperm.xlu0 %3615, %v1758
          %v3617 = vpop.permute.xlu0 %3616
          %3619 = vset.pattern.permute.xlu0 5
          %3620 = vperm.xlu0 %3619, %v1759
          %v3621 = vpop.permute.xlu0 %3620
          %3623 = vset.pattern.permute.xlu0 5
          %3624 = vperm.xlu0 %3623, %v1760
          %v3625 = vpop.permute.xlu0 %3624
          %3627 = vset.pattern.permute.xlu0 5
          %3628 = vperm.xlu0 %3627, %v1761
          %v3629 = vpop.permute.xlu0 %3628
          %3631 = vset.pattern.permute.xlu0 5
          %3632 = vperm.xlu0 %3631, %v1762
          %v3633 = vpop.permute.xlu0 %3632
          %3635 = vset.pattern.permute.xlu0 5
          %3636 = vperm.xlu0 %3635, %v1763
          %v3637 = vpop.permute.xlu0 %3636
          %3639 = vset.pattern.permute.xlu0 5
          %3640 = vperm.xlu0 %3639, %v1764
          %v3641 = vpop.permute.xlu0 %3640
          %3643 = vset.pattern.permute.xlu0 5
          %3644 = vperm.xlu0 %3643, %v1765
          %v3645 = vpop.permute.xlu0 %3644
          %3647 = vset.pattern.permute.xlu0 5
          %3648 = vperm.xlu0 %3647, %v1766
          %v3649 = vpop.permute.xlu0 %3648
          %3651 = vset.pattern.permute.xlu0 5
          %3652 = vperm.xlu0 %3651, %v1767
          %v3653 = vpop.permute.xlu0 %3652
          %3655 = vset.pattern.permute.xlu0 5
          %3656 = vperm.xlu0 %3655, %v1768
          %v3657 = vpop.permute.xlu0 %3656
          %3659 = vset.pattern.permute.xlu0 5
          %3660 = vperm.xlu0 %3659, %v1769
          %v3661 = vpop.permute.xlu0 %3660
          %3663 = vset.pattern.permute.xlu0 5
          %3664 = vperm.xlu0 %3663, %v1770
          %v3665 = vpop.permute.xlu0 %3664
          %3667 = vset.pattern.permute.xlu0 5
          %3668 = vperm.xlu0 %3667, %v1771
          %v3669 = vpop.permute.xlu0 %3668
          %3671 = vset.pattern.permute.xlu0 5
          %3672 = vperm.xlu0 %3671, %v1772
          %v3673 = vpop.permute.xlu0 %3672
          %3675 = vset.pattern.permute.xlu0 5
          %3676 = vperm.xlu0 %3675, %v1773
          %v3677 = vpop.permute.xlu0 %3676
          %3679 = vset.pattern.permute.xlu0 5
          %3680 = vperm.xlu0 %3679, %v1774
          %v3681 = vpop.permute.xlu0 %3680
          %3683 = vset.pattern.permute.xlu0 5
          %3684 = vperm.xlu0 %3683, %v1775
          %v3685 = vpop.permute.xlu0 %3684
          %3687 = vset.pattern.permute.xlu0 5
          %3688 = vperm.xlu0 %3687, %v1776
          %v3689 = vpop.permute.xlu0 %3688
          %3691 = vset.pattern.permute.xlu0 5
          %3692 = vperm.xlu0 %3691, %v1777
          %v3693 = vpop.permute.xlu0 %3692
          %3695 = vset.pattern.permute.xlu0 5
          %3696 = vperm.xlu0 %3695, %v1778
          %v3697 = vpop.permute.xlu0 %3696
          %v3699 = vmul.f32 %v3445, %v1587
          %v3700 = vmul.f32 %v3449, %v1588
          %v3701 = vmul.f32 %v3453, %v1589
          %v3702 = vmul.f32 %v3457, %v1590
          %v3703 = vmul.f32 %v3461, %v1591
          %v3704 = vmul.f32 %v3465, %v1592
          %v3705 = vmul.f32 %v3469, %v1593
          %v3706 = vmul.f32 %v3473, %v1594
          %v3707 = vmul.f32 %v3477, %v1595
          %v3708 = vmul.f32 %v3481, %v1596
          %v3709 = vmul.f32 %v3485, %v1597
          %v3710 = vmul.f32 %v3489, %v1598
          %v3711 = vmul.f32 %v3493, %v1599
          %v3712 = vmul.f32 %v3497, %v1600
          %v3713 = vmul.f32 %v3501, %v1601
          %v3714 = vmul.f32 %v3505, %v1602
          %v3715 = vmul.f32 %v3509, %v1603
          %v3716 = vmul.f32 %v3513, %v1604
          %v3717 = vmul.f32 %v3517, %v1605
          %v3718 = vmul.f32 %v3521, %v1606
          %v3719 = vmul.f32 %v3525, %v1607
          %v3720 = vmul.f32 %v3529, %v1608
          %v3721 = vmul.f32 %v3533, %v1609
          %v3722 = vmul.f32 %v3537, %v1610
          %v3723 = vmul.f32 %v3541, %v1611
          %v3724 = vmul.f32 %v3545, %v1612
          %v3725 = vmul.f32 %v3549, %v1613
          %v3726 = vmul.f32 %v3553, %v1614
          %v3727 = vmul.f32 %v3557, %v1615
          %v3728 = vmul.f32 %v3561, %v1616
          %v3729 = vmul.f32 %v3565, %v1617
          %v3730 = vmul.f32 %v3569, %v1618
          %v3731 = vmul.f32 %v3573, %v1619
          %v3732 = vmul.f32 %v3577, %v1620
          %v3733 = vmul.f32 %v3581, %v1621
          %v3734 = vmul.f32 %v3585, %v1622
          %v3735 = vmul.f32 %v3589, %v1623
          %v3736 = vmul.f32 %v3593, %v1624
          %v3737 = vmul.f32 %v3597, %v1625
          %v3738 = vmul.f32 %v3601, %v1626
          %v3739 = vmul.f32 %v3605, %v1627
          %v3740 = vmul.f32 %v3609, %v1628
          %v3741 = vmul.f32 %v3613, %v1629
          %v3742 = vmul.f32 %v3617, %v1630
          %v3743 = vmul.f32 %v3621, %v1631
          %v3744 = vmul.f32 %v3625, %v1632
          %v3745 = vmul.f32 %v3629, %v1633
          %v3746 = vmul.f32 %v3633, %v1634
          %v3747 = vmul.f32 %v3637, %v1635
          %v3748 = vmul.f32 %v3641, %v1636
          %v3749 = vmul.f32 %v3645, %v1637
          %v3750 = vmul.f32 %v3649, %v1638
          %v3751 = vmul.f32 %v3653, %v1639
          %v3752 = vmul.f32 %v3657, %v1640
          %v3753 = vmul.f32 %v3661, %v1641
          %v3754 = vmul.f32 %v3665, %v1642
          %v3755 = vmul.f32 %v3669, %v1643
          %v3756 = vmul.f32 %v3673, %v1644
          %v3757 = vmul.f32 %v3677, %v1645
          %v3758 = vmul.f32 %v3681, %v1646
          %v3759 = vmul.f32 %v3685, %v1647
          %v3760 = vmul.f32 %v3689, %v1648
          %v3761 = vmul.f32 %v3693, %v1649
          %v3762 = vmul.f32 %v3697, %v1650
          %3827 = vrot.lane.b32.xlu0 %v2419, 32
          %v3828 = vpop.permute.xlu0 %3827
          %3829 = vrot.lane.b32.xlu0 %v2420, 32
          %v3830 = vpop.permute.xlu0 %3829
          %3831 = vrot.lane.b32.xlu0 %v2421, 32
          %v3832 = vpop.permute.xlu0 %3831
          %3833 = vrot.lane.b32.xlu0 %v2422, 32
          %v3834 = vpop.permute.xlu0 %3833
          %3835 = vrot.lane.b32.xlu0 %v2423, 32
          %v3836 = vpop.permute.xlu0 %3835
          %3837 = vrot.lane.b32.xlu0 %v2424, 32
          %v3838 = vpop.permute.xlu0 %3837
          %3839 = vrot.lane.b32.xlu0 %v2425, 32
          %v3840 = vpop.permute.xlu0 %3839
          %3841 = vrot.lane.b32.xlu0 %v2426, 32
          %v3842 = vpop.permute.xlu0 %3841
          %3843 = vrot.lane.b32.xlu0 %v2427, 32
          %v3844 = vpop.permute.xlu0 %3843
          %3845 = vrot.lane.b32.xlu0 %v2428, 32
          %v3846 = vpop.permute.xlu0 %3845
          %3847 = vrot.lane.b32.xlu0 %v2429, 32
          %v3848 = vpop.permute.xlu0 %3847
          %3849 = vrot.lane.b32.xlu0 %v2430, 32
          %v3850 = vpop.permute.xlu0 %3849
          %3851 = vrot.lane.b32.xlu0 %v2431, 32
          %v3852 = vpop.permute.xlu0 %3851
          %3853 = vrot.lane.b32.xlu0 %v2432, 32
          %v3854 = vpop.permute.xlu0 %3853
          %3855 = vrot.lane.b32.xlu0 %v2433, 32
          %v3856 = vpop.permute.xlu0 %3855
          %3857 = vrot.lane.b32.xlu0 %v2434, 32
          %v3858 = vpop.permute.xlu0 %3857
          %3859 = vrot.lane.b32.xlu0 %v2435, 32
          %v3860 = vpop.permute.xlu0 %3859
          %3861 = vrot.lane.b32.xlu0 %v2436, 32
          %v3862 = vpop.permute.xlu0 %3861
          %3863 = vrot.lane.b32.xlu0 %v2437, 32
          %v3864 = vpop.permute.xlu0 %3863
          %3865 = vrot.lane.b32.xlu0 %v2438, 32
          %v3866 = vpop.permute.xlu0 %3865
          %3867 = vrot.lane.b32.xlu0 %v2439, 32
          %v3868 = vpop.permute.xlu0 %3867
          %3869 = vrot.lane.b32.xlu0 %v2440, 32
          %v3870 = vpop.permute.xlu0 %3869
          %3871 = vrot.lane.b32.xlu0 %v2441, 32
          %v3872 = vpop.permute.xlu0 %3871
          %3873 = vrot.lane.b32.xlu0 %v2442, 32
          %v3874 = vpop.permute.xlu0 %3873
          %3875 = vrot.lane.b32.xlu0 %v2443, 32
          %v3876 = vpop.permute.xlu0 %3875
          %3877 = vrot.lane.b32.xlu0 %v2444, 32
          %v3878 = vpop.permute.xlu0 %3877
          %3879 = vrot.lane.b32.xlu0 %v2445, 32
          %v3880 = vpop.permute.xlu0 %3879
          %3881 = vrot.lane.b32.xlu0 %v2446, 32
          %v3882 = vpop.permute.xlu0 %3881
          %3883 = vrot.lane.b32.xlu0 %v2447, 32
          %v3884 = vpop.permute.xlu0 %3883
          %3885 = vrot.lane.b32.xlu0 %v2448, 32
          %v3886 = vpop.permute.xlu0 %3885
          %3887 = vrot.lane.b32.xlu0 %v2449, 32
          %v3888 = vpop.permute.xlu0 %3887
          %3889 = vrot.lane.b32.xlu0 %v2450, 32
          %v3890 = vpop.permute.xlu0 %3889
          %3891 = vrot.lane.b32.xlu0 %v2451, 32
          %v3892 = vpop.permute.xlu0 %3891
          %3893 = vrot.lane.b32.xlu0 %v2452, 32
          %v3894 = vpop.permute.xlu0 %3893
          %3895 = vrot.lane.b32.xlu0 %v2453, 32
          %v3896 = vpop.permute.xlu0 %3895
          %3897 = vrot.lane.b32.xlu0 %v2454, 32
          %v3898 = vpop.permute.xlu0 %3897
          %3899 = vrot.lane.b32.xlu0 %v2455, 32
          %v3900 = vpop.permute.xlu0 %3899
          %3901 = vrot.lane.b32.xlu0 %v2456, 32
          %v3902 = vpop.permute.xlu0 %3901
          %3903 = vrot.lane.b32.xlu0 %v2457, 32
          %v3904 = vpop.permute.xlu0 %3903
          %3905 = vrot.lane.b32.xlu0 %v2458, 32
          %v3906 = vpop.permute.xlu0 %3905
          %3907 = vrot.lane.b32.xlu0 %v2459, 32
          %v3908 = vpop.permute.xlu0 %3907
          %3909 = vrot.lane.b32.xlu0 %v2460, 32
          %v3910 = vpop.permute.xlu0 %3909
          %3911 = vrot.lane.b32.xlu0 %v2461, 32
          %v3912 = vpop.permute.xlu0 %3911
          %3913 = vrot.lane.b32.xlu0 %v2462, 32
          %v3914 = vpop.permute.xlu0 %3913
          %3915 = vrot.lane.b32.xlu0 %v2463, 32
          %v3916 = vpop.permute.xlu0 %3915
          %3917 = vrot.lane.b32.xlu0 %v2464, 32
          %v3918 = vpop.permute.xlu0 %3917
          %3919 = vrot.lane.b32.xlu0 %v2465, 32
          %v3920 = vpop.permute.xlu0 %3919
          %3921 = vrot.lane.b32.xlu0 %v2466, 32
          %v3922 = vpop.permute.xlu0 %3921
          %3923 = vrot.lane.b32.xlu0 %v2467, 32
          %v3924 = vpop.permute.xlu0 %3923
          %3925 = vrot.lane.b32.xlu0 %v2468, 32
          %v3926 = vpop.permute.xlu0 %3925
          %3927 = vrot.lane.b32.xlu0 %v2469, 32
          %v3928 = vpop.permute.xlu0 %3927
          %3929 = vrot.lane.b32.xlu0 %v2470, 32
          %v3930 = vpop.permute.xlu0 %3929
          %3931 = vrot.lane.b32.xlu0 %v2471, 32
          %v3932 = vpop.permute.xlu0 %3931
          %3933 = vrot.lane.b32.xlu0 %v2472, 32
          %v3934 = vpop.permute.xlu0 %3933
          %3935 = vrot.lane.b32.xlu0 %v2473, 32
          %v3936 = vpop.permute.xlu0 %3935
          %3937 = vrot.lane.b32.xlu0 %v2474, 32
          %v3938 = vpop.permute.xlu0 %3937
          %3939 = vrot.lane.b32.xlu0 %v2475, 32
          %v3940 = vpop.permute.xlu0 %3939
          %3941 = vrot.lane.b32.xlu0 %v2476, 32
          %v3942 = vpop.permute.xlu0 %3941
          %3943 = vrot.lane.b32.xlu0 %v2477, 32
          %v3944 = vpop.permute.xlu0 %3943
          %3945 = vrot.lane.b32.xlu0 %v2478, 32
          %v3946 = vpop.permute.xlu0 %3945
          %3947 = vrot.lane.b32.xlu0 %v2479, 32
          %v3948 = vpop.permute.xlu0 %3947
          %3949 = vrot.lane.b32.xlu0 %v2480, 32
          %v3950 = vpop.permute.xlu0 %3949
          %3951 = vrot.lane.b32.xlu0 %v2481, 32
          %v3952 = vpop.permute.xlu0 %3951
          %3953 = vrot.lane.b32.xlu0 %v2482, 32
          %v3954 = vpop.permute.xlu0 %3953
          %4083 = vrot.lane.b32.xlu0 %v2739, 64
          %v4084 = vpop.permute.xlu0 %4083
          %4085 = vrot.lane.b32.xlu0 %v2740, 64
          %v4086 = vpop.permute.xlu0 %4085
          %4087 = vrot.lane.b32.xlu0 %v2741, 64
          %v4088 = vpop.permute.xlu0 %4087
          %4089 = vrot.lane.b32.xlu0 %v2742, 64
          %v4090 = vpop.permute.xlu0 %4089
          %4091 = vrot.lane.b32.xlu0 %v2743, 64
          %v4092 = vpop.permute.xlu0 %4091
          %4093 = vrot.lane.b32.xlu0 %v2744, 64
          %v4094 = vpop.permute.xlu0 %4093
          %4095 = vrot.lane.b32.xlu0 %v2745, 64
          %v4096 = vpop.permute.xlu0 %4095
          %4097 = vrot.lane.b32.xlu0 %v2746, 64
          %v4098 = vpop.permute.xlu0 %4097
          %4099 = vrot.lane.b32.xlu0 %v2747, 64
          %v4100 = vpop.permute.xlu0 %4099
          %4101 = vrot.lane.b32.xlu0 %v2748, 64
          %v4102 = vpop.permute.xlu0 %4101
          %4103 = vrot.lane.b32.xlu0 %v2749, 64
          %v4104 = vpop.permute.xlu0 %4103
          %4105 = vrot.lane.b32.xlu0 %v2750, 64
          %v4106 = vpop.permute.xlu0 %4105
          %4107 = vrot.lane.b32.xlu0 %v2751, 64
          %v4108 = vpop.permute.xlu0 %4107
          %4109 = vrot.lane.b32.xlu0 %v2752, 64
          %v4110 = vpop.permute.xlu0 %4109
          %4111 = vrot.lane.b32.xlu0 %v2753, 64
          %v4112 = vpop.permute.xlu0 %4111
          %4113 = vrot.lane.b32.xlu0 %v2754, 64
          %v4114 = vpop.permute.xlu0 %4113
          %4115 = vrot.lane.b32.xlu0 %v2755, 64
          %v4116 = vpop.permute.xlu0 %4115
          %4117 = vrot.lane.b32.xlu0 %v2756, 64
          %v4118 = vpop.permute.xlu0 %4117
          %4119 = vrot.lane.b32.xlu0 %v2757, 64
          %v4120 = vpop.permute.xlu0 %4119
          %4121 = vrot.lane.b32.xlu0 %v2758, 64
          %v4122 = vpop.permute.xlu0 %4121
          %4123 = vrot.lane.b32.xlu0 %v2759, 64
          %v4124 = vpop.permute.xlu0 %4123
          %4125 = vrot.lane.b32.xlu0 %v2760, 64
          %v4126 = vpop.permute.xlu0 %4125
          %4127 = vrot.lane.b32.xlu0 %v2761, 64
          %v4128 = vpop.permute.xlu0 %4127
          %4129 = vrot.lane.b32.xlu0 %v2762, 64
          %v4130 = vpop.permute.xlu0 %4129
          %4131 = vrot.lane.b32.xlu0 %v2763, 64
          %v4132 = vpop.permute.xlu0 %4131
          %4133 = vrot.lane.b32.xlu0 %v2764, 64
          %v4134 = vpop.permute.xlu0 %4133
          %4135 = vrot.lane.b32.xlu0 %v2765, 64
          %v4136 = vpop.permute.xlu0 %4135
          %4137 = vrot.lane.b32.xlu0 %v2766, 64
          %v4138 = vpop.permute.xlu0 %4137
          %4139 = vrot.lane.b32.xlu0 %v2767, 64
          %v4140 = vpop.permute.xlu0 %4139
          %4141 = vrot.lane.b32.xlu0 %v2768, 64
          %v4142 = vpop.permute.xlu0 %4141
          %4143 = vrot.lane.b32.xlu0 %v2769, 64
          %v4144 = vpop.permute.xlu0 %4143
          %4145 = vrot.lane.b32.xlu0 %v2770, 64
          %v4146 = vpop.permute.xlu0 %4145
          %4147 = vrot.lane.b32.xlu0 %v2771, 64
          %v4148 = vpop.permute.xlu0 %4147
          %4149 = vrot.lane.b32.xlu0 %v2772, 64
          %v4150 = vpop.permute.xlu0 %4149
          %4151 = vrot.lane.b32.xlu0 %v2773, 64
          %v4152 = vpop.permute.xlu0 %4151
          %4153 = vrot.lane.b32.xlu0 %v2774, 64
          %v4154 = vpop.permute.xlu0 %4153
          %4155 = vrot.lane.b32.xlu0 %v2775, 64
          %v4156 = vpop.permute.xlu0 %4155
          %4157 = vrot.lane.b32.xlu0 %v2776, 64
          %v4158 = vpop.permute.xlu0 %4157
          %4159 = vrot.lane.b32.xlu0 %v2777, 64
          %v4160 = vpop.permute.xlu0 %4159
          %4161 = vrot.lane.b32.xlu0 %v2778, 64
          %v4162 = vpop.permute.xlu0 %4161
          %4163 = vrot.lane.b32.xlu0 %v2779, 64
          %v4164 = vpop.permute.xlu0 %4163
          %4165 = vrot.lane.b32.xlu0 %v2780, 64
          %v4166 = vpop.permute.xlu0 %4165
          %4167 = vrot.lane.b32.xlu0 %v2781, 64
          %v4168 = vpop.permute.xlu0 %4167
          %4169 = vrot.lane.b32.xlu0 %v2782, 64
          %v4170 = vpop.permute.xlu0 %4169
          %4171 = vrot.lane.b32.xlu0 %v2783, 64
          %v4172 = vpop.permute.xlu0 %4171
          %4173 = vrot.lane.b32.xlu0 %v2784, 64
          %v4174 = vpop.permute.xlu0 %4173
          %4175 = vrot.lane.b32.xlu0 %v2785, 64
          %v4176 = vpop.permute.xlu0 %4175
          %4177 = vrot.lane.b32.xlu0 %v2786, 64
          %v4178 = vpop.permute.xlu0 %4177
          %4179 = vrot.lane.b32.xlu0 %v2787, 64
          %v4180 = vpop.permute.xlu0 %4179
          %4181 = vrot.lane.b32.xlu0 %v2788, 64
          %v4182 = vpop.permute.xlu0 %4181
          %4183 = vrot.lane.b32.xlu0 %v2789, 64
          %v4184 = vpop.permute.xlu0 %4183
          %4185 = vrot.lane.b32.xlu0 %v2790, 64
          %v4186 = vpop.permute.xlu0 %4185
          %4187 = vrot.lane.b32.xlu0 %v2791, 64
          %v4188 = vpop.permute.xlu0 %4187
          %4189 = vrot.lane.b32.xlu0 %v2792, 64
          %v4190 = vpop.permute.xlu0 %4189
          %4191 = vrot.lane.b32.xlu0 %v2793, 64
          %v4192 = vpop.permute.xlu0 %4191
          %4193 = vrot.lane.b32.xlu0 %v2794, 64
          %v4194 = vpop.permute.xlu0 %4193
          %4195 = vrot.lane.b32.xlu0 %v2795, 64
          %v4196 = vpop.permute.xlu0 %4195
          %4197 = vrot.lane.b32.xlu0 %v2796, 64
          %v4198 = vpop.permute.xlu0 %4197
          %4199 = vrot.lane.b32.xlu0 %v2797, 64
          %v4200 = vpop.permute.xlu0 %4199
          %4201 = vrot.lane.b32.xlu0 %v2798, 64
          %v4202 = vpop.permute.xlu0 %4201
          %4203 = vrot.lane.b32.xlu0 %v2799, 64
          %v4204 = vpop.permute.xlu0 %4203
          %4205 = vrot.lane.b32.xlu0 %v2800, 64
          %v4206 = vpop.permute.xlu0 %4205
          %4207 = vrot.lane.b32.xlu0 %v2801, 64
          %v4208 = vpop.permute.xlu0 %4207
          %4209 = vrot.lane.b32.xlu0 %v2802, 64
          %v4210 = vpop.permute.xlu0 %4209
          %4339 = vrot.lane.b32.xlu0 %v3059, 96
          %v4340 = vpop.permute.xlu0 %4339
          %4341 = vrot.lane.b32.xlu0 %v3060, 96
          %v4342 = vpop.permute.xlu0 %4341
          %4343 = vrot.lane.b32.xlu0 %v3061, 96
          %v4344 = vpop.permute.xlu0 %4343
          %4345 = vrot.lane.b32.xlu0 %v3062, 96
          %v4346 = vpop.permute.xlu0 %4345
          %4347 = vrot.lane.b32.xlu0 %v3063, 96
          %v4348 = vpop.permute.xlu0 %4347
          %4349 = vrot.lane.b32.xlu0 %v3064, 96
          %v4350 = vpop.permute.xlu0 %4349
          %4351 = vrot.lane.b32.xlu0 %v3065, 96
          %v4352 = vpop.permute.xlu0 %4351
          %4353 = vrot.lane.b32.xlu0 %v3066, 96
          %v4354 = vpop.permute.xlu0 %4353
          %4355 = vrot.lane.b32.xlu0 %v3067, 96
          %v4356 = vpop.permute.xlu0 %4355
          %4357 = vrot.lane.b32.xlu0 %v3068, 96
          %v4358 = vpop.permute.xlu0 %4357
          %4359 = vrot.lane.b32.xlu0 %v3069, 96
          %v4360 = vpop.permute.xlu0 %4359
          %4361 = vrot.lane.b32.xlu0 %v3070, 96
          %v4362 = vpop.permute.xlu0 %4361
          %4363 = vrot.lane.b32.xlu0 %v3071, 96
          %v4364 = vpop.permute.xlu0 %4363
          %4365 = vrot.lane.b32.xlu0 %v3072, 96
          %v4366 = vpop.permute.xlu0 %4365
          %4367 = vrot.lane.b32.xlu0 %v3073, 96
          %v4368 = vpop.permute.xlu0 %4367
          %4369 = vrot.lane.b32.xlu0 %v3074, 96
          %v4370 = vpop.permute.xlu0 %4369
          %4371 = vrot.lane.b32.xlu0 %v3075, 96
          %v4372 = vpop.permute.xlu0 %4371
          %4373 = vrot.lane.b32.xlu0 %v3076, 96
          %v4374 = vpop.permute.xlu0 %4373
          %4375 = vrot.lane.b32.xlu0 %v3077, 96
          %v4376 = vpop.permute.xlu0 %4375
          %4377 = vrot.lane.b32.xlu0 %v3078, 96
          %v4378 = vpop.permute.xlu0 %4377
          %4379 = vrot.lane.b32.xlu0 %v3079, 96
          %v4380 = vpop.permute.xlu0 %4379
          %4381 = vrot.lane.b32.xlu0 %v3080, 96
          %v4382 = vpop.permute.xlu0 %4381
          %4383 = vrot.lane.b32.xlu0 %v3081, 96
          %v4384 = vpop.permute.xlu0 %4383
          %4385 = vrot.lane.b32.xlu0 %v3082, 96
          %v4386 = vpop.permute.xlu0 %4385
          %4387 = vrot.lane.b32.xlu0 %v3083, 96
          %v4388 = vpop.permute.xlu0 %4387
          %4389 = vrot.lane.b32.xlu0 %v3084, 96
          %v4390 = vpop.permute.xlu0 %4389
          %4391 = vrot.lane.b32.xlu0 %v3085, 96
          %v4392 = vpop.permute.xlu0 %4391
          %4393 = vrot.lane.b32.xlu0 %v3086, 96
          %v4394 = vpop.permute.xlu0 %4393
          %4395 = vrot.lane.b32.xlu0 %v3087, 96
          %v4396 = vpop.permute.xlu0 %4395
          %4397 = vrot.lane.b32.xlu0 %v3088, 96
          %v4398 = vpop.permute.xlu0 %4397
          %4399 = vrot.lane.b32.xlu0 %v3089, 96
          %v4400 = vpop.permute.xlu0 %4399
          %4401 = vrot.lane.b32.xlu0 %v3090, 96
          %v4402 = vpop.permute.xlu0 %4401
          %4403 = vrot.lane.b32.xlu0 %v3091, 96
          %v4404 = vpop.permute.xlu0 %4403
          %4405 = vrot.lane.b32.xlu0 %v3092, 96
          %v4406 = vpop.permute.xlu0 %4405
          %4407 = vrot.lane.b32.xlu0 %v3093, 96
          %v4408 = vpop.permute.xlu0 %4407
          %4409 = vrot.lane.b32.xlu0 %v3094, 96
          %v4410 = vpop.permute.xlu0 %4409
          %4411 = vrot.lane.b32.xlu0 %v3095, 96
          %v4412 = vpop.permute.xlu0 %4411
          %4413 = vrot.lane.b32.xlu0 %v3096, 96
          %v4414 = vpop.permute.xlu0 %4413
          %4415 = vrot.lane.b32.xlu0 %v3097, 96
          %v4416 = vpop.permute.xlu0 %4415
          %4417 = vrot.lane.b32.xlu0 %v3098, 96
          %v4418 = vpop.permute.xlu0 %4417
          %4419 = vrot.lane.b32.xlu0 %v3099, 96
          %v4420 = vpop.permute.xlu0 %4419
          %4421 = vrot.lane.b32.xlu0 %v3100, 96
          %v4422 = vpop.permute.xlu0 %4421
          %4423 = vrot.lane.b32.xlu0 %v3101, 96
          %v4424 = vpop.permute.xlu0 %4423
          %4425 = vrot.lane.b32.xlu0 %v3102, 96
          %v4426 = vpop.permute.xlu0 %4425
          %4427 = vrot.lane.b32.xlu0 %v3103, 96
          %v4428 = vpop.permute.xlu0 %4427
          %4429 = vrot.lane.b32.xlu0 %v3104, 96
          %v4430 = vpop.permute.xlu0 %4429
          %4431 = vrot.lane.b32.xlu0 %v3105, 96
          %v4432 = vpop.permute.xlu0 %4431
          %4433 = vrot.lane.b32.xlu0 %v3106, 96
          %v4434 = vpop.permute.xlu0 %4433
          %4435 = vrot.lane.b32.xlu0 %v3107, 96
          %v4436 = vpop.permute.xlu0 %4435
          %4437 = vrot.lane.b32.xlu0 %v3108, 96
          %v4438 = vpop.permute.xlu0 %4437
          %4439 = vrot.lane.b32.xlu0 %v3109, 96
          %v4440 = vpop.permute.xlu0 %4439
          %4441 = vrot.lane.b32.xlu0 %v3110, 96
          %v4442 = vpop.permute.xlu0 %4441
          %4443 = vrot.lane.b32.xlu0 %v3111, 96
          %v4444 = vpop.permute.xlu0 %4443
          %4445 = vrot.lane.b32.xlu0 %v3112, 96
          %v4446 = vpop.permute.xlu0 %4445
          %4447 = vrot.lane.b32.xlu0 %v3113, 96
          %v4448 = vpop.permute.xlu0 %4447
          %4449 = vrot.lane.b32.xlu0 %v3114, 96
          %v4450 = vpop.permute.xlu0 %4449
          %4451 = vrot.lane.b32.xlu0 %v3115, 96
          %v4452 = vpop.permute.xlu0 %4451
          %4453 = vrot.lane.b32.xlu0 %v3116, 96
          %v4454 = vpop.permute.xlu0 %4453
          %4455 = vrot.lane.b32.xlu0 %v3117, 96
          %v4456 = vpop.permute.xlu0 %4455
          %4457 = vrot.lane.b32.xlu0 %v3118, 96
          %v4458 = vpop.permute.xlu0 %4457
          %4459 = vrot.lane.b32.xlu0 %v3119, 96
          %v4460 = vpop.permute.xlu0 %4459
          %4461 = vrot.lane.b32.xlu0 %v3120, 96
          %v4462 = vpop.permute.xlu0 %4461
          %4463 = vrot.lane.b32.xlu0 %v3121, 96
          %v4464 = vpop.permute.xlu0 %4463
          %4465 = vrot.lane.b32.xlu0 %v3122, 96
          %v4466 = vpop.permute.xlu0 %4465
          %4595 = vrot.lane.b32.xlu0 %v3699, 32
          %v4596 = vpop.permute.xlu0 %4595
          %4597 = vrot.lane.b32.xlu0 %v3700, 32
          %v4598 = vpop.permute.xlu0 %4597
          %4599 = vrot.lane.b32.xlu0 %v3701, 32
          %v4600 = vpop.permute.xlu0 %4599
          %4601 = vrot.lane.b32.xlu0 %v3702, 32
          %v4602 = vpop.permute.xlu0 %4601
          %4603 = vrot.lane.b32.xlu0 %v3703, 32
          %v4604 = vpop.permute.xlu0 %4603
          %4605 = vrot.lane.b32.xlu0 %v3704, 32
          %v4606 = vpop.permute.xlu0 %4605
          %4607 = vrot.lane.b32.xlu0 %v3705, 32
          %v4608 = vpop.permute.xlu0 %4607
          %4609 = vrot.lane.b32.xlu0 %v3706, 32
          %v4610 = vpop.permute.xlu0 %4609
          %4611 = vrot.lane.b32.xlu0 %v3707, 32
          %v4612 = vpop.permute.xlu0 %4611
          %4613 = vrot.lane.b32.xlu0 %v3708, 32
          %v4614 = vpop.permute.xlu0 %4613
          %4615 = vrot.lane.b32.xlu0 %v3709, 32
          %v4616 = vpop.permute.xlu0 %4615
          %4617 = vrot.lane.b32.xlu0 %v3710, 32
          %v4618 = vpop.permute.xlu0 %4617
          %4619 = vrot.lane.b32.xlu0 %v3711, 32
          %v4620 = vpop.permute.xlu0 %4619
          %4621 = vrot.lane.b32.xlu0 %v3712, 32
          %v4622 = vpop.permute.xlu0 %4621
          %4623 = vrot.lane.b32.xlu0 %v3713, 32
          %v4624 = vpop.permute.xlu0 %4623
          %4625 = vrot.lane.b32.xlu0 %v3714, 32
          %v4626 = vpop.permute.xlu0 %4625
          %4627 = vrot.lane.b32.xlu0 %v3715, 32
          %v4628 = vpop.permute.xlu0 %4627
          %4629 = vrot.lane.b32.xlu0 %v3716, 32
          %v4630 = vpop.permute.xlu0 %4629
          %4631 = vrot.lane.b32.xlu0 %v3717, 32
          %v4632 = vpop.permute.xlu0 %4631
          %4633 = vrot.lane.b32.xlu0 %v3718, 32
          %v4634 = vpop.permute.xlu0 %4633
          %4635 = vrot.lane.b32.xlu0 %v3719, 32
          %v4636 = vpop.permute.xlu0 %4635
          %4637 = vrot.lane.b32.xlu0 %v3720, 32
          %v4638 = vpop.permute.xlu0 %4637
          %4639 = vrot.lane.b32.xlu0 %v3721, 32
          %v4640 = vpop.permute.xlu0 %4639
          %4641 = vrot.lane.b32.xlu0 %v3722, 32
          %v4642 = vpop.permute.xlu0 %4641
          %4643 = vrot.lane.b32.xlu0 %v3723, 32
          %v4644 = vpop.permute.xlu0 %4643
          %4645 = vrot.lane.b32.xlu0 %v3724, 32
          %v4646 = vpop.permute.xlu0 %4645
          %4647 = vrot.lane.b32.xlu0 %v3725, 32
          %v4648 = vpop.permute.xlu0 %4647
          %4649 = vrot.lane.b32.xlu0 %v3726, 32
          %v4650 = vpop.permute.xlu0 %4649
          %4651 = vrot.lane.b32.xlu0 %v3727, 32
          %v4652 = vpop.permute.xlu0 %4651
          %4653 = vrot.lane.b32.xlu0 %v3728, 32
          %v4654 = vpop.permute.xlu0 %4653
          %4655 = vrot.lane.b32.xlu0 %v3729, 32
          %v4656 = vpop.permute.xlu0 %4655
          %4657 = vrot.lane.b32.xlu0 %v3730, 32
          %v4658 = vpop.permute.xlu0 %4657
          %4659 = vrot.lane.b32.xlu0 %v3731, 32
          %v4660 = vpop.permute.xlu0 %4659
          %4661 = vrot.lane.b32.xlu0 %v3732, 32
          %v4662 = vpop.permute.xlu0 %4661
          %4663 = vrot.lane.b32.xlu0 %v3733, 32
          %v4664 = vpop.permute.xlu0 %4663
          %4665 = vrot.lane.b32.xlu0 %v3734, 32
          %v4666 = vpop.permute.xlu0 %4665
          %4667 = vrot.lane.b32.xlu0 %v3735, 32
          %v4668 = vpop.permute.xlu0 %4667
          %4669 = vrot.lane.b32.xlu0 %v3736, 32
          %v4670 = vpop.permute.xlu0 %4669
          %4671 = vrot.lane.b32.xlu0 %v3737, 32
          %v4672 = vpop.permute.xlu0 %4671
          %4673 = vrot.lane.b32.xlu0 %v3738, 32
          %v4674 = vpop.permute.xlu0 %4673
          %4675 = vrot.lane.b32.xlu0 %v3739, 32
          %v4676 = vpop.permute.xlu0 %4675
          %4677 = vrot.lane.b32.xlu0 %v3740, 32
          %v4678 = vpop.permute.xlu0 %4677
          %4679 = vrot.lane.b32.xlu0 %v3741, 32
          %v4680 = vpop.permute.xlu0 %4679
          %4681 = vrot.lane.b32.xlu0 %v3742, 32
          %v4682 = vpop.permute.xlu0 %4681
          %4683 = vrot.lane.b32.xlu0 %v3743, 32
          %v4684 = vpop.permute.xlu0 %4683
          %4685 = vrot.lane.b32.xlu0 %v3744, 32
          %v4686 = vpop.permute.xlu0 %4685
          %4687 = vrot.lane.b32.xlu0 %v3745, 32
          %v4688 = vpop.permute.xlu0 %4687
          %4689 = vrot.lane.b32.xlu0 %v3746, 32
          %v4690 = vpop.permute.xlu0 %4689
          %4691 = vrot.lane.b32.xlu0 %v3747, 32
          %v4692 = vpop.permute.xlu0 %4691
          %4693 = vrot.lane.b32.xlu0 %v3748, 32
          %v4694 = vpop.permute.xlu0 %4693
          %4695 = vrot.lane.b32.xlu0 %v3749, 32
          %v4696 = vpop.permute.xlu0 %4695
          %4697 = vrot.lane.b32.xlu0 %v3750, 32
          %v4698 = vpop.permute.xlu0 %4697
          %4699 = vrot.lane.b32.xlu0 %v3751, 32
          %v4700 = vpop.permute.xlu0 %4699
          %4701 = vrot.lane.b32.xlu0 %v3752, 32
          %v4702 = vpop.permute.xlu0 %4701
          %4703 = vrot.lane.b32.xlu0 %v3753, 32
          %v4704 = vpop.permute.xlu0 %4703
          %4705 = vrot.lane.b32.xlu0 %v3754, 32
          %v4706 = vpop.permute.xlu0 %4705
          %4707 = vrot.lane.b32.xlu0 %v3755, 32
          %v4708 = vpop.permute.xlu0 %4707
          %4709 = vrot.lane.b32.xlu0 %v3756, 32
          %v4710 = vpop.permute.xlu0 %4709
          %4711 = vrot.lane.b32.xlu0 %v3757, 32
          %v4712 = vpop.permute.xlu0 %4711
          %4713 = vrot.lane.b32.xlu0 %v3758, 32
          %v4714 = vpop.permute.xlu0 %4713
          %4715 = vrot.lane.b32.xlu0 %v3759, 32
          %v4716 = vpop.permute.xlu0 %4715
          %4717 = vrot.lane.b32.xlu0 %v3760, 32
          %v4718 = vpop.permute.xlu0 %4717
          %4719 = vrot.lane.b32.xlu0 %v3761, 32
          %v4720 = vpop.permute.xlu0 %4719
          %4721 = vrot.lane.b32.xlu0 %v3762, 32
          %v4722 = vpop.permute.xlu0 %4721
          %vm4787 = vcmask 261120
          %v4788 = vsel %vm4787, %v2099, %v3828
          %v4789 = vsel %vm4787, %v2100, %v3830
          %v4790 = vsel %vm4787, %v2101, %v3832
          %v4791 = vsel %vm4787, %v2102, %v3834
          %v4792 = vsel %vm4787, %v2103, %v3836
          %v4793 = vsel %vm4787, %v2104, %v3838
          %v4794 = vsel %vm4787, %v2105, %v3840
          %v4795 = vsel %vm4787, %v2106, %v3842
          %v4796 = vsel %vm4787, %v2107, %v3844
          %v4797 = vsel %vm4787, %v2108, %v3846
          %v4798 = vsel %vm4787, %v2109, %v3848
          %v4799 = vsel %vm4787, %v2110, %v3850
          %v4800 = vsel %vm4787, %v2111, %v3852
          %v4801 = vsel %vm4787, %v2112, %v3854
          %v4802 = vsel %vm4787, %v2113, %v3856
          %v4803 = vsel %vm4787, %v2114, %v3858
          %v4804 = vsel %vm4787, %v2115, %v3860
          %v4805 = vsel %vm4787, %v2116, %v3862
          %v4806 = vsel %vm4787, %v2117, %v3864
          %v4807 = vsel %vm4787, %v2118, %v3866
          %v4808 = vsel %vm4787, %v2119, %v3868
          %v4809 = vsel %vm4787, %v2120, %v3870
          %v4810 = vsel %vm4787, %v2121, %v3872
          %v4811 = vsel %vm4787, %v2122, %v3874
          %v4812 = vsel %vm4787, %v2123, %v3876
          %v4813 = vsel %vm4787, %v2124, %v3878
          %v4814 = vsel %vm4787, %v2125, %v3880
          %v4815 = vsel %vm4787, %v2126, %v3882
          %v4816 = vsel %vm4787, %v2127, %v3884
          %v4817 = vsel %vm4787, %v2128, %v3886
          %v4818 = vsel %vm4787, %v2129, %v3888
          %v4819 = vsel %vm4787, %v2130, %v3890
          %v4820 = vsel %vm4787, %v2131, %v3892
          %v4821 = vsel %vm4787, %v2132, %v3894
          %v4822 = vsel %vm4787, %v2133, %v3896
          %v4823 = vsel %vm4787, %v2134, %v3898
          %v4824 = vsel %vm4787, %v2135, %v3900
          %v4825 = vsel %vm4787, %v2136, %v3902
          %v4826 = vsel %vm4787, %v2137, %v3904
          %v4827 = vsel %vm4787, %v2138, %v3906
          %v4828 = vsel %vm4787, %v2139, %v3908
          %v4829 = vsel %vm4787, %v2140, %v3910
          %v4830 = vsel %vm4787, %v2141, %v3912
          %v4831 = vsel %vm4787, %v2142, %v3914
          %v4832 = vsel %vm4787, %v2143, %v3916
          %v4833 = vsel %vm4787, %v2144, %v3918
          %v4834 = vsel %vm4787, %v2145, %v3920
          %v4835 = vsel %vm4787, %v2146, %v3922
          %v4836 = vsel %vm4787, %v2147, %v3924
          %v4837 = vsel %vm4787, %v2148, %v3926
          %v4838 = vsel %vm4787, %v2149, %v3928
          %v4839 = vsel %vm4787, %v2150, %v3930
          %v4840 = vsel %vm4787, %v2151, %v3932
          %v4841 = vsel %vm4787, %v2152, %v3934
          %v4842 = vsel %vm4787, %v2153, %v3936
          %v4843 = vsel %vm4787, %v2154, %v3938
          %v4844 = vsel %vm4787, %v2155, %v3940
          %v4845 = vsel %vm4787, %v2156, %v3942
          %v4846 = vsel %vm4787, %v2157, %v3944
          %v4847 = vsel %vm4787, %v2158, %v3946
          %v4848 = vsel %vm4787, %v2159, %v3948
          %v4849 = vsel %vm4787, %v2160, %v3950
          %v4850 = vsel %vm4787, %v2161, %v3952
          %v4851 = vsel %vm4787, %v2162, %v3954
          %vm4852 = vcmask 523264
          %v4853 = vsel %vm4852, %v4788, %v4084
          %v4854 = vsel %vm4852, %v4789, %v4086
          %v4855 = vsel %vm4852, %v4790, %v4088
          %v4856 = vsel %vm4852, %v4791, %v4090
          %v4857 = vsel %vm4852, %v4792, %v4092
          %v4858 = vsel %vm4852, %v4793, %v4094
          %v4859 = vsel %vm4852, %v4794, %v4096
          %v4860 = vsel %vm4852, %v4795, %v4098
          %v4861 = vsel %vm4852, %v4796, %v4100
          %v4862 = vsel %vm4852, %v4797, %v4102
          %v4863 = vsel %vm4852, %v4798, %v4104
          %v4864 = vsel %vm4852, %v4799, %v4106
          %v4865 = vsel %vm4852, %v4800, %v4108
          %v4866 = vsel %vm4852, %v4801, %v4110
          %v4867 = vsel %vm4852, %v4802, %v4112
          %v4868 = vsel %vm4852, %v4803, %v4114
          %v4869 = vsel %vm4852, %v4804, %v4116
          %v4870 = vsel %vm4852, %v4805, %v4118
          %v4871 = vsel %vm4852, %v4806, %v4120
          %v4872 = vsel %vm4852, %v4807, %v4122
          %v4873 = vsel %vm4852, %v4808, %v4124
          %v4874 = vsel %vm4852, %v4809, %v4126
          %v4875 = vsel %vm4852, %v4810, %v4128
          %v4876 = vsel %vm4852, %v4811, %v4130
          %v4877 = vsel %vm4852, %v4812, %v4132
          %v4878 = vsel %vm4852, %v4813, %v4134
          %v4879 = vsel %vm4852, %v4814, %v4136
          %v4880 = vsel %vm4852, %v4815, %v4138
          %v4881 = vsel %vm4852, %v4816, %v4140
          %v4882 = vsel %vm4852, %v4817, %v4142
          %v4883 = vsel %vm4852, %v4818, %v4144
          %v4884 = vsel %vm4852, %v4819, %v4146
          %v4885 = vsel %vm4852, %v4820, %v4148
          %v4886 = vsel %vm4852, %v4821, %v4150
          %v4887 = vsel %vm4852, %v4822, %v4152
          %v4888 = vsel %vm4852, %v4823, %v4154
          %v4889 = vsel %vm4852, %v4824, %v4156
          %v4890 = vsel %vm4852, %v4825, %v4158
          %v4891 = vsel %vm4852, %v4826, %v4160
          %v4892 = vsel %vm4852, %v4827, %v4162
          %v4893 = vsel %vm4852, %v4828, %v4164
          %v4894 = vsel %vm4852, %v4829, %v4166
          %v4895 = vsel %vm4852, %v4830, %v4168
          %v4896 = vsel %vm4852, %v4831, %v4170
          %v4897 = vsel %vm4852, %v4832, %v4172
          %v4898 = vsel %vm4852, %v4833, %v4174
          %v4899 = vsel %vm4852, %v4834, %v4176
          %v4900 = vsel %vm4852, %v4835, %v4178
          %v4901 = vsel %vm4852, %v4836, %v4180
          %v4902 = vsel %vm4852, %v4837, %v4182
          %v4903 = vsel %vm4852, %v4838, %v4184
          %v4904 = vsel %vm4852, %v4839, %v4186
          %v4905 = vsel %vm4852, %v4840, %v4188
          %v4906 = vsel %vm4852, %v4841, %v4190
          %v4907 = vsel %vm4852, %v4842, %v4192
          %v4908 = vsel %vm4852, %v4843, %v4194
          %v4909 = vsel %vm4852, %v4844, %v4196
          %v4910 = vsel %vm4852, %v4845, %v4198
          %v4911 = vsel %vm4852, %v4846, %v4200
          %v4912 = vsel %vm4852, %v4847, %v4202
          %v4913 = vsel %vm4852, %v4848, %v4204
          %v4914 = vsel %vm4852, %v4849, %v4206
          %v4915 = vsel %vm4852, %v4850, %v4208
          %v4916 = vsel %vm4852, %v4851, %v4210
          %vm4917 = vcmask 785408
          %v4918 = vsel %vm4917, %v4853, %v4340
          %v4919 = vsel %vm4917, %v4854, %v4342
          %v4920 = vsel %vm4917, %v4855, %v4344
          %v4921 = vsel %vm4917, %v4856, %v4346
          %v4922 = vsel %vm4917, %v4857, %v4348
          %v4923 = vsel %vm4917, %v4858, %v4350
          %v4924 = vsel %vm4917, %v4859, %v4352
          %v4925 = vsel %vm4917, %v4860, %v4354
          %v4926 = vsel %vm4917, %v4861, %v4356
          %v4927 = vsel %vm4917, %v4862, %v4358
          %v4928 = vsel %vm4917, %v4863, %v4360
          %v4929 = vsel %vm4917, %v4864, %v4362
          %v4930 = vsel %vm4917, %v4865, %v4364
          %v4931 = vsel %vm4917, %v4866, %v4366
          %v4932 = vsel %vm4917, %v4867, %v4368
          %v4933 = vsel %vm4917, %v4868, %v4370
          %v4934 = vsel %vm4917, %v4869, %v4372
          %v4935 = vsel %vm4917, %v4870, %v4374
          %v4936 = vsel %vm4917, %v4871, %v4376
          %v4937 = vsel %vm4917, %v4872, %v4378
          %v4938 = vsel %vm4917, %v4873, %v4380
          %v4939 = vsel %vm4917, %v4874, %v4382
          %v4940 = vsel %vm4917, %v4875, %v4384
          %v4941 = vsel %vm4917, %v4876, %v4386
          %v4942 = vsel %vm4917, %v4877, %v4388
          %v4943 = vsel %vm4917, %v4878, %v4390
          %v4944 = vsel %vm4917, %v4879, %v4392
          %v4945 = vsel %vm4917, %v4880, %v4394
          %v4946 = vsel %vm4917, %v4881, %v4396
          %v4947 = vsel %vm4917, %v4882, %v4398
          %v4948 = vsel %vm4917, %v4883, %v4400
          %v4949 = vsel %vm4917, %v4884, %v4402
          %v4950 = vsel %vm4917, %v4885, %v4404
          %v4951 = vsel %vm4917, %v4886, %v4406
          %v4952 = vsel %vm4917, %v4887, %v4408
          %v4953 = vsel %vm4917, %v4888, %v4410
          %v4954 = vsel %vm4917, %v4889, %v4412
          %v4955 = vsel %vm4917, %v4890, %v4414
          %v4956 = vsel %vm4917, %v4891, %v4416
          %v4957 = vsel %vm4917, %v4892, %v4418
          %v4958 = vsel %vm4917, %v4893, %v4420
          %v4959 = vsel %vm4917, %v4894, %v4422
          %v4960 = vsel %vm4917, %v4895, %v4424
          %v4961 = vsel %vm4917, %v4896, %v4426
          %v4962 = vsel %vm4917, %v4897, %v4428
          %v4963 = vsel %vm4917, %v4898, %v4430
          %v4964 = vsel %vm4917, %v4899, %v4432
          %v4965 = vsel %vm4917, %v4900, %v4434
          %v4966 = vsel %vm4917, %v4901, %v4436
          %v4967 = vsel %vm4917, %v4902, %v4438
          %v4968 = vsel %vm4917, %v4903, %v4440
          %v4969 = vsel %vm4917, %v4904, %v4442
          %v4970 = vsel %vm4917, %v4905, %v4444
          %v4971 = vsel %vm4917, %v4906, %v4446
          %v4972 = vsel %vm4917, %v4907, %v4448
          %v4973 = vsel %vm4917, %v4908, %v4450
          %v4974 = vsel %vm4917, %v4909, %v4452
          %v4975 = vsel %vm4917, %v4910, %v4454
          %v4976 = vsel %vm4917, %v4911, %v4456
          %v4977 = vsel %vm4917, %v4912, %v4458
          %v4978 = vsel %vm4917, %v4913, %v4460
          %v4979 = vsel %vm4917, %v4914, %v4462
          %v4980 = vsel %vm4917, %v4915, %v4464
          %v4981 = vsel %vm4917, %v4916, %v4466
          %v4982 = vsel %vm4787, %v3379, %v4596
          %v4983 = vsel %vm4787, %v3380, %v4598
          %v4984 = vsel %vm4787, %v3381, %v4600
          %v4985 = vsel %vm4787, %v3382, %v4602
          %v4986 = vsel %vm4787, %v3383, %v4604
          %v4987 = vsel %vm4787, %v3384, %v4606
          %v4988 = vsel %vm4787, %v3385, %v4608
          %v4989 = vsel %vm4787, %v3386, %v4610
          %v4990 = vsel %vm4787, %v3387, %v4612
          %v4991 = vsel %vm4787, %v3388, %v4614
          %v4992 = vsel %vm4787, %v3389, %v4616
          %v4993 = vsel %vm4787, %v3390, %v4618
          %v4994 = vsel %vm4787, %v3391, %v4620
          %v4995 = vsel %vm4787, %v3392, %v4622
          %v4996 = vsel %vm4787, %v3393, %v4624
          %v4997 = vsel %vm4787, %v3394, %v4626
          %v4998 = vsel %vm4787, %v3395, %v4628
          %v4999 = vsel %vm4787, %v3396, %v4630
          %v5000 = vsel %vm4787, %v3397, %v4632
          %v5001 = vsel %vm4787, %v3398, %v4634
          %v5002 = vsel %vm4787, %v3399, %v4636
          %v5003 = vsel %vm4787, %v3400, %v4638
          %v5004 = vsel %vm4787, %v3401, %v4640
          %v5005 = vsel %vm4787, %v3402, %v4642
          %v5006 = vsel %vm4787, %v3403, %v4644
          %v5007 = vsel %vm4787, %v3404, %v4646
          %v5008 = vsel %vm4787, %v3405, %v4648
          %v5009 = vsel %vm4787, %v3406, %v4650
          %v5010 = vsel %vm4787, %v3407, %v4652
          %v5011 = vsel %vm4787, %v3408, %v4654
          %v5012 = vsel %vm4787, %v3409, %v4656
          %v5013 = vsel %vm4787, %v3410, %v4658
          %v5014 = vsel %vm4787, %v3411, %v4660
          %v5015 = vsel %vm4787, %v3412, %v4662
          %v5016 = vsel %vm4787, %v3413, %v4664
          %v5017 = vsel %vm4787, %v3414, %v4666
          %v5018 = vsel %vm4787, %v3415, %v4668
          %v5019 = vsel %vm4787, %v3416, %v4670
          %v5020 = vsel %vm4787, %v3417, %v4672
          %v5021 = vsel %vm4787, %v3418, %v4674
          %v5022 = vsel %vm4787, %v3419, %v4676
          %v5023 = vsel %vm4787, %v3420, %v4678
          %v5024 = vsel %vm4787, %v3421, %v4680
          %v5025 = vsel %vm4787, %v3422, %v4682
          %v5026 = vsel %vm4787, %v3423, %v4684
          %v5027 = vsel %vm4787, %v3424, %v4686
          %v5028 = vsel %vm4787, %v3425, %v4688
          %v5029 = vsel %vm4787, %v3426, %v4690
          %v5030 = vsel %vm4787, %v3427, %v4692
          %v5031 = vsel %vm4787, %v3428, %v4694
          %v5032 = vsel %vm4787, %v3429, %v4696
          %v5033 = vsel %vm4787, %v3430, %v4698
          %v5034 = vsel %vm4787, %v3431, %v4700
          %v5035 = vsel %vm4787, %v3432, %v4702
          %v5036 = vsel %vm4787, %v3433, %v4704
          %v5037 = vsel %vm4787, %v3434, %v4706
          %v5038 = vsel %vm4787, %v3435, %v4708
          %v5039 = vsel %vm4787, %v3436, %v4710
          %v5040 = vsel %vm4787, %v3437, %v4712
          %v5041 = vsel %vm4787, %v3438, %v4714
          %v5042 = vsel %vm4787, %v3439, %v4716
          %v5043 = vsel %vm4787, %v3440, %v4718
          %v5044 = vsel %vm4787, %v3441, %v4720
          %v5045 = vsel %vm4787, %v3442, %v4722
          %v5046 = vld [vmem:[%s322] sm:$0xff]
          %v5047 = vld [vmem:[%s322 + $0x8] sm:$0xff]
          %v5048 = vld [vmem:[%s322 + $0x10] sm:$0xff]
          %v5049 = vld [vmem:[%s322 + $0x18] sm:$0xff]
          %v5050 = vld [vmem:[%s322 + $0x20] sm:$0xff]
          %v5051 = vld [vmem:[%s322 + $0x28] sm:$0xff]
          %v5052 = vld [vmem:[%s322 + $0x30] sm:$0xff]
          %v5053 = vld [vmem:[%s322 + $0x38] sm:$0xff]
          %v5054 = vld [vmem:[%s322 + $0x40] sm:$0xff]
          %v5055 = vld [vmem:[%s322 + $0x48] sm:$0xff]
          %v5056 = vld [vmem:[%s322 + $0x50] sm:$0xff]
          %v5057 = vld [vmem:[%s322 + $0x58] sm:$0xff]
          %v5058 = vld [vmem:[%s322 + $0x60] sm:$0xff]
          %v5059 = vld [vmem:[%s322 + $0x68] sm:$0xff]
          %v5060 = vld [vmem:[%s322 + $0x70] sm:$0xff]
          %v5061 = vld [vmem:[%s322 + $0x78] sm:$0xff]
          %v5062 = vld [vmem:[%s322 + $0x80] sm:$0xff]
          %v5063 = vld [vmem:[%s322 + $0x88] sm:$0xff]
          %v5064 = vld [vmem:[%s322 + $0x90] sm:$0xff]
          %v5065 = vld [vmem:[%s322 + $0x98] sm:$0xff]
          %v5066 = vld [vmem:[%s322 + $0xa0] sm:$0xff]
          %v5067 = vld [vmem:[%s322 + $0xa8] sm:$0xff]
          %v5068 = vld [vmem:[%s322 + $0xb0] sm:$0xff]
          %v5069 = vld [vmem:[%s322 + $0xb8] sm:$0xff]
          %v5071 = vsel %vm4852, %v4982, 0
          %v5074 = vsel %vm4852, %v4983, 0
          %v5077 = vsel %vm4852, %v4984, 0
          %v5080 = vsel %vm4852, %v4985, 0
          %v5083 = vsel %vm4852, %v4986, 0
          %v5086 = vsel %vm4852, %v4987, 0
          %v5089 = vsel %vm4852, %v4988, 0
          %v5092 = vsel %vm4852, %v4989, 0
          %v5095 = vsel %vm4852, %v4990, 0
          %v5098 = vsel %vm4852, %v4991, 0
          %v5101 = vsel %vm4852, %v4992, 0
          %v5104 = vsel %vm4852, %v4993, 0
          %v5107 = vsel %vm4852, %v4994, 0
          %v5110 = vsel %vm4852, %v4995, 0
          %v5113 = vsel %vm4852, %v4996, 0
          %v5116 = vsel %vm4852, %v4997, 0
          %v5119 = vsel %vm4852, %v4998, 0
          %v5122 = vsel %vm4852, %v4999, 0
          %v5125 = vsel %vm4852, %v5000, 0
          %v5128 = vsel %vm4852, %v5001, 0
          %v5131 = vsel %vm4852, %v5002, 0
          %v5134 = vsel %vm4852, %v5003, 0
          %v5137 = vsel %vm4852, %v5004, 0
          %v5140 = vsel %vm4852, %v5005, 0
          %v5143 = vsel %vm4852, %v5006, 0
          %v5146 = vsel %vm4852, %v5007, 0
          %v5149 = vsel %vm4852, %v5008, 0
          %v5152 = vsel %vm4852, %v5009, 0
          %v5155 = vsel %vm4852, %v5010, 0
          %v5158 = vsel %vm4852, %v5011, 0
          %v5161 = vsel %vm4852, %v5012, 0
          %v5164 = vsel %vm4852, %v5013, 0
          %v5167 = vsel %vm4852, %v5014, 0
          %v5170 = vsel %vm4852, %v5015, 0
          %v5173 = vsel %vm4852, %v5016, 0
          %v5176 = vsel %vm4852, %v5017, 0
          %v5179 = vsel %vm4852, %v5018, 0
          %v5182 = vsel %vm4852, %v5019, 0
          %v5185 = vsel %vm4852, %v5020, 0
          %v5188 = vsel %vm4852, %v5021, 0
          %v5191 = vsel %vm4852, %v5022, 0
          %v5194 = vsel %vm4852, %v5023, 0
          %v5197 = vsel %vm4852, %v5024, 0
          %v5200 = vsel %vm4852, %v5025, 0
          %v5203 = vsel %vm4852, %v5026, 0
          %v5206 = vsel %vm4852, %v5027, 0
          %v5209 = vsel %vm4852, %v5028, 0
          %v5212 = vsel %vm4852, %v5029, 0
          %v5215 = vsel %vm4852, %v5030, 0
          %v5218 = vsel %vm4852, %v5031, 0
          %v5221 = vsel %vm4852, %v5032, 0
          %v5224 = vsel %vm4852, %v5033, 0
          %v5227 = vsel %vm4852, %v5034, 0
          %v5230 = vsel %vm4852, %v5035, 0
          %v5233 = vsel %vm4852, %v5036, 0
          %v5236 = vsel %vm4852, %v5037, 0
          %v5239 = vsel %vm4852, %v5038, 0
          %v5242 = vsel %vm4852, %v5039, 0
          %v5245 = vsel %vm4852, %v5040, 0
          %v5248 = vsel %vm4852, %v5041, 0
          %v5251 = vsel %vm4852, %v5042, 0
          %v5254 = vsel %vm4852, %v5043, 0
          %v5257 = vsel %vm4852, %v5044, 0
          %v5260 = vsel %vm4852, %v5045, 0
          %5262 = vmatprep.subr.mxu0 0.0
          %5263 = vmatpush1.msra.mxu0 %v5046
          %5264 = vmatprep.subr.mxu0 0.0
          %5265 = vmatpush1.msra.mxu0 %v5047
          %5266 = vmatprep.subr.mxu0 0.0
          %5267 = vmatpush1.msra.mxu0 %v5048
          %5268 = vmatprep.subr.mxu0 0.0
          %5269 = vmatpush1.msra.mxu0 %v5049
          %5270 = vmatprep.subr.mxu0 0.0
          %5271 = vmatpush1.msra.mxu0 %v5050
          %5272 = vmatprep.subr.mxu0 0.0
          %5273 = vmatpush1.msra.mxu0 %v5051
          %5274 = vmatprep.subr.mxu0 0.0
          %5275 = vmatpush1.msra.mxu0 %v5052
          %5276 = vmatprep.subr.mxu0 0.0
          %5277 = vmatpush1.msra.mxu0 %v5053
          %5278 = vmatprep.subr.mxu0 0.0
          %5279 = vmatpush1.msra.mxu0 %v5054
          %5280 = vmatprep.subr.mxu0 0.0
          %5281 = vmatpush1.msra.mxu0 %v5055
          %5282 = vmatprep.subr.mxu0 0.0
          %5283 = vmatpush1.msra.mxu0 %v5056
          %5284 = vmatprep.subr.mxu0 0.0
          %5285 = vmatpush1.msra.mxu0 %v5057
          %5286 = vmatprep.subr.mxu0 0.0
          %5287 = vmatpush1.msra.mxu0 %v5058
          %5288 = vmatprep.subr.mxu0 0.0
          %5289 = vmatpush1.msra.mxu0 %v5059
          %5290 = vmatprep.subr.mxu0 0.0
          %5291 = vmatpush1.msra.mxu0 %v5060
          %5292 = vmatprep.subr.mxu0 0.0
          %5293 = vmatpush1.msra.mxu0 %v5061
          %5294 = vmatprep.subr.mxu0 0.0
          %5295 = vmatpush1.msra.mxu0 %v5062
          %5296 = vmatprep.subr.mxu0 0.0
          %5297 = vmatpush1.msra.mxu0 %v5063
          %5298 = vmatprep.subr.mxu0 0.0
          %5299 = vmatpush1.msra.mxu0 %v5064
          %5300 = vmatprep.subr.mxu0 0.0
          %5301 = vmatpush1.msra.mxu0 %v5065
          %5302 = vmatprep.subr.mxu0 0.0
          %5303 = vmatpush1.msra.mxu0 %v5066
          %5304 = vmatprep.subr.mxu0 0.0
          %5305 = vmatpush1.msra.mxu0 %v5067
          %5306 = vmatprep.subr.mxu0 0.0
          %5307 = vmatpush1.msra.mxu0 %v5068
          %5308 = vmatprep.subr.mxu0 0.0
          %5309 = vmatpush1.msra.mxu0 %v5069
          %5310 = vmatprep.subr.mxu0 0.0
          %5311 = vmatpush1.msra.mxu0 0.0
          %5312 = vmatprep.subr.mxu0 0.0
          %5313 = vmatpush1.msra.mxu0 0.0
          %5314 = vmatprep.subr.mxu0 0.0
          %5315 = vmatpush1.msra.mxu0 0.0
          %5316 = vmatprep.subr.mxu0 0.0
          %5317 = vmatpush1.msra.mxu0 0.0
          %5318 = vmatprep.subr.mxu0 0.0
          %5319 = vmatpush1.msra.mxu0 0.0
          %5320 = vmatprep.subr.mxu0 0.0
          %5321 = vmatpush1.msra.mxu0 0.0
          %5322 = vmatprep.subr.mxu0 0.0
          %5323 = vmatpush1.msra.mxu0 0.0
          %5324 = vmatprep.subr.mxu0 0.0
          %5325 = vmatpush1.msra.mxu0 0.0
          %5326 = vmatprep.mubr.f32.mxu0 %v5071
          %5327 = vmatmul.mubr.f32.gmra.mrb[0].mxu0 %v4918
          %v5328 = vpop.f32.mrb[0].mxu0
          %v5329 = vadd.f32 0.0, %v5328
          %v5330 = vpop.f32.mrb[0].mxu0
          %5331 = vmatprep.mubr.f32.mxu0 %v5074
          %5332 = vmatmul.mubr.f32.gmra.mrb[0].mxu0 %v4919
          %v5333 = vpop.f32.mrb[0].mxu0
          %v5334 = vadd.f32 0.0, %v5333
          %v5335 = vpop.f32.mrb[0].mxu0
          %5336 = vmatprep.mubr.f32.mxu0 %v5077
          %5337 = vmatmul.mubr.f32.gmra.mrb[0].mxu0 %v4920
          %v5338 = vpop.f32.mrb[0].mxu0
          %v5339 = vadd.f32 0.0, %v5338
          %v5340 = vpop.f32.mrb[0].mxu0
          %5341 = vmatprep.mubr.f32.mxu0 %v5080
          %5342 = vmatmul.mubr.f32.gmra.mrb[0].mxu0 %v4921
          %v5343 = vpop.f32.mrb[0].mxu0
          %v5344 = vadd.f32 0.0, %v5343
          %v5345 = vpop.f32.mrb[0].mxu0
          %5346 = vmatprep.mubr.f32.mxu0 %v5083
          %5347 = vmatmul.mubr.f32.gmra.mrb[0].mxu0 %v4922
          %v5348 = vpop.f32.mrb[0].mxu0
          %v5349 = vadd.f32 0.0, %v5348
          %v5350 = vpop.f32.mrb[0].mxu0
          %5351 = vmatprep.mubr.f32.mxu0 %v5086
          %5352 = vmatmul.mubr.f32.gmra.mrb[0].mxu0 %v4923
          %v5353 = vpop.f32.mrb[0].mxu0
          %v5354 = vadd.f32 0.0, %v5353
          %v5355 = vpop.f32.mrb[0].mxu0
          %5356 = vmatprep.mubr.f32.mxu0 %v5089
          %5357 = vmatmul.mubr.f32.gmra.mrb[0].mxu0 %v4924
          %v5358 = vpop.f32.mrb[0].mxu0
          %v5359 = vadd.f32 0.0, %v5358
          %v5360 = vpop.f32.mrb[0].mxu0
          %5361 = vmatprep.mubr.f32.mxu0 %v5092
          %5362 = vmatmul.mubr.f32.gmra.mrb[0].mxu0 %v4925
          %v5363 = vpop.f32.mrb[0].mxu0
          %v5364 = vadd.f32 0.0, %v5363
          %v5365 = vpop.f32.mrb[0].mxu0
          %5366 = vmatprep.mubr.f32.mxu0 %v5095
          %5367 = vmatmul.mubr.f32.gmra.mrb[0].mxu0 %v4926
          %v5368 = vpop.f32.mrb[0].mxu0
          %v5369 = vadd.f32 0.0, %v5368
          %v5370 = vpop.f32.mrb[0].mxu0
          %5371 = vmatprep.mubr.f32.mxu0 %v5098
          %5372 = vmatmul.mubr.f32.gmra.mrb[0].mxu0 %v4927
          %v5373 = vpop.f32.mrb[0].mxu0
          %v5374 = vadd.f32 0.0, %v5373
          %v5375 = vpop.f32.mrb[0].mxu0
          %5376 = vmatprep.mubr.f32.mxu0 %v5101
          %5377 = vmatmul.mubr.f32.gmra.mrb[0].mxu0 %v4928
          %v5378 = vpop.f32.mrb[0].mxu0
          %v5379 = vadd.f32 0.0, %v5378
          %v5380 = vpop.f32.mrb[0].mxu0
          %5381 = vmatprep.mubr.f32.mxu0 %v5104
          %5382 = vmatmul.mubr.f32.gmra.mrb[0].mxu0 %v4929
          %v5383 = vpop.f32.mrb[0].mxu0
          %v5384 = vadd.f32 0.0, %v5383
          %v5385 = vpop.f32.mrb[0].mxu0
          %5386 = vmatprep.mubr.f32.mxu0 %v5107
          %5387 = vmatmul.mubr.f32.gmra.mrb[0].mxu0 %v4930
          %v5388 = vpop.f32.mrb[0].mxu0
          %v5389 = vadd.f32 0.0, %v5388
          %v5390 = vpop.f32.mrb[0].mxu0
          %5391 = vmatprep.mubr.f32.mxu0 %v5110
          %5392 = vmatmul.mubr.f32.gmra.mrb[0].mxu0 %v4931
          %v5393 = vpop.f32.mrb[0].mxu0
          %v5394 = vadd.f32 0.0, %v5393
          %v5395 = vpop.f32.mrb[0].mxu0
          %5396 = vmatprep.mubr.f32.mxu0 %v5113
          %5397 = vmatmul.mubr.f32.gmra.mrb[0].mxu0 %v4932
          %v5398 = vpop.f32.mrb[0].mxu0
          %v5399 = vadd.f32 0.0, %v5398
          %v5400 = vpop.f32.mrb[0].mxu0
          %5401 = vmatprep.mubr.f32.mxu0 %v5116
          %5402 = vmatmul.mubr.f32.gmra.mrb[0].mxu0 %v4933
          %v5403 = vpop.f32.mrb[0].mxu0
          %v5404 = vadd.f32 0.0, %v5403
          %v5405 = vpop.f32.mrb[0].mxu0
          %5406 = vmatprep.mubr.f32.mxu0 %v5119
          %5407 = vmatmul.mubr.f32.gmra.mrb[0].mxu0 %v4934
          %v5408 = vpop.f32.mrb[0].mxu0
          %v5409 = vadd.f32 0.0, %v5408
          %v5410 = vpop.f32.mrb[0].mxu0
          %5411 = vmatprep.mubr.f32.mxu0 %v5122
          %5412 = vmatmul.mubr.f32.gmra.mrb[0].mxu0 %v4935
          %v5413 = vpop.f32.mrb[0].mxu0
          %v5414 = vadd.f32 0.0, %v5413
          %v5415 = vpop.f32.mrb[0].mxu0
          %5416 = vmatprep.mubr.f32.mxu0 %v5125
          %5417 = vmatmul.mubr.f32.gmra.mrb[0].mxu0 %v4936
          %v5418 = vpop.f32.mrb[0].mxu0
          %v5419 = vadd.f32 0.0, %v5418
          %v5420 = vpop.f32.mrb[0].mxu0
          %5421 = vmatprep.mubr.f32.mxu0 %v5128
          %5422 = vmatmul.mubr.f32.gmra.mrb[0].mxu0 %v4937
          %v5423 = vpop.f32.mrb[0].mxu0
          %v5424 = vadd.f32 0.0, %v5423
          %v5425 = vpop.f32.mrb[0].mxu0
          %5426 = vmatprep.mubr.f32.mxu0 %v5131
          %5427 = vmatmul.mubr.f32.gmra.mrb[0].mxu0 %v4938
          %v5428 = vpop.f32.mrb[0].mxu0
          %v5429 = vadd.f32 0.0, %v5428
          %v5430 = vpop.f32.mrb[0].mxu0
          %5431 = vmatprep.mubr.f32.mxu0 %v5134
          %5432 = vmatmul.mubr.f32.gmra.mrb[0].mxu0 %v4939
          %v5433 = vpop.f32.mrb[0].mxu0
          %v5434 = vadd.f32 0.0, %v5433
          %v5435 = vpop.f32.mrb[0].mxu0
          %5436 = vmatprep.mubr.f32.mxu0 %v5137
          %5437 = vmatmul.mubr.f32.gmra.mrb[0].mxu0 %v4940
          %v5438 = vpop.f32.mrb[0].mxu0
          %v5439 = vadd.f32 0.0, %v5438
          %v5440 = vpop.f32.mrb[0].mxu0
          %5441 = vmatprep.mubr.f32.mxu0 %v5140
          %5442 = vmatmul.mubr.f32.gmra.mrb[0].mxu0 %v4941
          %v5443 = vpop.f32.mrb[0].mxu0
          %v5444 = vadd.f32 0.0, %v5443
          %v5445 = vpop.f32.mrb[0].mxu0
          %5446 = vmatprep.mubr.f32.mxu0 %v5143
          %5447 = vmatmul.mubr.f32.gmra.mrb[0].mxu0 %v4942
          %v5448 = vpop.f32.mrb[0].mxu0
          %v5449 = vadd.f32 0.0, %v5448
          %v5450 = vpop.f32.mrb[0].mxu0
          %5451 = vmatprep.mubr.f32.mxu0 %v5146
          %5452 = vmatmul.mubr.f32.gmra.mrb[0].mxu0 %v4943
          %v5453 = vpop.f32.mrb[0].mxu0
          %v5454 = vadd.f32 0.0, %v5453
          %v5455 = vpop.f32.mrb[0].mxu0
          %5456 = vmatprep.mubr.f32.mxu0 %v5149
          %5457 = vmatmul.mubr.f32.gmra.mrb[0].mxu0 %v4944
          %v5458 = vpop.f32.mrb[0].mxu0
          %v5459 = vadd.f32 0.0, %v5458
          %v5460 = vpop.f32.mrb[0].mxu0
          %5461 = vmatprep.mubr.f32.mxu0 %v5152
          %5462 = vmatmul.mubr.f32.gmra.mrb[0].mxu0 %v4945
          %v5463 = vpop.f32.mrb[0].mxu0
          %v5464 = vadd.f32 0.0, %v5463
          %v5465 = vpop.f32.mrb[0].mxu0
          %5466 = vmatprep.mubr.f32.mxu0 %v5155
          %5467 = vmatmul.mubr.f32.gmra.mrb[0].mxu0 %v4946
          %v5468 = vpop.f32.mrb[0].mxu0
          %v5469 = vadd.f32 0.0, %v5468
          %v5470 = vpop.f32.mrb[0].mxu0
          %5471 = vmatprep.mubr.f32.mxu0 %v5158
          %5472 = vmatmul.mubr.f32.gmra.mrb[0].mxu0 %v4947
          %v5473 = vpop.f32.mrb[0].mxu0
          %v5474 = vadd.f32 0.0, %v5473
          %v5475 = vpop.f32.mrb[0].mxu0
          %5476 = vmatprep.mubr.f32.mxu0 %v5161
          %5477 = vmatmul.mubr.f32.gmra.mrb[0].mxu0 %v4948
          %v5478 = vpop.f32.mrb[0].mxu0
          %v5479 = vadd.f32 0.0, %v5478
          %v5480 = vpop.f32.mrb[0].mxu0
          %5481 = vmatprep.mubr.f32.mxu0 %v5164
          %5482 = vmatmul.mubr.f32.gmra.mrb[0].mxu0 %v4949
          %v5483 = vpop.f32.mrb[0].mxu0
          %v5484 = vadd.f32 0.0, %v5483
          %v5485 = vpop.f32.mrb[0].mxu0
          %5486 = vmatprep.mubr.f32.mxu0 %v5167
          %5487 = vmatmul.mubr.f32.gmra.mrb[0].mxu0 %v4950
          %v5488 = vpop.f32.mrb[0].mxu0
          %v5489 = vadd.f32 0.0, %v5488
          %v5490 = vpop.f32.mrb[0].mxu0
          %5491 = vmatprep.mubr.f32.mxu0 %v5170
          %5492 = vmatmul.mubr.f32.gmra.mrb[0].mxu0 %v4951
          %v5493 = vpop.f32.mrb[0].mxu0
          %v5494 = vadd.f32 0.0, %v5493
          %v5495 = vpop.f32.mrb[0].mxu0
          %5496 = vmatprep.mubr.f32.mxu0 %v5173
          %5497 = vmatmul.mubr.f32.gmra.mrb[0].mxu0 %v4952
          %v5498 = vpop.f32.mrb[0].mxu0
          %v5499 = vadd.f32 0.0, %v5498
          %v5500 = vpop.f32.mrb[0].mxu0
          %5501 = vmatprep.mubr.f32.mxu0 %v5176
          %5502 = vmatmul.mubr.f32.gmra.mrb[0].mxu0 %v4953
          %v5503 = vpop.f32.mrb[0].mxu0
          %v5504 = vadd.f32 0.0, %v5503
          %v5505 = vpop.f32.mrb[0].mxu0
          %5506 = vmatprep.mubr.f32.mxu0 %v5179
          %5507 = vmatmul.mubr.f32.gmra.mrb[0].mxu0 %v4954
          %v5508 = vpop.f32.mrb[0].mxu0
          %v5509 = vadd.f32 0.0, %v5508
          %v5510 = vpop.f32.mrb[0].mxu0
          %5511 = vmatprep.mubr.f32.mxu0 %v5182
          %5512 = vmatmul.mubr.f32.gmra.mrb[0].mxu0 %v4955
          %v5513 = vpop.f32.mrb[0].mxu0
          %v5514 = vadd.f32 0.0, %v5513
          %v5515 = vpop.f32.mrb[0].mxu0
          %5516 = vmatprep.mubr.f32.mxu0 %v5185
          %5517 = vmatmul.mubr.f32.gmra.mrb[0].mxu0 %v4956
          %v5518 = vpop.f32.mrb[0].mxu0
          %v5519 = vadd.f32 0.0, %v5518
          %v5520 = vpop.f32.mrb[0].mxu0
          %5521 = vmatprep.mubr.f32.mxu0 %v5188
          %5522 = vmatmul.mubr.f32.gmra.mrb[0].mxu0 %v4957
          %v5523 = vpop.f32.mrb[0].mxu0
          %v5524 = vadd.f32 0.0, %v5523
          %v5525 = vpop.f32.mrb[0].mxu0
          %5526 = vmatprep.mubr.f32.mxu0 %v5191
          %5527 = vmatmul.mubr.f32.gmra.mrb[0].mxu0 %v4958
          %v5528 = vpop.f32.mrb[0].mxu0
          %v5529 = vadd.f32 0.0, %v5528
          %v5530 = vpop.f32.mrb[0].mxu0
          %5531 = vmatprep.mubr.f32.mxu0 %v5194
          %5532 = vmatmul.mubr.f32.gmra.mrb[0].mxu0 %v4959
          %v5533 = vpop.f32.mrb[0].mxu0
          %v5534 = vadd.f32 0.0, %v5533
          %v5535 = vpop.f32.mrb[0].mxu0
          %5536 = vmatprep.mubr.f32.mxu0 %v5197
          %5537 = vmatmul.mubr.f32.gmra.mrb[0].mxu0 %v4960
          %v5538 = vpop.f32.mrb[0].mxu0
          %v5539 = vadd.f32 0.0, %v5538
          %v5540 = vpop.f32.mrb[0].mxu0
          %5541 = vmatprep.mubr.f32.mxu0 %v5200
          %5542 = vmatmul.mubr.f32.gmra.mrb[0].mxu0 %v4961
          %v5543 = vpop.f32.mrb[0].mxu0
          %v5544 = vadd.f32 0.0, %v5543
          %v5545 = vpop.f32.mrb[0].mxu0
          %5546 = vmatprep.mubr.f32.mxu0 %v5203
          %5547 = vmatmul.mubr.f32.gmra.mrb[0].mxu0 %v4962
          %v5548 = vpop.f32.mrb[0].mxu0
          %v5549 = vadd.f32 0.0, %v5548
          %v5550 = vpop.f32.mrb[0].mxu0
          %5551 = vmatprep.mubr.f32.mxu0 %v5206
          %5552 = vmatmul.mubr.f32.gmra.mrb[0].mxu0 %v4963
          %v5553 = vpop.f32.mrb[0].mxu0
          %v5554 = vadd.f32 0.0, %v5553
          %v5555 = vpop.f32.mrb[0].mxu0
          %5556 = vmatprep.mubr.f32.mxu0 %v5209
          %5557 = vmatmul.mubr.f32.gmra.mrb[0].mxu0 %v4964
          %v5558 = vpop.f32.mrb[0].mxu0
          %v5559 = vadd.f32 0.0, %v5558
          %v5560 = vpop.f32.mrb[0].mxu0
          %5561 = vmatprep.mubr.f32.mxu0 %v5212
          %5562 = vmatmul.mubr.f32.gmra.mrb[0].mxu0 %v4965
          %v5563 = vpop.f32.mrb[0].mxu0
          %v5564 = vadd.f32 0.0, %v5563
          %v5565 = vpop.f32.mrb[0].mxu0
          %5566 = vmatprep.mubr.f32.mxu0 %v5215
          %5567 = vmatmul.mubr.f32.gmra.mrb[0].mxu0 %v4966
          %v5568 = vpop.f32.mrb[0].mxu0
          %v5569 = vadd.f32 0.0, %v5568
          %v5570 = vpop.f32.mrb[0].mxu0
          %5571 = vmatprep.mubr.f32.mxu0 %v5218
          %5572 = vmatmul.mubr.f32.gmra.mrb[0].mxu0 %v4967
          %v5573 = vpop.f32.mrb[0].mxu0
          %v5574 = vadd.f32 0.0, %v5573
          %v5575 = vpop.f32.mrb[0].mxu0
          %5576 = vmatprep.mubr.f32.mxu0 %v5221
          %5577 = vmatmul.mubr.f32.gmra.mrb[0].mxu0 %v4968
          %v5578 = vpop.f32.mrb[0].mxu0
          %v5579 = vadd.f32 0.0, %v5578
          %v5580 = vpop.f32.mrb[0].mxu0
          %5581 = vmatprep.mubr.f32.mxu0 %v5224
          %5582 = vmatmul.mubr.f32.gmra.mrb[0].mxu0 %v4969
          %v5583 = vpop.f32.mrb[0].mxu0
          %v5584 = vadd.f32 0.0, %v5583
          %v5585 = vpop.f32.mrb[0].mxu0
          %5586 = vmatprep.mubr.f32.mxu0 %v5227
          %5587 = vmatmul.mubr.f32.gmra.mrb[0].mxu0 %v4970
          %v5588 = vpop.f32.mrb[0].mxu0
          %v5589 = vadd.f32 0.0, %v5588
          %v5590 = vpop.f32.mrb[0].mxu0
          %5591 = vmatprep.mubr.f32.mxu0 %v5230
          %5592 = vmatmul.mubr.f32.gmra.mrb[0].mxu0 %v4971
          %v5593 = vpop.f32.mrb[0].mxu0
          %v5594 = vadd.f32 0.0, %v5593
          %v5595 = vpop.f32.mrb[0].mxu0
          %5596 = vmatprep.mubr.f32.mxu0 %v5233
          %5597 = vmatmul.mubr.f32.gmra.mrb[0].mxu0 %v4972
          %v5598 = vpop.f32.mrb[0].mxu0
          %v5599 = vadd.f32 0.0, %v5598
          %v5600 = vpop.f32.mrb[0].mxu0
          %5601 = vmatprep.mubr.f32.mxu0 %v5236
          %5602 = vmatmul.mubr.f32.gmra.mrb[0].mxu0 %v4973
          %v5603 = vpop.f32.mrb[0].mxu0
          %v5604 = vadd.f32 0.0, %v5603
          %v5605 = vpop.f32.mrb[0].mxu0
          %5606 = vmatprep.mubr.f32.mxu0 %v5239
          %5607 = vmatmul.mubr.f32.gmra.mrb[0].mxu0 %v4974
          %v5608 = vpop.f32.mrb[0].mxu0
          %v5609 = vadd.f32 0.0, %v5608
          %v5610 = vpop.f32.mrb[0].mxu0
          %5611 = vmatprep.mubr.f32.mxu0 %v5242
          %5612 = vmatmul.mubr.f32.gmra.mrb[0].mxu0 %v4975
          %v5613 = vpop.f32.mrb[0].mxu0
          %v5614 = vadd.f32 0.0, %v5613
          %v5615 = vpop.f32.mrb[0].mxu0
          %5616 = vmatprep.mubr.f32.mxu0 %v5245
          %5617 = vmatmul.mubr.f32.gmra.mrb[0].mxu0 %v4976
          %v5618 = vpop.f32.mrb[0].mxu0
          %v5619 = vadd.f32 0.0, %v5618
          %v5620 = vpop.f32.mrb[0].mxu0
          %5621 = vmatprep.mubr.f32.mxu0 %v5248
          %5622 = vmatmul.mubr.f32.gmra.mrb[0].mxu0 %v4977
          %v5623 = vpop.f32.mrb[0].mxu0
          %v5624 = vadd.f32 0.0, %v5623
          %v5625 = vpop.f32.mrb[0].mxu0
          %5626 = vmatprep.mubr.f32.mxu0 %v5251
          %5627 = vmatmul.mubr.f32.gmra.mrb[0].mxu0 %v4978
          %v5628 = vpop.f32.mrb[0].mxu0
          %v5629 = vadd.f32 0.0, %v5628
          %v5630 = vpop.f32.mrb[0].mxu0
          %5631 = vmatprep.mubr.f32.mxu0 %v5254
          %5632 = vmatmul.mubr.f32.gmra.mrb[0].mxu0 %v4979
          %v5633 = vpop.f32.mrb[0].mxu0
          %v5634 = vadd.f32 0.0, %v5633
          %v5635 = vpop.f32.mrb[0].mxu0
          %5636 = vmatprep.mubr.f32.mxu0 %v5257
          %5637 = vmatmul.mubr.f32.gmra.mrb[0].mxu0 %v4980
          %v5638 = vpop.f32.mrb[0].mxu0
          %v5639 = vadd.f32 0.0, %v5638
          %v5640 = vpop.f32.mrb[0].mxu0
          %5641 = vmatprep.mubr.f32.mxu0 %v5260
          %5642 = vmatmul.mubr.f32.gmra.mrb[0].mxu0 %v4981
          %v5643 = vpop.f32.mrb[0].mxu0
          %v5644 = vadd.f32 0.0, %v5643
          %v5645 = vpop.f32.mrb[0].mxu0
          %5646 = vdwg.mxu0
          %v5647 = vpack.c.bf16 %v5334, %v5329
          %v5648 = vpack.c.bf16 %v5344, %v5339
          %v5649 = vpack.c.bf16 %v5354, %v5349
          %v5650 = vpack.c.bf16 %v5364, %v5359
          %v5651 = vpack.c.bf16 %v5374, %v5369
          %v5652 = vpack.c.bf16 %v5384, %v5379
          %v5653 = vpack.c.bf16 %v5394, %v5389
          %v5654 = vpack.c.bf16 %v5404, %v5399
          %v5655 = vpack.c.bf16 %v5414, %v5409
          %v5656 = vpack.c.bf16 %v5424, %v5419
          %v5657 = vpack.c.bf16 %v5434, %v5429
          %v5658 = vpack.c.bf16 %v5444, %v5439
          %v5659 = vpack.c.bf16 %v5454, %v5449
          %v5660 = vpack.c.bf16 %v5464, %v5459
          %v5661 = vpack.c.bf16 %v5474, %v5469
          %v5662 = vpack.c.bf16 %v5484, %v5479
          %v5663 = vpack.c.bf16 %v5494, %v5489
          %v5664 = vpack.c.bf16 %v5504, %v5499
          %v5665 = vpack.c.bf16 %v5514, %v5509
          %v5666 = vpack.c.bf16 %v5524, %v5519
          %v5667 = vpack.c.bf16 %v5534, %v5529
          %v5668 = vpack.c.bf16 %v5544, %v5539
          %v5669 = vpack.c.bf16 %v5554, %v5549
          %v5670 = vpack.c.bf16 %v5564, %v5559
          %v5671 = vpack.c.bf16 %v5574, %v5569
          %v5672 = vpack.c.bf16 %v5584, %v5579
          %v5673 = vpack.c.bf16 %v5594, %v5589
          %v5674 = vpack.c.bf16 %v5604, %v5599
          %v5675 = vpack.c.bf16 %v5614, %v5609
          %v5676 = vpack.c.bf16 %v5624, %v5619
          %v5677 = vpack.c.bf16 %v5634, %v5629
          %v5678 = vpack.c.bf16 %v5644, %v5639
          %5679 = vst.msk [vmem:[#allocation5] sm:$0xff] %vm4787, %v5647
          %5680 = vst.msk [vmem:[#allocation5 + $0x8] sm:$0xff] %vm4787, %v5648
          %5681 = vst.msk [vmem:[#allocation5 + $0x10] sm:$0xff] %vm4787, %v5649
          %5682 = vst.msk [vmem:[#allocation5 + $0x18] sm:$0xff] %vm4787, %v5650
          %5683 = vst.msk [vmem:[#allocation5 + $0x20] sm:$0xff] %vm4787, %v5651
          %5684 = vst.msk [vmem:[#allocation5 + $0x28] sm:$0xff] %vm4787, %v5652
          %5685 = vst.msk [vmem:[#allocation5 + $0x30] sm:$0xff] %vm4787, %v5653
          %5686 = vst.msk [vmem:[#allocation5 + $0x38] sm:$0xff] %vm4787, %v5654
          %5687 = vst.msk [vmem:[#allocation5 + $0x40] sm:$0xff] %vm4787, %v5655
          %5688 = vst.msk [vmem:[#allocation5 + $0x48] sm:$0xff] %vm4787, %v5656
          %5689 = vst.msk [vmem:[#allocation5 + $0x50] sm:$0xff] %vm4787, %v5657
          %5690 = vst.msk [vmem:[#allocation5 + $0x58] sm:$0xff] %vm4787, %v5658
          %5691 = vst.msk [vmem:[#allocation5 + $0x60] sm:$0xff] %vm4787, %v5659
          %5692 = vst.msk [vmem:[#allocation5 + $0x68] sm:$0xff] %vm4787, %v5660
          %5693 = vst.msk [vmem:[#allocation5 + $0x70] sm:$0xff] %vm4787, %v5661
          %5694 = vst.msk [vmem:[#allocation5 + $0x78] sm:$0xff] %vm4787, %v5662
          %5695 = vst.msk [vmem:[#allocation5 + $0x80] sm:$0xff] %vm4787, %v5663
          %5696 = vst.msk [vmem:[#allocation5 + $0x88] sm:$0xff] %vm4787, %v5664
          %5697 = vst.msk [vmem:[#allocation5 + $0x90] sm:$0xff] %vm4787, %v5665
          %5698 = vst.msk [vmem:[#allocation5 + $0x98] sm:$0xff] %vm4787, %v5666
          %5699 = vst.msk [vmem:[#allocation5 + $0xa0] sm:$0xff] %vm4787, %v5667
          %5700 = vst.msk [vmem:[#allocation5 + $0xa8] sm:$0xff] %vm4787, %v5668
          %5701 = vst.msk [vmem:[#allocation5 + $0xb0] sm:$0xff] %vm4787, %v5669
          %5702 = vst.msk [vmem:[#allocation5 + $0xb8] sm:$0xff] %vm4787, %v5670
          %5703 = vst.msk [vmem:[#allocation5 + $0xc0] sm:$0xff] %vm4787, %v5671
          %5704 = vst.msk [vmem:[#allocation5 + $0xc8] sm:$0xff] %vm4787, %v5672
          %5705 = vst.msk [vmem:[#allocation5 + $0xd0] sm:$0xff] %vm4787, %v5673
          %5706 = vst.msk [vmem:[#allocation5 + $0xd8] sm:$0xff] %vm4787, %v5674
          %5707 = vst.msk [vmem:[#allocation5 + $0xe0] sm:$0xff] %vm4787, %v5675
          %5708 = vst.msk [vmem:[#allocation5 + $0xe8] sm:$0xff] %vm4787, %v5676
          %5709 = vst.msk [vmem:[#allocation5 + $0xf0] sm:$0xff] %vm4787, %v5677
          %5710 = vst.msk [vmem:[#allocation5 + $0xf8] sm:$0xff] %vm4787, %v5678
          %v5711 = vld [vmem:[%s314] sm:$0xff]
          %v5712 = vld [vmem:[%s314 + $0x8] sm:$0xff]
          %v5713 = vld [vmem:[%s314 + $0x10] sm:$0xff]
          %v5714 = vld [vmem:[%s314 + $0x18] sm:$0xff]
          %v5715 = vld [vmem:[%s317] sm:$0x1]
          %v5717 = vlaneseq
          %v5718 = vshrl.u32 %v5717, 7
          %v5719 = vsub.s32 0, %v5718
          %v5720 = vrot.slane %v5715, %v5719
          %v5723 = vsel %vm4787, %v1587, 0
          %v5726 = vsel %vm4787, %v1588, 0
          %v5729 = vsel %vm4787, %v1589, 0
          %v5732 = vsel %vm4787, %v1590, 0
          %v5735 = vsel %vm4787, %v1591, 0
          %v5738 = vsel %vm4787, %v1592, 0
          %v5741 = vsel %vm4787, %v1593, 0
          %v5744 = vsel %vm4787, %v1594, 0
          %v5747 = vsel %vm4787, %v1595, 0
          %v5750 = vsel %vm4787, %v1596, 0
          %v5753 = vsel %vm4787, %v1597, 0
          %v5756 = vsel %vm4787, %v1598, 0
          %v5759 = vsel %vm4787, %v1599, 0
          %v5762 = vsel %vm4787, %v1600, 0
          %v5765 = vsel %vm4787, %v1601, 0
          %v5768 = vsel %vm4787, %v1602, 0
          %v5771 = vsel %vm4787, %v1603, 0
          %v5774 = vsel %vm4787, %v1604, 0
          %v5777 = vsel %vm4787, %v1605, 0
          %v5780 = vsel %vm4787, %v1606, 0
          %v5783 = vsel %vm4787, %v1607, 0
          %v5786 = vsel %vm4787, %v1608, 0
          %v5789 = vsel %vm4787, %v1609, 0
          %v5792 = vsel %vm4787, %v1610, 0
          %v5795 = vsel %vm4787, %v1611, 0
          %v5798 = vsel %vm4787, %v1612, 0
          %v5801 = vsel %vm4787, %v1613, 0
          %v5804 = vsel %vm4787, %v1614, 0
          %v5807 = vsel %vm4787, %v1615, 0
          %v5810 = vsel %vm4787, %v1616, 0
          %v5813 = vsel %vm4787, %v1617, 0
          %v5816 = vsel %vm4787, %v1618, 0
          %v5819 = vsel %vm4787, %v1619, 0
          %v5822 = vsel %vm4787, %v1620, 0
          %v5825 = vsel %vm4787, %v1621, 0
          %v5828 = vsel %vm4787, %v1622, 0
          %v5831 = vsel %vm4787, %v1623, 0
          %v5834 = vsel %vm4787, %v1624, 0
          %v5837 = vsel %vm4787, %v1625, 0
          %v5840 = vsel %vm4787, %v1626, 0
          %v5843 = vsel %vm4787, %v1627, 0
          %v5846 = vsel %vm4787, %v1628, 0
          %v5849 = vsel %vm4787, %v1629, 0
          %v5852 = vsel %vm4787, %v1630, 0
          %v5855 = vsel %vm4787, %v1631, 0
          %v5858 = vsel %vm4787, %v1632, 0
          %v5861 = vsel %vm4787, %v1633, 0
          %v5864 = vsel %vm4787, %v1634, 0
          %v5867 = vsel %vm4787, %v1635, 0
          %v5870 = vsel %vm4787, %v1636, 0
          %v5873 = vsel %vm4787, %v1637, 0
          %v5876 = vsel %vm4787, %v1638, 0
          %v5879 = vsel %vm4787, %v1639, 0
          %v5882 = vsel %vm4787, %v1640, 0
          %v5885 = vsel %vm4787, %v1641, 0
          %v5888 = vsel %vm4787, %v1642, 0
          %v5891 = vsel %vm4787, %v1643, 0
          %v5894 = vsel %vm4787, %v1644, 0
          %v5897 = vsel %vm4787, %v1645, 0
          %v5900 = vsel %vm4787, %v1646, 0
          %v5903 = vsel %vm4787, %v1647, 0
          %v5906 = vsel %vm4787, %v1648, 0
          %v5909 = vsel %vm4787, %v1649, 0
          %v5912 = vsel %vm4787, %v1650, 0
          %5914 = vmatprep.subr.mxu0 0.0
          %5915 = vmatpush1.msra.mxu0 %v5711
          %5916 = vmatprep.subr.mxu0 0.0
          %5917 = vmatpush1.msra.mxu0 %v5712
          %5918 = vmatprep.subr.mxu0 0.0
          %5919 = vmatpush1.msra.mxu0 %v5713
          %5920 = vmatprep.subr.mxu0 0.0
          %5921 = vmatpush1.msra.mxu0 %v5714
          %5922 = vmatprep.subr.mxu0 0.0
          %5923 = vmatpush1.msra.mxu0 0.0
          %5924 = vmatprep.subr.mxu0 0.0
          %5925 = vmatpush1.msra.mxu0 0.0
          %5926 = vmatprep.subr.mxu0 0.0
          %5927 = vmatpush1.msra.mxu0 0.0
          %5928 = vmatprep.subr.mxu0 0.0
          %5929 = vmatpush1.msra.mxu0 0.0
          %5930 = vmatprep.subr.mxu0 0.0
          %5931 = vmatpush1.msra.mxu0 0.0
          %5932 = vmatprep.subr.mxu0 0.0
          %5933 = vmatpush1.msra.mxu0 0.0
          %5934 = vmatprep.subr.mxu0 0.0
          %5935 = vmatpush1.msra.mxu0 0.0
          %5936 = vmatprep.subr.mxu0 0.0
          %5937 = vmatpush1.msra.mxu0 0.0
          %5938 = vmatprep.subr.mxu0 0.0
          %5939 = vmatpush1.msra.mxu0 0.0
          %5940 = vmatprep.subr.mxu0 0.0
          %5941 = vmatpush1.msra.mxu0 0.0
          %5942 = vmatprep.subr.mxu0 0.0
          %5943 = vmatpush1.msra.mxu0 0.0
          %5944 = vmatprep.subr.mxu0 0.0
          %5945 = vmatpush1.msra.mxu0 0.0
          %5946 = vmatprep.subr.mxu0 0.0
          %5947 = vmatpush1.msra.mxu0 0.0
          %5948 = vmatprep.subr.mxu0 0.0
          %5949 = vmatpush1.msra.mxu0 0.0
          %5950 = vmatprep.subr.mxu0 0.0
          %5951 = vmatpush1.msra.mxu0 0.0
          %5952 = vmatprep.subr.mxu0 0.0
          %5953 = vmatpush1.msra.mxu0 0.0
          %5954 = vmatprep.subr.mxu0 0.0
          %5955 = vmatpush1.msra.mxu0 0.0
          %5956 = vmatprep.subr.mxu0 0.0
          %5957 = vmatpush1.msra.mxu0 0.0
          %5958 = vmatprep.subr.mxu0 0.0
          %5959 = vmatpush1.msra.mxu0 0.0
          %5960 = vmatprep.subr.mxu0 0.0
          %5961 = vmatpush1.msra.mxu0 0.0
          %5962 = vmatprep.subr.mxu0 0.0
          %5963 = vmatpush1.msra.mxu0 0.0
          %5964 = vmatprep.subr.mxu0 0.0
          %5965 = vmatpush1.msra.mxu0 0.0
          %5966 = vmatprep.subr.mxu0 0.0
          %5967 = vmatpush1.msra.mxu0 0.0
          %5968 = vmatprep.subr.mxu0 0.0
          %5969 = vmatpush1.msra.mxu0 0.0
          %5970 = vmatprep.subr.mxu0 0.0
          %5971 = vmatpush1.msra.mxu0 0.0
          %5972 = vmatprep.subr.mxu0 0.0
          %5973 = vmatpush1.msra.mxu0 0.0
          %5974 = vmatprep.subr.mxu0 0.0
          %5975 = vmatpush1.msra.mxu0 0.0
          %5976 = vmatprep.subr.mxu0 0.0
          %5977 = vmatpush1.msra.mxu0 0.0
          %5978 = vmatprep.mubr.f32.mxu0 0.0
          %5979 = vmatmul.mubr.f32.gmra.mrb[0].mxu0 %v5723
          %v5980 = vpop.f32.mrb[0].mxu0
          %v5981 = vadd.f32 %v5720, %v5980
          %v5982 = vpop.f32.mrb[0].mxu0
          %5983 = vmatprep.mubr.f32.mxu0 0.0
          %5984 = vmatmul.mubr.f32.gmra.mrb[0].mxu0 %v5726
          %v5985 = vpop.f32.mrb[0].mxu0
          %v5986 = vadd.f32 %v5720, %v5985
          %v5987 = vpop.f32.mrb[0].mxu0
          %5988 = vmatprep.mubr.f32.mxu0 0.0
          %5989 = vmatmul.mubr.f32.gmra.mrb[0].mxu0 %v5729
          %v5990 = vpop.f32.mrb[0].mxu0
          %v5991 = vadd.f32 %v5720, %v5990
          %v5992 = vpop.f32.mrb[0].mxu0
          %5993 = vmatprep.mubr.f32.mxu0 0.0
          %5994 = vmatmul.mubr.f32.gmra.mrb[0].mxu0 %v5732
          %v5995 = vpop.f32.mrb[0].mxu0
          %v5996 = vadd.f32 %v5720, %v5995
          %v5997 = vpop.f32.mrb[0].mxu0
          %5998 = vmatprep.mubr.f32.mxu0 0.0
          %5999 = vmatmul.mubr.f32.gmra.mrb[0].mxu0 %v5735
          %v6000 = vpop.f32.mrb[0].mxu0
          %v6001 = vadd.f32 %v5720, %v6000
          %v6002 = vpop.f32.mrb[0].mxu0
          %6003 = vmatprep.mubr.f32.mxu0 0.0
          %6004 = vmatmul.mubr.f32.gmra.mrb[0].mxu0 %v5738
          %v6005 = vpop.f32.mrb[0].mxu0
          %v6006 = vadd.f32 %v5720, %v6005
          %v6007 = vpop.f32.mrb[0].mxu0
          %6008 = vmatprep.mubr.f32.mxu0 0.0
          %6009 = vmatmul.mubr.f32.gmra.mrb[0].mxu0 %v5741
          %v6010 = vpop.f32.mrb[0].mxu0
          %v6011 = vadd.f32 %v5720, %v6010
          %v6012 = vpop.f32.mrb[0].mxu0
          %6013 = vmatprep.mubr.f32.mxu0 0.0
          %6014 = vmatmul.mubr.f32.gmra.mrb[0].mxu0 %v5744
          %v6015 = vpop.f32.mrb[0].mxu0
          %v6016 = vadd.f32 %v5720, %v6015
          %v6017 = vpop.f32.mrb[0].mxu0
          %6018 = vmatprep.mubr.f32.mxu0 0.0
          %6019 = vmatmul.mubr.f32.gmra.mrb[0].mxu0 %v5747
          %v6020 = vpop.f32.mrb[0].mxu0
          %v6021 = vadd.f32 %v5720, %v6020
          %v6022 = vpop.f32.mrb[0].mxu0
          %6023 = vmatprep.mubr.f32.mxu0 0.0
          %6024 = vmatmul.mubr.f32.gmra.mrb[0].mxu0 %v5750
          %v6025 = vpop.f32.mrb[0].mxu0
          %v6026 = vadd.f32 %v5720, %v6025
          %v6027 = vpop.f32.mrb[0].mxu0
          %6028 = vmatprep.mubr.f32.mxu0 0.0
          %6029 = vmatmul.mubr.f32.gmra.mrb[0].mxu0 %v5753
          %v6030 = vpop.f32.mrb[0].mxu0
          %v6031 = vadd.f32 %v5720, %v6030
          %v6032 = vpop.f32.mrb[0].mxu0
          %6033 = vmatprep.mubr.f32.mxu0 0.0
          %6034 = vmatmul.mubr.f32.gmra.mrb[0].mxu0 %v5756
          %v6035 = vpop.f32.mrb[0].mxu0
          %v6036 = vadd.f32 %v5720, %v6035
          %v6037 = vpop.f32.mrb[0].mxu0
          %6038 = vmatprep.mubr.f32.mxu0 0.0
          %6039 = vmatmul.mubr.f32.gmra.mrb[0].mxu0 %v5759
          %v6040 = vpop.f32.mrb[0].mxu0
          %v6041 = vadd.f32 %v5720, %v6040
          %v6042 = vpop.f32.mrb[0].mxu0
          %6043 = vmatprep.mubr.f32.mxu0 0.0
          %6044 = vmatmul.mubr.f32.gmra.mrb[0].mxu0 %v5762
          %v6045 = vpop.f32.mrb[0].mxu0
          %v6046 = vadd.f32 %v5720, %v6045
          %v6047 = vpop.f32.mrb[0].mxu0
          %6048 = vmatprep.mubr.f32.mxu0 0.0
          %6049 = vmatmul.mubr.f32.gmra.mrb[0].mxu0 %v5765
          %v6050 = vpop.f32.mrb[0].mxu0
          %v6051 = vadd.f32 %v5720, %v6050
          %v6052 = vpop.f32.mrb[0].mxu0
          %6053 = vmatprep.mubr.f32.mxu0 0.0
          %6054 = vmatmul.mubr.f32.gmra.mrb[0].mxu0 %v5768
          %v6055 = vpop.f32.mrb[0].mxu0
          %v6056 = vadd.f32 %v5720, %v6055
          %v6057 = vpop.f32.mrb[0].mxu0
          %6058 = vmatprep.mubr.f32.mxu0 0.0
          %6059 = vmatmul.mubr.f32.gmra.mrb[0].mxu0 %v5771
          %v6060 = vpop.f32.mrb[0].mxu0
          %v6061 = vadd.f32 %v5720, %v6060
          %v6062 = vpop.f32.mrb[0].mxu0
          %6063 = vmatprep.mubr.f32.mxu0 0.0
          %6064 = vmatmul.mubr.f32.gmra.mrb[0].mxu0 %v5774
          %v6065 = vpop.f32.mrb[0].mxu0
          %v6066 = vadd.f32 %v5720, %v6065
          %v6067 = vpop.f32.mrb[0].mxu0
          %6068 = vmatprep.mubr.f32.mxu0 0.0
          %6069 = vmatmul.mubr.f32.gmra.mrb[0].mxu0 %v5777
          %v6070 = vpop.f32.mrb[0].mxu0
          %v6071 = vadd.f32 %v5720, %v6070
          %v6072 = vpop.f32.mrb[0].mxu0
          %6073 = vmatprep.mubr.f32.mxu0 0.0
          %6074 = vmatmul.mubr.f32.gmra.mrb[0].mxu0 %v5780
          %v6075 = vpop.f32.mrb[0].mxu0
          %v6076 = vadd.f32 %v5720, %v6075
          %v6077 = vpop.f32.mrb[0].mxu0
          %6078 = vmatprep.mubr.f32.mxu0 0.0
          %6079 = vmatmul.mubr.f32.gmra.mrb[0].mxu0 %v5783
          %v6080 = vpop.f32.mrb[0].mxu0
          %v6081 = vadd.f32 %v5720, %v6080
          %v6082 = vpop.f32.mrb[0].mxu0
          %6083 = vmatprep.mubr.f32.mxu0 0.0
          %6084 = vmatmul.mubr.f32.gmra.mrb[0].mxu0 %v5786
          %v6085 = vpop.f32.mrb[0].mxu0
          %v6086 = vadd.f32 %v5720, %v6085
          %v6087 = vpop.f32.mrb[0].mxu0
          %6088 = vmatprep.mubr.f32.mxu0 0.0
          %6089 = vmatmul.mubr.f32.gmra.mrb[0].mxu0 %v5789
          %v6090 = vpop.f32.mrb[0].mxu0
          %v6091 = vadd.f32 %v5720, %v6090
          %v6092 = vpop.f32.mrb[0].mxu0
          %6093 = vmatprep.mubr.f32.mxu0 0.0
          %6094 = vmatmul.mubr.f32.gmra.mrb[0].mxu0 %v5792
          %v6095 = vpop.f32.mrb[0].mxu0
          %v6096 = vadd.f32 %v5720, %v6095
          %v6097 = vpop.f32.mrb[0].mxu0
          %6098 = vmatprep.mubr.f32.mxu0 0.0
          %6099 = vmatmul.mubr.f32.gmra.mrb[0].mxu0 %v5795
          %v6100 = vpop.f32.mrb[0].mxu0
          %v6101 = vadd.f32 %v5720, %v6100
          %v6102 = vpop.f32.mrb[0].mxu0
          %6103 = vmatprep.mubr.f32.mxu0 0.0
          %6104 = vmatmul.mubr.f32.gmra.mrb[0].mxu0 %v5798
          %v6105 = vpop.f32.mrb[0].mxu0
          %v6106 = vadd.f32 %v5720, %v6105
          %v6107 = vpop.f32.mrb[0].mxu0
          %6108 = vmatprep.mubr.f32.mxu0 0.0
          %6109 = vmatmul.mubr.f32.gmra.mrb[0].mxu0 %v5801
          %v6110 = vpop.f32.mrb[0].mxu0
          %v6111 = vadd.f32 %v5720, %v6110
          %v6112 = vpop.f32.mrb[0].mxu0
          %6113 = vmatprep.mubr.f32.mxu0 0.0
          %6114 = vmatmul.mubr.f32.gmra.mrb[0].mxu0 %v5804
          %v6115 = vpop.f32.mrb[0].mxu0
          %v6116 = vadd.f32 %v5720, %v6115
          %v6117 = vpop.f32.mrb[0].mxu0
          %6118 = vmatprep.mubr.f32.mxu0 0.0
          %6119 = vmatmul.mubr.f32.gmra.mrb[0].mxu0 %v5807
          %v6120 = vpop.f32.mrb[0].mxu0
          %v6121 = vadd.f32 %v5720, %v6120
          %v6122 = vpop.f32.mrb[0].mxu0
          %6123 = vmatprep.mubr.f32.mxu0 0.0
          %6124 = vmatmul.mubr.f32.gmra.mrb[0].mxu0 %v5810
          %v6125 = vpop.f32.mrb[0].mxu0
          %v6126 = vadd.f32 %v5720, %v6125
          %v6127 = vpop.f32.mrb[0].mxu0
          %6128 = vmatprep.mubr.f32.mxu0 0.0
          %6129 = vmatmul.mubr.f32.gmra.mrb[0].mxu0 %v5813
          %v6130 = vpop.f32.mrb[0].mxu0
          %v6131 = vadd.f32 %v5720, %v6130
          %v6132 = vpop.f32.mrb[0].mxu0
          %6133 = vmatprep.mubr.f32.mxu0 0.0
          %6134 = vmatmul.mubr.f32.gmra.mrb[0].mxu0 %v5816
          %v6135 = vpop.f32.mrb[0].mxu0
          %v6136 = vadd.f32 %v5720, %v6135
          %v6137 = vpop.f32.mrb[0].mxu0
          %6138 = vmatprep.mubr.f32.mxu0 0.0
          %6139 = vmatmul.mubr.f32.gmra.mrb[0].mxu0 %v5819
          %v6140 = vpop.f32.mrb[0].mxu0
          %v6141 = vadd.f32 %v5720, %v6140
          %v6142 = vpop.f32.mrb[0].mxu0
          %6143 = vmatprep.mubr.f32.mxu0 0.0
          %6144 = vmatmul.mubr.f32.gmra.mrb[0].mxu0 %v5822
          %v6145 = vpop.f32.mrb[0].mxu0
          %v6146 = vadd.f32 %v5720, %v6145
          %v6147 = vpop.f32.mrb[0].mxu0
          %6148 = vmatprep.mubr.f32.mxu0 0.0
          %6149 = vmatmul.mubr.f32.gmra.mrb[0].mxu0 %v5825
          %v6150 = vpop.f32.mrb[0].mxu0
          %v6151 = vadd.f32 %v5720, %v6150
          %v6152 = vpop.f32.mrb[0].mxu0
          %6153 = vmatprep.mubr.f32.mxu0 0.0
          %6154 = vmatmul.mubr.f32.gmra.mrb[0].mxu0 %v5828
          %v6155 = vpop.f32.mrb[0].mxu0
          %v6156 = vadd.f32 %v5720, %v6155
          %v6157 = vpop.f32.mrb[0].mxu0
          %6158 = vmatprep.mubr.f32.mxu0 0.0
          %6159 = vmatmul.mubr.f32.gmra.mrb[0].mxu0 %v5831
          %v6160 = vpop.f32.mrb[0].mxu0
          %v6161 = vadd.f32 %v5720, %v6160
          %v6162 = vpop.f32.mrb[0].mxu0
          %6163 = vmatprep.mubr.f32.mxu0 0.0
          %6164 = vmatmul.mubr.f32.gmra.mrb[0].mxu0 %v5834
          %v6165 = vpop.f32.mrb[0].mxu0
          %v6166 = vadd.f32 %v5720, %v6165
          %v6167 = vpop.f32.mrb[0].mxu0
          %6168 = vmatprep.mubr.f32.mxu0 0.0
          %6169 = vmatmul.mubr.f32.gmra.mrb[0].mxu0 %v5837
          %v6170 = vpop.f32.mrb[0].mxu0
          %v6171 = vadd.f32 %v5720, %v6170
          %v6172 = vpop.f32.mrb[0].mxu0
          %6173 = vmatprep.mubr.f32.mxu0 0.0
          %6174 = vmatmul.mubr.f32.gmra.mrb[0].mxu0 %v5840
          %v6175 = vpop.f32.mrb[0].mxu0
          %v6176 = vadd.f32 %v5720, %v6175
          %v6177 = vpop.f32.mrb[0].mxu0
          %6178 = vmatprep.mubr.f32.mxu0 0.0
          %6179 = vmatmul.mubr.f32.gmra.mrb[0].mxu0 %v5843
          %v6180 = vpop.f32.mrb[0].mxu0
          %v6181 = vadd.f32 %v5720, %v6180
          %v6182 = vpop.f32.mrb[0].mxu0
          %6183 = vmatprep.mubr.f32.mxu0 0.0
          %6184 = vmatmul.mubr.f32.gmra.mrb[0].mxu0 %v5846
          %v6185 = vpop.f32.mrb[0].mxu0
          %v6186 = vadd.f32 %v5720, %v6185
          %v6187 = vpop.f32.mrb[0].mxu0
          %6188 = vmatprep.mubr.f32.mxu0 0.0
          %6189 = vmatmul.mubr.f32.gmra.mrb[0].mxu0 %v5849
          %v6190 = vpop.f32.mrb[0].mxu0
          %v6191 = vadd.f32 %v5720, %v6190
          %v6192 = vpop.f32.mrb[0].mxu0
          %6193 = vmatprep.mubr.f32.mxu0 0.0
          %6194 = vmatmul.mubr.f32.gmra.mrb[0].mxu0 %v5852
          %v6195 = vpop.f32.mrb[0].mxu0
          %v6196 = vadd.f32 %v5720, %v6195
          %v6197 = vpop.f32.mrb[0].mxu0
          %6198 = vmatprep.mubr.f32.mxu0 0.0
          %6199 = vmatmul.mubr.f32.gmra.mrb[0].mxu0 %v5855
          %v6200 = vpop.f32.mrb[0].mxu0
          %v6201 = vadd.f32 %v5720, %v6200
          %v6202 = vpop.f32.mrb[0].mxu0
          %6203 = vmatprep.mubr.f32.mxu0 0.0
          %6204 = vmatmul.mubr.f32.gmra.mrb[0].mxu0 %v5858
          %v6205 = vpop.f32.mrb[0].mxu0
          %v6206 = vadd.f32 %v5720, %v6205
          %v6207 = vpop.f32.mrb[0].mxu0
          %6208 = vmatprep.mubr.f32.mxu0 0.0
          %6209 = vmatmul.mubr.f32.gmra.mrb[0].mxu0 %v5861
          %v6210 = vpop.f32.mrb[0].mxu0
          %v6211 = vadd.f32 %v5720, %v6210
          %v6212 = vpop.f32.mrb[0].mxu0
          %6213 = vmatprep.mubr.f32.mxu0 0.0
          %6214 = vmatmul.mubr.f32.gmra.mrb[0].mxu0 %v5864
          %v6215 = vpop.f32.mrb[0].mxu0
          %v6216 = vadd.f32 %v5720, %v6215
          %v6217 = vpop.f32.mrb[0].mxu0
          %6218 = vmatprep.mubr.f32.mxu0 0.0
          %6219 = vmatmul.mubr.f32.gmra.mrb[0].mxu0 %v5867
          %v6220 = vpop.f32.mrb[0].mxu0
          %v6221 = vadd.f32 %v5720, %v6220
          %v6222 = vpop.f32.mrb[0].mxu0
          %6223 = vmatprep.mubr.f32.mxu0 0.0
          %6224 = vmatmul.mubr.f32.gmra.mrb[0].mxu0 %v5870
          %v6225 = vpop.f32.mrb[0].mxu0
          %v6226 = vadd.f32 %v5720, %v6225
          %v6227 = vpop.f32.mrb[0].mxu0
          %6228 = vmatprep.mubr.f32.mxu0 0.0
          %6229 = vmatmul.mubr.f32.gmra.mrb[0].mxu0 %v5873
          %v6230 = vpop.f32.mrb[0].mxu0
          %v6231 = vadd.f32 %v5720, %v6230
          %v6232 = vpop.f32.mrb[0].mxu0
          %6233 = vmatprep.mubr.f32.mxu0 0.0
          %6234 = vmatmul.mubr.f32.gmra.mrb[0].mxu0 %v5876
          %v6235 = vpop.f32.mrb[0].mxu0
          %v6236 = vadd.f32 %v5720, %v6235
          %v6237 = vpop.f32.mrb[0].mxu0
          %6238 = vmatprep.mubr.f32.mxu0 0.0
          %6239 = vmatmul.mubr.f32.gmra.mrb[0].mxu0 %v5879
          %v6240 = vpop.f32.mrb[0].mxu0
          %v6241 = vadd.f32 %v5720, %v6240
          %v6242 = vpop.f32.mrb[0].mxu0
          %6243 = vmatprep.mubr.f32.mxu0 0.0
          %6244 = vmatmul.mubr.f32.gmra.mrb[0].mxu0 %v5882
          %v6245 = vpop.f32.mrb[0].mxu0
          %v6246 = vadd.f32 %v5720, %v6245
          %v6247 = vpop.f32.mrb[0].mxu0
          %6248 = vmatprep.mubr.f32.mxu0 0.0
          %6249 = vmatmul.mubr.f32.gmra.mrb[0].mxu0 %v5885
          %v6250 = vpop.f32.mrb[0].mxu0
          %v6251 = vadd.f32 %v5720, %v6250
          %v6252 = vpop.f32.mrb[0].mxu0
          %6253 = vmatprep.mubr.f32.mxu0 0.0
          %6254 = vmatmul.mubr.f32.gmra.mrb[0].mxu0 %v5888
          %v6255 = vpop.f32.mrb[0].mxu0
          %v6256 = vadd.f32 %v5720, %v6255
          %v6257 = vpop.f32.mrb[0].mxu0
          %6258 = vmatprep.mubr.f32.mxu0 0.0
          %6259 = vmatmul.mubr.f32.gmra.mrb[0].mxu0 %v5891
          %v6260 = vpop.f32.mrb[0].mxu0
          %v6261 = vadd.f32 %v5720, %v6260
          %v6262 = vpop.f32.mrb[0].mxu0
          %6263 = vmatprep.mubr.f32.mxu0 0.0
          %6264 = vmatmul.mubr.f32.gmra.mrb[0].mxu0 %v5894
          %v6265 = vpop.f32.mrb[0].mxu0
          %v6266 = vadd.f32 %v5720, %v6265
          %v6267 = vpop.f32.mrb[0].mxu0
          %6268 = vmatprep.mubr.f32.mxu0 0.0
          %6269 = vmatmul.mubr.f32.gmra.mrb[0].mxu0 %v5897
          %v6270 = vpop.f32.mrb[0].mxu0
          %v6271 = vadd.f32 %v5720, %v6270
          %v6272 = vpop.f32.mrb[0].mxu0
          %6273 = vmatprep.mubr.f32.mxu0 0.0
          %6274 = vmatmul.mubr.f32.gmra.mrb[0].mxu0 %v5900
          %v6275 = vpop.f32.mrb[0].mxu0
          %v6276 = vadd.f32 %v5720, %v6275
          %v6277 = vpop.f32.mrb[0].mxu0
          %6278 = vmatprep.mubr.f32.mxu0 0.0
          %6279 = vmatmul.mubr.f32.gmra.mrb[0].mxu0 %v5903
          %v6280 = vpop.f32.mrb[0].mxu0
          %v6281 = vadd.f32 %v5720, %v6280
          %v6282 = vpop.f32.mrb[0].mxu0
          %6283 = vmatprep.mubr.f32.mxu0 0.0
          %6284 = vmatmul.mubr.f32.gmra.mrb[0].mxu0 %v5906
          %v6285 = vpop.f32.mrb[0].mxu0
          %v6286 = vadd.f32 %v5720, %v6285
          %v6287 = vpop.f32.mrb[0].mxu0
          %6288 = vmatprep.mubr.f32.mxu0 0.0
          %6289 = vmatmul.mubr.f32.gmra.mrb[0].mxu0 %v5909
          %v6290 = vpop.f32.mrb[0].mxu0
          %v6291 = vadd.f32 %v5720, %v6290
          %v6292 = vpop.f32.mrb[0].mxu0
          %6293 = vmatprep.mubr.f32.mxu0 0.0
          %6294 = vmatmul.mubr.f32.gmra.mrb[0].mxu0 %v5912
          %v6295 = vpop.f32.mrb[0].mxu0
          %v6296 = vadd.f32 %v5720, %v6295
          %v6297 = vpop.f32.mrb[0].mxu0
          %6298 = vdwg.mxu0
          %6299 = vst.msk [vmem:[#allocation4] sm:$0xff] %vm4787, %v5981
          %6300 = vst.msk [vmem:[#allocation4 + $0x8] sm:$0xff] %vm4787, %v5986
          %6301 = vst.msk [vmem:[#allocation4 + $0x10] sm:$0xff] %vm4787, %v5991
          %6302 = vst.msk [vmem:[#allocation4 + $0x18] sm:$0xff] %vm4787, %v5996
          %6303 = vst.msk [vmem:[#allocation4 + $0x20] sm:$0xff] %vm4787, %v6001
          %6304 = vst.msk [vmem:[#allocation4 + $0x28] sm:$0xff] %vm4787, %v6006
          %6305 = vst.msk [vmem:[#allocation4 + $0x30] sm:$0xff] %vm4787, %v6011
          %6306 = vst.msk [vmem:[#allocation4 + $0x38] sm:$0xff] %vm4787, %v6016
          %6307 = vst.msk [vmem:[#allocation4 + $0x40] sm:$0xff] %vm4787, %v6021
          %6308 = vst.msk [vmem:[#allocation4 + $0x48] sm:$0xff] %vm4787, %v6026
          %6309 = vst.msk [vmem:[#allocation4 + $0x50] sm:$0xff] %vm4787, %v6031
          %6310 = vst.msk [vmem:[#allocation4 + $0x58] sm:$0xff] %vm4787, %v6036
          %6311 = vst.msk [vmem:[#allocation4 + $0x60] sm:$0xff] %vm4787, %v6041
          %6312 = vst.msk [vmem:[#allocation4 + $0x68] sm:$0xff] %vm4787, %v6046
          %6313 = vst.msk [vmem:[#allocation4 + $0x70] sm:$0xff] %vm4787, %v6051
          %6314 = vst.msk [vmem:[#allocation4 + $0x78] sm:$0xff] %vm4787, %v6056
          %6315 = vst.msk [vmem:[#allocation4 + $0x80] sm:$0xff] %vm4787, %v6061
          %6316 = vst.msk [vmem:[#allocation4 + $0x88] sm:$0xff] %vm4787, %v6066
          %6317 = vst.msk [vmem:[#allocation4 + $0x90] sm:$0xff] %vm4787, %v6071
          %6318 = vst.msk [vmem:[#allocation4 + $0x98] sm:$0xff] %vm4787, %v6076
          %6319 = vst.msk [vmem:[#allocation4 + $0xa0] sm:$0xff] %vm4787, %v6081
          %6320 = vst.msk [vmem:[#allocation4 + $0xa8] sm:$0xff] %vm4787, %v6086
          %6321 = vst.msk [vmem:[#allocation4 + $0xb0] sm:$0xff] %vm4787, %v6091
          %6322 = vst.msk [vmem:[#allocation4 + $0xb8] sm:$0xff] %vm4787, %v6096
          %6323 = vst.msk [vmem:[#allocation4 + $0xc0] sm:$0xff] %vm4787, %v6101
          %6324 = vst.msk [vmem:[#allocation4 + $0xc8] sm:$0xff] %vm4787, %v6106
          %6325 = vst.msk [vmem:[#allocation4 + $0xd0] sm:$0xff] %vm4787, %v6111
          %6326 = vst.msk [vmem:[#allocation4 + $0xd8] sm:$0xff] %vm4787, %v6116
          %6327 = vst.msk [vmem:[#allocation4 + $0xe0] sm:$0xff] %vm4787, %v6121
          %6328 = vst.msk [vmem:[#allocation4 + $0xe8] sm:$0xff] %vm4787, %v6126
          %6329 = vst.msk [vmem:[#allocation4 + $0xf0] sm:$0xff] %vm4787, %v6131
          %6330 = vst.msk [vmem:[#allocation4 + $0xf8] sm:$0xff] %vm4787, %v6136
          %6331 = vst.msk [vmem:[#allocation4 + $0x100] sm:$0xff] %vm4787, %v6141
          %6332 = vst.msk [vmem:[#allocation4 + $0x108] sm:$0xff] %vm4787, %v6146
          %6333 = vst.msk [vmem:[#allocation4 + $0x110] sm:$0xff] %vm4787, %v6151
          %6334 = vst.msk [vmem:[#allocation4 + $0x118] sm:$0xff] %vm4787, %v6156
          %6335 = vst.msk [vmem:[#allocation4 + $0x120] sm:$0xff] %vm4787, %v6161
          %6336 = vst.msk [vmem:[#allocation4 + $0x128] sm:$0xff] %vm4787, %v6166
          %6337 = vst.msk [vmem:[#allocation4 + $0x130] sm:$0xff] %vm4787, %v6171
          %6338 = vst.msk [vmem:[#allocation4 + $0x138] sm:$0xff] %vm4787, %v6176
          %6339 = vst.msk [vmem:[#allocation4 + $0x140] sm:$0xff] %vm4787, %v6181
          %6340 = vst.msk [vmem:[#allocation4 + $0x148] sm:$0xff] %vm4787, %v6186
          %6341 = vst.msk [vmem:[#allocation4 + $0x150] sm:$0xff] %vm4787, %v6191
          %6342 = vst.msk [vmem:[#allocation4 + $0x158] sm:$0xff] %vm4787, %v6196
          %6343 = vst.msk [vmem:[#allocation4 + $0x160] sm:$0xff] %vm4787, %v6201
          %6344 = vst.msk [vmem:[#allocation4 + $0x168] sm:$0xff] %vm4787, %v6206
          %6345 = vst.msk [vmem:[#allocation4 + $0x170] sm:$0xff] %vm4787, %v6211
          %6346 = vst.msk [vmem:[#allocation4 + $0x178] sm:$0xff] %vm4787, %v6216
          %6347 = vst.msk [vmem:[#allocation4 + $0x180] sm:$0xff] %vm4787, %v6221
          %6348 = vst.msk [vmem:[#allocation4 + $0x188] sm:$0xff] %vm4787, %v6226
          %6349 = vst.msk [vmem:[#allocation4 + $0x190] sm:$0xff] %vm4787, %v6231
          %6350 = vst.msk [vmem:[#allocation4 + $0x198] sm:$0xff] %vm4787, %v6236
          %6351 = vst.msk [vmem:[#allocation4 + $0x1a0] sm:$0xff] %vm4787, %v6241
          %6352 = vst.msk [vmem:[#allocation4 + $0x1a8] sm:$0xff] %vm4787, %v6246
          %6353 = vst.msk [vmem:[#allocation4 + $0x1b0] sm:$0xff] %vm4787, %v6251
          %6354 = vst.msk [vmem:[#allocation4 + $0x1b8] sm:$0xff] %vm4787, %v6256
          %6355 = vst.msk [vmem:[#allocation4 + $0x1c0] sm:$0xff] %vm4787, %v6261
          %6356 = vst.msk [vmem:[#allocation4 + $0x1c8] sm:$0xff] %vm4787, %v6266
          %6357 = vst.msk [vmem:[#allocation4 + $0x1d0] sm:$0xff] %vm4787, %v6271
          %6358 = vst.msk [vmem:[#allocation4 + $0x1d8] sm:$0xff] %vm4787, %v6276
          %6359 = vst.msk [vmem:[#allocation4 + $0x1e0] sm:$0xff] %vm4787, %v6281
          %6360 = vst.msk [vmem:[#allocation4 + $0x1e8] sm:$0xff] %vm4787, %v6286
          %6361 = vst.msk [vmem:[#allocation4 + $0x1f0] sm:$0xff] %vm4787, %v6291
          %6362 = vst.msk [vmem:[#allocation4 + $0x1f8] sm:$0xff] %vm4787, %v6296
        $region123: #{tpu_custom_call.1} parent=43 // pred_fallthru
          _
        %s6363 = smul.u32 %s25, 256
        %s6364 = sshra.s32 %s6363, 4
        %s6365 = sand.u32 %s6363, 15
        %s6366 = smul.u32 %s6364, 4
        %s6367 = smul.addr %s6366, 8
        %s6368 = scalar_lea.vmem [#allocation6], %s6367
        %v6369 = vld [vmem:[%s6368] sm:$0xff]
        %v6370 = vld [vmem:[%s6368 + $0x8] sm:$0xff]
        %v6371 = vld [vmem:[%s6368 + $0x10] sm:$0xff]
        %v6372 = vld [vmem:[%s6368 + $0x18] sm:$0xff]
        %v6373 = vld [vmem:[%s6368 + $0x20] sm:$0xff]
        %v6374 = vld [vmem:[%s6368 + $0x28] sm:$0xff]
        %v6375 = vld [vmem:[%s6368 + $0x30] sm:$0xff]
        %v6376 = vld [vmem:[%s6368 + $0x38] sm:$0xff]
        %v6377 = vld [vmem:[%s6368 + $0x40] sm:$0xff]
        %v6378 = vld [vmem:[%s6368 + $0x48] sm:$0xff]
        %v6379 = vld [vmem:[%s6368 + $0x50] sm:$0xff]
        %v6380 = vld [vmem:[%s6368 + $0x58] sm:$0xff]
        %v6381 = vld [vmem:[%s6368 + $0x60] sm:$0xff]
        %v6382 = vld [vmem:[%s6368 + $0x68] sm:$0xff]
        %v6383 = vld [vmem:[%s6368 + $0x70] sm:$0xff]
        %v6384 = vld [vmem:[%s6368 + $0x78] sm:$0xff]
        %v6385 = vld [vmem:[%s6368 + $0x80] sm:$0xff]
        %v6386 = vld [vmem:[%s6368 + $0x88] sm:$0xff]
        %v6387 = vld [vmem:[%s6368 + $0x90] sm:$0xff]
        %v6388 = vld [vmem:[%s6368 + $0x98] sm:$0xff]
        %v6389 = vld [vmem:[%s6368 + $0xa0] sm:$0xff]
        %v6390 = vld [vmem:[%s6368 + $0xa8] sm:$0xff]
        %v6391 = vld [vmem:[%s6368 + $0xb0] sm:$0xff]
        %v6392 = vld [vmem:[%s6368 + $0xb8] sm:$0xff]
        %v6393 = vld [vmem:[%s6368 + $0xc0] sm:$0xff]
        %v6394 = vld [vmem:[%s6368 + $0xc8] sm:$0xff]
        %v6395 = vld [vmem:[%s6368 + $0xd0] sm:$0xff]
        %v6396 = vld [vmem:[%s6368 + $0xd8] sm:$0xff]
        %v6397 = vld [vmem:[%s6368 + $0xe0] sm:$0xff]
        %v6398 = vld [vmem:[%s6368 + $0xe8] sm:$0xff]
        %v6399 = vld [vmem:[%s6368 + $0xf0] sm:$0xff]
        %v6400 = vld [vmem:[%s6368 + $0xf8] sm:$0xff]
        %v6401 = vld [vmem:[%s6368 + $0x100] sm:$0xff]
        %v6402 = vld [vmem:[%s6368 + $0x108] sm:$0xff]
        %v6403 = vld [vmem:[%s6368 + $0x110] sm:$0xff]
        %v6404 = vld [vmem:[%s6368 + $0x118] sm:$0xff]
        %v6405 = vld [vmem:[%s6368 + $0x120] sm:$0xff]
        %v6406 = vld [vmem:[%s6368 + $0x128] sm:$0xff]
        %v6407 = vld [vmem:[%s6368 + $0x130] sm:$0xff]
        %v6408 = vld [vmem:[%s6368 + $0x138] sm:$0xff]
        %v6409 = vld [vmem:[%s6368 + $0x140] sm:$0xff]
        %v6410 = vld [vmem:[%s6368 + $0x148] sm:$0xff]
        %v6411 = vld [vmem:[%s6368 + $0x150] sm:$0xff]
        %v6412 = vld [vmem:[%s6368 + $0x158] sm:$0xff]
        %v6413 = vld [vmem:[%s6368 + $0x160] sm:$0xff]
        %v6414 = vld [vmem:[%s6368 + $0x168] sm:$0xff]
        %v6415 = vld [vmem:[%s6368 + $0x170] sm:$0xff]
        %v6416 = vld [vmem:[%s6368 + $0x178] sm:$0xff]
        %v6417 = vld [vmem:[%s6368 + $0x180] sm:$0xff]
        %v6418 = vld [vmem:[%s6368 + $0x188] sm:$0xff]
        %v6419 = vld [vmem:[%s6368 + $0x190] sm:$0xff]
        %v6420 = vld [vmem:[%s6368 + $0x198] sm:$0xff]
        %v6421 = vld [vmem:[%s6368 + $0x1a0] sm:$0xff]
        %v6422 = vld [vmem:[%s6368 + $0x1a8] sm:$0xff]
        %v6423 = vld [vmem:[%s6368 + $0x1b0] sm:$0xff]
        %v6424 = vld [vmem:[%s6368 + $0x1b8] sm:$0xff]
        %v6425 = vld [vmem:[%s6368 + $0x1c0] sm:$0xff]
        %v6426 = vld [vmem:[%s6368 + $0x1c8] sm:$0xff]
        %v6427 = vld [vmem:[%s6368 + $0x1d0] sm:$0xff]
        %v6428 = vld [vmem:[%s6368 + $0x1d8] sm:$0xff]
        %v6429 = vld [vmem:[%s6368 + $0x1e0] sm:$0xff]
        %v6430 = vld [vmem:[%s6368 + $0x1e8] sm:$0xff]
        %v6431 = vld [vmem:[%s6368 + $0x1f0] sm:$0xff]
        %v6432 = vld [vmem:[%s6368 + $0x1f8] sm:$0xff]
        %v6433 = vld [vmem:[#allocation5] sm:$0xff]
        %v6434 = vld [vmem:[#allocation5 + $0x8] sm:$0xff]
        %v6435 = vld [vmem:[#allocation5 + $0x10] sm:$0xff]
        %v6436 = vld [vmem:[#allocation5 + $0x18] sm:$0xff]
        %v6437 = vld [vmem:[#allocation5 + $0x20] sm:$0xff]
        %v6438 = vld [vmem:[#allocation5 + $0x28] sm:$0xff]
        %v6439 = vld [vmem:[#allocation5 + $0x30] sm:$0xff]
        %v6440 = vld [vmem:[#allocation5 + $0x38] sm:$0xff]
        %v6441 = vld [vmem:[#allocation5 + $0x40] sm:$0xff]
        %v6442 = vld [vmem:[#allocation5 + $0x48] sm:$0xff]
        %v6443 = vld [vmem:[#allocation5 + $0x50] sm:$0xff]
        %v6444 = vld [vmem:[#allocation5 + $0x58] sm:$0xff]
        %v6445 = vld [vmem:[#allocation5 + $0x60] sm:$0xff]
        %v6446 = vld [vmem:[#allocation5 + $0x68] sm:$0xff]
        %v6447 = vld [vmem:[#allocation5 + $0x70] sm:$0xff]
        %v6448 = vld [vmem:[#allocation5 + $0x78] sm:$0xff]
        %v6449 = vld [vmem:[#allocation5 + $0x80] sm:$0xff]
        %v6450 = vld [vmem:[#allocation5 + $0x88] sm:$0xff]
        %v6451 = vld [vmem:[#allocation5 + $0x90] sm:$0xff]
        %v6452 = vld [vmem:[#allocation5 + $0x98] sm:$0xff]
        %v6453 = vld [vmem:[#allocation5 + $0xa0] sm:$0xff]
        %v6454 = vld [vmem:[#allocation5 + $0xa8] sm:$0xff]
        %v6455 = vld [vmem:[#allocation5 + $0xb0] sm:$0xff]
        %v6456 = vld [vmem:[#allocation5 + $0xb8] sm:$0xff]
        %v6457 = vld [vmem:[#allocation5 + $0xc0] sm:$0xff]
        %v6458 = vld [vmem:[#allocation5 + $0xc8] sm:$0xff]
        %v6459 = vld [vmem:[#allocation5 + $0xd0] sm:$0xff]
        %v6460 = vld [vmem:[#allocation5 + $0xd8] sm:$0xff]
        %v6461 = vld [vmem:[#allocation5 + $0xe0] sm:$0xff]
        %v6462 = vld [vmem:[#allocation5 + $0xe8] sm:$0xff]
        %v6463 = vld [vmem:[#allocation5 + $0xf0] sm:$0xff]
        %v6464 = vld [vmem:[#allocation5 + $0xf8] sm:$0xff]
        %6465 = vmatprep.subr.bf16.mxu0 0
        %6466 = vmatpush1.bf16.msra.mxu0 %v6433
        %6467 = vmatprep.subr.bf16.mxu0 0
        %6468 = vmatpush1.bf16.msra.mxu0 %v6434
        %6469 = vmatprep.subr.bf16.mxu0 0
        %6470 = vmatpush1.bf16.msra.mxu0 %v6435
        %6471 = vmatprep.subr.bf16.mxu0 0
        %6472 = vmatpush1.bf16.msra.mxu0 %v6436
        %6473 = vmatprep.subr.bf16.mxu0 0
        %6474 = vmatpush1.bf16.msra.mxu0 %v6437
        %6475 = vmatprep.subr.bf16.mxu0 0
        %6476 = vmatpush1.bf16.msra.mxu0 %v6438
        %6477 = vmatprep.subr.bf16.mxu0 0
        %6478 = vmatpush1.bf16.msra.mxu0 %v6439
        %6479 = vmatprep.subr.bf16.mxu0 0
        %6480 = vmatpush1.bf16.msra.mxu0 %v6440
        %6481 = vmatprep.subr.bf16.mxu0 0
        %6482 = vmatpush1.bf16.msra.mxu0 %v6441
        %6483 = vmatprep.subr.bf16.mxu0 0
        %6484 = vmatpush1.bf16.msra.mxu0 %v6442
        %6485 = vmatprep.subr.bf16.mxu0 0
        %6486 = vmatpush1.bf16.msra.mxu0 %v6443
        %6487 = vmatprep.subr.bf16.mxu0 0
        %6488 = vmatpush1.bf16.msra.mxu0 %v6444
        %6489 = vmatprep.subr.bf16.mxu0 0
        %6490 = vmatpush1.bf16.msra.mxu0 %v6445
        %6491 = vmatprep.subr.bf16.mxu0 0
        %6492 = vmatpush1.bf16.msra.mxu0 %v6446
        %6493 = vmatprep.subr.bf16.mxu0 0
        %6494 = vmatpush1.bf16.msra.mxu0 %v6447
        %6495 = vmatprep.subr.bf16.mxu0 0
        %6496 = vmatpush1.bf16.msra.mxu0 %v6448
        %6497 = vmatprep.mubr.bf16.mxu0 %v6370
        %6498 = vmatmul.mubr.bf16.gmra.mrb[0].mxu0 %v6369
        %v6499 = vpop.f32.mrb[0].mxu0
        %v6500 = vadd.f32 0.0, %v6499
        %v6501 = vpop.f32.mrb[0].mxu0
        %v6502 = vpop.f32.mrb[0].mxu0
        %v6503 = vadd.f32 0.0, %v6502
        %v6504 = vpop.f32.mrb[0].mxu0
        %6505 = vmatprep.mubr.bf16.mxu0 %v6374
        %6506 = vmatmul.mubr.bf16.gmra.mrb[0].mxu0 %v6373
        %v6507 = vpop.f32.mrb[0].mxu0
        %v6508 = vadd.f32 0.0, %v6507
        %v6509 = vpop.f32.mrb[0].mxu0
        %v6510 = vpop.f32.mrb[0].mxu0
        %v6511 = vadd.f32 0.0, %v6510
        %v6512 = vpop.f32.mrb[0].mxu0
        %6513 = vmatprep.mubr.bf16.mxu0 %v6378
        %6514 = vmatmul.mubr.bf16.gmra.mrb[0].mxu0 %v6377
        %v6515 = vpop.f32.mrb[0].mxu0
        %v6516 = vadd.f32 0.0, %v6515
        %v6517 = vpop.f32.mrb[0].mxu0
        %v6518 = vpop.f32.mrb[0].mxu0
        %v6519 = vadd.f32 0.0, %v6518
        %v6520 = vpop.f32.mrb[0].mxu0
        %6521 = vmatprep.mubr.bf16.mxu0 %v6382
        %6522 = vmatmul.mubr.bf16.gmra.mrb[0].mxu0 %v6381
        %v6523 = vpop.f32.mrb[0].mxu0
        %v6524 = vadd.f32 0.0, %v6523
        %v6525 = vpop.f32.mrb[0].mxu0
        %v6526 = vpop.f32.mrb[0].mxu0
        %v6527 = vadd.f32 0.0, %v6526
        %v6528 = vpop.f32.mrb[0].mxu0
        %6529 = vmatprep.mubr.bf16.mxu0 %v6386
        %6530 = vmatmul.mubr.bf16.gmra.mrb[0].mxu0 %v6385
        %v6531 = vpop.f32.mrb[0].mxu0
        %v6532 = vadd.f32 0.0, %v6531
        %v6533 = vpop.f32.mrb[0].mxu0
        %v6534 = vpop.f32.mrb[0].mxu0
        %v6535 = vadd.f32 0.0, %v6534
        %v6536 = vpop.f32.mrb[0].mxu0
        %6537 = vmatprep.mubr.bf16.mxu0 %v6390
        %6538 = vmatmul.mubr.bf16.gmra.mrb[0].mxu0 %v6389
        %v6539 = vpop.f32.mrb[0].mxu0
        %v6540 = vadd.f32 0.0, %v6539
        %v6541 = vpop.f32.mrb[0].mxu0
        %v6542 = vpop.f32.mrb[0].mxu0
        %v6543 = vadd.f32 0.0, %v6542
        %v6544 = vpop.f32.mrb[0].mxu0
        %6545 = vmatprep.mubr.bf16.mxu0 %v6394
        %6546 = vmatmul.mubr.bf16.gmra.mrb[0].mxu0 %v6393
        %v6547 = vpop.f32.mrb[0].mxu0
        %v6548 = vadd.f32 0.0, %v6547
        %v6549 = vpop.f32.mrb[0].mxu0
        %v6550 = vpop.f32.mrb[0].mxu0
        %v6551 = vadd.f32 0.0, %v6550
        %v6552 = vpop.f32.mrb[0].mxu0
        %6553 = vmatprep.mubr.bf16.mxu0 %v6398
        %6554 = vmatmul.mubr.bf16.gmra.mrb[0].mxu0 %v6397
        %v6555 = vpop.f32.mrb[0].mxu0
        %v6556 = vadd.f32 0.0, %v6555
        %v6557 = vpop.f32.mrb[0].mxu0
        %v6558 = vpop.f32.mrb[0].mxu0
        %v6559 = vadd.f32 0.0, %v6558
        %v6560 = vpop.f32.mrb[0].mxu0
        %6561 = vmatprep.mubr.bf16.mxu0 %v6402
        %6562 = vmatmul.mubr.bf16.gmra.mrb[0].mxu0 %v6401
        %v6563 = vpop.f32.mrb[0].mxu0
        %v6564 = vadd.f32 0.0, %v6563
        %v6565 = vpop.f32.mrb[0].mxu0
        %v6566 = vpop.f32.mrb[0].mxu0
        %v6567 = vadd.f32 0.0, %v6566
        %v6568 = vpop.f32.mrb[0].mxu0
        %6569 = vmatprep.mubr.bf16.mxu0 %v6406
        %6570 = vmatmul.mubr.bf16.gmra.mrb[0].mxu0 %v6405
        %v6571 = vpop.f32.mrb[0].mxu0
        %v6572 = vadd.f32 0.0, %v6571
        %v6573 = vpop.f32.mrb[0].mxu0
        %v6574 = vpop.f32.mrb[0].mxu0
        %v6575 = vadd.f32 0.0, %v6574
        %v6576 = vpop.f32.mrb[0].mxu0
        %6577 = vmatprep.mubr.bf16.mxu0 %v6410
        %6578 = vmatmul.mubr.bf16.gmra.mrb[0].mxu0 %v6409
        %v6579 = vpop.f32.mrb[0].mxu0
        %v6580 = vadd.f32 0.0, %v6579
        %v6581 = vpop.f32.mrb[0].mxu0
        %v6582 = vpop.f32.mrb[0].mxu0
        %v6583 = vadd.f32 0.0, %v6582
        %v6584 = vpop.f32.mrb[0].mxu0
        %6585 = vmatprep.mubr.bf16.mxu0 %v6414
        %6586 = vmatmul.mubr.bf16.gmra.mrb[0].mxu0 %v6413
        %v6587 = vpop.f32.mrb[0].mxu0
        %v6588 = vadd.f32 0.0, %v6587
        %v6589 = vpop.f32.mrb[0].mxu0
        %v6590 = vpop.f32.mrb[0].mxu0
        %v6591 = vadd.f32 0.0, %v6590
        %v6592 = vpop.f32.mrb[0].mxu0
        %6593 = vmatprep.mubr.bf16.mxu0 %v6418
        %6594 = vmatmul.mubr.bf16.gmra.mrb[0].mxu0 %v6417
        %v6595 = vpop.f32.mrb[0].mxu0
        %v6596 = vadd.f32 0.0, %v6595
        %v6597 = vpop.f32.mrb[0].mxu0
        %v6598 = vpop.f32.mrb[0].mxu0
        %v6599 = vadd.f32 0.0, %v6598
        %v6600 = vpop.f32.mrb[0].mxu0
        %6601 = vmatprep.mubr.bf16.mxu0 %v6422
        %6602 = vmatmul.mubr.bf16.gmra.mrb[0].mxu0 %v6421
        %v6603 = vpop.f32.mrb[0].mxu0
        %v6604 = vadd.f32 0.0, %v6603
        %v6605 = vpop.f32.mrb[0].mxu0
        %v6606 = vpop.f32.mrb[0].mxu0
        %v6607 = vadd.f32 0.0, %v6606
        %v6608 = vpop.f32.mrb[0].mxu0
        %6609 = vmatprep.mubr.bf16.mxu0 %v6426
        %6610 = vmatmul.mubr.bf16.gmra.mrb[0].mxu0 %v6425
        %v6611 = vpop.f32.mrb[0].mxu0
        %v6612 = vadd.f32 0.0, %v6611
        %v6613 = vpop.f32.mrb[0].mxu0
        %v6614 = vpop.f32.mrb[0].mxu0
        %v6615 = vadd.f32 0.0, %v6614
        %v6616 = vpop.f32.mrb[0].mxu0
        %6617 = vmatprep.mubr.bf16.mxu0 %v6430
        %6618 = vmatmul.mubr.bf16.gmra.mrb[0].mxu0 %v6429
        %v6619 = vpop.f32.mrb[0].mxu0
        %v6620 = vadd.f32 0.0, %v6619
        %v6621 = vpop.f32.mrb[0].mxu0
        %v6622 = vpop.f32.mrb[0].mxu0
        %v6623 = vadd.f32 0.0, %v6622
        %v6624 = vpop.f32.mrb[0].mxu0
        %6625 = vdwg.mxu0
        %6626 = vmatprep.subr.bf16.mxu0 0
        %6627 = vmatpush1.bf16.msra.mxu0 %v6449
        %6628 = vmatprep.subr.bf16.mxu0 0
        %6629 = vmatpush1.bf16.msra.mxu0 %v6450
        %6630 = vmatprep.subr.bf16.mxu0 0
        %6631 = vmatpush1.bf16.msra.mxu0 %v6451
        %6632 = vmatprep.subr.bf16.mxu0 0
        %6633 = vmatpush1.bf16.msra.mxu0 %v6452
        %6634 = vmatprep.subr.bf16.mxu0 0
        %6635 = vmatpush1.bf16.msra.mxu0 %v6453
        %6636 = vmatprep.subr.bf16.mxu0 0
        %6637 = vmatpush1.bf16.msra.mxu0 %v6454
        %6638 = vmatprep.subr.bf16.mxu0 0
        %6639 = vmatpush1.bf16.msra.mxu0 %v6455
        %6640 = vmatprep.subr.bf16.mxu0 0
        %6641 = vmatpush1.bf16.msra.mxu0 %v6456
        %6642 = vmatprep.subr.bf16.mxu0 0
        %6643 = vmatpush1.bf16.msra.mxu0 %v6457
        %6644 = vmatprep.subr.bf16.mxu0 0
        %6645 = vmatpush1.bf16.msra.mxu0 %v6458
        %6646 = vmatprep.subr.bf16.mxu0 0
        %6647 = vmatpush1.bf16.msra.mxu0 %v6459
        %6648 = vmatprep.subr.bf16.mxu0 0
        %6649 = vmatpush1.bf16.msra.mxu0 %v6460
        %6650 = vmatprep.subr.bf16.mxu0 0
        %6651 = vmatpush1.bf16.msra.mxu0 %v6461
        %6652 = vmatprep.subr.bf16.mxu0 0
        %6653 = vmatpush1.bf16.msra.mxu0 %v6462
        %6654 = vmatprep.subr.bf16.mxu0 0
        %6655 = vmatpush1.bf16.msra.mxu0 %v6463
        %6656 = vmatprep.subr.bf16.mxu0 0
        %6657 = vmatpush1.bf16.msra.mxu0 %v6464
        %6658 = vmatprep.mubr.bf16.mxu0 %v6372
        %6659 = vmatmul.mubr.bf16.gmra.mrb[0].mxu0 %v6371
        %v6660 = vpop.f32.mrb[0].mxu0
        %v6661 = vadd.f32 %v6500, %v6660
        %v6662 = vpop.f32.mrb[0].mxu0
        %v6663 = vpop.f32.mrb[0].mxu0
        %v6664 = vadd.f32 %v6503, %v6663
        %v6665 = vpop.f32.mrb[0].mxu0
        %6666 = vmatprep.mubr.bf16.mxu0 %v6376
        %6667 = vmatmul.mubr.bf16.gmra.mrb[0].mxu0 %v6375
        %v6668 = vpop.f32.mrb[0].mxu0
        %v6669 = vadd.f32 %v6508, %v6668
        %v6670 = vpop.f32.mrb[0].mxu0
        %v6671 = vpop.f32.mrb[0].mxu0
        %v6672 = vadd.f32 %v6511, %v6671
        %v6673 = vpop.f32.mrb[0].mxu0
        %6674 = vmatprep.mubr.bf16.mxu0 %v6380
        %6675 = vmatmul.mubr.bf16.gmra.mrb[0].mxu0 %v6379
        %v6676 = vpop.f32.mrb[0].mxu0
        %v6677 = vadd.f32 %v6516, %v6676
        %v6678 = vpop.f32.mrb[0].mxu0
        %v6679 = vpop.f32.mrb[0].mxu0
        %v6680 = vadd.f32 %v6519, %v6679
        %v6681 = vpop.f32.mrb[0].mxu0
        %6682 = vmatprep.mubr.bf16.mxu0 %v6384
        %6683 = vmatmul.mubr.bf16.gmra.mrb[0].mxu0 %v6383
        %v6684 = vpop.f32.mrb[0].mxu0
        %v6685 = vadd.f32 %v6524, %v6684
        %v6686 = vpop.f32.mrb[0].mxu0
        %v6687 = vpop.f32.mrb[0].mxu0
        %v6688 = vadd.f32 %v6527, %v6687
        %v6689 = vpop.f32.mrb[0].mxu0
        %6690 = vmatprep.mubr.bf16.mxu0 %v6388
        %6691 = vmatmul.mubr.bf16.gmra.mrb[0].mxu0 %v6387
        %v6692 = vpop.f32.mrb[0].mxu0
        %v6693 = vadd.f32 %v6532, %v6692
        %v6694 = vpop.f32.mrb[0].mxu0
        %v6695 = vpop.f32.mrb[0].mxu0
        %v6696 = vadd.f32 %v6535, %v6695
        %v6697 = vpop.f32.mrb[0].mxu0
        %6698 = vmatprep.mubr.bf16.mxu0 %v6392
        %6699 = vmatmul.mubr.bf16.gmra.mrb[0].mxu0 %v6391
        %v6700 = vpop.f32.mrb[0].mxu0
        %v6701 = vadd.f32 %v6540, %v6700
        %v6702 = vpop.f32.mrb[0].mxu0
        %v6703 = vpop.f32.mrb[0].mxu0
        %v6704 = vadd.f32 %v6543, %v6703
        %v6705 = vpop.f32.mrb[0].mxu0
        %6706 = vmatprep.mubr.bf16.mxu0 %v6396
        %6707 = vmatmul.mubr.bf16.gmra.mrb[0].mxu0 %v6395
        %v6708 = vpop.f32.mrb[0].mxu0
        %v6709 = vadd.f32 %v6548, %v6708
        %v6710 = vpop.f32.mrb[0].mxu0
        %v6711 = vpop.f32.mrb[0].mxu0
        %v6712 = vadd.f32 %v6551, %v6711
        %v6713 = vpop.f32.mrb[0].mxu0
        %6714 = vmatprep.mubr.bf16.mxu0 %v6400
        %6715 = vmatmul.mubr.bf16.gmra.mrb[0].mxu0 %v6399
        %v6716 = vpop.f32.mrb[0].mxu0
        %v6717 = vadd.f32 %v6556, %v6716
        %v6718 = vpop.f32.mrb[0].mxu0
        %v6719 = vpop.f32.mrb[0].mxu0
        %v6720 = vadd.f32 %v6559, %v6719
        %v6721 = vpop.f32.mrb[0].mxu0
        %6722 = vmatprep.mubr.bf16.mxu0 %v6404
        %6723 = vmatmul.mubr.bf16.gmra.mrb[0].mxu0 %v6403
        %v6724 = vpop.f32.mrb[0].mxu0
        %v6725 = vadd.f32 %v6564, %v6724
        %v6726 = vpop.f32.mrb[0].mxu0
        %v6727 = vpop.f32.mrb[0].mxu0
        %v6728 = vadd.f32 %v6567, %v6727
        %v6729 = vpop.f32.mrb[0].mxu0
        %6730 = vmatprep.mubr.bf16.mxu0 %v6408
        %6731 = vmatmul.mubr.bf16.gmra.mrb[0].mxu0 %v6407
        %v6732 = vpop.f32.mrb[0].mxu0
        %v6733 = vadd.f32 %v6572, %v6732
        %v6734 = vpop.f32.mrb[0].mxu0
        %v6735 = vpop.f32.mrb[0].mxu0
        %v6736 = vadd.f32 %v6575, %v6735
        %v6737 = vpop.f32.mrb[0].mxu0
        %6738 = vmatprep.mubr.bf16.mxu0 %v6412
        %6739 = vmatmul.mubr.bf16.gmra.mrb[0].mxu0 %v6411
        %v6740 = vpop.f32.mrb[0].mxu0
        %v6741 = vadd.f32 %v6580, %v6740
        %v6742 = vpop.f32.mrb[0].mxu0
        %v6743 = vpop.f32.mrb[0].mxu0
        %v6744 = vadd.f32 %v6583, %v6743
        %v6745 = vpop.f32.mrb[0].mxu0
        %6746 = vmatprep.mubr.bf16.mxu0 %v6416
        %6747 = vmatmul.mubr.bf16.gmra.mrb[0].mxu0 %v6415
        %v6748 = vpop.f32.mrb[0].mxu0
        %v6749 = vadd.f32 %v6588, %v6748
        %v6750 = vpop.f32.mrb[0].mxu0
        %v6751 = vpop.f32.mrb[0].mxu0
        %v6752 = vadd.f32 %v6591, %v6751
        %v6753 = vpop.f32.mrb[0].mxu0
        %6754 = vmatprep.mubr.bf16.mxu0 %v6420
        %6755 = vmatmul.mubr.bf16.gmra.mrb[0].mxu0 %v6419
        %v6756 = vpop.f32.mrb[0].mxu0
        %v6757 = vadd.f32 %v6596, %v6756
        %v6758 = vpop.f32.mrb[0].mxu0
        %v6759 = vpop.f32.mrb[0].mxu0
        %v6760 = vadd.f32 %v6599, %v6759
        %v6761 = vpop.f32.mrb[0].mxu0
        %6762 = vmatprep.mubr.bf16.mxu0 %v6424
        %6763 = vmatmul.mubr.bf16.gmra.mrb[0].mxu0 %v6423
        %v6764 = vpop.f32.mrb[0].mxu0
        %v6765 = vadd.f32 %v6604, %v6764
        %v6766 = vpop.f32.mrb[0].mxu0
        %v6767 = vpop.f32.mrb[0].mxu0
        %v6768 = vadd.f32 %v6607, %v6767
        %v6769 = vpop.f32.mrb[0].mxu0
        %6770 = vmatprep.mubr.bf16.mxu0 %v6428
        %6771 = vmatmul.mubr.bf16.gmra.mrb[0].mxu0 %v6427
        %v6772 = vpop.f32.mrb[0].mxu0
        %v6773 = vadd.f32 %v6612, %v6772
        %v6774 = vpop.f32.mrb[0].mxu0
        %v6775 = vpop.f32.mrb[0].mxu0
        %v6776 = vadd.f32 %v6615, %v6775
        %v6777 = vpop.f32.mrb[0].mxu0
        %6778 = vmatprep.mubr.bf16.mxu0 %v6432
        %6779 = vmatmul.mubr.bf16.gmra.mrb[0].mxu0 %v6431
        %v6780 = vpop.f32.mrb[0].mxu0
        %v6781 = vadd.f32 %v6620, %v6780
        %v6782 = vpop.f32.mrb[0].mxu0
        %v6783 = vpop.f32.mrb[0].mxu0
        %v6784 = vadd.f32 %v6623, %v6783
        %v6785 = vpop.f32.mrb[0].mxu0
        %6786 = vdwg.mxu0
        %s6787 = scalar_lea.vmem [#allocation4], %s6363
        %v6788 = vld [vmem:[%s6787] sm:$0xff]
        %v6789 = vld [vmem:[%s6787 + $0x8] sm:$0xff]
        %v6790 = vld [vmem:[%s6787 + $0x10] sm:$0xff]
        %v6791 = vld [vmem:[%s6787 + $0x18] sm:$0xff]
        %v6792 = vld [vmem:[%s6787 + $0x20] sm:$0xff]
        %v6793 = vld [vmem:[%s6787 + $0x28] sm:$0xff]
        %v6794 = vld [vmem:[%s6787 + $0x30] sm:$0xff]
        %v6795 = vld [vmem:[%s6787 + $0x38] sm:$0xff]
        %v6796 = vld [vmem:[%s6787 + $0x40] sm:$0xff]
        %v6797 = vld [vmem:[%s6787 + $0x48] sm:$0xff]
        %v6798 = vld [vmem:[%s6787 + $0x50] sm:$0xff]
        %v6799 = vld [vmem:[%s6787 + $0x58] sm:$0xff]
        %v6800 = vld [vmem:[%s6787 + $0x60] sm:$0xff]
        %v6801 = vld [vmem:[%s6787 + $0x68] sm:$0xff]
        %v6802 = vld [vmem:[%s6787 + $0x70] sm:$0xff]
        %v6803 = vld [vmem:[%s6787 + $0x78] sm:$0xff]
        %v6804 = vld [vmem:[%s6787 + $0x80] sm:$0xff]
        %v6805 = vld [vmem:[%s6787 + $0x88] sm:$0xff]
        %v6806 = vld [vmem:[%s6787 + $0x90] sm:$0xff]
        %v6807 = vld [vmem:[%s6787 + $0x98] sm:$0xff]
        %v6808 = vld [vmem:[%s6787 + $0xa0] sm:$0xff]
        %v6809 = vld [vmem:[%s6787 + $0xa8] sm:$0xff]
        %v6810 = vld [vmem:[%s6787 + $0xb0] sm:$0xff]
        %v6811 = vld [vmem:[%s6787 + $0xb8] sm:$0xff]
        %v6812 = vld [vmem:[%s6787 + $0xc0] sm:$0xff]
        %v6813 = vld [vmem:[%s6787 + $0xc8] sm:$0xff]
        %v6814 = vld [vmem:[%s6787 + $0xd0] sm:$0xff]
        %v6815 = vld [vmem:[%s6787 + $0xd8] sm:$0xff]
        %v6816 = vld [vmem:[%s6787 + $0xe0] sm:$0xff]
        %v6817 = vld [vmem:[%s6787 + $0xe8] sm:$0xff]
        %v6818 = vld [vmem:[%s6787 + $0xf0] sm:$0xff]
        %v6819 = vld [vmem:[%s6787 + $0xf8] sm:$0xff]
        %v6820 = vadd.f32 %v6788, %v6661
        %v6821 = vadd.f32 %v6789, %v6664
        %v6822 = vadd.f32 %v6790, %v6669
        %v6823 = vadd.f32 %v6791, %v6672
        %v6824 = vadd.f32 %v6792, %v6677
        %v6825 = vadd.f32 %v6793, %v6680
        %v6826 = vadd.f32 %v6794, %v6685
        %v6827 = vadd.f32 %v6795, %v6688
        %v6828 = vadd.f32 %v6796, %v6693
        %v6829 = vadd.f32 %v6797, %v6696
        %v6830 = vadd.f32 %v6798, %v6701
        %v6831 = vadd.f32 %v6799, %v6704
        %v6832 = vadd.f32 %v6800, %v6709
        %v6833 = vadd.f32 %v6801, %v6712
        %v6834 = vadd.f32 %v6802, %v6717
        %v6835 = vadd.f32 %v6803, %v6720
        %v6836 = vadd.f32 %v6804, %v6725
        %v6837 = vadd.f32 %v6805, %v6728
        %v6838 = vadd.f32 %v6806, %v6733
        %v6839 = vadd.f32 %v6807, %v6736
        %v6840 = vadd.f32 %v6808, %v6741
        %v6841 = vadd.f32 %v6809, %v6744
        %v6842 = vadd.f32 %v6810, %v6749
        %v6843 = vadd.f32 %v6811, %v6752
        %v6844 = vadd.f32 %v6812, %v6757
        %v6845 = vadd.f32 %v6813, %v6760
        %v6846 = vadd.f32 %v6814, %v6765
        %v6847 = vadd.f32 %v6815, %v6768
        %v6848 = vadd.f32 %v6816, %v6773
        %v6849 = vadd.f32 %v6817, %v6776
        %v6850 = vadd.f32 %v6818, %v6781
        %v6851 = vadd.f32 %v6819, %v6784
        %v6852 = vtanh.pop %v6820
        %v6853 = vtanh.pop %v6821
        %v6854 = vtanh.pop %v6822
        %v6855 = vtanh.pop %v6823
        %v6856 = vtanh.pop %v6824
        %v6857 = vtanh.pop %v6825
        %v6858 = vtanh.pop %v6826
        %v6859 = vtanh.pop %v6827
        %v6860 = vtanh.pop %v6828
        %v6861 = vtanh.pop %v6829
        %v6862 = vtanh.pop %v6830
        %v6863 = vtanh.pop %v6831
        %v6864 = vtanh.pop %v6832
        %v6865 = vtanh.pop %v6833
        %v6866 = vtanh.pop %v6834
        %v6867 = vtanh.pop %v6835
        %v6868 = vtanh.pop %v6836
        %v6869 = vtanh.pop %v6837
        %v6870 = vtanh.pop %v6838
        %v6871 = vtanh.pop %v6839
        %v6872 = vtanh.pop %v6840
        %v6873 = vtanh.pop %v6841
        %v6874 = vtanh.pop %v6842
        %v6875 = vtanh.pop %v6843
        %v6876 = vtanh.pop %v6844
        %v6877 = vtanh.pop %v6845
        %v6878 = vtanh.pop %v6846
        %v6879 = vtanh.pop %v6847
        %v6880 = vtanh.pop %v6848
        %v6881 = vtanh.pop %v6849
        %v6882 = vtanh.pop %v6850
        %v6883 = vtanh.pop %v6851
        %v6884 = vld [vmem:[%s327] sm:$0xff]
        %v6885 = vld [vmem:[%s327 + $0x8] sm:$0xff]
        %v6886 = vld [vmem:[%s327 + $0x10] sm:$0xff]
        %v6887 = vld [vmem:[%s327 + $0x18] sm:$0xff]
        %vm6888 = vcmask 261120
        %v6890 = vsel %vm6888, %v6852, 0
        %v6893 = vsel %vm6888, %v6853, 0
        %v6896 = vsel %vm6888, %v6854, 0
        %v6899 = vsel %vm6888, %v6855, 0
        %v6902 = vsel %vm6888, %v6856, 0
        %v6905 = vsel %vm6888, %v6857, 0
        %v6908 = vsel %vm6888, %v6858, 0
        %v6911 = vsel %vm6888, %v6859, 0
        %v6914 = vsel %vm6888, %v6860, 0
        %v6917 = vsel %vm6888, %v6861, 0
        %v6920 = vsel %vm6888, %v6862, 0
        %v6923 = vsel %vm6888, %v6863, 0
        %v6926 = vsel %vm6888, %v6864, 0
        %v6929 = vsel %vm6888, %v6865, 0
        %v6932 = vsel %vm6888, %v6866, 0
        %v6935 = vsel %vm6888, %v6867, 0
        %v6938 = vsel %vm6888, %v6868, 0
        %v6941 = vsel %vm6888, %v6869, 0
        %v6944 = vsel %vm6888, %v6870, 0
        %v6947 = vsel %vm6888, %v6871, 0
        %v6950 = vsel %vm6888, %v6872, 0
        %v6953 = vsel %vm6888, %v6873, 0
        %v6956 = vsel %vm6888, %v6874, 0
        %v6959 = vsel %vm6888, %v6875, 0
        %v6962 = vsel %vm6888, %v6876, 0
        %v6965 = vsel %vm6888, %v6877, 0
        %v6968 = vsel %vm6888, %v6878, 0
        %v6971 = vsel %vm6888, %v6879, 0
        %v6974 = vsel %vm6888, %v6880, 0
        %v6977 = vsel %vm6888, %v6881, 0
        %v6980 = vsel %vm6888, %v6882, 0
        %v6983 = vsel %vm6888, %v6883, 0
        %6985 = vmatprep.subr.mxu0 0.0
        %6986 = vmatpush1.msra.mxu0 %v6884
        %6987 = vmatprep.subr.mxu0 0.0
        %6988 = vmatpush1.msra.mxu0 %v6885
        %6989 = vmatprep.subr.mxu0 0.0
        %6990 = vmatpush1.msra.mxu0 %v6886
        %6991 = vmatprep.subr.mxu0 0.0
        %6992 = vmatpush1.msra.mxu0 %v6887
        %6993 = vmatprep.subr.mxu0 0.0
        %6994 = vmatpush1.msra.mxu0 0.0
        %6995 = vmatprep.subr.mxu0 0.0
        %6996 = vmatpush1.msra.mxu0 0.0
        %6997 = vmatprep.subr.mxu0 0.0
        %6998 = vmatpush1.msra.mxu0 0.0
        %6999 = vmatprep.subr.mxu0 0.0
        %7000 = vmatpush1.msra.mxu0 0.0
        %7001 = vmatprep.subr.mxu0 0.0
        %7002 = vmatpush1.msra.mxu0 0.0
        %7003 = vmatprep.subr.mxu0 0.0
        %7004 = vmatpush1.msra.mxu0 0.0
        %7005 = vmatprep.subr.mxu0 0.0
        %7006 = vmatpush1.msra.mxu0 0.0
        %7007 = vmatprep.subr.mxu0 0.0
        %7008 = vmatpush1.msra.mxu0 0.0
        %7009 = vmatprep.subr.mxu0 0.0
        %7010 = vmatpush1.msra.mxu0 0.0
        %7011 = vmatprep.subr.mxu0 0.0
        %7012 = vmatpush1.msra.mxu0 0.0
        %7013 = vmatprep.subr.mxu0 0.0
        %7014 = vmatpush1.msra.mxu0 0.0
        %7015 = vmatprep.subr.mxu0 0.0
        %7016 = vmatpush1.msra.mxu0 0.0
        %7017 = vmatprep.subr.mxu0 0.0
        %7018 = vmatpush1.msra.mxu0 0.0
        %7019 = vmatprep.subr.mxu0 0.0
        %7020 = vmatpush1.msra.mxu0 0.0
        %7021 = vmatprep.subr.mxu0 0.0
        %7022 = vmatpush1.msra.mxu0 0.0
        %7023 = vmatprep.subr.mxu0 0.0
        %7024 = vmatpush1.msra.mxu0 0.0
        %7025 = vmatprep.subr.mxu0 0.0
        %7026 = vmatpush1.msra.mxu0 0.0
        %7027 = vmatprep.subr.mxu0 0.0
        %7028 = vmatpush1.msra.mxu0 0.0
        %7029 = vmatprep.subr.mxu0 0.0
        %7030 = vmatpush1.msra.mxu0 0.0
        %7031 = vmatprep.subr.mxu0 0.0
        %7032 = vmatpush1.msra.mxu0 0.0
        %7033 = vmatprep.subr.mxu0 0.0
        %7034 = vmatpush1.msra.mxu0 0.0
        %7035 = vmatprep.subr.mxu0 0.0
        %7036 = vmatpush1.msra.mxu0 0.0
        %7037 = vmatprep.subr.mxu0 0.0
        %7038 = vmatpush1.msra.mxu0 0.0
        %7039 = vmatprep.subr.mxu0 0.0
        %7040 = vmatpush1.msra.mxu0 0.0
        %7041 = vmatprep.subr.mxu0 0.0
        %7042 = vmatpush1.msra.mxu0 0.0
        %7043 = vmatprep.subr.mxu0 0.0
        %7044 = vmatpush1.msra.mxu0 0.0
        %7045 = vmatprep.subr.mxu0 0.0
        %7046 = vmatpush1.msra.mxu0 0.0
        %7047 = vmatprep.subr.mxu0 0.0
        %7048 = vmatpush1.msra.mxu0 0.0
        %7049 = vmatprep.mubr.f32.mxu0 0.0
        %7050 = vmatmul.mubr.f32.gmra.mrb[0].mxu0 %v6890
        %v7051 = vpop.f32.mrb[0].mxu0
        %v7052 = vadd.f32 0.0, %v7051
        %v7053 = vpop.f32.mrb[0].mxu0
        %7054 = vmatprep.mubr.f32.mxu0 0.0
        %7055 = vmatmul.mubr.f32.gmra.mrb[0].mxu0 %v6893
        %v7056 = vpop.f32.mrb[0].mxu0
        %v7057 = vadd.f32 0.0, %v7056
        %v7058 = vpop.f32.mrb[0].mxu0
        %7059 = vmatprep.mubr.f32.mxu0 0.0
        %7060 = vmatmul.mubr.f32.gmra.mrb[0].mxu0 %v6896
        %v7061 = vpop.f32.mrb[0].mxu0
        %v7062 = vadd.f32 0.0, %v7061
        %v7063 = vpop.f32.mrb[0].mxu0
        %7064 = vmatprep.mubr.f32.mxu0 0.0
        %7065 = vmatmul.mubr.f32.gmra.mrb[0].mxu0 %v6899
        %v7066 = vpop.f32.mrb[0].mxu0
        %v7067 = vadd.f32 0.0, %v7066
        %v7068 = vpop.f32.mrb[0].mxu0
        %7069 = vmatprep.mubr.f32.mxu0 0.0
        %7070 = vmatmul.mubr.f32.gmra.mrb[0].mxu0 %v6902
        %v7071 = vpop.f32.mrb[0].mxu0
        %v7072 = vadd.f32 0.0, %v7071
        %v7073 = vpop.f32.mrb[0].mxu0
        %7074 = vmatprep.mubr.f32.mxu0 0.0
        %7075 = vmatmul.mubr.f32.gmra.mrb[0].mxu0 %v6905
        %v7076 = vpop.f32.mrb[0].mxu0
        %v7077 = vadd.f32 0.0, %v7076
        %v7078 = vpop.f32.mrb[0].mxu0
        %7079 = vmatprep.mubr.f32.mxu0 0.0
        %7080 = vmatmul.mubr.f32.gmra.mrb[0].mxu0 %v6908
        %v7081 = vpop.f32.mrb[0].mxu0
        %v7082 = vadd.f32 0.0, %v7081
        %v7083 = vpop.f32.mrb[0].mxu0
        %7084 = vmatprep.mubr.f32.mxu0 0.0
        %7085 = vmatmul.mubr.f32.gmra.mrb[0].mxu0 %v6911
        %v7086 = vpop.f32.mrb[0].mxu0
        %v7087 = vadd.f32 0.0, %v7086
        %v7088 = vpop.f32.mrb[0].mxu0
        %7089 = vmatprep.mubr.f32.mxu0 0.0
        %7090 = vmatmul.mubr.f32.gmra.mrb[0].mxu0 %v6914
        %v7091 = vpop.f32.mrb[0].mxu0
        %v7092 = vadd.f32 0.0, %v7091
        %v7093 = vpop.f32.mrb[0].mxu0
        %7094 = vmatprep.mubr.f32.mxu0 0.0
        %7095 = vmatmul.mubr.f32.gmra.mrb[0].mxu0 %v6917
        %v7096 = vpop.f32.mrb[0].mxu0
        %v7097 = vadd.f32 0.0, %v7096
        %v7098 = vpop.f32.mrb[0].mxu0
        %7099 = vmatprep.mubr.f32.mxu0 0.0
        %7100 = vmatmul.mubr.f32.gmra.mrb[0].mxu0 %v6920
        %v7101 = vpop.f32.mrb[0].mxu0
        %v7102 = vadd.f32 0.0, %v7101
        %v7103 = vpop.f32.mrb[0].mxu0
        %7104 = vmatprep.mubr.f32.mxu0 0.0
        %7105 = vmatmul.mubr.f32.gmra.mrb[0].mxu0 %v6923
        %v7106 = vpop.f32.mrb[0].mxu0
        %v7107 = vadd.f32 0.0, %v7106
        %v7108 = vpop.f32.mrb[0].mxu0
        %7109 = vmatprep.mubr.f32.mxu0 0.0
        %7110 = vmatmul.mubr.f32.gmra.mrb[0].mxu0 %v6926
        %v7111 = vpop.f32.mrb[0].mxu0
        %v7112 = vadd.f32 0.0, %v7111
        %v7113 = vpop.f32.mrb[0].mxu0
        %7114 = vmatprep.mubr.f32.mxu0 0.0
        %7115 = vmatmul.mubr.f32.gmra.mrb[0].mxu0 %v6929
        %v7116 = vpop.f32.mrb[0].mxu0
        %v7117 = vadd.f32 0.0, %v7116
        %v7118 = vpop.f32.mrb[0].mxu0
        %7119 = vmatprep.mubr.f32.mxu0 0.0
        %7120 = vmatmul.mubr.f32.gmra.mrb[0].mxu0 %v6932
        %v7121 = vpop.f32.mrb[0].mxu0
        %v7122 = vadd.f32 0.0, %v7121
        %v7123 = vpop.f32.mrb[0].mxu0
        %7124 = vmatprep.mubr.f32.mxu0 0.0
        %7125 = vmatmul.mubr.f32.gmra.mrb[0].mxu0 %v6935
        %v7126 = vpop.f32.mrb[0].mxu0
        %v7127 = vadd.f32 0.0, %v7126
        %v7128 = vpop.f32.mrb[0].mxu0
        %7129 = vmatprep.mubr.f32.mxu0 0.0
        %7130 = vmatmul.mubr.f32.gmra.mrb[0].mxu0 %v6938
        %v7131 = vpop.f32.mrb[0].mxu0
        %v7132 = vadd.f32 0.0, %v7131
        %v7133 = vpop.f32.mrb[0].mxu0
        %7134 = vmatprep.mubr.f32.mxu0 0.0
        %7135 = vmatmul.mubr.f32.gmra.mrb[0].mxu0 %v6941
        %v7136 = vpop.f32.mrb[0].mxu0
        %v7137 = vadd.f32 0.0, %v7136
        %v7138 = vpop.f32.mrb[0].mxu0
        %7139 = vmatprep.mubr.f32.mxu0 0.0
        %7140 = vmatmul.mubr.f32.gmra.mrb[0].mxu0 %v6944
        %v7141 = vpop.f32.mrb[0].mxu0
        %v7142 = vadd.f32 0.0, %v7141
        %v7143 = vpop.f32.mrb[0].mxu0
        %7144 = vmatprep.mubr.f32.mxu0 0.0
        %7145 = vmatmul.mubr.f32.gmra.mrb[0].mxu0 %v6947
        %v7146 = vpop.f32.mrb[0].mxu0
        %v7147 = vadd.f32 0.0, %v7146
        %v7148 = vpop.f32.mrb[0].mxu0
        %7149 = vmatprep.mubr.f32.mxu0 0.0
        %7150 = vmatmul.mubr.f32.gmra.mrb[0].mxu0 %v6950
        %v7151 = vpop.f32.mrb[0].mxu0
        %v7152 = vadd.f32 0.0, %v7151
        %v7153 = vpop.f32.mrb[0].mxu0
        %7154 = vmatprep.mubr.f32.mxu0 0.0
        %7155 = vmatmul.mubr.f32.gmra.mrb[0].mxu0 %v6953
        %v7156 = vpop.f32.mrb[0].mxu0
        %v7157 = vadd.f32 0.0, %v7156
        %v7158 = vpop.f32.mrb[0].mxu0
        %7159 = vmatprep.mubr.f32.mxu0 0.0
        %7160 = vmatmul.mubr.f32.gmra.mrb[0].mxu0 %v6956
        %v7161 = vpop.f32.mrb[0].mxu0
        %v7162 = vadd.f32 0.0, %v7161
        %v7163 = vpop.f32.mrb[0].mxu0
        %7164 = vmatprep.mubr.f32.mxu0 0.0
        %7165 = vmatmul.mubr.f32.gmra.mrb[0].mxu0 %v6959
        %v7166 = vpop.f32.mrb[0].mxu0
        %v7167 = vadd.f32 0.0, %v7166
        %v7168 = vpop.f32.mrb[0].mxu0
        %7169 = vmatprep.mubr.f32.mxu0 0.0
        %7170 = vmatmul.mubr.f32.gmra.mrb[0].mxu0 %v6962
        %v7171 = vpop.f32.mrb[0].mxu0
        %v7172 = vadd.f32 0.0, %v7171
        %v7173 = vpop.f32.mrb[0].mxu0
        %7174 = vmatprep.mubr.f32.mxu0 0.0
        %7175 = vmatmul.mubr.f32.gmra.mrb[0].mxu0 %v6965
        %v7176 = vpop.f32.mrb[0].mxu0
        %v7177 = vadd.f32 0.0, %v7176
        %v7178 = vpop.f32.mrb[0].mxu0
        %7179 = vmatprep.mubr.f32.mxu0 0.0
        %7180 = vmatmul.mubr.f32.gmra.mrb[0].mxu0 %v6968
        %v7181 = vpop.f32.mrb[0].mxu0
        %v7182 = vadd.f32 0.0, %v7181
        %v7183 = vpop.f32.mrb[0].mxu0
        %7184 = vmatprep.mubr.f32.mxu0 0.0
        %7185 = vmatmul.mubr.f32.gmra.mrb[0].mxu0 %v6971
        %v7186 = vpop.f32.mrb[0].mxu0
        %v7187 = vadd.f32 0.0, %v7186
        %v7188 = vpop.f32.mrb[0].mxu0
        %7189 = vmatprep.mubr.f32.mxu0 0.0
        %7190 = vmatmul.mubr.f32.gmra.mrb[0].mxu0 %v6974
        %v7191 = vpop.f32.mrb[0].mxu0
        %v7192 = vadd.f32 0.0, %v7191
        %v7193 = vpop.f32.mrb[0].mxu0
        %7194 = vmatprep.mubr.f32.mxu0 0.0
        %7195 = vmatmul.mubr.f32.gmra.mrb[0].mxu0 %v6977
        %v7196 = vpop.f32.mrb[0].mxu0
        %v7197 = vadd.f32 0.0, %v7196
        %v7198 = vpop.f32.mrb[0].mxu0
        %7199 = vmatprep.mubr.f32.mxu0 0.0
        %7200 = vmatmul.mubr.f32.gmra.mrb[0].mxu0 %v6980
        %v7201 = vpop.f32.mrb[0].mxu0
        %v7202 = vadd.f32 0.0, %v7201
        %v7203 = vpop.f32.mrb[0].mxu0
        %7204 = vmatprep.mubr.f32.mxu0 0.0
        %7205 = vmatmul.mubr.f32.gmra.mrb[0].mxu0 %v6983
        %v7206 = vpop.f32.mrb[0].mxu0
        %v7207 = vadd.f32 0.0, %v7206
        %v7208 = vpop.f32.mrb[0].mxu0
        %7209 = vdwg.mxu0
        %v7210 = vlaneseq
        %v7211 = vand.u32 %v7210, 127
        %vm7212 = vcmp.lt.s32.totalorder %v7211, 16
        %v7213 = vsel %vm7212, %v7052, -1e+30
        %v7214 = vsel %vm7212, %v7057, -1e+30
        %v7215 = vsel %vm7212, %v7062, -1e+30
        %v7216 = vsel %vm7212, %v7067, -1e+30
        %v7217 = vsel %vm7212, %v7072, -1e+30
        %v7218 = vsel %vm7212, %v7077, -1e+30
        %v7219 = vsel %vm7212, %v7082, -1e+30
        %v7220 = vsel %vm7212, %v7087, -1e+30
        %v7221 = vsel %vm7212, %v7092, -1e+30
        %v7222 = vsel %vm7212, %v7097, -1e+30
        %v7223 = vsel %vm7212, %v7102, -1e+30
        %v7224 = vsel %vm7212, %v7107, -1e+30
        %v7225 = vsel %vm7212, %v7112, -1e+30
        %v7226 = vsel %vm7212, %v7117, -1e+30
        %v7227 = vsel %vm7212, %v7122, -1e+30
        %v7228 = vsel %vm7212, %v7127, -1e+30
        %v7229 = vsel %vm7212, %v7132, -1e+30
        %v7230 = vsel %vm7212, %v7137, -1e+30
        %v7231 = vsel %vm7212, %v7142, -1e+30
        %v7232 = vsel %vm7212, %v7147, -1e+30
        %v7233 = vsel %vm7212, %v7152, -1e+30
        %v7234 = vsel %vm7212, %v7157, -1e+30
        %v7235 = vsel %vm7212, %v7162, -1e+30
        %v7236 = vsel %vm7212, %v7167, -1e+30
        %v7237 = vsel %vm7212, %v7172, -1e+30
        %v7238 = vsel %vm7212, %v7177, -1e+30
        %v7239 = vsel %vm7212, %v7182, -1e+30
        %v7240 = vsel %vm7212, %v7187, -1e+30
        %v7241 = vsel %vm7212, %v7192, -1e+30
        %v7242 = vsel %vm7212, %v7197, -1e+30
        %v7243 = vsel %vm7212, %v7202, -1e+30
        %v7244 = vsel %vm7212, %v7207, -1e+30
        %7245 = vmax.xlane.f32.xlu0 %v7213
        %v7246 = vpop.xlane.xlu0 %7245
        %7247 = vmax.xlane.f32.xlu0 %v7214
        %v7248 = vpop.xlane.xlu0 %7247
        %7249 = vmax.xlane.f32.xlu0 %v7215
        %v7250 = vpop.xlane.xlu0 %7249
        %7251 = vmax.xlane.f32.xlu0 %v7216
        %v7252 = vpop.xlane.xlu0 %7251
        %7253 = vmax.xlane.f32.xlu0 %v7217
        %v7254 = vpop.xlane.xlu0 %7253
        %7255 = vmax.xlane.f32.xlu0 %v7218
        %v7256 = vpop.xlane.xlu0 %7255
        %7257 = vmax.xlane.f32.xlu0 %v7219
        %v7258 = vpop.xlane.xlu0 %7257
        %7259 = vmax.xlane.f32.xlu0 %v7220
        %v7260 = vpop.xlane.xlu0 %7259
        %7261 = vmax.xlane.f32.xlu0 %v7221
        %v7262 = vpop.xlane.xlu0 %7261
        %7263 = vmax.xlane.f32.xlu0 %v7222
        %v7264 = vpop.xlane.xlu0 %7263
        %7265 = vmax.xlane.f32.xlu0 %v7223
        %v7266 = vpop.xlane.xlu0 %7265
        %7267 = vmax.xlane.f32.xlu0 %v7224
        %v7268 = vpop.xlane.xlu0 %7267
        %7269 = vmax.xlane.f32.xlu0 %v7225
        %v7270 = vpop.xlane.xlu0 %7269
        %7271 = vmax.xlane.f32.xlu0 %v7226
        %v7272 = vpop.xlane.xlu0 %7271
        %7273 = vmax.xlane.f32.xlu0 %v7227
        %v7274 = vpop.xlane.xlu0 %7273
        %7275 = vmax.xlane.f32.xlu0 %v7228
        %v7276 = vpop.xlane.xlu0 %7275
        %7277 = vmax.xlane.f32.xlu0 %v7229
        %v7278 = vpop.xlane.xlu0 %7277
        %7279 = vmax.xlane.f32.xlu0 %v7230
        %v7280 = vpop.xlane.xlu0 %7279
        %7281 = vmax.xlane.f32.xlu0 %v7231
        %v7282 = vpop.xlane.xlu0 %7281
        %7283 = vmax.xlane.f32.xlu0 %v7232
        %v7284 = vpop.xlane.xlu0 %7283
        %7285 = vmax.xlane.f32.xlu0 %v7233
        %v7286 = vpop.xlane.xlu0 %7285
        %7287 = vmax.xlane.f32.xlu0 %v7234
        %v7288 = vpop.xlane.xlu0 %7287
        %7289 = vmax.xlane.f32.xlu0 %v7235
        %v7290 = vpop.xlane.xlu0 %7289
        %7291 = vmax.xlane.f32.xlu0 %v7236
        %v7292 = vpop.xlane.xlu0 %7291
        %7293 = vmax.xlane.f32.xlu0 %v7237
        %v7294 = vpop.xlane.xlu0 %7293
        %7295 = vmax.xlane.f32.xlu0 %v7238
        %v7296 = vpop.xlane.xlu0 %7295
        %7297 = vmax.xlane.f32.xlu0 %v7239
        %v7298 = vpop.xlane.xlu0 %7297
        %7299 = vmax.xlane.f32.xlu0 %v7240
        %v7300 = vpop.xlane.xlu0 %7299
        %7301 = vmax.xlane.f32.xlu0 %v7241
        %v7302 = vpop.xlane.xlu0 %7301
        %7303 = vmax.xlane.f32.xlu0 %v7242
        %v7304 = vpop.xlane.xlu0 %7303
        %7305 = vmax.xlane.f32.xlu0 %v7243
        %v7306 = vpop.xlane.xlu0 %7305
        %7307 = vmax.xlane.f32.xlu0 %v7244
        %v7308 = vpop.xlane.xlu0 %7307
        %v7309 = vsub.f32 %v7213, %v7246
        %v7310 = vsub.f32 %v7214, %v7248
        %v7311 = vsub.f32 %v7215, %v7250
        %v7312 = vsub.f32 %v7216, %v7252
        %v7313 = vsub.f32 %v7217, %v7254
        %v7314 = vsub.f32 %v7218, %v7256
        %v7315 = vsub.f32 %v7219, %v7258
        %v7316 = vsub.f32 %v7220, %v7260
        %v7317 = vsub.f32 %v7221, %v7262
        %v7318 = vsub.f32 %v7222, %v7264
        %v7319 = vsub.f32 %v7223, %v7266
        %v7320 = vsub.f32 %v7224, %v7268
        %v7321 = vsub.f32 %v7225, %v7270
        %v7322 = vsub.f32 %v7226, %v7272
        %v7323 = vsub.f32 %v7227, %v7274
        %v7324 = vsub.f32 %v7228, %v7276
        %v7325 = vsub.f32 %v7229, %v7278
        %v7326 = vsub.f32 %v7230, %v7280
        %v7327 = vsub.f32 %v7231, %v7282
        %v7328 = vsub.f32 %v7232, %v7284
        %v7329 = vsub.f32 %v7233, %v7286
        %v7330 = vsub.f32 %v7234, %v7288
        %v7331 = vsub.f32 %v7235, %v7290
        %v7332 = vsub.f32 %v7236, %v7292
        %v7333 = vsub.f32 %v7237, %v7294
        %v7334 = vsub.f32 %v7238, %v7296
        %v7335 = vsub.f32 %v7239, %v7298
        %v7336 = vsub.f32 %v7240, %v7300
        %v7337 = vsub.f32 %v7241, %v7302
        %v7338 = vsub.f32 %v7242, %v7304
        %v7339 = vsub.f32 %v7243, %v7306
        %v7340 = vsub.f32 %v7244, %v7308
        %v7341 = vmul.f32 %v7309, 1.442695
        %v7342 = vpow.pop %v7341
        %v7343 = vmul.f32 %v7310, 1.442695
        %v7344 = vpow.pop %v7343
        %v7345 = vmul.f32 %v7311, 1.442695
        %v7346 = vpow.pop %v7345
        %v7347 = vmul.f32 %v7312, 1.442695
        %v7348 = vpow.pop %v7347
        %v7349 = vmul.f32 %v7313, 1.442695
        %v7350 = vpow.pop %v7349
        %v7351 = vmul.f32 %v7314, 1.442695
        %v7352 = vpow.pop %v7351
        %v7353 = vmul.f32 %v7315, 1.442695
        %v7354 = vpow.pop %v7353
        %v7355 = vmul.f32 %v7316, 1.442695
        %v7356 = vpow.pop %v7355
        %v7357 = vmul.f32 %v7317, 1.442695
        %v7358 = vpow.pop %v7357
        %v7359 = vmul.f32 %v7318, 1.442695
        %v7360 = vpow.pop %v7359
        %v7361 = vmul.f32 %v7319, 1.442695
        %v7362 = vpow.pop %v7361
        %v7363 = vmul.f32 %v7320, 1.442695
        %v7364 = vpow.pop %v7363
        %v7365 = vmul.f32 %v7321, 1.442695
        %v7366 = vpow.pop %v7365
        %v7367 = vmul.f32 %v7322, 1.442695
        %v7368 = vpow.pop %v7367
        %v7369 = vmul.f32 %v7323, 1.442695
        %v7370 = vpow.pop %v7369
        %v7371 = vmul.f32 %v7324, 1.442695
        %v7372 = vpow.pop %v7371
        %v7373 = vmul.f32 %v7325, 1.442695
        %v7374 = vpow.pop %v7373
        %v7375 = vmul.f32 %v7326, 1.442695
        %v7376 = vpow.pop %v7375
        %v7377 = vmul.f32 %v7327, 1.442695
        %v7378 = vpow.pop %v7377
        %v7379 = vmul.f32 %v7328, 1.442695
        %v7380 = vpow.pop %v7379
        %v7381 = vmul.f32 %v7329, 1.442695
        %v7382 = vpow.pop %v7381
        %v7383 = vmul.f32 %v7330, 1.442695
        %v7384 = vpow.pop %v7383
        %v7385 = vmul.f32 %v7331, 1.442695
        %v7386 = vpow.pop %v7385
        %v7387 = vmul.f32 %v7332, 1.442695
        %v7388 = vpow.pop %v7387
        %v7389 = vmul.f32 %v7333, 1.442695
        %v7390 = vpow.pop %v7389
        %v7391 = vmul.f32 %v7334, 1.442695
        %v7392 = vpow.pop %v7391
        %v7393 = vmul.f32 %v7335, 1.442695
        %v7394 = vpow.pop %v7393
        %v7395 = vmul.f32 %v7336, 1.442695
        %v7396 = vpow.pop %v7395
        %v7397 = vmul.f32 %v7337, 1.442695
        %v7398 = vpow.pop %v7397
        %v7399 = vmul.f32 %v7338, 1.442695
        %v7400 = vpow.pop %v7399
        %v7401 = vmul.f32 %v7339, 1.442695
        %v7402 = vpow.pop %v7401
        %v7403 = vmul.f32 %v7340, 1.442695
        %v7404 = vpow.pop %v7403
        %7405 = vadd.xlane.f32.xlu0 %v7342
        %v7406 = vpop.xlane.xlu0 %7405
        %7407 = vadd.xlane.f32.xlu0 %v7344
        %v7408 = vpop.xlane.xlu0 %7407
        %7409 = vadd.xlane.f32.xlu0 %v7346
        %v7410 = vpop.xlane.xlu0 %7409
        %7411 = vadd.xlane.f32.xlu0 %v7348
        %v7412 = vpop.xlane.xlu0 %7411
        %7413 = vadd.xlane.f32.xlu0 %v7350
        %v7414 = vpop.xlane.xlu0 %7413
        %7415 = vadd.xlane.f32.xlu0 %v7352
        %v7416 = vpop.xlane.xlu0 %7415
        %7417 = vadd.xlane.f32.xlu0 %v7354
        %v7418 = vpop.xlane.xlu0 %7417
        %7419 = vadd.xlane.f32.xlu0 %v7356
        %v7420 = vpop.xlane.xlu0 %7419
        %7421 = vadd.xlane.f32.xlu0 %v7358
        %v7422 = vpop.xlane.xlu0 %7421
        %7423 = vadd.xlane.f32.xlu0 %v7360
        %v7424 = vpop.xlane.xlu0 %7423
        %7425 = vadd.xlane.f32.xlu0 %v7362
        %v7426 = vpop.xlane.xlu0 %7425
        %7427 = vadd.xlane.f32.xlu0 %v7364
        %v7428 = vpop.xlane.xlu0 %7427
        %7429 = vadd.xlane.f32.xlu0 %v7366
        %v7430 = vpop.xlane.xlu0 %7429
        %7431 = vadd.xlane.f32.xlu0 %v7368
        %v7432 = vpop.xlane.xlu0 %7431
        %7433 = vadd.xlane.f32.xlu0 %v7370
        %v7434 = vpop.xlane.xlu0 %7433
        %7435 = vadd.xlane.f32.xlu0 %v7372
        %v7436 = vpop.xlane.xlu0 %7435
        %7437 = vadd.xlane.f32.xlu0 %v7374
        %v7438 = vpop.xlane.xlu0 %7437
        %7439 = vadd.xlane.f32.xlu0 %v7376
        %v7440 = vpop.xlane.xlu0 %7439
        %7441 = vadd.xlane.f32.xlu0 %v7378
        %v7442 = vpop.xlane.xlu0 %7441
        %7443 = vadd.xlane.f32.xlu0 %v7380
        %v7444 = vpop.xlane.xlu0 %7443
        %7445 = vadd.xlane.f32.xlu0 %v7382
        %v7446 = vpop.xlane.xlu0 %7445
        %7447 = vadd.xlane.f32.xlu0 %v7384
        %v7448 = vpop.xlane.xlu0 %7447
        %7449 = vadd.xlane.f32.xlu0 %v7386
        %v7450 = vpop.xlane.xlu0 %7449
        %7451 = vadd.xlane.f32.xlu0 %v7388
        %v7452 = vpop.xlane.xlu0 %7451
        %7453 = vadd.xlane.f32.xlu0 %v7390
        %v7454 = vpop.xlane.xlu0 %7453
        %7455 = vadd.xlane.f32.xlu0 %v7392
        %v7456 = vpop.xlane.xlu0 %7455
        %7457 = vadd.xlane.f32.xlu0 %v7394
        %v7458 = vpop.xlane.xlu0 %7457
        %7459 = vadd.xlane.f32.xlu0 %v7396
        %v7460 = vpop.xlane.xlu0 %7459
        %7461 = vadd.xlane.f32.xlu0 %v7398
        %v7462 = vpop.xlane.xlu0 %7461
        %7463 = vadd.xlane.f32.xlu0 %v7400
        %v7464 = vpop.xlane.xlu0 %7463
        %7465 = vadd.xlane.f32.xlu0 %v7402
        %v7466 = vpop.xlane.xlu0 %7465
        %7467 = vadd.xlane.f32.xlu0 %v7404
        %v7468 = vpop.xlane.xlu0 %7467
        %v7469 = vrcp.pop %v7406
        %v7470 = vrcp.pop %v7408
        %v7471 = vrcp.pop %v7410
        %v7472 = vrcp.pop %v7412
        %v7473 = vrcp.pop %v7414
        %v7474 = vrcp.pop %v7416
        %v7475 = vrcp.pop %v7418
        %v7476 = vrcp.pop %v7420
        %v7477 = vrcp.pop %v7422
        %v7478 = vrcp.pop %v7424
        %v7479 = vrcp.pop %v7426
        %v7480 = vrcp.pop %v7428
        %v7481 = vrcp.pop %v7430
        %v7482 = vrcp.pop %v7432
        %v7483 = vrcp.pop %v7434
        %v7484 = vrcp.pop %v7436
        %v7485 = vrcp.pop %v7438
        %v7486 = vrcp.pop %v7440
        %v7487 = vrcp.pop %v7442
        %v7488 = vrcp.pop %v7444
        %v7489 = vrcp.pop %v7446
        %v7490 = vrcp.pop %v7448
        %v7491 = vrcp.pop %v7450
        %v7492 = vrcp.pop %v7452
        %v7493 = vrcp.pop %v7454
        %v7494 = vrcp.pop %v7456
        %v7495 = vrcp.pop %v7458
        %v7496 = vrcp.pop %v7460
        %v7497 = vrcp.pop %v7462
        %v7498 = vrcp.pop %v7464
        %v7499 = vrcp.pop %v7466
        %v7500 = vrcp.pop %v7468
        %v7501 = vmul.f32 %v7342, %v7469
        %v7502 = vmul.f32 %v7344, %v7470
        %v7503 = vmul.f32 %v7346, %v7471
        %v7504 = vmul.f32 %v7348, %v7472
        %v7505 = vmul.f32 %v7350, %v7473
        %v7506 = vmul.f32 %v7352, %v7474
        %v7507 = vmul.f32 %v7354, %v7475
        %v7508 = vmul.f32 %v7356, %v7476
        %v7509 = vmul.f32 %v7358, %v7477
        %v7510 = vmul.f32 %v7360, %v7478
        %v7511 = vmul.f32 %v7362, %v7479
        %v7512 = vmul.f32 %v7364, %v7480
        %v7513 = vmul.f32 %v7366, %v7481
        %v7514 = vmul.f32 %v7368, %v7482
        %v7515 = vmul.f32 %v7370, %v7483
        %v7516 = vmul.f32 %v7372, %v7484
        %v7517 = vmul.f32 %v7374, %v7485
        %v7518 = vmul.f32 %v7376, %v7486
        %v7519 = vmul.f32 %v7378, %v7487
        %v7520 = vmul.f32 %v7380, %v7488
        %v7521 = vmul.f32 %v7382, %v7489
        %v7522 = vmul.f32 %v7384, %v7490
        %v7523 = vmul.f32 %v7386, %v7491
        %v7524 = vmul.f32 %v7388, %v7492
        %v7525 = vmul.f32 %v7390, %v7493
        %v7526 = vmul.f32 %v7392, %v7494
        %v7527 = vmul.f32 %v7394, %v7495
        %v7528 = vmul.f32 %v7396, %v7496
        %v7529 = vmul.f32 %v7398, %v7497
        %v7530 = vmul.f32 %v7400, %v7498
        %v7531 = vmul.f32 %v7402, %v7499
        %v7532 = vmul.f32 %v7404, %v7500
        %v7533 = vld [vmem:[#allocation7] sm:$0xff]
        %v7534 = vld [vmem:[%s308] sm:$0xff]
        %v7535 = vld [vmem:[%s308 + $0x8] sm:$0xff]
        %7536 = vmatprep.subr.mxu0 0.0
        %7537 = vmatpush1.msra.mxu0 %v7501
        %7538 = vmatprep.subr.mxu0 0.0
        %7539 = vmatpush1.msra.mxu0 %v7502
        %7540 = vmatprep.subr.mxu0 0.0
        %7541 = vmatpush1.msra.mxu0 %v7503
        %7542 = vmatprep.subr.mxu0 0.0
        %7543 = vmatpush1.msra.mxu0 %v7504
        %7544 = vmatprep.subr.mxu0 0.0
        %7545 = vmatpush1.msra.mxu0 %v7505
        %7546 = vmatprep.subr.mxu0 0.0
        %7547 = vmatpush1.msra.mxu0 %v7506
        %7548 = vmatprep.subr.mxu0 0.0
        %7549 = vmatpush1.msra.mxu0 %v7507
        %7550 = vmatprep.subr.mxu0 0.0
        %7551 = vmatpush1.msra.mxu0 %v7508
        %7552 = vmatprep.subr.mxu0 0.0
        %7553 = vmatpush1.msra.mxu0 %v7509
        %7554 = vmatprep.subr.mxu0 0.0
        %7555 = vmatpush1.msra.mxu0 %v7510
        %7556 = vmatprep.subr.mxu0 0.0
        %7557 = vmatpush1.msra.mxu0 %v7511
        %7558 = vmatprep.subr.mxu0 0.0
        %7559 = vmatpush1.msra.mxu0 %v7512
        %7560 = vmatprep.subr.mxu0 0.0
        %7561 = vmatpush1.msra.mxu0 %v7513
        %7562 = vmatprep.subr.mxu0 0.0
        %7563 = vmatpush1.msra.mxu0 %v7514
        %7564 = vmatprep.subr.mxu0 0.0
        %7565 = vmatpush1.msra.mxu0 %v7515
        %7566 = vmatprep.subr.mxu0 0.0
        %7567 = vmatpush1.msra.mxu0 %v7516
        %7568 = vmatprep.subr.mxu0 0.0
        %7569 = vmatpush1.msra.mxu0 %v7517
        %7570 = vmatprep.subr.mxu0 0.0
        %7571 = vmatpush1.msra.mxu0 %v7518
        %7572 = vmatprep.subr.mxu0 0.0
        %7573 = vmatpush1.msra.mxu0 %v7519
        %7574 = vmatprep.subr.mxu0 0.0
        %7575 = vmatpush1.msra.mxu0 %v7520
        %7576 = vmatprep.subr.mxu0 0.0
        %7577 = vmatpush1.msra.mxu0 %v7521
        %7578 = vmatprep.subr.mxu0 0.0
        %7579 = vmatpush1.msra.mxu0 %v7522
        %7580 = vmatprep.subr.mxu0 0.0
        %7581 = vmatpush1.msra.mxu0 %v7523
        %7582 = vmatprep.subr.mxu0 0.0
        %7583 = vmatpush1.msra.mxu0 %v7524
        %7584 = vmatprep.subr.mxu0 0.0
        %7585 = vmatpush1.msra.mxu0 %v7525
        %7586 = vmatprep.subr.mxu0 0.0
        %7587 = vmatpush1.msra.mxu0 %v7526
        %7588 = vmatprep.subr.mxu0 0.0
        %7589 = vmatpush1.msra.mxu0 %v7527
        %7590 = vmatprep.subr.mxu0 0.0
        %7591 = vmatpush1.msra.mxu0 %v7528
        %7592 = vmatprep.subr.mxu0 0.0
        %7593 = vmatpush1.msra.mxu0 %v7529
        %7594 = vmatprep.subr.mxu0 0.0
        %7595 = vmatpush1.msra.mxu0 %v7530
        %7596 = vmatprep.subr.mxu0 0.0
        %7597 = vmatpush1.msra.mxu0 %v7531
        %7598 = vmatprep.subr.mxu0 0.0
        %7599 = vmatpush1.msra.mxu0 %v7532
        %7600 = vmatprep.mubr.f32.mxu0 %v7535
        %7601 = vmatmul.mubr.f32.gmra.mrb[0].mxu0 %v7534
        %v7602 = vpop.f32.mrb[0].mxu0
        %v7603 = vadd.f32 0.0, %v7602
        %v7604 = vpop.f32.mrb[0].mxu0
        %7605 = vdwg.mxu0
        %v7606 = vadd.f32 %v7533, %v7603
        %7607 = vst [vmem:[#allocation7] sm:$0xff] %v7606
        %s7608 = scalar_lea.vmem [#allocation3], %s6363
        %7609 = vst.msk [vmem:[%s7608] sm:$0xff] %vm6888, %v6852
        %7610 = vst.msk [vmem:[%s7608 + $0x8] sm:$0xff] %vm6888, %v6853
        %7611 = vst.msk [vmem:[%s7608 + $0x10] sm:$0xff] %vm6888, %v6854
        %7612 = vst.msk [vmem:[%s7608 + $0x18] sm:$0xff] %vm6888, %v6855
        %7613 = vst.msk [vmem:[%s7608 + $0x20] sm:$0xff] %vm6888, %v6856
        %7614 = vst.msk [vmem:[%s7608 + $0x28] sm:$0xff] %vm6888, %v6857
        %7615 = vst.msk [vmem:[%s7608 + $0x30] sm:$0xff] %vm6888, %v6858
        %7616 = vst.msk [vmem:[%s7608 + $0x38] sm:$0xff] %vm6888, %v6859
        %7617 = vst.msk [vmem:[%s7608 + $0x40] sm:$0xff] %vm6888, %v6860
        %7618 = vst.msk [vmem:[%s7608 + $0x48] sm:$0xff] %vm6888, %v6861
        %7619 = vst.msk [vmem:[%s7608 + $0x50] sm:$0xff] %vm6888, %v6862
        %7620 = vst.msk [vmem:[%s7608 + $0x58] sm:$0xff] %vm6888, %v6863
        %7621 = vst.msk [vmem:[%s7608 + $0x60] sm:$0xff] %vm6888, %v6864
        %7622 = vst.msk [vmem:[%s7608 + $0x68] sm:$0xff] %vm6888, %v6865
        %7623 = vst.msk [vmem:[%s7608 + $0x70] sm:$0xff] %vm6888, %v6866
        %7624 = vst.msk [vmem:[%s7608 + $0x78] sm:$0xff] %vm6888, %v6867
        %7625 = vst.msk [vmem:[%s7608 + $0x80] sm:$0xff] %vm6888, %v6868
        %7626 = vst.msk [vmem:[%s7608 + $0x88] sm:$0xff] %vm6888, %v6869
        %7627 = vst.msk [vmem:[%s7608 + $0x90] sm:$0xff] %vm6888, %v6870
        %7628 = vst.msk [vmem:[%s7608 + $0x98] sm:$0xff] %vm6888, %v6871
        %7629 = vst.msk [vmem:[%s7608 + $0xa0] sm:$0xff] %vm6888, %v6872
        %7630 = vst.msk [vmem:[%s7608 + $0xa8] sm:$0xff] %vm6888, %v6873
        %7631 = vst.msk [vmem:[%s7608 + $0xb0] sm:$0xff] %vm6888, %v6874
        %7632 = vst.msk [vmem:[%s7608 + $0xb8] sm:$0xff] %vm6888, %v6875
        %7633 = vst.msk [vmem:[%s7608 + $0xc0] sm:$0xff] %vm6888, %v6876
        %7634 = vst.msk [vmem:[%s7608 + $0xc8] sm:$0xff] %vm6888, %v6877
        %7635 = vst.msk [vmem:[%s7608 + $0xd0] sm:$0xff] %vm6888, %v6878
        %7636 = vst.msk [vmem:[%s7608 + $0xd8] sm:$0xff] %vm6888, %v6879
        %7637 = vst.msk [vmem:[%s7608 + $0xe0] sm:$0xff] %vm6888, %v6880
        %7638 = vst.msk [vmem:[%s7608 + $0xe8] sm:$0xff] %vm6888, %v6881
        %7639 = vst.msk [vmem:[%s7608 + $0xf0] sm:$0xff] %vm6888, %v6882
        %7640 = vst.msk [vmem:[%s7608 + $0xf8] sm:$0xff] %vm6888, %v6883
        // Predicated region
        $region124: #{tpu_custom_call.1} parent=43 // pred_check
          %p7641 = pneg %p196
        $region125: #{tpu_custom_call.1} parent=43 // pred_check_branch
          %7643 = sbr.rel (%p7641) target = $region127
        $region126: #{tpu_custom_call.1} parent=43 // pred_region
          %s7645 = ssub.s32 128, 128
          %7646 = vsyncadd [#allocation8], %s7645
          %s7648 = sshll.u32 [#allocation7], 4
          %s7649 = int_to_ptr.vmem [resolvable:$true] %s7648
          %7651 = dma.vmem_to_hbm [thread:$0]  %s7649, 128, %s8, [#allocation8]
        $region127: #{tpu_custom_call.1} parent=43 // pred_fallthru
          _
        // Predicated region
        $region128: #{tpu_custom_call.1} parent=43 // pred_check
          %p7652 = pneg %p196
        $region129: #{tpu_custom_call.1} parent=43 // pred_check_branch
          %7654 = sbr.rel (%p7652) target = $region131
        $region130: #{tpu_custom_call.1} parent=43 // pred_region
          %7655 = dma.done [#allocation8], 128
        $region131: #{tpu_custom_call.1} parent=43 // pred_fallthru
          _
      $region44: #{tpu_custom_call.1} parent=5 // pred_fallthru
        _
      %p7656 = scmp.le.s32.totalorder 2, %s15
      // Predicated region
      $region132: #{tpu_custom_call.1} parent=5 // pred_check
        %p7657 = pneg %p7656
      $region133: #{tpu_custom_call.1} parent=5 // pred_check_branch
        %7659 = sbr.rel (%p7657) target = $region135
      $region134: #{tpu_custom_call.1} parent=5 // pred_region
        %s7660 = ssub.s32 %s15, 2
      $region135: #{tpu_custom_call.1} parent=5 // pred_fallthru
        _
    $region6: #{tpu_custom_call.1} parent=1 // loop_footer
      %s19 = sadd.s32 1, %s15
    $region7: #{tpu_custom_call.1} parent=1 // loop_footer_branch
      %14 = sbr.rel target = $region3
    $region8: #{tpu_custom_call.1} parent=1 // loop_exit
      _
    %7661 = vsyncpa [#allocation8], 1
    %s7662 = scalar_lea.sflag [#allocation8], 1
    %7663 = vsyncpa %s7662, 1
  %7664 = vsyncmov [#allocation2]
  %s7665 = vpop.sfrf %7664
  %p7666 = scmp.eq.s32.totalorder %s7665, 0
  %p7667 = pneg %p7666
  %7669 = shalt.err (%p7667)
  %s7670 = scalar_lea.sflag [#allocation2], 1
  %7671 = vsyncmov %s7670
  %s7672 = vpop.sfrf %7671
  %p7673 = scmp.eq.s32.totalorder %s7672, 0
  %p7674 = pneg %p7673
  %7676 = shalt.err (%p7674)

</llo_original>
